<compile_context>
chip_gen: v7x
topology: tpu7x:2x2x1
jax: 0.10.0
libtpu: 0.0.40
codegen_flags: <defaults>
</compile_context>

<pallas_src>
import numpy as np
import jax
import jax.numpy as jnp
from jax.experimental import pallas as pl
from jax.experimental.pallas import tpu as pltpu

# ---- small synthetic config (PyTorch defaults: base_dim=512, emb_dim=2048, target_size=160) ----
BASE_DIM = 32
EMB_DIM = 64
N_CHANNEL = 3
TARGET_SIZE = 16              # one 2x downsample: 16 -> init_H = 8
INIT_H = INIT_W = 8
N_DIM = min(512, BASE_DIM)    # resolution_channels[...] = min(512, base_dim) = 32
HALF = N_DIM // 2             # 16
LRELU = 0.2
EPS = 1e-5                    # nn.InstanceNorm2d default eps

S1 = TARGET_SIZE * TARGET_SIZE        # 256 pixels at full res
S2 = INIT_H * INIT_W                  # 64 pixels after the 2x downsample
W1RES = TARGET_SIZE                   # row width at full res
W2RES = INIT_W                        # row width after downsample

B_TILE = 2                   # batch elements fused per grid step (grid stays >= 2 for v7x)
PAD = 24                     # per-element slack rows in the conv scratch (>= W+1, multiple of 8)
TROWS = 16                   # rows per element in the head tap-sum matmul (9 used, padded to 16)
XIN = 32                     # host-side first-conv im2col channels: 9*3 = 27, padded to 32


# ----------------------------- in-kernel helpers -----------------------------

def _conv3x3(pad_ref, x_flat, w_ref, *, btile, S, W):
    """3x3 / pad=1 conv on flattened per-element (S, C) tiles as ONE im2col matmul.

    x_flat: (btile*S, C) f32.  w_ref: (9*C, N) bf16, tap-major rows, taps ordered
    (dy, dx) row-major.  Each element's activation is written into its own padded
    slot of the scratch; the 9 shifted taps are masked with 0/1 row+column
    validity masks (so the scratch pad rows never need zeroing) and concatenated
    along lanes into an (M, 9*C) slab that hits the MXU once (bf16, f32 acc).
    """
    assert (W & (W - 1)) == 0 and (S & (S - 1)) == 0 and PAD >= W + 1
    C = x_flat.shape[1]
    M = btile * S
    SP = S + 2 * PAD
    for b in range(btile):
        pad_ref[pl.ds(b * SP + PAD, S), :] = x_flat[b * S:(b + 1) * S, :]

    m = jax.lax.broadcasted_iota(jnp.int32, (M, 1), 0)
    s = jnp.bitwise_and(m, S - 1)          # spatial index inside the element
    j = jnp.bitwise_and(m, W - 1)          # column inside the row
    top_ok = s >= W                        # dy = -1 rows valid
    bot_ok = s < S - W                     # dy = +1 rows valid
    left_ok = j >= 1                       # dx = -1 cols valid
    right_ok = j <= W - 2                  # dx = +1 cols valid

    cols = []
    for dy in (-1, 0, 1):
        for dx in (-1, 0, 1):
            off = PAD + dy * W + dx
            parts = [pad_ref[pl.ds(b * SP + off, S), :] for b in range(btile)]
            sh = jnp.concatenate(parts, axis=0) if btile > 1 else parts[0]
            mask = None
            if dy == -1:
                mask = top_ok
            elif dy == 1:
                mask = bot_ok
            if dx == -1:
                mask = left_ok if mask is None else jnp.logical_and(mask, left_ok)
            elif dx == 1:
                mask = right_ok if mask is None else jnp.logical_and(mask, right_ok)
            if mask is not None:
                sh = jnp.where(mask, sh, 0.0)
            cols.append(sh)
    im = jnp.concatenate(cols, axis=1).astype(jnp.bfloat16)        # (M, 9*C)
    return jnp.dot(im, w_ref[...], preferred_element_type=jnp.float32)


def _instnorm_lrelu(h_flat, *, btile, S):
    """InstanceNorm2d(affine=False) per (element, channel) over the spatial axis,
    fused with LeakyReLU(0.2).  Centred two-pass variance (avoids E[x^2]-E[x]^2
    cancellation); rsqrt uses the EUP slot."""
    outs = []
    for b in range(btile):
        hb = h_flat[b * S:(b + 1) * S, :]
        mean = jnp.mean(hb, axis=0, keepdims=True)
        d = hb - mean
        var = jnp.mean(d * d, axis=0, keepdims=True)
        xn = d * jax.lax.rsqrt(var + EPS)
        outs.append(jnp.where(xn > 0, xn, LRELU * xn))
    return jnp.concatenate(outs, axis=0) if btile > 1 else outs[0]


# ----------------------------- the fused kernel -----------------------------

def disc_kernel(xim_ref, y_ref, pool_ref, tap_ref,
                w1_ref, b11_ref, w12_ref, b12_ref, br1_ref,
                w21_ref, b21_ref, w22_ref, b22_ref, br2_ref,
                wadv_ref, badv_ref, wy_ref, wh_ref,
                o_ref, pad_a, pad_b):
    C = N_DIM

    # ---- residual block 1 (first_relu=False, downsample=True), 16x16 -> 8x8 ----
    # conv1 (host-side im2col) and its 1x1 residual projection share ONE matmul:
    # output cols [0,C) = conv1, cols [C,2C) = x @ wr1 (centre-tap rows only).
    t1 = jnp.dot(xim_ref[...], w1_ref[...], preferred_element_type=jnp.float32)   # (M1, 2C)
    h = t1[:, :C] + b11_ref[...]
    res1 = t1[:, C:]
    h = _instnorm_lrelu(h, btile=B_TILE, S=S1)                                     # norm1 + relu2
    h = _conv3x3(pad_a, h, w12_ref, btile=B_TILE, S=S1, W=W1RES) + b12_ref[...]    # conv2
    # AvgPool2d(2,2) commutes with the 1x1 residual conv: add before pooling,
    # then ONE block-diagonal bf16 pool matmul per step.
    pre = (h + res1).astype(jnp.bfloat16)
    h1 = jnp.dot(pool_ref[...], pre, preferred_element_type=jnp.float32) + br1_ref[...]  # (M2, C)

    # ---- residual block 2 (first_relu=True, downsample=False), 8x8 ----
    xr = jnp.where(h1 > 0, h1, LRELU * h1)                                         # relu1
    t2 = _conv3x3(pad_b, xr, w21_ref, btile=B_TILE, S=S2, W=W2RES)                 # conv1 + folded 1x1
    h = t2[:, :C] + b21_ref[...]
    res2 = t2[:, C:]
    h = _instnorm_lrelu(h, btile=B_TILE, S=S2)
    h = _conv3x3(pad_b, h, w22_ref, btile=B_TILE, S=S2, W=W2RES) + b22_ref[...]    # conv2
    h2 = h + res2 + br2_ref[...]

    # ---- head ----
    hr = jnp.maximum(h2, 0.0)                                                      # nn.ReLU
    hr16 = hr.astype(jnp.bfloat16)
    # adv_out = spatial mean of a 3x3 (C->1) conv == <w_adv[t], per-tap masked
    # spatial sums>; the tap sums come from one block-diagonal 0/1-mask matmul.
    taps = jnp.dot(tap_ref[...], hr16, preferred_element_type=jnp.float32)         # (BT*TROWS, C)
    tapsw = taps * wadv_ref[...]
    # projection term: mean_s sum_c (h @ Wh) * (y @ Wy)
    hp = jnp.dot(hr16, wh_ref[...], preferred_element_type=jnp.float32)            # (M2, HALF)
    yp = jnp.dot(y_ref[...], wy_ref[...], preferred_element_type=jnp.float32)      # (M2, HALF)
    prod = hp * yp

    inv_s = 1.0 / S2
    vals = []
    for b in range(B_TILE):
        adv = jnp.sum(jnp.sum(tapsw[b * TROWS:(b + 1) * TROWS, :], axis=1, keepdims=True),
                      axis=0, keepdims=True)
        prj = jnp.sum(jnp.sum(prod[b * S2:(b + 1) * S2, :], axis=1, keepdims=True),
                      axis=0, keepdims=True)
        vals.append((adv + prj) * inv_s + badv_ref[...])
    row = jnp.concatenate(vals, axis=1) if B_TILE > 1 else vals[0]                 # (1, B_TILE)
    o_ref[0] = row


# ----------------------------- host-side constants & glue -----------------------------

def _avgpool2x2_block_diag(H, W, btile):
    Ho, Wo = H // 2, W // 2
    P = np.zeros((Ho * Wo, H * W), np.float32)
    for oh in range(Ho):
        for ow in range(Wo):
            for dh in range(2):
                for dw in range(2):
                    P[oh * Wo + ow, (2 * oh + dh) * W + (2 * ow + dw)] = 0.25
    return jnp.asarray(np.kron(np.eye(btile, dtype=np.float32), P), jnp.bfloat16)


def _head_tapmask_block_diag(H, W, btile, trows):
    # Row t = 0/1 validity mask of 3x3-conv tap t (pad=1) over the flat spatial
    # axis, so (mask_t @ hr)[c] is that tap's spatial sum of conv contributions.
    M = np.zeros((trows, H * W), np.float32)
    t = 0
    for dy in (-1, 0, 1):
        for dx in (-1, 0, 1):
            for r in range(max(0, dy), H + min(0, dy)):
                for c in range(max(0, dx), W + min(0, dx)):
                    M[t, r * W + c] = 1.0
            t += 1
    return jnp.asarray(np.kron(np.eye(btile, dtype=np.float32), M), jnp.bfloat16)


POOL_BD = _avgpool2x2_block_diag(TARGET_SIZE, TARGET_SIZE, B_TILE)    # (128, 512) bf16
TAPMASK_BD = _head_tapmask_block_diag(INIT_H, INIT_W, B_TILE, TROWS)  # (32, 128)  bf16


def _im2col_host(x_nhwc):
    """3x3 / pad=1 im2col on the wrapper side: (B,H,W,C) -> (B, H*W, 9*C), tap-major."""
    B, H, W, C = x_nhwc.shape
    xp = jnp.pad(x_nhwc, ((0, 0), (1, 1), (1, 1), (0, 0)))
    cols = [xp[:, 1 + dy:1 + dy + H, 1 + dx:1 + dx + W, :]
            for dy in (-1, 0, 1) for dx in (-1, 0, 1)]
    return jnp.concatenate(cols, axis=-1).reshape(B, H * W, 9 * C)


def _full(shape):
    return pl.BlockSpec(shape, lambda i: (0, 0))


@jax.jit
def discriminator_forward(x_nchw, y_nhwc, params):
    B = x_nchw.shape[0]
    assert B % B_TILE == 0, "batch must be a multiple of B_TILE"
    G = B // B_TILE
    # Host-side layout prep: NCHW -> NHWC, first-conv im2col (lane-dense input
    # instead of a 3-channel tile), pad 27 -> 32 channels, cast to bf16.
    x_nhwc = jnp.transpose(x_nchw, (0, 2, 3, 1))
    xim = _im2col_host(x_nhwc)                                        # (B, S1, 27)
    xim = jnp.pad(xim, ((0, 0), (0, 0), (0, XIN - 9 * N_CHANNEL)))
    xim = xim.reshape(B * S1, XIN).astype(jnp.bfloat16)
    yf = y_nhwc.reshape(B * S2, EMB_DIM).astype(jnp.bfloat16)
    p = params

    grid_spec = pltpu.PrefetchScalarGridSpec(
        num_scalar_prefetch=0,
        grid=(G,),
        in_specs=[
            pl.BlockSpec((B_TILE * S1, XIN), lambda i: (i, 0)),       # x im2col
            pl.BlockSpec((B_TILE * S2, EMB_DIM), lambda i: (i, 0)),   # y
            _full((B_TILE * S2, B_TILE * S1)),                        # block-diag 2x2 avg-pool
            _full((B_TILE * TROWS, B_TILE * S2)),                     # block-diag head tap masks
            _full((XIN, 2 * N_DIM)), _full((1, N_DIM)),               # block1 w1(+wr1 fold), b1
            _full((9 * N_DIM, N_DIM)), _full((1, N_DIM)),             # block1 w2, b2
            _full((1, N_DIM)),                                        # block1 res bias
            _full((9 * N_DIM, 2 * N_DIM)), _full((1, N_DIM)),         # block2 w1(+wr2 fold), b1
            _full((9 * N_DIM, N_DIM)), _full((1, N_DIM)),             # block2 w2, b2
            _full((1, N_DIM)),                                        # block2 res bias
            _full((B_TILE * TROWS, N_DIM)), _full((1, 1)),            # w_adv (tiled), b_adv
            _full((EMB_DIM, HALF)), _full((N_DIM, HALF)),             # wy, wh
        ],
        out_specs=pl.BlockSpec((1, 1, B_TILE), lambda i: (i, 0, 0)),
        scratch_shapes=[
            pltpu.VMEM((B_TILE * (S1 + 2 * PAD), N_DIM), jnp.float32),  # block1 conv pad buf
            pltpu.VMEM((B_TILE * (S2 + 2 * PAD), N_DIM), jnp.float32),  # block2 conv pad buf
        ],
    )
    out = pl.pallas_call(
        disc_kernel,
        out_shape=jax.ShapeDtypeStruct((G, 1, B_TILE), jnp.float32),
        grid_spec=grid_spec,
        compiler_params=pltpu.CompilerParams(
            dimension_semantics=("parallel",)),   # v7x: one batch-tile per TensorCore
    )(xim, yf, POOL_BD, TAPMASK_BD,
      p["w1aug"], p["b11"], p["w12"], p["b12"], p["br1"],
      p["w21aug"], p["b21"], p["w22"], p["b22"], p["br2"],
      p["wadv"], p["badv"], p["wy"], p["wh"])
    return out.reshape(B, 1)


# ----------------------------- parameters (synthetic, deterministic) -----------------------------

def _spectral_normalize(w):
    # Exact spectral normalization (stands in for nn.utils.spectral_norm's
    # power-iteration reparametrization) — applied once at parameter setup.
    w64 = np.asarray(w, dtype=np.float64)
    sigma = float(np.linalg.svd(w64, compute_uv=False)[0])
    return np.asarray(w64 / max(sigma, 1e-12), dtype=np.float32)


def _sn_matrix(key, k, n):
    # TODO(synk): torch.nn.init.orthogonal_ replaced by a deterministic Gaussian init.
    w = np.asarray(jax.random.normal(key, (k, n), jnp.float32)) * 0.2
    return _spectral_normalize(w)


def init_params(key):
    ks = jax.random.split(key, 9)
    C = N_DIM
    bf = lambda a: jnp.asarray(a, jnp.bfloat16)
    zeros = lambda n: jnp.zeros((1, n), jnp.float32)   # biases init to 0 (init_parameter)

    # block 1: 3x3 conv (3->C) and its 1x1 residual projection folded into one
    # (XIN, 2C) weight: cols [0,C) = conv1, cols [C,2C) only read centre-tap rows.
    w1 = _sn_matrix(ks[0], 9 * N_CHANNEL, C)
    wr1 = _sn_matrix(ks[2], N_CHANNEL, C)
    w1aug = np.zeros((XIN, 2 * C), np.float32)
    w1aug[:9 * N_CHANNEL, :C] = w1
    w1aug[4 * N_CHANNEL:5 * N_CHANNEL, C:] = wr1

    w12 = _sn_matrix(ks[1], 9 * C, C)

    # block 2: 3x3 conv (C->C) + folded 1x1 residual (centre-tap rows 128:160).
    w21 = _sn_matrix(ks[3], 9 * C, C)
    wr2 = _sn_matrix(ks[5], C, C)
    w21aug = np.zeros((9 * C, 2 * C), np.float32)
    w21aug[:, :C] = w21
    w21aug[4 * C:5 * C, C:] = wr2

    w22 = _sn_matrix(ks[4], 9 * C, C)

    # head: adv 3x3 conv (C->1) as per-tap/per-channel weights, tiled per batch
    # element to line up with the block-diagonal tap-sum matmul rows.
    w_adv = _sn_matrix(ks[6], 9 * C, 1).reshape(9, C)
    wadv = np.zeros((B_TILE * TROWS, C), np.float32)
    for b in range(B_TILE):
        wadv[b * TROWS:b * TROWS + 9, :] = w_adv

    return dict(
        w1aug=bf(w1aug), b11=zeros(C), w12=bf(w12), b12=zeros(C), br1=zeros(C),
        w21aug=bf(w21aug), b21=zeros(C), w22=bf(w22), b22=zeros(C), br2=zeros(C),
        wadv=jnp.asarray(wadv, jnp.float32), badv=jnp.zeros((1, 1), jnp.float32),
        wy=bf(_sn_matrix(ks[7], EMB_DIM, HALF)),
        wh=bf(_sn_matrix(ks[8], C, HALF)),
    )


if __name__ == "__main__":
    key = jax.random.PRNGKey(0)
    kx, ky, kp = jax.random.split(key, 3)
    B = 2 * B_TILE   # 4: grid of 2 steps -> both v7x TensorCores busy
    x = jax.random.normal(kx, (B, N_CHANNEL, TARGET_SIZE, TARGET_SIZE), jnp.float32)  # NCHW like torch
    y = jax.random.normal(ky, (B, INIT_H, INIT_W, EMB_DIM), jnp.float32)
    params = init_params(kp)
    out = discriminator_forward(x, y, params)
    out = jax.block_until_ready(out)
    assert out.shape == (B, 1) and out.dtype == jnp.float32
    assert bool(jnp.all(jnp.isfinite(out)))
    print("KERNEL_OK")
</pallas_src>

<mosaic_0001>
module attributes {stable_mosaic.version = 11 : i64} {
  func.func @disc_kernel(%arg0: i32, %arg1: memref<512x32xbf16, #tpu.memory_space<vmem>>, %arg2: memref<128x64xbf16, #tpu.memory_space<vmem>>, %arg3: memref<128x512xbf16, #tpu.memory_space<vmem>>, %arg4: memref<32x128xbf16, #tpu.memory_space<vmem>>, %arg5: memref<32x64xbf16, #tpu.memory_space<vmem>>, %arg6: memref<1x32xf32, #tpu.memory_space<vmem>>, %arg7: memref<288x32xbf16, #tpu.memory_space<vmem>>, %arg8: memref<1x32xf32, #tpu.memory_space<vmem>>, %arg9: memref<1x32xf32, #tpu.memory_space<vmem>>, %arg10: memref<288x64xbf16, #tpu.memory_space<vmem>>, %arg11: memref<1x32xf32, #tpu.memory_space<vmem>>, %arg12: memref<288x32xbf16, #tpu.memory_space<vmem>>, %arg13: memref<1x32xf32, #tpu.memory_space<vmem>>, %arg14: memref<1x32xf32, #tpu.memory_space<vmem>>, %arg15: memref<32x32xf32, #tpu.memory_space<vmem>>, %arg16: memref<1x1xf32, #tpu.memory_space<vmem>>, %arg17: memref<64x16xbf16, #tpu.memory_space<vmem>>, %arg18: memref<32x16xbf16, #tpu.memory_space<vmem>>, %arg19: memref<1x1x2xf32, #tpu.memory_space<vmem>>, %arg20: memref<608x32xf32, #tpu.memory_space<vmem>>, %arg21: memref<224x32xf32, #tpu.memory_space<vmem>>) attributes {dimension_semantics = [#tpu.dimension_semantics<parallel>], iteration_bounds = array<i64: 2>, scalar_prefetch = 0 : i64, scratch_operands = 2 : i64, tpu.core_type = #tpu.core_type<tc>, window_params = [{transform_indices = @transform_0, window_bounds = array<i64: 512, 32>}, {transform_indices = @transform_1, window_bounds = array<i64: 128, 64>}, {pipeline_mode = #tpu.pipeline_mode<synchronous>, transform_indices = @transform_2, window_bounds = array<i64: 128, 512>}, {pipeline_mode = #tpu.pipeline_mode<synchronous>, transform_indices = @transform_3, window_bounds = array<i64: 32, 128>}, {pipeline_mode = #tpu.pipeline_mode<synchronous>, transform_indices = @transform_4, window_bounds = array<i64: 32, 64>}, {pipeline_mode = #tpu.pipeline_mode<synchronous>, transform_indices = @transform_5, window_bounds = array<i64: 1, 32>}, {pipeline_mode = #tpu.pipeline_mode<synchronous>, transform_indices = @transform_6, window_bounds = array<i64: 288, 32>}, {pipeline_mode = #tpu.pipeline_mode<synchronous>, transform_indices = @transform_7, window_bounds = array<i64: 1, 32>}, {pipeline_mode = #tpu.pipeline_mode<synchronous>, transform_indices = @transform_8, window_bounds = array<i64: 1, 32>}, {pipeline_mode = #tpu.pipeline_mode<synchronous>, transform_indices = @transform_9, window_bounds = array<i64: 288, 64>}, {pipeline_mode = #tpu.pipeline_mode<synchronous>, transform_indices = @transform_10, window_bounds = array<i64: 1, 32>}, {pipeline_mode = #tpu.pipeline_mode<synchronous>, transform_indices = @transform_11, window_bounds = array<i64: 288, 32>}, {pipeline_mode = #tpu.pipeline_mode<synchronous>, transform_indices = @transform_12, window_bounds = array<i64: 1, 32>}, {pipeline_mode = #tpu.pipeline_mode<synchronous>, transform_indices = @transform_13, window_bounds = array<i64: 1, 32>}, {pipeline_mode = #tpu.pipeline_mode<synchronous>, transform_indices = @transform_14, window_bounds = array<i64: 32, 32>}, {pipeline_mode = #tpu.pipeline_mode<synchronous>, transform_indices = @transform_15, window_bounds = array<i64: 1, 1>}, {pipeline_mode = #tpu.pipeline_mode<synchronous>, transform_indices = @transform_16, window_bounds = array<i64: 64, 16>}, {pipeline_mode = #tpu.pipeline_mode<synchronous>, transform_indices = @transform_17, window_bounds = array<i64: 32, 16>}, {transform_indices = @transform_18, window_bounds = array<i64: 1, 1, 2>}]} {
    %c0 = arith.constant 0 : index
    %c0_0 = arith.constant 0 : index
    %0 = vector.load %arg1[%c0, %c0_0] : memref<512x32xbf16, #tpu.memory_space<vmem>>, vector<512x32xbf16>
    %c0_1 = arith.constant 0 : index
    %c0_2 = arith.constant 0 : index
    %1 = vector.load %arg5[%c0_1, %c0_2] : memref<32x64xbf16, #tpu.memory_space<vmem>>, vector<32x64xbf16>
    %cst = arith.constant dense<0.000000e+00> : vector<512x64xf32>
    %2 = tpu.matmul %0, %1, %cst {dimension_numbers = #tpu.dot_dimension_numbers<[1], [0], [0], [1], [0, 0, 1, 1], [], []>} : vector<512x32xbf16>, vector<32x64xbf16>, vector<512x64xf32> -> vector<512x64xf32>
    %3 = vector.extract_strided_slice %2 {offsets = [0, 0], sizes = [512, 32], strides = [1, 1]} : vector<512x64xf32> to vector<512x32xf32>
    %c0_3 = arith.constant 0 : index
    %c0_4 = arith.constant 0 : index
    %4 = vector.load %arg6[%c0_3, %c0_4] : memref<1x32xf32, #tpu.memory_space<vmem>>, vector<1x32xf32>
    %5 = vector.broadcast %4 : vector<1x32xf32> to vector<512x32xf32>
    %6 = arith.addf %3, %5 : vector<512x32xf32>
    %7 = vector.extract_strided_slice %2 {offsets = [0, 32], sizes = [512, 32], strides = [1, 1]} : vector<512x64xf32> to vector<512x32xf32>
    %8 = vector.extract_strided_slice %6 {offsets = [0, 0], sizes = [256, 32], strides = [1, 1]} : vector<512x32xf32> to vector<256x32xf32>
    %cst_5 = arith.constant dense<0.000000e+00> : vector<32xf32>
    %9 = vector.multi_reduction <add>, %8, %cst_5 [0] : vector<256x32xf32> to vector<32xf32>
    %10 = vector.shape_cast %9 : vector<32xf32> to vector<1x32xf32>
    %cst_6 = arith.constant 2.560000e+02 : f32
    %11 = vector.broadcast %cst_6 : f32 to vector<1x32xf32>
    %12 = arith.divf %10, %11 : vector<1x32xf32>
    %13 = vector.broadcast %12 : vector<1x32xf32> to vector<256x32xf32>
    %14 = arith.subf %8, %13 : vector<256x32xf32>
    %15 = arith.mulf %14, %14 : vector<256x32xf32>
    %cst_7 = arith.constant dense<0.000000e+00> : vector<32xf32>
    %16 = vector.multi_reduction <add>, %15, %cst_7 [0] : vector<256x32xf32> to vector<32xf32>
    %17 = vector.shape_cast %16 : vector<32xf32> to vector<1x32xf32>
    %cst_8 = arith.constant 2.560000e+02 : f32
    %18 = vector.broadcast %cst_8 : f32 to vector<1x32xf32>
    %19 = arith.divf %17, %18 : vector<1x32xf32>
    %cst_9 = arith.constant 9.99999974E-6 : f32
    %20 = vector.broadcast %cst_9 : f32 to vector<1x32xf32>
    %21 = arith.addf %19, %20 : vector<1x32xf32>
    %22 = math.rsqrt %21 : vector<1x32xf32>
    %23 = vector.broadcast %22 : vector<1x32xf32> to vector<256x32xf32>
    %24 = arith.mulf %14, %23 : vector<256x32xf32>
    %cst_10 = arith.constant 0.000000e+00 : f32
    %25 = vector.broadcast %cst_10 : f32 to vector<256x32xf32>
    %26 = arith.cmpf ogt, %24, %25 : vector<256x32xf32>
    %cst_11 = arith.constant 2.000000e-01 : f32
    %27 = vector.broadcast %cst_11 : f32 to vector<256x32xf32>
    %28 = arith.mulf %27, %24 : vector<256x32xf32>
    %29 = arith.select %26, %24, %28 : vector<256x32xi1>, vector<256x32xf32>
    %30 = vector.extract_strided_slice %6 {offsets = [256, 0], sizes = [256, 32], strides = [1, 1]} : vector<512x32xf32> to vector<256x32xf32>
    %cst_12 = arith.constant dense<0.000000e+00> : vector<32xf32>
    %31 = vector.multi_reduction <add>, %30, %cst_12 [0] : vector<256x32xf32> to vector<32xf32>
    %32 = vector.shape_cast %31 : vector<32xf32> to vector<1x32xf32>
    %cst_13 = arith.constant 2.560000e+02 : f32
    %33 = vector.broadcast %cst_13 : f32 to vector<1x32xf32>
    %34 = arith.divf %32, %33 : vector<1x32xf32>
    %35 = vector.broadcast %34 : vector<1x32xf32> to vector<256x32xf32>
    %36 = arith.subf %30, %35 : vector<256x32xf32>
    %37 = arith.mulf %36, %36 : vector<256x32xf32>
    %cst_14 = arith.constant dense<0.000000e+00> : vector<32xf32>
    %38 = vector.multi_reduction <add>, %37, %cst_14 [0] : vector<256x32xf32> to vector<32xf32>
    %39 = vector.shape_cast %38 : vector<32xf32> to vector<1x32xf32>
    %cst_15 = arith.constant 2.560000e+02 : f32
    %40 = vector.broadcast %cst_15 : f32 to vector<1x32xf32>
    %41 = arith.divf %39, %40 : vector<1x32xf32>
    %cst_16 = arith.constant 9.99999974E-6 : f32
    %42 = vector.broadcast %cst_16 : f32 to vector<1x32xf32>
    %43 = arith.addf %41, %42 : vector<1x32xf32>
    %44 = math.rsqrt %43 : vector<1x32xf32>
    %45 = vector.broadcast %44 : vector<1x32xf32> to vector<256x32xf32>
    %46 = arith.mulf %36, %45 : vector<256x32xf32>
    %cst_17 = arith.constant 0.000000e+00 : f32
    %47 = vector.broadcast %cst_17 : f32 to vector<256x32xf32>
    %48 = arith.cmpf ogt, %46, %47 : vector<256x32xf32>
    %cst_18 = arith.constant 2.000000e-01 : f32
    %49 = vector.broadcast %cst_18 : f32 to vector<256x32xf32>
    %50 = arith.mulf %49, %46 : vector<256x32xf32>
    %51 = arith.select %48, %46, %50 : vector<256x32xi1>, vector<256x32xf32>
    %52 = tpu.concatenate %29, %51 in 0 : vector<256x32xf32>, vector<256x32xf32> -> vector<512x32xf32>
    %53 = vector.extract_strided_slice %52 {offsets = [0, 0], sizes = [256, 32], strides = [1, 1]} : vector<512x32xf32> to vector<256x32xf32>
    %c24 = arith.constant 24 : index
    %c0_19 = arith.constant 0 : index
    %54 = vector.load %arg20[%c24, %c0_19] : memref<608x32xf32, #tpu.memory_space<vmem>>, vector<256x32xf32>
    tpu.vector_store %arg20[%c24, %c0_19], %53 {strides = array<i32>} : memref<608x32xf32, #tpu.memory_space<vmem>>, vector<256x32xf32>,
    %55 = vector.extract_strided_slice %52 {offsets = [256, 0], sizes = [256, 32], strides = [1, 1]} : vector<512x32xf32> to vector<256x32xf32>
    %c328 = arith.constant 328 : index
    %c0_20 = arith.constant 0 : index
    %56 = vector.load %arg20[%c328, %c0_20] : memref<608x32xf32, #tpu.memory_space<vmem>>, vector<256x32xf32>
    tpu.vector_store %arg20[%c328, %c0_20], %55 {strides = array<i32>} : memref<608x32xf32, #tpu.memory_space<vmem>>, vector<256x32xf32>,
    %57 = tpu.iota {dimensions = array<i32: 0>} : vector<512x1xi32>
    %c255_i32 = arith.constant 255 : i32
    %58 = vector.broadcast %c255_i32 : i32 to vector<512x1xi32>
    %59 = arith.andi %57, %58 : vector<512x1xi32>
    %c15_i32 = arith.constant 15 : i32
    %60 = vector.broadcast %c15_i32 : i32 to vector<512x1xi32>
    %61 = arith.andi %57, %60 : vector<512x1xi32>
    %c16_i32 = arith.constant 16 : i32
    %62 = vector.broadcast %c16_i32 : i32 to vector<512x1xi32>
    %63 = arith.cmpi sge, %59, %62 : vector<512x1xi32>
    %c240_i32 = arith.constant 240 : i32
    %64 = vector.broadcast %c240_i32 : i32 to vector<512x1xi32>
    %65 = arith.cmpi slt, %59, %64 : vector<512x1xi32>
    %c1_i32 = arith.constant 1 : i32
    %66 = vector.broadcast %c1_i32 : i32 to vector<512x1xi32>
    %67 = arith.cmpi sge, %61, %66 : vector<512x1xi32>
    %c14_i32 = arith.constant 14 : i32
    %68 = vector.broadcast %c14_i32 : i32 to vector<512x1xi32>
    %69 = arith.cmpi sle, %61, %68 : vector<512x1xi32>
    %c7 = arith.constant 7 : index
    %c0_21 = arith.constant 0 : index
    %70 = vector.load %arg20[%c7, %c0_21] : memref<608x32xf32, #tpu.memory_space<vmem>>, vector<256x32xf32>
    %c311 = arith.constant 311 : index
    %c0_22 = arith.constant 0 : index
    %71 = vector.load %arg20[%c311, %c0_22] : memref<608x32xf32, #tpu.memory_space<vmem>>, vector<256x32xf32>
    %72 = tpu.concatenate %70, %71 in 0 : vector<256x32xf32>, vector<256x32xf32> -> vector<512x32xf32>
    %73 = arith.andi %63, %67 : vector<512x1xi1>
    %cst_23 = arith.constant 0.000000e+00 : f32
    %74 = vector.shape_cast %73 : vector<512x1xi1> to vector<512x1xi1>
    %75 = vector.broadcast %74 : vector<512x1xi1> to vector<512x32xi1>
    %76 = vector.broadcast %cst_23 : f32 to vector<512x32xf32>
    %77 = arith.select %75, %72, %76 : vector<512x32xi1>, vector<512x32xf32>
    %c8 = arith.constant 8 : index
    %c0_24 = arith.constant 0 : index
    %78 = vector.load %arg20[%c8, %c0_24] : memref<608x32xf32, #tpu.memory_space<vmem>>, vector<256x32xf32>
    %c312 = arith.constant 312 : index
    %c0_25 = arith.constant 0 : index
    %79 = vector.load %arg20[%c312, %c0_25] : memref<608x32xf32, #tpu.memory_space<vmem>>, vector<256x32xf32>
    %80 = tpu.concatenate %78, %79 in 0 : vector<256x32xf32>, vector<256x32xf32> -> vector<512x32xf32>
    %cst_26 = arith.constant 0.000000e+00 : f32
    %81 = vector.shape_cast %63 : vector<512x1xi1> to vector<512x1xi1>
    %82 = vector.broadcast %81 : vector<512x1xi1> to vector<512x32xi1>
    %83 = vector.broadcast %cst_26 : f32 to vector<512x32xf32>
    %84 = arith.select %82, %80, %83 : vector<512x32xi1>, vector<512x32xf32>
    %c9 = arith.constant 9 : index
    %c0_27 = arith.constant 0 : index
    %85 = vector.load %arg20[%c9, %c0_27] : memref<608x32xf32, #tpu.memory_space<vmem>>, vector<256x32xf32>
    %c313 = arith.constant 313 : index
    %c0_28 = arith.constant 0 : index
    %86 = vector.load %arg20[%c313, %c0_28] : memref<608x32xf32, #tpu.memory_space<vmem>>, vector<256x32xf32>
    %87 = tpu.concatenate %85, %86 in 0 : vector<256x32xf32>, vector<256x32xf32> -> vector<512x32xf32>
    %88 = arith.andi %63, %69 : vector<512x1xi1>
    %cst_29 = arith.constant 0.000000e+00 : f32
    %89 = vector.shape_cast %88 : vector<512x1xi1> to vector<512x1xi1>
    %90 = vector.broadcast %89 : vector<512x1xi1> to vector<512x32xi1>
    %91 = vector.broadcast %cst_29 : f32 to vector<512x32xf32>
    %92 = arith.select %90, %87, %91 : vector<512x32xi1>, vector<512x32xf32>
    %c23 = arith.constant 23 : index
    %c0_30 = arith.constant 0 : index
    %93 = vector.load %arg20[%c23, %c0_30] : memref<608x32xf32, #tpu.memory_space<vmem>>, vector<256x32xf32>
    %c327 = arith.constant 327 : index
    %c0_31 = arith.constant 0 : index
    %94 = vector.load %arg20[%c327, %c0_31] : memref<608x32xf32, #tpu.memory_space<vmem>>, vector<256x32xf32>
    %95 = tpu.concatenate %93, %94 in 0 : vector<256x32xf32>, vector<256x32xf32> -> vector<512x32xf32>
    %cst_32 = arith.constant 0.000000e+00 : f32
    %96 = vector.shape_cast %67 : vector<512x1xi1> to vector<512x1xi1>
    %97 = vector.broadcast %96 : vector<512x1xi1> to vector<512x32xi1>
    %98 = vector.broadcast %cst_32 : f32 to vector<512x32xf32>
    %99 = arith.select %97, %95, %98 : vector<512x32xi1>, vector<512x32xf32>
    %c24_33 = arith.constant 24 : index
    %c0_34 = arith.constant 0 : index
    %100 = vector.load %arg20[%c24_33, %c0_34] : memref<608x32xf32, #tpu.memory_space<vmem>>, vector<256x32xf32>
    %c328_35 = arith.constant 328 : index
    %c0_36 = arith.constant 0 : index
    %101 = vector.load %arg20[%c328_35, %c0_36] : memref<608x32xf32, #tpu.memory_space<vmem>>, vector<256x32xf32>
    %102 = tpu.concatenate %100, %101 in 0 : vector<256x32xf32>, vector<256x32xf32> -> vector<512x32xf32>
    %c25 = arith.constant 25 : index
    %c0_37 = arith.constant 0 : index
    %103 = vector.load %arg20[%c25, %c0_37] : memref<608x32xf32, #tpu.memory_space<vmem>>, vector<256x32xf32>
    %c329 = arith.constant 329 : index
    %c0_38 = arith.constant 0 : index
    %104 = vector.load %arg20[%c329, %c0_38] : memref<608x32xf32, #tpu.memory_space<vmem>>, vector<256x32xf32>
    %105 = tpu.concatenate %103, %104 in 0 : vector<256x32xf32>, vector<256x32xf32> -> vector<512x32xf32>
    %cst_39 = arith.constant 0.000000e+00 : f32
    %106 = vector.shape_cast %69 : vector<512x1xi1> to vector<512x1xi1>
    %107 = vector.broadcast %106 : vector<512x1xi1> to vector<512x32xi1>
    %108 = vector.broadcast %cst_39 : f32 to vector<512x32xf32>
    %109 = arith.select %107, %105, %108 : vector<512x32xi1>, vector<512x32xf32>
    %c39 = arith.constant 39 : index
    %c0_40 = arith.constant 0 : index
    %110 = vector.load %arg20[%c39, %c0_40] : memref<608x32xf32, #tpu.memory_space<vmem>>, vector<256x32xf32>
    %c343 = arith.constant 343 : index
    %c0_41 = arith.constant 0 : index
    %111 = vector.load %arg20[%c343, %c0_41] : memref<608x32xf32, #tpu.memory_space<vmem>>, vector<256x32xf32>
    %112 = tpu.concatenate %110, %111 in 0 : vector<256x32xf32>, vector<256x32xf32> -> vector<512x32xf32>
    %113 = arith.andi %65, %67 : vector<512x1xi1>
    %cst_42 = arith.constant 0.000000e+00 : f32
    %114 = vector.shape_cast %113 : vector<512x1xi1> to vector<512x1xi1>
    %115 = vector.broadcast %114 : vector<512x1xi1> to vector<512x32xi1>
    %116 = vector.broadcast %cst_42 : f32 to vector<512x32xf32>
    %117 = arith.select %115, %112, %116 : vector<512x32xi1>, vector<512x32xf32>
    %c40 = arith.constant 40 : index
    %c0_43 = arith.constant 0 : index
    %118 = vector.load %arg20[%c40, %c0_43] : memref<608x32xf32, #tpu.memory_space<vmem>>, vector<256x32xf32>
    %c344 = arith.constant 344 : index
    %c0_44 = arith.constant 0 : index
    %119 = vector.load %arg20[%c344, %c0_44] : memref<608x32xf32, #tpu.memory_space<vmem>>, vector<256x32xf32>
    %120 = tpu.concatenate %118, %119 in 0 : vector<256x32xf32>, vector<256x32xf32> -> vector<512x32xf32>
    %cst_45 = arith.constant 0.000000e+00 : f32
    %121 = vector.shape_cast %65 : vector<512x1xi1> to vector<512x1xi1>
    %122 = vector.broadcast %121 : vector<512x1xi1> to vector<512x32xi1>
    %123 = vector.broadcast %cst_45 : f32 to vector<512x32xf32>
    %124 = arith.select %122, %120, %123 : vector<512x32xi1>, vector<512x32xf32>
    %c41 = arith.constant 41 : index
    %c0_46 = arith.constant 0 : index
    %125 = vector.load %arg20[%c41, %c0_46] : memref<608x32xf32, #tpu.memory_space<vmem>>, vector<256x32xf32>
    %c345 = arith.constant 345 : index
    %c0_47 = arith.constant 0 : index
    %126 = vector.load %arg20[%c345, %c0_47] : memref<608x32xf32, #tpu.memory_space<vmem>>, vector<256x32xf32>
    %127 = tpu.concatenate %125, %126 in 0 : vector<256x32xf32>, vector<256x32xf32> -> vector<512x32xf32>
    %128 = arith.andi %65, %69 : vector<512x1xi1>
    %cst_48 = arith.constant 0.000000e+00 : f32
    %129 = vector.shape_cast %128 : vector<512x1xi1> to vector<512x1xi1>
    %130 = vector.broadcast %129 : vector<512x1xi1> to vector<512x32xi1>
    %131 = vector.broadcast %cst_48 : f32 to vector<512x32xf32>
    %132 = arith.select %130, %127, %131 : vector<512x32xi1>, vector<512x32xf32>
    %133 = tpu.concatenate %77, %84, %92, %99, %102, %109, %117, %124, %132 in 1 : vector<512x32xf32>, vector<512x32xf32>, vector<512x32xf32>, vector<512x32xf32>, vector<512x32xf32>, vector<512x32xf32>, vector<512x32xf32>, vector<512x32xf32>, vector<512x32xf32> -> vector<512x288xf32>
    %134 = arith.truncf %133 : vector<512x288xf32> to vector<512x288xbf16>
    %c0_49 = arith.constant 0 : index
    %c0_50 = arith.constant 0 : index
    %135 = vector.load %arg7[%c0_49, %c0_50] : memref<288x32xbf16, #tpu.memory_space<vmem>>, vector<288x32xbf16>
    %cst_51 = arith.constant dense<0.000000e+00> : vector<512x32xf32>
    %136 = tpu.matmul %134, %135, %cst_51 {dimension_numbers = #tpu.dot_dimension_numbers<[1], [0], [0], [1], [0, 0, 1, 1], [], []>} : vector<512x288xbf16>, vector<288x32xbf16>, vector<512x32xf32> -> vector<512x32xf32>
    %c0_52 = arith.constant 0 : index
    %c0_53 = arith.constant 0 : index
    %137 = vector.load %arg8[%c0_52, %c0_53] : memref<1x32xf32, #tpu.memory_space<vmem>>, vector<1x32xf32>
    %138 = vector.broadcast %137 : vector<1x32xf32> to vector<512x32xf32>
    %139 = arith.addf %136, %138 : vector<512x32xf32>
    %140 = arith.addf %139, %7 : vector<512x32xf32>
    %141 = arith.truncf %140 : vector<512x32xf32> to vector<512x32xbf16>
    %c0_54 = arith.constant 0 : index
    %c0_55 = arith.constant 0 : index
    %142 = vector.load %arg3[%c0_54, %c0_55] : memref<128x512xbf16, #tpu.memory_space<vmem>>, vector<128x512xbf16>
    %cst_56 = arith.constant dense<0.000000e+00> : vector<128x32xf32>
    %143 = tpu.matmul %142, %141, %cst_56 {dimension_numbers = #tpu.dot_dimension_numbers<[1], [0], [0], [1], [0, 0, 1, 1], [], []>} : vector<128x512xbf16>, vector<512x32xbf16>, vector<128x32xf32> -> vector<128x32xf32>
    %c0_57 = arith.constant 0 : index
    %c0_58 = arith.constant 0 : index
    %144 = vector.load %arg9[%c0_57, %c0_58] : memref<1x32xf32, #tpu.memory_space<vmem>>, vector<1x32xf32>
    %145 = vector.broadcast %144 : vector<1x32xf32> to vector<128x32xf32>
    %146 = arith.addf %143, %145 : vector<128x32xf32>
    %cst_59 = arith.constant 0.000000e+00 : f32
    %147 = vector.broadcast %cst_59 : f32 to vector<128x32xf32>
    %148 = arith.cmpf ogt, %146, %147 : vector<128x32xf32>
    %cst_60 = arith.constant 2.000000e-01 : f32
    %149 = vector.broadcast %cst_60 : f32 to vector<128x32xf32>
    %150 = arith.mulf %149, %146 : vector<128x32xf32>
    %151 = arith.select %148, %146, %150 : vector<128x32xi1>, vector<128x32xf32>
    %152 = vector.extract_strided_slice %151 {offsets = [0, 0], sizes = [64, 32], strides = [1, 1]} : vector<128x32xf32> to vector<64x32xf32>
    %c24_61 = arith.constant 24 : index
    %c0_62 = arith.constant 0 : index
    %153 = vector.load %arg21[%c24_61, %c0_62] : memref<224x32xf32, #tpu.memory_space<vmem>>, vector<64x32xf32>
    tpu.vector_store %arg21[%c24_61, %c0_62], %152 {strides = array<i32>} : memref<224x32xf32, #tpu.memory_space<vmem>>, vector<64x32xf32>,
    %154 = vector.extract_strided_slice %151 {offsets = [64, 0], sizes = [64, 32], strides = [1, 1]} : vector<128x32xf32> to vector<64x32xf32>
    %c136 = arith.constant 136 : index
    %c0_63 = arith.constant 0 : index
    %155 = vector.load %arg21[%c136, %c0_63] : memref<224x32xf32, #tpu.memory_space<vmem>>, vector<64x32xf32>
    tpu.vector_store %arg21[%c136, %c0_63], %154 {strides = array<i32>} : memref<224x32xf32, #tpu.memory_space<vmem>>, vector<64x32xf32>,
    %156 = tpu.iota {dimensions = array<i32: 0>} : vector<128x1xi32>
    %c63_i32 = arith.constant 63 : i32
    %157 = vector.broadcast %c63_i32 : i32 to vector<128x1xi32>
    %158 = arith.andi %156, %157 : vector<128x1xi32>
    %c7_i32 = arith.constant 7 : i32
    %159 = vector.broadcast %c7_i32 : i32 to vector<128x1xi32>
    %160 = arith.andi %156, %159 : vector<128x1xi32>
    %c8_i32 = arith.constant 8 : i32
    %161 = vector.broadcast %c8_i32 : i32 to vector<128x1xi32>
    %162 = arith.cmpi sge, %158, %161 : vector<128x1xi32>
    %c56_i32 = arith.constant 56 : i32
    %163 = vector.broadcast %c56_i32 : i32 to vector<128x1xi32>
    %164 = arith.cmpi slt, %158, %163 : vector<128x1xi32>
    %c1_i32_64 = arith.constant 1 : i32
    %165 = vector.broadcast %c1_i32_64 : i32 to vector<128x1xi32>
    %166 = arith.cmpi sge, %160, %165 : vector<128x1xi32>
    %c6_i32 = arith.constant 6 : i32
    %167 = vector.broadcast %c6_i32 : i32 to vector<128x1xi32>
    %168 = arith.cmpi sle, %160, %167 : vector<128x1xi32>
    %c15 = arith.constant 15 : index
    %c0_65 = arith.constant 0 : index
    %169 = vector.load %arg21[%c15, %c0_65] : memref<224x32xf32, #tpu.memory_space<vmem>>, vector<64x32xf32>
    %c127 = arith.constant 127 : index
    %c0_66 = arith.constant 0 : index
    %170 = vector.load %arg21[%c127, %c0_66] : memref<224x32xf32, #tpu.memory_space<vmem>>, vector<64x32xf32>
    %171 = tpu.concatenate %169, %170 in 0 : vector<64x32xf32>, vector<64x32xf32> -> vector<128x32xf32>
    %172 = arith.andi %162, %166 : vector<128x1xi1>
    %cst_67 = arith.constant 0.000000e+00 : f32
    %173 = vector.shape_cast %172 : vector<128x1xi1> to vector<128x1xi1>
    %174 = vector.broadcast %173 : vector<128x1xi1> to vector<128x32xi1>
    %175 = vector.broadcast %cst_67 : f32 to vector<128x32xf32>
    %176 = arith.select %174, %171, %175 : vector<128x32xi1>, vector<128x32xf32>
    %c16 = arith.constant 16 : index
    %c0_68 = arith.constant 0 : index
    %177 = vector.load %arg21[%c16, %c0_68] : memref<224x32xf32, #tpu.memory_space<vmem>>, vector<64x32xf32>
    %c128 = arith.constant 128 : index
    %c0_69 = arith.constant 0 : index
    %178 = vector.load %arg21[%c128, %c0_69] : memref<224x32xf32, #tpu.memory_space<vmem>>, vector<64x32xf32>
    %179 = tpu.concatenate %177, %178 in 0 : vector<64x32xf32>, vector<64x32xf32> -> vector<128x32xf32>
    %cst_70 = arith.constant 0.000000e+00 : f32
    %180 = vector.shape_cast %162 : vector<128x1xi1> to vector<128x1xi1>
    %181 = vector.broadcast %180 : vector<128x1xi1> to vector<128x32xi1>
    %182 = vector.broadcast %cst_70 : f32 to vector<128x32xf32>
    %183 = arith.select %181, %179, %182 : vector<128x32xi1>, vector<128x32xf32>
    %c17 = arith.constant 17 : index
    %c0_71 = arith.constant 0 : index
    %184 = vector.load %arg21[%c17, %c0_71] : memref<224x32xf32, #tpu.memory_space<vmem>>, vector<64x32xf32>
    %c129 = arith.constant 129 : index
    %c0_72 = arith.constant 0 : index
    %185 = vector.load %arg21[%c129, %c0_72] : memref<224x32xf32, #tpu.memory_space<vmem>>, vector<64x32xf32>
    %186 = tpu.concatenate %184, %185 in 0 : vector<64x32xf32>, vector<64x32xf32> -> vector<128x32xf32>
    %187 = arith.andi %162, %168 : vector<128x1xi1>
    %cst_73 = arith.constant 0.000000e+00 : f32
    %188 = vector.shape_cast %187 : vector<128x1xi1> to vector<128x1xi1>
    %189 = vector.broadcast %188 : vector<128x1xi1> to vector<128x32xi1>
    %190 = vector.broadcast %cst_73 : f32 to vector<128x32xf32>
    %191 = arith.select %189, %186, %190 : vector<128x32xi1>, vector<128x32xf32>
    %c23_74 = arith.constant 23 : index
    %c0_75 = arith.constant 0 : index
    %192 = vector.load %arg21[%c23_74, %c0_75] : memref<224x32xf32, #tpu.memory_space<vmem>>, vector<64x32xf32>
    %c135 = arith.constant 135 : index
    %c0_76 = arith.constant 0 : index
    %193 = vector.load %arg21[%c135, %c0_76] : memref<224x32xf32, #tpu.memory_space<vmem>>, vector<64x32xf32>
    %194 = tpu.concatenate %192, %193 in 0 : vector<64x32xf32>, vector<64x32xf32> -> vector<128x32xf32>
    %cst_77 = arith.constant 0.000000e+00 : f32
    %195 = vector.shape_cast %166 : vector<128x1xi1> to vector<128x1xi1>
    %196 = vector.broadcast %195 : vector<128x1xi1> to vector<128x32xi1>
    %197 = vector.broadcast %cst_77 : f32 to vector<128x32xf32>
    %198 = arith.select %196, %194, %197 : vector<128x32xi1>, vector<128x32xf32>
    %c24_78 = arith.constant 24 : index
    %c0_79 = arith.constant 0 : index
    %199 = vector.load %arg21[%c24_78, %c0_79] : memref<224x32xf32, #tpu.memory_space<vmem>>, vector<64x32xf32>
    %c136_80 = arith.constant 136 : index
    %c0_81 = arith.constant 0 : index
    %200 = vector.load %arg21[%c136_80, %c0_81] : memref<224x32xf32, #tpu.memory_space<vmem>>, vector<64x32xf32>
    %201 = tpu.concatenate %199, %200 in 0 : vector<64x32xf32>, vector<64x32xf32> -> vector<128x32xf32>
    %c25_82 = arith.constant 25 : index
    %c0_83 = arith.constant 0 : index
    %202 = vector.load %arg21[%c25_82, %c0_83] : memref<224x32xf32, #tpu.memory_space<vmem>>, vector<64x32xf32>
    %c137 = arith.constant 137 : index
    %c0_84 = arith.constant 0 : index
    %203 = vector.load %arg21[%c137, %c0_84] : memref<224x32xf32, #tpu.memory_space<vmem>>, vector<64x32xf32>
    %204 = tpu.concatenate %202, %203 in 0 : vector<64x32xf32>, vector<64x32xf32> -> vector<128x32xf32>
    %cst_85 = arith.constant 0.000000e+00 : f32
    %205 = vector.shape_cast %168 : vector<128x1xi1> to vector<128x1xi1>
    %206 = vector.broadcast %205 : vector<128x1xi1> to vector<128x32xi1>
    %207 = vector.broadcast %cst_85 : f32 to vector<128x32xf32>
    %208 = arith.select %206, %204, %207 : vector<128x32xi1>, vector<128x32xf32>
    %c31 = arith.constant 31 : index
    %c0_86 = arith.constant 0 : index
    %209 = vector.load %arg21[%c31, %c0_86] : memref<224x32xf32, #tpu.memory_space<vmem>>, vector<64x32xf32>
    %c143 = arith.constant 143 : index
    %c0_87 = arith.constant 0 : index
    %210 = vector.load %arg21[%c143, %c0_87] : memref<224x32xf32, #tpu.memory_space<vmem>>, vector<64x32xf32>
    %211 = tpu.concatenate %209, %210 in 0 : vector<64x32xf32>, vector<64x32xf32> -> vector<128x32xf32>
    %212 = arith.andi %164, %166 : vector<128x1xi1>
    %cst_88 = arith.constant 0.000000e+00 : f32
    %213 = vector.shape_cast %212 : vector<128x1xi1> to vector<128x1xi1>
    %214 = vector.broadcast %213 : vector<128x1xi1> to vector<128x32xi1>
    %215 = vector.broadcast %cst_88 : f32 to vector<128x32xf32>
    %216 = arith.select %214, %211, %215 : vector<128x32xi1>, vector<128x32xf32>
    %c32 = arith.constant 32 : index
    %c0_89 = arith.constant 0 : index
    %217 = vector.load %arg21[%c32, %c0_89] : memref<224x32xf32, #tpu.memory_space<vmem>>, vector<64x32xf32>
    %c144 = arith.constant 144 : index
    %c0_90 = arith.constant 0 : index
    %218 = vector.load %arg21[%c144, %c0_90] : memref<224x32xf32, #tpu.memory_space<vmem>>, vector<64x32xf32>
    %219 = tpu.concatenate %217, %218 in 0 : vector<64x32xf32>, vector<64x32xf32> -> vector<128x32xf32>
    %cst_91 = arith.constant 0.000000e+00 : f32
    %220 = vector.shape_cast %164 : vector<128x1xi1> to vector<128x1xi1>
    %221 = vector.broadcast %220 : vector<128x1xi1> to vector<128x32xi1>
    %222 = vector.broadcast %cst_91 : f32 to vector<128x32xf32>
    %223 = arith.select %221, %219, %222 : vector<128x32xi1>, vector<128x32xf32>
    %c33 = arith.constant 33 : index
    %c0_92 = arith.constant 0 : index
    %224 = vector.load %arg21[%c33, %c0_92] : memref<224x32xf32, #tpu.memory_space<vmem>>, vector<64x32xf32>
    %c145 = arith.constant 145 : index
    %c0_93 = arith.constant 0 : index
    %225 = vector.load %arg21[%c145, %c0_93] : memref<224x32xf32, #tpu.memory_space<vmem>>, vector<64x32xf32>
    %226 = tpu.concatenate %224, %225 in 0 : vector<64x32xf32>, vector<64x32xf32> -> vector<128x32xf32>
    %227 = arith.andi %164, %168 : vector<128x1xi1>
    %cst_94 = arith.constant 0.000000e+00 : f32
    %228 = vector.shape_cast %227 : vector<128x1xi1> to vector<128x1xi1>
    %229 = vector.broadcast %228 : vector<128x1xi1> to vector<128x32xi1>
    %230 = vector.broadcast %cst_94 : f32 to vector<128x32xf32>
    %231 = arith.select %229, %226, %230 : vector<128x32xi1>, vector<128x32xf32>
    %232 = tpu.concatenate %176, %183, %191, %198, %201, %208, %216, %223, %231 in 1 : vector<128x32xf32>, vector<128x32xf32>, vector<128x32xf32>, vector<128x32xf32>, vector<128x32xf32>, vector<128x32xf32>, vector<128x32xf32>, vector<128x32xf32>, vector<128x32xf32> -> vector<128x288xf32>
    %233 = arith.truncf %232 : vector<128x288xf32> to vector<128x288xbf16>
    %c0_95 = arith.constant 0 : index
    %c0_96 = arith.constant 0 : index
    %234 = vector.load %arg10[%c0_95, %c0_96] : memref<288x64xbf16, #tpu.memory_space<vmem>>, vector<288x64xbf16>
    %cst_97 = arith.constant dense<0.000000e+00> : vector<128x64xf32>
    %235 = tpu.matmul %233, %234, %cst_97 {dimension_numbers = #tpu.dot_dimension_numbers<[1], [0], [0], [1], [0, 0, 1, 1], [], []>} : vector<128x288xbf16>, vector<288x64xbf16>, vector<128x64xf32> -> vector<128x64xf32>
    %236 = vector.extract_strided_slice %235 {offsets = [0, 0], sizes = [128, 32], strides = [1, 1]} : vector<128x64xf32> to vector<128x32xf32>
    %c0_98 = arith.constant 0 : index
    %c0_99 = arith.constant 0 : index
    %237 = vector.load %arg11[%c0_98, %c0_99] : memref<1x32xf32, #tpu.memory_space<vmem>>, vector<1x32xf32>
    %238 = vector.broadcast %237 : vector<1x32xf32> to vector<128x32xf32>
    %239 = arith.addf %236, %238 : vector<128x32xf32>
    %240 = vector.extract_strided_slice %235 {offsets = [0, 32], sizes = [128, 32], strides = [1, 1]} : vector<128x64xf32> to vector<128x32xf32>
    %241 = vector.extract_strided_slice %239 {offsets = [0, 0], sizes = [64, 32], strides = [1, 1]} : vector<128x32xf32> to vector<64x32xf32>
    %cst_100 = arith.constant dense<0.000000e+00> : vector<32xf32>
    %242 = vector.multi_reduction <add>, %241, %cst_100 [0] : vector<64x32xf32> to vector<32xf32>
    %243 = vector.shape_cast %242 : vector<32xf32> to vector<1x32xf32>
    %cst_101 = arith.constant 6.400000e+01 : f32
    %244 = vector.broadcast %cst_101 : f32 to vector<1x32xf32>
    %245 = arith.divf %243, %244 : vector<1x32xf32>
    %246 = vector.broadcast %245 : vector<1x32xf32> to vector<64x32xf32>
    %247 = arith.subf %241, %246 : vector<64x32xf32>
    %248 = arith.mulf %247, %247 : vector<64x32xf32>
    %cst_102 = arith.constant dense<0.000000e+00> : vector<32xf32>
    %249 = vector.multi_reduction <add>, %248, %cst_102 [0] : vector<64x32xf32> to vector<32xf32>
    %250 = vector.shape_cast %249 : vector<32xf32> to vector<1x32xf32>
    %cst_103 = arith.constant 6.400000e+01 : f32
    %251 = vector.broadcast %cst_103 : f32 to vector<1x32xf32>
    %252 = arith.divf %250, %251 : vector<1x32xf32>
    %cst_104 = arith.constant 9.99999974E-6 : f32
    %253 = vector.broadcast %cst_104 : f32 to vector<1x32xf32>
    %254 = arith.addf %252, %253 : vector<1x32xf32>
    %255 = math.rsqrt %254 : vector<1x32xf32>
    %256 = vector.broadcast %255 : vector<1x32xf32> to vector<64x32xf32>
    %257 = arith.mulf %247, %256 : vector<64x32xf32>
    %cst_105 = arith.constant 0.000000e+00 : f32
    %258 = vector.broadcast %cst_105 : f32 to vector<64x32xf32>
    %259 = arith.cmpf ogt, %257, %258 : vector<64x32xf32>
    %cst_106 = arith.constant 2.000000e-01 : f32
    %260 = vector.broadcast %cst_106 : f32 to vector<64x32xf32>
    %261 = arith.mulf %260, %257 : vector<64x32xf32>
    %262 = arith.select %259, %257, %261 : vector<64x32xi1>, vector<64x32xf32>
    %263 = vector.extract_strided_slice %239 {offsets = [64, 0], sizes = [64, 32], strides = [1, 1]} : vector<128x32xf32> to vector<64x32xf32>
    %cst_107 = arith.constant dense<0.000000e+00> : vector<32xf32>
    %264 = vector.multi_reduction <add>, %263, %cst_107 [0] : vector<64x32xf32> to vector<32xf32>
    %265 = vector.shape_cast %264 : vector<32xf32> to vector<1x32xf32>
    %cst_108 = arith.constant 6.400000e+01 : f32
    %266 = vector.broadcast %cst_108 : f32 to vector<1x32xf32>
    %267 = arith.divf %265, %266 : vector<1x32xf32>
    %268 = vector.broadcast %267 : vector<1x32xf32> to vector<64x32xf32>
    %269 = arith.subf %263, %268 : vector<64x32xf32>
    %270 = arith.mulf %269, %269 : vector<64x32xf32>
    %cst_109 = arith.constant dense<0.000000e+00> : vector<32xf32>
    %271 = vector.multi_reduction <add>, %270, %cst_109 [0] : vector<64x32xf32> to vector<32xf32>
    %272 = vector.shape_cast %271 : vector<32xf32> to vector<1x32xf32>
    %cst_110 = arith.constant 6.400000e+01 : f32
    %273 = vector.broadcast %cst_110 : f32 to vector<1x32xf32>
    %274 = arith.divf %272, %273 : vector<1x32xf32>
    %cst_111 = arith.constant 9.99999974E-6 : f32
    %275 = vector.broadcast %cst_111 : f32 to vector<1x32xf32>
    %276 = arith.addf %274, %275 : vector<1x32xf32>
    %277 = math.rsqrt %276 : vector<1x32xf32>
    %278 = vector.broadcast %277 : vector<1x32xf32> to vector<64x32xf32>
    %279 = arith.mulf %269, %278 : vector<64x32xf32>
    %cst_112 = arith.constant 0.000000e+00 : f32
    %280 = vector.broadcast %cst_112 : f32 to vector<64x32xf32>
    %281 = arith.cmpf ogt, %279, %280 : vector<64x32xf32>
    %cst_113 = arith.constant 2.000000e-01 : f32
    %282 = vector.broadcast %cst_113 : f32 to vector<64x32xf32>
    %283 = arith.mulf %282, %279 : vector<64x32xf32>
    %284 = arith.select %281, %279, %283 : vector<64x32xi1>, vector<64x32xf32>
    %285 = tpu.concatenate %262, %284 in 0 : vector<64x32xf32>, vector<64x32xf32> -> vector<128x32xf32>
    %286 = vector.extract_strided_slice %285 {offsets = [0, 0], sizes = [64, 32], strides = [1, 1]} : vector<128x32xf32> to vector<64x32xf32>
    %c24_114 = arith.constant 24 : index
    %c0_115 = arith.constant 0 : index
    %287 = vector.load %arg21[%c24_114, %c0_115] : memref<224x32xf32, #tpu.memory_space<vmem>>, vector<64x32xf32>
    tpu.vector_store %arg21[%c24_114, %c0_115], %286 {strides = array<i32>} : memref<224x32xf32, #tpu.memory_space<vmem>>, vector<64x32xf32>,
    %288 = vector.extract_strided_slice %285 {offsets = [64, 0], sizes = [64, 32], strides = [1, 1]} : vector<128x32xf32> to vector<64x32xf32>
    %c136_116 = arith.constant 136 : index
    %c0_117 = arith.constant 0 : index
    %289 = vector.load %arg21[%c136_116, %c0_117] : memref<224x32xf32, #tpu.memory_space<vmem>>, vector<64x32xf32>
    tpu.vector_store %arg21[%c136_116, %c0_117], %288 {strides = array<i32>} : memref<224x32xf32, #tpu.memory_space<vmem>>, vector<64x32xf32>,
    %290 = tpu.iota {dimensions = array<i32: 0>} : vector<128x1xi32>
    %c63_i32_118 = arith.constant 63 : i32
    %291 = vector.broadcast %c63_i32_118 : i32 to vector<128x1xi32>
    %292 = arith.andi %290, %291 : vector<128x1xi32>
    %c7_i32_119 = arith.constant 7 : i32
    %293 = vector.broadcast %c7_i32_119 : i32 to vector<128x1xi32>
    %294 = arith.andi %290, %293 : vector<128x1xi32>
    %c8_i32_120 = arith.constant 8 : i32
    %295 = vector.broadcast %c8_i32_120 : i32 to vector<128x1xi32>
    %296 = arith.cmpi sge, %292, %295 : vector<128x1xi32>
    %c56_i32_121 = arith.constant 56 : i32
    %297 = vector.broadcast %c56_i32_121 : i32 to vector<128x1xi32>
    %298 = arith.cmpi slt, %292, %297 : vector<128x1xi32>
    %c1_i32_122 = arith.constant 1 : i32
    %299 = vector.broadcast %c1_i32_122 : i32 to vector<128x1xi32>
    %300 = arith.cmpi sge, %294, %299 : vector<128x1xi32>
    %c6_i32_123 = arith.constant 6 : i32
    %301 = vector.broadcast %c6_i32_123 : i32 to vector<128x1xi32>
    %302 = arith.cmpi sle, %294, %301 : vector<128x1xi32>
    %c15_124 = arith.constant 15 : index
    %c0_125 = arith.constant 0 : index
    %303 = vector.load %arg21[%c15_124, %c0_125] : memref<224x32xf32, #tpu.memory_space<vmem>>, vector<64x32xf32>
    %c127_126 = arith.constant 127 : index
    %c0_127 = arith.constant 0 : index
    %304 = vector.load %arg21[%c127_126, %c0_127] : memref<224x32xf32, #tpu.memory_space<vmem>>, vector<64x32xf32>
    %305 = tpu.concatenate %303, %304 in 0 : vector<64x32xf32>, vector<64x32xf32> -> vector<128x32xf32>
    %306 = arith.andi %296, %300 : vector<128x1xi1>
    %cst_128 = arith.constant 0.000000e+00 : f32
    %307 = vector.shape_cast %306 : vector<128x1xi1> to vector<128x1xi1>
    %308 = vector.broadcast %307 : vector<128x1xi1> to vector<128x32xi1>
    %309 = vector.broadcast %cst_128 : f32 to vector<128x32xf32>
    %310 = arith.select %308, %305, %309 : vector<128x32xi1>, vector<128x32xf32>
    %c16_129 = arith.constant 16 : index
    %c0_130 = arith.constant 0 : index
    %311 = vector.load %arg21[%c16_129, %c0_130] : memref<224x32xf32, #tpu.memory_space<vmem>>, vector<64x32xf32>
    %c128_131 = arith.constant 128 : index
    %c0_132 = arith.constant 0 : index
    %312 = vector.load %arg21[%c128_131, %c0_132] : memref<224x32xf32, #tpu.memory_space<vmem>>, vector<64x32xf32>
    %313 = tpu.concatenate %311, %312 in 0 : vector<64x32xf32>, vector<64x32xf32> -> vector<128x32xf32>
    %cst_133 = arith.constant 0.000000e+00 : f32
    %314 = vector.shape_cast %296 : vector<128x1xi1> to vector<128x1xi1>
    %315 = vector.broadcast %314 : vector<128x1xi1> to vector<128x32xi1>
    %316 = vector.broadcast %cst_133 : f32 to vector<128x32xf32>
    %317 = arith.select %315, %313, %316 : vector<128x32xi1>, vector<128x32xf32>
    %c17_134 = arith.constant 17 : index
    %c0_135 = arith.constant 0 : index
    %318 = vector.load %arg21[%c17_134, %c0_135] : memref<224x32xf32, #tpu.memory_space<vmem>>, vector<64x32xf32>
    %c129_136 = arith.constant 129 : index
    %c0_137 = arith.constant 0 : index
    %319 = vector.load %arg21[%c129_136, %c0_137] : memref<224x32xf32, #tpu.memory_space<vmem>>, vector<64x32xf32>
    %320 = tpu.concatenate %318, %319 in 0 : vector<64x32xf32>, vector<64x32xf32> -> vector<128x32xf32>
    %321 = arith.andi %296, %302 : vector<128x1xi1>
    %cst_138 = arith.constant 0.000000e+00 : f32
    %322 = vector.shape_cast %321 : vector<128x1xi1> to vector<128x1xi1>
    %323 = vector.broadcast %322 : vector<128x1xi1> to vector<128x32xi1>
    %324 = vector.broadcast %cst_138 : f32 to vector<128x32xf32>
    %325 = arith.select %323, %320, %324 : vector<128x32xi1>, vector<128x32xf32>
    %c23_139 = arith.constant 23 : index
    %c0_140 = arith.constant 0 : index
    %326 = vector.load %arg21[%c23_139, %c0_140] : memref<224x32xf32, #tpu.memory_space<vmem>>, vector<64x32xf32>
    %c135_141 = arith.constant 135 : index
    %c0_142 = arith.constant 0 : index
    %327 = vector.load %arg21[%c135_141, %c0_142] : memref<224x32xf32, #tpu.memory_space<vmem>>, vector<64x32xf32>
    %328 = tpu.concatenate %326, %327 in 0 : vector<64x32xf32>, vector<64x32xf32> -> vector<128x32xf32>
    %cst_143 = arith.constant 0.000000e+00 : f32
    %329 = vector.shape_cast %300 : vector<128x1xi1> to vector<128x1xi1>
    %330 = vector.broadcast %329 : vector<128x1xi1> to vector<128x32xi1>
    %331 = vector.broadcast %cst_143 : f32 to vector<128x32xf32>
    %332 = arith.select %330, %328, %331 : vector<128x32xi1>, vector<128x32xf32>
    %c24_144 = arith.constant 24 : index
    %c0_145 = arith.constant 0 : index
    %333 = vector.load %arg21[%c24_144, %c0_145] : memref<224x32xf32, #tpu.memory_space<vmem>>, vector<64x32xf32>
    %c136_146 = arith.constant 136 : index
    %c0_147 = arith.constant 0 : index
    %334 = vector.load %arg21[%c136_146, %c0_147] : memref<224x32xf32, #tpu.memory_space<vmem>>, vector<64x32xf32>
    %335 = tpu.concatenate %333, %334 in 0 : vector<64x32xf32>, vector<64x32xf32> -> vector<128x32xf32>
    %c25_148 = arith.constant 25 : index
    %c0_149 = arith.constant 0 : index
    %336 = vector.load %arg21[%c25_148, %c0_149] : memref<224x32xf32, #tpu.memory_space<vmem>>, vector<64x32xf32>
    %c137_150 = arith.constant 137 : index
    %c0_151 = arith.constant 0 : index
    %337 = vector.load %arg21[%c137_150, %c0_151] : memref<224x32xf32, #tpu.memory_space<vmem>>, vector<64x32xf32>
    %338 = tpu.concatenate %336, %337 in 0 : vector<64x32xf32>, vector<64x32xf32> -> vector<128x32xf32>
    %cst_152 = arith.constant 0.000000e+00 : f32
    %339 = vector.shape_cast %302 : vector<128x1xi1> to vector<128x1xi1>
    %340 = vector.broadcast %339 : vector<128x1xi1> to vector<128x32xi1>
    %341 = vector.broadcast %cst_152 : f32 to vector<128x32xf32>
    %342 = arith.select %340, %338, %341 : vector<128x32xi1>, vector<128x32xf32>
    %c31_153 = arith.constant 31 : index
    %c0_154 = arith.constant 0 : index
    %343 = vector.load %arg21[%c31_153, %c0_154] : memref<224x32xf32, #tpu.memory_space<vmem>>, vector<64x32xf32>
    %c143_155 = arith.constant 143 : index
    %c0_156 = arith.constant 0 : index
    %344 = vector.load %arg21[%c143_155, %c0_156] : memref<224x32xf32, #tpu.memory_space<vmem>>, vector<64x32xf32>
    %345 = tpu.concatenate %343, %344 in 0 : vector<64x32xf32>, vector<64x32xf32> -> vector<128x32xf32>
    %346 = arith.andi %298, %300 : vector<128x1xi1>
    %cst_157 = arith.constant 0.000000e+00 : f32
    %347 = vector.shape_cast %346 : vector<128x1xi1> to vector<128x1xi1>
    %348 = vector.broadcast %347 : vector<128x1xi1> to vector<128x32xi1>
    %349 = vector.broadcast %cst_157 : f32 to vector<128x32xf32>
    %350 = arith.select %348, %345, %349 : vector<128x32xi1>, vector<128x32xf32>
    %c32_158 = arith.constant 32 : index
    %c0_159 = arith.constant 0 : index
    %351 = vector.load %arg21[%c32_158, %c0_159] : memref<224x32xf32, #tpu.memory_space<vmem>>, vector<64x32xf32>
    %c144_160 = arith.constant 144 : index
    %c0_161 = arith.constant 0 : index
    %352 = vector.load %arg21[%c144_160, %c0_161] : memref<224x32xf32, #tpu.memory_space<vmem>>, vector<64x32xf32>
    %353 = tpu.concatenate %351, %352 in 0 : vector<64x32xf32>, vector<64x32xf32> -> vector<128x32xf32>
    %cst_162 = arith.constant 0.000000e+00 : f32
    %354 = vector.shape_cast %298 : vector<128x1xi1> to vector<128x1xi1>
    %355 = vector.broadcast %354 : vector<128x1xi1> to vector<128x32xi1>
    %356 = vector.broadcast %cst_162 : f32 to vector<128x32xf32>
    %357 = arith.select %355, %353, %356 : vector<128x32xi1>, vector<128x32xf32>
    %c33_163 = arith.constant 33 : index
    %c0_164 = arith.constant 0 : index
    %358 = vector.load %arg21[%c33_163, %c0_164] : memref<224x32xf32, #tpu.memory_space<vmem>>, vector<64x32xf32>
    %c145_165 = arith.constant 145 : index
    %c0_166 = arith.constant 0 : index
    %359 = vector.load %arg21[%c145_165, %c0_166] : memref<224x32xf32, #tpu.memory_space<vmem>>, vector<64x32xf32>
    %360 = tpu.concatenate %358, %359 in 0 : vector<64x32xf32>, vector<64x32xf32> -> vector<128x32xf32>
    %361 = arith.andi %298, %302 : vector<128x1xi1>
    %cst_167 = arith.constant 0.000000e+00 : f32
    %362 = vector.shape_cast %361 : vector<128x1xi1> to vector<128x1xi1>
    %363 = vector.broadcast %362 : vector<128x1xi1> to vector<128x32xi1>
    %364 = vector.broadcast %cst_167 : f32 to vector<128x32xf32>
    %365 = arith.select %363, %360, %364 : vector<128x32xi1>, vector<128x32xf32>
    %366 = tpu.concatenate %310, %317, %325, %332, %335, %342, %350, %357, %365 in 1 : vector<128x32xf32>, vector<128x32xf32>, vector<128x32xf32>, vector<128x32xf32>, vector<128x32xf32>, vector<128x32xf32>, vector<128x32xf32>, vector<128x32xf32>, vector<128x32xf32> -> vector<128x288xf32>
    %367 = arith.truncf %366 : vector<128x288xf32> to vector<128x288xbf16>
    %c0_168 = arith.constant 0 : index
    %c0_169 = arith.constant 0 : index
    %368 = vector.load %arg12[%c0_168, %c0_169] : memref<288x32xbf16, #tpu.memory_space<vmem>>, vector<288x32xbf16>
    %cst_170 = arith.constant dense<0.000000e+00> : vector<128x32xf32>
    %369 = tpu.matmul %367, %368, %cst_170 {dimension_numbers = #tpu.dot_dimension_numbers<[1], [0], [0], [1], [0, 0, 1, 1], [], []>} : vector<128x288xbf16>, vector<288x32xbf16>, vector<128x32xf32> -> vector<128x32xf32>
    %c0_171 = arith.constant 0 : index
    %c0_172 = arith.constant 0 : index
    %370 = vector.load %arg13[%c0_171, %c0_172] : memref<1x32xf32, #tpu.memory_space<vmem>>, vector<1x32xf32>
    %371 = vector.broadcast %370 : vector<1x32xf32> to vector<128x32xf32>
    %372 = arith.addf %369, %371 : vector<128x32xf32>
    %373 = arith.addf %372, %240 : vector<128x32xf32>
    %c0_173 = arith.constant 0 : index
    %c0_174 = arith.constant 0 : index
    %374 = vector.load %arg14[%c0_173, %c0_174] : memref<1x32xf32, #tpu.memory_space<vmem>>, vector<1x32xf32>
    %375 = vector.broadcast %374 : vector<1x32xf32> to vector<128x32xf32>
    %376 = arith.addf %373, %375 : vector<128x32xf32>
    %cst_175 = arith.constant 0.000000e+00 : f32
    %377 = vector.broadcast %cst_175 : f32 to vector<128x32xf32>
    %378 = arith.maximumf %376, %377 : vector<128x32xf32>
    %379 = arith.truncf %378 : vector<128x32xf32> to vector<128x32xbf16>
    %c0_176 = arith.constant 0 : index
    %c0_177 = arith.constant 0 : index
    %380 = vector.load %arg4[%c0_176, %c0_177] : memref<32x128xbf16, #tpu.memory_space<vmem>>, vector<32x128xbf16>
    %cst_178 = arith.constant dense<0.000000e+00> : vector<32x32xf32>
    %381 = tpu.matmul %380, %379, %cst_178 {dimension_numbers = #tpu.dot_dimension_numbers<[1], [0], [0], [1], [0, 0, 1, 1], [], []>} : vector<32x128xbf16>, vector<128x32xbf16>, vector<32x32xf32> -> vector<32x32xf32>
    %c0_179 = arith.constant 0 : index
    %c0_180 = arith.constant 0 : index
    %382 = vector.load %arg15[%c0_179, %c0_180] : memref<32x32xf32, #tpu.memory_space<vmem>>, vector<32x32xf32>
    %383 = arith.mulf %381, %382 : vector<32x32xf32>
    %c0_181 = arith.constant 0 : index
    %c0_182 = arith.constant 0 : index
    %384 = vector.load %arg18[%c0_181, %c0_182] : memref<32x16xbf16, #tpu.memory_space<vmem>>, vector<32x16xbf16>
    %cst_183 = arith.constant dense<0.000000e+00> : vector<128x16xf32>
    %385 = tpu.matmul %379, %384, %cst_183 {dimension_numbers = #tpu.dot_dimension_numbers<[1], [0], [0], [1], [0, 0, 1, 1], [], []>} : vector<128x32xbf16>, vector<32x16xbf16>, vector<128x16xf32> -> vector<128x16xf32>
    %c0_184 = arith.constant 0 : index
    %c0_185 = arith.constant 0 : index
    %386 = vector.load %arg2[%c0_184, %c0_185] : memref<128x64xbf16, #tpu.memory_space<vmem>>, vector<128x64xbf16>
    %c0_186 = arith.constant 0 : index
    %c0_187 = arith.constant 0 : index
    %387 = vector.load %arg17[%c0_186, %c0_187] : memref<64x16xbf16, #tpu.memory_space<vmem>>, vector<64x16xbf16>
    %cst_188 = arith.constant dense<0.000000e+00> : vector<128x16xf32>
    %388 = tpu.matmul %386, %387, %cst_188 {dimension_numbers = #tpu.dot_dimension_numbers<[1], [0], [0], [1], [0, 0, 1, 1], [], []>} : vector<128x64xbf16>, vector<64x16xbf16>, vector<128x16xf32> -> vector<128x16xf32>
    %389 = arith.mulf %385, %388 : vector<128x16xf32>
    %390 = vector.extract_strided_slice %383 {offsets = [0, 0], sizes = [16, 32], strides = [1, 1]} : vector<32x32xf32> to vector<16x32xf32>
    %cst_189 = arith.constant dense<0.000000e+00> : vector<16xf32>
    %391 = vector.multi_reduction <add>, %390, %cst_189 [1] : vector<16x32xf32> to vector<16xf32>
    %392 = vector.shape_cast %391 : vector<16xf32> to vector<16x1xf32>
    %cst_190 = arith.constant dense<0.000000e+00> : vector<1xf32>
    %393 = vector.multi_reduction <add>, %392, %cst_190 [0] : vector<16x1xf32> to vector<1xf32>
    %394 = vector.shape_cast %393 : vector<1xf32> to vector<1x1xf32>
    %395 = vector.extract_strided_slice %389 {offsets = [0, 0], sizes = [64, 16], strides = [1, 1]} : vector<128x16xf32> to vector<64x16xf32>
    %cst_191 = arith.constant dense<0.000000e+00> : vector<64xf32>
    %396 = vector.multi_reduction <add>, %395, %cst_191 [1] : vector<64x16xf32> to vector<64xf32>
    %397 = vector.shape_cast %396 : vector<64xf32> to vector<64x1xf32>
    %cst_192 = arith.constant dense<0.000000e+00> : vector<1xf32>
    %398 = vector.multi_reduction <add>, %397, %cst_192 [0] : vector<64x1xf32> to vector<1xf32>
    %399 = vector.shape_cast %398 : vector<1xf32> to vector<1x1xf32>
    %400 = arith.addf %394, %399 : vector<1x1xf32>
    %cst_193 = arith.constant 1.562500e-02 : f32
    %401 = vector.broadcast %cst_193 : f32 to vector<1x1xf32>
    %402 = arith.mulf %400, %401 : vector<1x1xf32>
    %c0_194 = arith.constant 0 : index
    %c0_195 = arith.constant 0 : index
    %403 = vector.load %arg16[%c0_194, %c0_195] : memref<1x1xf32, #tpu.memory_space<vmem>>, vector<1x1xf32>
    %404 = arith.addf %402, %403 : vector<1x1xf32>
    %405 = vector.extract_strided_slice %383 {offsets = [16, 0], sizes = [16, 32], strides = [1, 1]} : vector<32x32xf32> to vector<16x32xf32>
    %cst_196 = arith.constant dense<0.000000e+00> : vector<16xf32>
    %406 = vector.multi_reduction <add>, %405, %cst_196 [1] : vector<16x32xf32> to vector<16xf32>
    %407 = vector.shape_cast %406 : vector<16xf32> to vector<16x1xf32>
    %cst_197 = arith.constant dense<0.000000e+00> : vector<1xf32>
    %408 = vector.multi_reduction <add>, %407, %cst_197 [0] : vector<16x1xf32> to vector<1xf32>
    %409 = vector.shape_cast %408 : vector<1xf32> to vector<1x1xf32>
    %410 = vector.extract_strided_slice %389 {offsets = [64, 0], sizes = [64, 16], strides = [1, 1]} : vector<128x16xf32> to vector<64x16xf32>
    %cst_198 = arith.constant dense<0.000000e+00> : vector<64xf32>
    %411 = vector.multi_reduction <add>, %410, %cst_198 [1] : vector<64x16xf32> to vector<64xf32>
    %412 = vector.shape_cast %411 : vector<64xf32> to vector<64x1xf32>
    %cst_199 = arith.constant dense<0.000000e+00> : vector<1xf32>
    %413 = vector.multi_reduction <add>, %412, %cst_199 [0] : vector<64x1xf32> to vector<1xf32>
    %414 = vector.shape_cast %413 : vector<1xf32> to vector<1x1xf32>
    %415 = arith.addf %409, %414 : vector<1x1xf32>
    %cst_200 = arith.constant 1.562500e-02 : f32
    %416 = vector.broadcast %cst_200 : f32 to vector<1x1xf32>
    %417 = arith.mulf %415, %416 : vector<1x1xf32>
    %c0_201 = arith.constant 0 : index
    %c0_202 = arith.constant 0 : index
    %418 = vector.load %arg16[%c0_201, %c0_202] : memref<1x1xf32, #tpu.memory_space<vmem>>, vector<1x1xf32>
    %419 = arith.addf %417, %418 : vector<1x1xf32>
    %420 = tpu.concatenate %404, %419 in 1 : vector<1x1xf32>, vector<1x1xf32> -> vector<1x2xf32>
    %c0_203 = arith.constant 0 : index
    %c0_204 = arith.constant 0 : index
    %c0_205 = arith.constant 0 : index
    %421 = vector.load %arg19[%c0_203, %c0_204, %c0_205] : memref<1x1x2xf32, #tpu.memory_space<vmem>>, vector<1x1x2xf32>
    %422 = vector.shape_cast %421 : vector<1x1x2xf32> to vector<1x2xf32>
    %423 = vector.shape_cast %420 : vector<1x2xf32> to vector<1x1x2xf32>
    tpu.vector_store %arg19[%c0_203, %c0_204, %c0_205], %423 {strides = array<i32>} : memref<1x1x2xf32, #tpu.memory_space<vmem>>, vector<1x1x2xf32>,
    return
  }
  func.func @transform_0(%arg0: i32) -> (i32, i32) {
    %c0_i32 = arith.constant 0 : i32
    %c0_i32_0 = arith.constant 0 : i32
    return %arg0, %c0_i32 : i32, i32
  }
  func.func @transform_1(%arg0: i32) -> (i32, i32) {
    %c0_i32 = arith.constant 0 : i32
    %c0_i32_0 = arith.constant 0 : i32
    return %arg0, %c0_i32 : i32, i32
  }
  func.func @transform_2(%arg0: i32) -> (i32, i32) {
    %c0_i32 = arith.constant 0 : i32
    %c0_i32_0 = arith.constant 0 : i32
    %c0_i32_1 = arith.constant 0 : i32
    return %c0_i32, %c0_i32_0 : i32, i32
  }
  func.func @transform_3(%arg0: i32) -> (i32, i32) {
    %c0_i32 = arith.constant 0 : i32
    %c0_i32_0 = arith.constant 0 : i32
    %c0_i32_1 = arith.constant 0 : i32
    return %c0_i32, %c0_i32_0 : i32, i32
  }
  func.func @transform_4(%arg0: i32) -> (i32, i32) {
    %c0_i32 = arith.constant 0 : i32
    %c0_i32_0 = arith.constant 0 : i32
    %c0_i32_1 = arith.constant 0 : i32
    return %c0_i32, %c0_i32_0 : i32, i32
  }
  func.func @transform_5(%arg0: i32) -> (i32, i32) {
    %c0_i32 = arith.constant 0 : i32
    %c0_i32_0 = arith.constant 0 : i32
    %c0_i32_1 = arith.constant 0 : i32
    return %c0_i32, %c0_i32_0 : i32, i32
  }
  func.func @transform_6(%arg0: i32) -> (i32, i32) {
    %c0_i32 = arith.constant 0 : i32
    %c0_i32_0 = arith.constant 0 : i32
    %c0_i32_1 = arith.constant 0 : i32
    return %c0_i32, %c0_i32_0 : i32, i32
  }
  func.func @transform_7(%arg0: i32) -> (i32, i32) {
    %c0_i32 = arith.constant 0 : i32
    %c0_i32_0 = arith.constant 0 : i32
    %c0_i32_1 = arith.constant 0 : i32
    return %c0_i32, %c0_i32_0 : i32, i32
  }
  func.func @transform_8(%arg0: i32) -> (i32, i32) {
    %c0_i32 = arith.constant 0 : i32
    %c0_i32_0 = arith.constant 0 : i32
    %c0_i32_1 = arith.constant 0 : i32
    return %c0_i32, %c0_i32_0 : i32, i32
  }
  func.func @transform_9(%arg0: i32) -> (i32, i32) {
    %c0_i32 = arith.constant 0 : i32
    %c0_i32_0 = arith.constant 0 : i32
    %c0_i32_1 = arith.constant 0 : i32
    return %c0_i32, %c0_i32_0 : i32, i32
  }
  func.func @transform_10(%arg0: i32) -> (i32, i32) {
    %c0_i32 = arith.constant 0 : i32
    %c0_i32_0 = arith.constant 0 : i32
    %c0_i32_1 = arith.constant 0 : i32
    return %c0_i32, %c0_i32_0 : i32, i32
  }
  func.func @transform_11(%arg0: i32) -> (i32, i32) {
    %c0_i32 = arith.constant 0 : i32
    %c0_i32_0 = arith.constant 0 : i32
    %c0_i32_1 = arith.constant 0 : i32
    return %c0_i32, %c0_i32_0 : i32, i32
  }
  func.func @transform_12(%arg0: i32) -> (i32, i32) {
    %c0_i32 = arith.constant 0 : i32
    %c0_i32_0 = arith.constant 0 : i32
    %c0_i32_1 = arith.constant 0 : i32
    return %c0_i32, %c0_i32_0 : i32, i32
  }
  func.func @transform_13(%arg0: i32) -> (i32, i32) {
    %c0_i32 = arith.constant 0 : i32
    %c0_i32_0 = arith.constant 0 : i32
    %c0_i32_1 = arith.constant 0 : i32
    return %c0_i32, %c0_i32_0 : i32, i32
  }
  func.func @transform_14(%arg0: i32) -> (i32, i32) {
    %c0_i32 = arith.constant 0 : i32
    %c0_i32_0 = arith.constant 0 : i32
    %c0_i32_1 = arith.constant 0 : i32
    return %c0_i32, %c0_i32_0 : i32, i32
  }
  func.func @transform_15(%arg0: i32) -> (i32, i32) {
    %c0_i32 = arith.constant 0 : i32
    %c0_i32_0 = arith.constant 0 : i32
    %c0_i32_1 = arith.constant 0 : i32
    return %c0_i32, %c0_i32_0 : i32, i32
  }
  func.func @transform_16(%arg0: i32) -> (i32, i32) {
    %c0_i32 = arith.constant 0 : i32
    %c0_i32_0 = arith.constant 0 : i32
    %c0_i32_1 = arith.constant 0 : i32
    return %c0_i32, %c0_i32_0 : i32, i32
  }
  func.func @transform_17(%arg0: i32) -> (i32, i32) {
    %c0_i32 = arith.constant 0 : i32
    %c0_i32_0 = arith.constant 0 : i32
    %c0_i32_1 = arith.constant 0 : i32
    return %c0_i32, %c0_i32_0 : i32, i32
  }
  func.func @transform_18(%arg0: i32) -> (i32, i32, i32) {
    %c0_i32 = arith.constant 0 : i32
    %c0_i32_0 = arith.constant 0 : i32
    %c0_i32_1 = arith.constant 0 : i32
    return %arg0, %c0_i32, %c0_i32_0 : i32, i32, i32
  }
}

</mosaic_0001>

<llo_original>
// kernel: discriminator_forward.1
$region0: #{discriminator_forward.1}
  #allocation0 [shape = 'u32[]', space=smem, size = 0x4, offset = 0x4, fixed_abs, tag = 'smem constant byte address 0x4 - core index']
  #allocation1 [shape = 'u32[144,128]{1,0:T(1,128)}', space=vmem, size = 0x12000, scoped, tag = 'internal scratch']
  #allocation2 [shape = 'f32[608,32]{1,0:T(8,128)}', space=vmem, size = 0x4c000, scoped, tag = 'scratch operand']
  #allocation3 [shape = 'f32[224,32]{1,0:T(8,128)}', space=vmem, size = 0x1c000, scoped, tag = 'scratch operand']
  #allocation4 [shape = 'f32[1,1]{1,0:T(1,128)S(1)}', space=vmem, size = 0x200, scoped, tag = 'scoped memory for discriminator_forward.1']
  %s0 = inlined_call_operand.vmem [shape: bf16[1024,32], index: 0, kind: input, shape index: {}]
  %s1 = inlined_call_operand.vmem [shape: bf16[256,64], index: 1, kind: input, shape index: {}]
  %s2 = inlined_call_operand.vmem [shape: bf16[128,512], index: 2, kind: input, shape index: {}]
  %s3 = inlined_call_operand.vmem [shape: bf16[32,128], index: 3, kind: input, shape index: {}]
  %s4 = inlined_call_operand.vmem [shape: bf16[32,64], index: 4, kind: input, shape index: {}]
  %s5 = inlined_call_operand.vmem [shape: f32[1,32], index: 5, kind: input, shape index: {}]
  %s6 = inlined_call_operand.vmem [shape: bf16[288,32], index: 6, kind: input, shape index: {}]
  %s7 = inlined_call_operand.vmem [shape: f32[1,32], index: 7, kind: input, shape index: {}]
  %s8 = inlined_call_operand.vmem [shape: f32[1,32], index: 8, kind: input, shape index: {}]
  %s9 = inlined_call_operand.vmem [shape: bf16[288,64], index: 9, kind: input, shape index: {}]
  %s10 = inlined_call_operand.vmem [shape: f32[1,32], index: 10, kind: input, shape index: {}]
  %s11 = inlined_call_operand.vmem [shape: bf16[288,32], index: 11, kind: input, shape index: {}]
  %s12 = inlined_call_operand.vmem [shape: f32[1,32], index: 12, kind: input, shape index: {}]
  %s13 = inlined_call_operand.vmem [shape: f32[1,32], index: 13, kind: input, shape index: {}]
  %s14 = inlined_call_operand.vmem [shape: f32[32,32], index: 14, kind: input, shape index: {}]
  %s15 = inlined_call_operand.<no memory space> [shape: f32[1,1], index: 15, kind: input, shape index: {}]
  %s16 = inlined_call_operand.vmem [shape: bf16[64,16], index: 16, kind: input, shape index: {}]
  %s17 = inlined_call_operand.vmem [shape: bf16[32,16], index: 17, kind: input, shape index: {}]
  %s18 = inlined_call_operand.vmem [shape: f32[2,1,2], index: 18, kind: output, shape index: {}]
  %s19 = sld [smem:[#allocation0]]
  $region105: #{discriminator_forward.1} parent=0
    _
  %s21 = ssub.s32 1, %s19
  %s22 = scalar_select 0, %s21, %s19
  %v23 = vstv %s15
  %24 = vst [vmem:[#allocation4] sm:$0x1] %v23
  loop: start=0, step=1, limit=4
  $region2: #{discriminator_forward.1} parent=0 // loop_pre_header
    _
  $region3: #{discriminator_forward.1} parent=0 // loop_header
    %s26 = sphi 0, %s30
    %p27 = scmp.ge.s32.totalorder %s26, 4
    %s36 = sphi 0, %s38
    %s39 = sphi 0, %s36
    %s40 = sphi 0, %s39
    %s56 = sphi 0, %s40
    %s62 = sphi 0, %s64
    %s65 = sphi 0, %s62
    %s66 = sphi 0, %s65
    %s82 = sphi 0, %s66
    %s86 = sphi 0, %s86
    %s88 = sphi 0, %s86
    %s89 = sphi 0, %s88
    %s103 = sphi 0, %s89
    %s107 = sphi 0, %s107
    %s109 = sphi 0, %s107
    %s110 = sphi 0, %s109
    %s124 = sphi 0, %s110
    %s128 = sphi 0, %s128
    %s130 = sphi 0, %s128
    %s131 = sphi 0, %s130
    %s145 = sphi 0, %s131
    %s149 = sphi 0, %s149
    %s151 = sphi 0, %s149
    %s152 = sphi 0, %s151
    %s166 = sphi 0, %s152
    %s170 = sphi 0, %s170
    %s172 = sphi 0, %s170
    %s173 = sphi 0, %s172
    %s187 = sphi 0, %s173
    %s191 = sphi 0, %s191
    %s193 = sphi 0, %s191
    %s194 = sphi 0, %s193
    %s208 = sphi 0, %s194
    %s212 = sphi 0, %s212
    %s214 = sphi 0, %s212
    %s215 = sphi 0, %s214
    %s229 = sphi 0, %s215
    %s233 = sphi 0, %s233
    %s235 = sphi 0, %s233
    %s236 = sphi 0, %s235
    %s250 = sphi 0, %s236
    %s254 = sphi 0, %s254
    %s256 = sphi 0, %s254
    %s257 = sphi 0, %s256
    %s271 = sphi 0, %s257
    %s275 = sphi 0, %s275
    %s277 = sphi 0, %s275
    %s278 = sphi 0, %s277
    %s292 = sphi 0, %s278
    %s296 = sphi 0, %s296
    %s298 = sphi 0, %s296
    %s299 = sphi 0, %s298
    %s313 = sphi 0, %s299
    %s317 = sphi 0, %s317
    %s319 = sphi 0, %s317
    %s320 = sphi 0, %s319
    %s334 = sphi 0, %s320
    %s338 = sphi 0, %s338
    %s340 = sphi 0, %s338
    %s341 = sphi 0, %s340
    %s355 = sphi 0, %s341
    %s359 = sphi 0, %s359
    %s361 = sphi 0, %s359
    %s362 = sphi 0, %s361
    %s376 = sphi 0, %s362
    %s380 = sphi 0, %s380
    %s382 = sphi 0, %s380
    %s383 = sphi 0, %s382
    %s397 = sphi 0, %s383
    %s401 = sphi 0, %s401
    %s403 = sphi 0, %s401
    %s404 = sphi 0, %s403
    %s418 = sphi 0, %s404
    %s424 = sphi 0, %s426
    %s427 = sphi 0, %s424
    %s428 = sphi 0, %s427
    %s444 = sphi 0, %s428
  $region4: #{discriminator_forward.1} parent=0 // loop_header_branch
    %29 = sbr.rel (%p27) target = $region8
  $region5: #{discriminator_forward.1} parent=0 // loop_body
    %s31 = ssub.s32 %s26, 1
    %s32 = ssub.s32 %s26, 2
    %s33 = sadd.s32 %s26, 1
    %s34 = ssub.s32 %s26, %s33
    %p35 = scmp.eq.s32.totalorder %s34, 0
    %s37 = sadd.s32 %s36, 1
    %s38 = scalar_select %p35, %s36, %s37
    %p41 = pneg %p35
    %p42 = scmp.eq.s32.totalorder %s26, 1
    %p43 = por %p41, %p42
    %p44 = scmp.ne.s32.totalorder %s36, %s39
    %p45 = scmp.eq.s32.totalorder %s26, 0
    %p46 = por %p44, %p45
    %p47 = scmp.ne.s32.totalorder %s36, %s39
    %p48 = scmp.eq.s32.totalorder %s31, 1
    %p49 = por %p47, %p48
    %p50 = scmp.ne.s32.totalorder %s39, %s40
    %p51 = scmp.eq.s32.totalorder %s31, 0
    %p52 = por %p50, %p51
    %p53 = scmp.ne.s32.totalorder %s39, %s40
    %p54 = scmp.eq.s32.totalorder %s32, 1
    %p55 = por %p53, %p54
    %p57 = scmp.ne.s32.totalorder %s40, %s56
    %p58 = scmp.eq.s32.totalorder %s32, 0
    %p59 = por %p57, %p58
    %s60 = ssub.s32 %s26, %s33
    %p61 = scmp.eq.s32.totalorder %s60, 0
    %s63 = sadd.s32 %s62, 1
    %s64 = scalar_select %p61, %s62, %s63
    %p67 = pneg %p61
    %p68 = scmp.eq.s32.totalorder %s26, 1
    %p69 = por %p67, %p68
    %p70 = scmp.ne.s32.totalorder %s62, %s65
    %p71 = scmp.eq.s32.totalorder %s26, 0
    %p72 = por %p70, %p71
    %p73 = scmp.ne.s32.totalorder %s62, %s65
    %p74 = scmp.eq.s32.totalorder %s31, 1
    %p75 = por %p73, %p74
    %p76 = scmp.ne.s32.totalorder %s65, %s66
    %p77 = scmp.eq.s32.totalorder %s31, 0
    %p78 = por %p76, %p77
    %p79 = scmp.ne.s32.totalorder %s65, %s66
    %p80 = scmp.eq.s32.totalorder %s32, 1
    %p81 = por %p79, %p80
    %p83 = scmp.ne.s32.totalorder %s66, %s82
    %p84 = scmp.eq.s32.totalorder %s32, 0
    %p85 = por %p83, %p84
    %s87 = sadd.s32 %s86, 1
    %p90 = scmp.eq.s32.totalorder %s26, 1
    %p91 = scmp.ne.s32.totalorder %s86, %s88
    %p92 = scmp.eq.s32.totalorder %s26, 0
    %p93 = por %p91, %p92
    %p94 = scmp.ne.s32.totalorder %s86, %s88
    %p95 = scmp.eq.s32.totalorder %s31, 1
    %p96 = por %p94, %p95
    %p97 = scmp.ne.s32.totalorder %s88, %s89
    %p98 = scmp.eq.s32.totalorder %s31, 0
    %p99 = por %p97, %p98
    %p100 = scmp.ne.s32.totalorder %s88, %s89
    %p101 = scmp.eq.s32.totalorder %s32, 1
    %p102 = por %p100, %p101
    %p104 = scmp.ne.s32.totalorder %s89, %s103
    %p105 = scmp.eq.s32.totalorder %s32, 0
    %p106 = por %p104, %p105
    %s108 = sadd.s32 %s107, 1
    %p111 = scmp.eq.s32.totalorder %s26, 1
    %p112 = scmp.ne.s32.totalorder %s107, %s109
    %p113 = scmp.eq.s32.totalorder %s26, 0
    %p114 = por %p112, %p113
    %p115 = scmp.ne.s32.totalorder %s107, %s109
    %p116 = scmp.eq.s32.totalorder %s31, 1
    %p117 = por %p115, %p116
    %p118 = scmp.ne.s32.totalorder %s109, %s110
    %p119 = scmp.eq.s32.totalorder %s31, 0
    %p120 = por %p118, %p119
    %p121 = scmp.ne.s32.totalorder %s109, %s110
    %p122 = scmp.eq.s32.totalorder %s32, 1
    %p123 = por %p121, %p122
    %p125 = scmp.ne.s32.totalorder %s110, %s124
    %p126 = scmp.eq.s32.totalorder %s32, 0
    %p127 = por %p125, %p126
    %s129 = sadd.s32 %s128, 1
    %p132 = scmp.eq.s32.totalorder %s26, 1
    %p133 = scmp.ne.s32.totalorder %s128, %s130
    %p134 = scmp.eq.s32.totalorder %s26, 0
    %p135 = por %p133, %p134
    %p136 = scmp.ne.s32.totalorder %s128, %s130
    %p137 = scmp.eq.s32.totalorder %s31, 1
    %p138 = por %p136, %p137
    %p139 = scmp.ne.s32.totalorder %s130, %s131
    %p140 = scmp.eq.s32.totalorder %s31, 0
    %p141 = por %p139, %p140
    %p142 = scmp.ne.s32.totalorder %s130, %s131
    %p143 = scmp.eq.s32.totalorder %s32, 1
    %p144 = por %p142, %p143
    %p146 = scmp.ne.s32.totalorder %s131, %s145
    %p147 = scmp.eq.s32.totalorder %s32, 0
    %p148 = por %p146, %p147
    %s150 = sadd.s32 %s149, 1
    %p153 = scmp.eq.s32.totalorder %s26, 1
    %p154 = scmp.ne.s32.totalorder %s149, %s151
    %p155 = scmp.eq.s32.totalorder %s26, 0
    %p156 = por %p154, %p155
    %p157 = scmp.ne.s32.totalorder %s149, %s151
    %p158 = scmp.eq.s32.totalorder %s31, 1
    %p159 = por %p157, %p158
    %p160 = scmp.ne.s32.totalorder %s151, %s152
    %p161 = scmp.eq.s32.totalorder %s31, 0
    %p162 = por %p160, %p161
    %p163 = scmp.ne.s32.totalorder %s151, %s152
    %p164 = scmp.eq.s32.totalorder %s32, 1
    %p165 = por %p163, %p164
    %p167 = scmp.ne.s32.totalorder %s152, %s166
    %p168 = scmp.eq.s32.totalorder %s32, 0
    %p169 = por %p167, %p168
    %s171 = sadd.s32 %s170, 1
    %p174 = scmp.eq.s32.totalorder %s26, 1
    %p175 = scmp.ne.s32.totalorder %s170, %s172
    %p176 = scmp.eq.s32.totalorder %s26, 0
    %p177 = por %p175, %p176
    %p178 = scmp.ne.s32.totalorder %s170, %s172
    %p179 = scmp.eq.s32.totalorder %s31, 1
    %p180 = por %p178, %p179
    %p181 = scmp.ne.s32.totalorder %s172, %s173
    %p182 = scmp.eq.s32.totalorder %s31, 0
    %p183 = por %p181, %p182
    %p184 = scmp.ne.s32.totalorder %s172, %s173
    %p185 = scmp.eq.s32.totalorder %s32, 1
    %p186 = por %p184, %p185
    %p188 = scmp.ne.s32.totalorder %s173, %s187
    %p189 = scmp.eq.s32.totalorder %s32, 0
    %p190 = por %p188, %p189
    %s192 = sadd.s32 %s191, 1
    %p195 = scmp.eq.s32.totalorder %s26, 1
    %p196 = scmp.ne.s32.totalorder %s191, %s193
    %p197 = scmp.eq.s32.totalorder %s26, 0
    %p198 = por %p196, %p197
    %p199 = scmp.ne.s32.totalorder %s191, %s193
    %p200 = scmp.eq.s32.totalorder %s31, 1
    %p201 = por %p199, %p200
    %p202 = scmp.ne.s32.totalorder %s193, %s194
    %p203 = scmp.eq.s32.totalorder %s31, 0
    %p204 = por %p202, %p203
    %p205 = scmp.ne.s32.totalorder %s193, %s194
    %p206 = scmp.eq.s32.totalorder %s32, 1
    %p207 = por %p205, %p206
    %p209 = scmp.ne.s32.totalorder %s194, %s208
    %p210 = scmp.eq.s32.totalorder %s32, 0
    %p211 = por %p209, %p210
    %s213 = sadd.s32 %s212, 1
    %p216 = scmp.eq.s32.totalorder %s26, 1
    %p217 = scmp.ne.s32.totalorder %s212, %s214
    %p218 = scmp.eq.s32.totalorder %s26, 0
    %p219 = por %p217, %p218
    %p220 = scmp.ne.s32.totalorder %s212, %s214
    %p221 = scmp.eq.s32.totalorder %s31, 1
    %p222 = por %p220, %p221
    %p223 = scmp.ne.s32.totalorder %s214, %s215
    %p224 = scmp.eq.s32.totalorder %s31, 0
    %p225 = por %p223, %p224
    %p226 = scmp.ne.s32.totalorder %s214, %s215
    %p227 = scmp.eq.s32.totalorder %s32, 1
    %p228 = por %p226, %p227
    %p230 = scmp.ne.s32.totalorder %s215, %s229
    %p231 = scmp.eq.s32.totalorder %s32, 0
    %p232 = por %p230, %p231
    %s234 = sadd.s32 %s233, 1
    %p237 = scmp.eq.s32.totalorder %s26, 1
    %p238 = scmp.ne.s32.totalorder %s233, %s235
    %p239 = scmp.eq.s32.totalorder %s26, 0
    %p240 = por %p238, %p239
    %p241 = scmp.ne.s32.totalorder %s233, %s235
    %p242 = scmp.eq.s32.totalorder %s31, 1
    %p243 = por %p241, %p242
    %p244 = scmp.ne.s32.totalorder %s235, %s236
    %p245 = scmp.eq.s32.totalorder %s31, 0
    %p246 = por %p244, %p245
    %p247 = scmp.ne.s32.totalorder %s235, %s236
    %p248 = scmp.eq.s32.totalorder %s32, 1
    %p249 = por %p247, %p248
    %p251 = scmp.ne.s32.totalorder %s236, %s250
    %p252 = scmp.eq.s32.totalorder %s32, 0
    %p253 = por %p251, %p252
    %s255 = sadd.s32 %s254, 1
    %p258 = scmp.eq.s32.totalorder %s26, 1
    %p259 = scmp.ne.s32.totalorder %s254, %s256
    %p260 = scmp.eq.s32.totalorder %s26, 0
    %p261 = por %p259, %p260
    %p262 = scmp.ne.s32.totalorder %s254, %s256
    %p263 = scmp.eq.s32.totalorder %s31, 1
    %p264 = por %p262, %p263
    %p265 = scmp.ne.s32.totalorder %s256, %s257
    %p266 = scmp.eq.s32.totalorder %s31, 0
    %p267 = por %p265, %p266
    %p268 = scmp.ne.s32.totalorder %s256, %s257
    %p269 = scmp.eq.s32.totalorder %s32, 1
    %p270 = por %p268, %p269
    %p272 = scmp.ne.s32.totalorder %s257, %s271
    %p273 = scmp.eq.s32.totalorder %s32, 0
    %p274 = por %p272, %p273
    %s276 = sadd.s32 %s275, 1
    %p279 = scmp.eq.s32.totalorder %s26, 1
    %p280 = scmp.ne.s32.totalorder %s275, %s277
    %p281 = scmp.eq.s32.totalorder %s26, 0
    %p282 = por %p280, %p281
    %p283 = scmp.ne.s32.totalorder %s275, %s277
    %p284 = scmp.eq.s32.totalorder %s31, 1
    %p285 = por %p283, %p284
    %p286 = scmp.ne.s32.totalorder %s277, %s278
    %p287 = scmp.eq.s32.totalorder %s31, 0
    %p288 = por %p286, %p287
    %p289 = scmp.ne.s32.totalorder %s277, %s278
    %p290 = scmp.eq.s32.totalorder %s32, 1
    %p291 = por %p289, %p290
    %p293 = scmp.ne.s32.totalorder %s278, %s292
    %p294 = scmp.eq.s32.totalorder %s32, 0
    %p295 = por %p293, %p294
    %s297 = sadd.s32 %s296, 1
    %p300 = scmp.eq.s32.totalorder %s26, 1
    %p301 = scmp.ne.s32.totalorder %s296, %s298
    %p302 = scmp.eq.s32.totalorder %s26, 0
    %p303 = por %p301, %p302
    %p304 = scmp.ne.s32.totalorder %s296, %s298
    %p305 = scmp.eq.s32.totalorder %s31, 1
    %p306 = por %p304, %p305
    %p307 = scmp.ne.s32.totalorder %s298, %s299
    %p308 = scmp.eq.s32.totalorder %s31, 0
    %p309 = por %p307, %p308
    %p310 = scmp.ne.s32.totalorder %s298, %s299
    %p311 = scmp.eq.s32.totalorder %s32, 1
    %p312 = por %p310, %p311
    %p314 = scmp.ne.s32.totalorder %s299, %s313
    %p315 = scmp.eq.s32.totalorder %s32, 0
    %p316 = por %p314, %p315
    %s318 = sadd.s32 %s317, 1
    %p321 = scmp.eq.s32.totalorder %s26, 1
    %p322 = scmp.ne.s32.totalorder %s317, %s319
    %p323 = scmp.eq.s32.totalorder %s26, 0
    %p324 = por %p322, %p323
    %p325 = scmp.ne.s32.totalorder %s317, %s319
    %p326 = scmp.eq.s32.totalorder %s31, 1
    %p327 = por %p325, %p326
    %p328 = scmp.ne.s32.totalorder %s319, %s320
    %p329 = scmp.eq.s32.totalorder %s31, 0
    %p330 = por %p328, %p329
    %p331 = scmp.ne.s32.totalorder %s319, %s320
    %p332 = scmp.eq.s32.totalorder %s32, 1
    %p333 = por %p331, %p332
    %p335 = scmp.ne.s32.totalorder %s320, %s334
    %p336 = scmp.eq.s32.totalorder %s32, 0
    %p337 = por %p335, %p336
    %s339 = sadd.s32 %s338, 1
    %p342 = scmp.eq.s32.totalorder %s26, 1
    %p343 = scmp.ne.s32.totalorder %s338, %s340
    %p344 = scmp.eq.s32.totalorder %s26, 0
    %p345 = por %p343, %p344
    %p346 = scmp.ne.s32.totalorder %s338, %s340
    %p347 = scmp.eq.s32.totalorder %s31, 1
    %p348 = por %p346, %p347
    %p349 = scmp.ne.s32.totalorder %s340, %s341
    %p350 = scmp.eq.s32.totalorder %s31, 0
    %p351 = por %p349, %p350
    %p352 = scmp.ne.s32.totalorder %s340, %s341
    %p353 = scmp.eq.s32.totalorder %s32, 1
    %p354 = por %p352, %p353
    %p356 = scmp.ne.s32.totalorder %s341, %s355
    %p357 = scmp.eq.s32.totalorder %s32, 0
    %p358 = por %p356, %p357
    %s360 = sadd.s32 %s359, 1
    %p363 = scmp.eq.s32.totalorder %s26, 1
    %p364 = scmp.ne.s32.totalorder %s359, %s361
    %p365 = scmp.eq.s32.totalorder %s26, 0
    %p366 = por %p364, %p365
    %p367 = scmp.ne.s32.totalorder %s359, %s361
    %p368 = scmp.eq.s32.totalorder %s31, 1
    %p369 = por %p367, %p368
    %p370 = scmp.ne.s32.totalorder %s361, %s362
    %p371 = scmp.eq.s32.totalorder %s31, 0
    %p372 = por %p370, %p371
    %p373 = scmp.ne.s32.totalorder %s361, %s362
    %p374 = scmp.eq.s32.totalorder %s32, 1
    %p375 = por %p373, %p374
    %p377 = scmp.ne.s32.totalorder %s362, %s376
    %p378 = scmp.eq.s32.totalorder %s32, 0
    %p379 = por %p377, %p378
    %s381 = sadd.s32 %s380, 1
    %p384 = scmp.eq.s32.totalorder %s26, 1
    %p385 = scmp.ne.s32.totalorder %s380, %s382
    %p386 = scmp.eq.s32.totalorder %s26, 0
    %p387 = por %p385, %p386
    %p388 = scmp.ne.s32.totalorder %s380, %s382
    %p389 = scmp.eq.s32.totalorder %s31, 1
    %p390 = por %p388, %p389
    %p391 = scmp.ne.s32.totalorder %s382, %s383
    %p392 = scmp.eq.s32.totalorder %s31, 0
    %p393 = por %p391, %p392
    %p394 = scmp.ne.s32.totalorder %s382, %s383
    %p395 = scmp.eq.s32.totalorder %s32, 1
    %p396 = por %p394, %p395
    %p398 = scmp.ne.s32.totalorder %s383, %s397
    %p399 = scmp.eq.s32.totalorder %s32, 0
    %p400 = por %p398, %p399
    %s402 = sadd.s32 %s401, 1
    %p405 = scmp.eq.s32.totalorder %s26, 1
    %p406 = scmp.ne.s32.totalorder %s401, %s403
    %p407 = scmp.eq.s32.totalorder %s26, 0
    %p408 = por %p406, %p407
    %p409 = scmp.ne.s32.totalorder %s401, %s403
    %p410 = scmp.eq.s32.totalorder %s31, 1
    %p411 = por %p409, %p410
    %p412 = scmp.ne.s32.totalorder %s403, %s404
    %p413 = scmp.eq.s32.totalorder %s31, 0
    %p414 = por %p412, %p413
    %p415 = scmp.ne.s32.totalorder %s403, %s404
    %p416 = scmp.eq.s32.totalorder %s32, 1
    %p417 = por %p415, %p416
    %p419 = scmp.ne.s32.totalorder %s404, %s418
    %p420 = scmp.eq.s32.totalorder %s32, 0
    %p421 = por %p419, %p420
    %s422 = ssub.s32 %s26, %s33
    %p423 = scmp.eq.s32.totalorder %s422, 0
    %s425 = sadd.s32 %s424, 1
    %s426 = scalar_select %p423, %s424, %s425
    %p429 = pneg %p423
    %p430 = scmp.eq.s32.totalorder %s26, 1
    %p431 = por %p429, %p430
    %p432 = scmp.ne.s32.totalorder %s424, %s427
    %p433 = scmp.eq.s32.totalorder %s26, 0
    %p434 = por %p432, %p433
    %p435 = scmp.ne.s32.totalorder %s424, %s427
    %p436 = scmp.eq.s32.totalorder %s31, 1
    %p437 = por %p435, %p436
    %p438 = scmp.ne.s32.totalorder %s427, %s428
    %p439 = scmp.eq.s32.totalorder %s31, 0
    %p440 = por %p438, %p439
    %p441 = scmp.ne.s32.totalorder %s427, %s428
    %p442 = scmp.eq.s32.totalorder %s32, 1
    %p443 = por %p441, %p442
    %p445 = scmp.ne.s32.totalorder %s428, %s444
    %p446 = scmp.eq.s32.totalorder %s32, 0
    %p447 = por %p445, %p446
    %p448 = scmp.le.s32.totalorder 1, %s26
    %p449 = scmp.lt.s32.totalorder %s26, 3
    %p450 = pnand %p448, %p449
    %p451 = pneg %p450
    // Predicated region
    $region9: #{discriminator_forward.1} parent=5 // pred_check
      _
    $region10: #{discriminator_forward.1} parent=5 // pred_check_branch
      %453 = sbr.rel (%p450) target = $region12
    $region11: #{discriminator_forward.1} parent=5 // pred_region
      %s454 = ssub.s32 %s26, 1
      // Predicated region
      $region13: #{discriminator_forward.1} parent=11 // pred_check
        %p455 = pneg %p99
      $region14: #{discriminator_forward.1} parent=11 // pred_check_branch
        %457 = sbr.rel (%p455) target = $region16
      $region15: #{discriminator_forward.1} parent=11 // pred_region
        _
      $region16: #{discriminator_forward.1} parent=11 // pred_fallthru
        _
      // Predicated region
      $region17: #{discriminator_forward.1} parent=11 // pred_check
        %p458 = pneg %p120
      $region18: #{discriminator_forward.1} parent=11 // pred_check_branch
        %460 = sbr.rel (%p458) target = $region20
      $region19: #{discriminator_forward.1} parent=11 // pred_region
        _
      $region20: #{discriminator_forward.1} parent=11 // pred_fallthru
        _
      // Predicated region
      $region21: #{discriminator_forward.1} parent=11 // pred_check
        %p461 = pneg %p141
      $region22: #{discriminator_forward.1} parent=11 // pred_check_branch
        %463 = sbr.rel (%p461) target = $region24
      $region23: #{discriminator_forward.1} parent=11 // pred_region
        _
      $region24: #{discriminator_forward.1} parent=11 // pred_fallthru
        _
      // Predicated region
      $region25: #{discriminator_forward.1} parent=11 // pred_check
        %p464 = pneg %p162
      $region26: #{discriminator_forward.1} parent=11 // pred_check_branch
        %466 = sbr.rel (%p464) target = $region28
      $region27: #{discriminator_forward.1} parent=11 // pred_region
        _
      $region28: #{discriminator_forward.1} parent=11 // pred_fallthru
        _
      // Predicated region
      $region29: #{discriminator_forward.1} parent=11 // pred_check
        %p467 = pneg %p183
      $region30: #{discriminator_forward.1} parent=11 // pred_check_branch
        %469 = sbr.rel (%p467) target = $region32
      $region31: #{discriminator_forward.1} parent=11 // pred_region
        _
      $region32: #{discriminator_forward.1} parent=11 // pred_fallthru
        _
      // Predicated region
      $region33: #{discriminator_forward.1} parent=11 // pred_check
        %p470 = pneg %p204
      $region34: #{discriminator_forward.1} parent=11 // pred_check_branch
        %472 = sbr.rel (%p470) target = $region36
      $region35: #{discriminator_forward.1} parent=11 // pred_region
        _
      $region36: #{discriminator_forward.1} parent=11 // pred_fallthru
        _
      // Predicated region
      $region37: #{discriminator_forward.1} parent=11 // pred_check
        %p473 = pneg %p225
      $region38: #{discriminator_forward.1} parent=11 // pred_check_branch
        %475 = sbr.rel (%p473) target = $region40
      $region39: #{discriminator_forward.1} parent=11 // pred_region
        _
      $region40: #{discriminator_forward.1} parent=11 // pred_fallthru
        _
      // Predicated region
      $region41: #{discriminator_forward.1} parent=11 // pred_check
        %p476 = pneg %p246
      $region42: #{discriminator_forward.1} parent=11 // pred_check_branch
        %478 = sbr.rel (%p476) target = $region44
      $region43: #{discriminator_forward.1} parent=11 // pred_region
        _
      $region44: #{discriminator_forward.1} parent=11 // pred_fallthru
        _
      // Predicated region
      $region45: #{discriminator_forward.1} parent=11 // pred_check
        %p479 = pneg %p267
      $region46: #{discriminator_forward.1} parent=11 // pred_check_branch
        %481 = sbr.rel (%p479) target = $region48
      $region47: #{discriminator_forward.1} parent=11 // pred_region
        _
      $region48: #{discriminator_forward.1} parent=11 // pred_fallthru
        _
      // Predicated region
      $region49: #{discriminator_forward.1} parent=11 // pred_check
        %p482 = pneg %p288
      $region50: #{discriminator_forward.1} parent=11 // pred_check_branch
        %484 = sbr.rel (%p482) target = $region52
      $region51: #{discriminator_forward.1} parent=11 // pred_region
        _
      $region52: #{discriminator_forward.1} parent=11 // pred_fallthru
        _
      // Predicated region
      $region53: #{discriminator_forward.1} parent=11 // pred_check
        %p485 = pneg %p309
      $region54: #{discriminator_forward.1} parent=11 // pred_check_branch
        %487 = sbr.rel (%p485) target = $region56
      $region55: #{discriminator_forward.1} parent=11 // pred_region
        _
      $region56: #{discriminator_forward.1} parent=11 // pred_fallthru
        _
      // Predicated region
      $region57: #{discriminator_forward.1} parent=11 // pred_check
        %p488 = pneg %p330
      $region58: #{discriminator_forward.1} parent=11 // pred_check_branch
        %490 = sbr.rel (%p488) target = $region60
      $region59: #{discriminator_forward.1} parent=11 // pred_region
        _
      $region60: #{discriminator_forward.1} parent=11 // pred_fallthru
        _
      // Predicated region
      $region61: #{discriminator_forward.1} parent=11 // pred_check
        %p491 = pneg %p351
      $region62: #{discriminator_forward.1} parent=11 // pred_check_branch
        %493 = sbr.rel (%p491) target = $region64
      $region63: #{discriminator_forward.1} parent=11 // pred_region
        _
      $region64: #{discriminator_forward.1} parent=11 // pred_fallthru
        _
      // Predicated region
      $region65: #{discriminator_forward.1} parent=11 // pred_check
        %p494 = pneg %p372
      $region66: #{discriminator_forward.1} parent=11 // pred_check_branch
        %496 = sbr.rel (%p494) target = $region68
      $region67: #{discriminator_forward.1} parent=11 // pred_region
        _
      $region68: #{discriminator_forward.1} parent=11 // pred_fallthru
        _
      // Predicated region
      $region69: #{discriminator_forward.1} parent=11 // pred_check
        %p497 = pneg %p393
      $region70: #{discriminator_forward.1} parent=11 // pred_check_branch
        %499 = sbr.rel (%p497) target = $region72
      $region71: #{discriminator_forward.1} parent=11 // pred_region
        _
      $region72: #{discriminator_forward.1} parent=11 // pred_fallthru
        _
      // Predicated region
      $region73: #{discriminator_forward.1} parent=11 // pred_check
        %p500 = pneg %p414
      $region74: #{discriminator_forward.1} parent=11 // pred_check_branch
        %502 = sbr.rel (%p500) target = $region76
      $region75: #{discriminator_forward.1} parent=11 // pred_region
        _
      $region76: #{discriminator_forward.1} parent=11 // pred_fallthru
        _
    $region12: #{discriminator_forward.1} parent=5 // pred_fallthru
      _
    %p503 = scmp.lt.s32.totalorder %s26, 2
    // Predicated region
    $region77: #{discriminator_forward.1} parent=5 // pred_check
      %p504 = pneg %p503
    $region78: #{discriminator_forward.1} parent=5 // pred_check_branch
      %506 = sbr.rel (%p504) target = $region80
    $region79: #{discriminator_forward.1} parent=5 // pred_region
      // Predicated region
      $region81: #{discriminator_forward.1} parent=79 // pred_check
        %p507 = pneg %p46
      $region82: #{discriminator_forward.1} parent=79 // pred_check_branch
        %509 = sbr.rel (%p507) target = $region84
      $region83: #{discriminator_forward.1} parent=79 // pred_region
        %s510 = smul.u32 64, %s26
        %p511 = scmp.lt.s32.totalorder %s510, 127
        %s512 = scalar_select %p511, %s510, 127
        %s513 = smul.addr %s512, 4
        %s514 = scalar_lea.vmem %s0, %s513
        %s515 = smul.u32 64, %s26
      $region84: #{discriminator_forward.1} parent=79 // pred_fallthru
        _
      // Predicated region
      $region85: #{discriminator_forward.1} parent=79 // pred_check
        %p516 = pneg %p72
      $region86: #{discriminator_forward.1} parent=79 // pred_check_branch
        %518 = sbr.rel (%p516) target = $region88
      $region87: #{discriminator_forward.1} parent=79 // pred_region
        %s519 = smul.u32 16, %s26
        %p520 = scmp.lt.s32.totalorder %s519, 31
        %s521 = scalar_select %p520, %s519, 31
        %s522 = smul.addr %s521, 4
        %s523 = scalar_lea.vmem %s1, %s522
        %s524 = smul.u32 16, %s26
      $region88: #{discriminator_forward.1} parent=79 // pred_fallthru
        _
    $region80: #{discriminator_forward.1} parent=5 // pred_fallthru
      _
    %p525 = scmp.le.s32.totalorder 1, %s26
    %p526 = scmp.lt.s32.totalorder %s26, 3
    %p527 = pnand %p525, %p526
    %p528 = pneg %p527
    // Predicated region
    $region89: #{discriminator_forward.1} parent=5 // pred_check
      _
    $region90: #{discriminator_forward.1} parent=5 // pred_check_branch
      %530 = sbr.rel (%p527) target = $region92
    $region91: #{discriminator_forward.1} parent=5 // pred_region
      %s531 = ssub.s32 %s26, 1
      %s532 = smul.u32 64, %s31
      %p533 = scmp.lt.s32.totalorder %s532, 127
      %s534 = scalar_select %p533, %s532, 127
      %s535 = smul.addr %s534, 4
      %s536 = scalar_lea.vmem %s0, %s535
      %p537 = pneg %p52
      %p538 = pneg %p49
      %s539 = smul.u32 16, %s31
      %p540 = scmp.lt.s32.totalorder %s539, 31
      %s541 = scalar_select %p540, %s539, 31
      %s542 = smul.addr %s541, 4
      %s543 = scalar_lea.vmem %s1, %s542
      %p544 = pneg %p78
      %p545 = pneg %p75
      %p546 = pneg %p99
      %p547 = pneg %p96
      %p548 = pneg %p120
      %p549 = pneg %p117
      %p550 = pneg %p141
      %p551 = pneg %p138
      %p552 = pneg %p162
      %p553 = pneg %p159
      %p554 = pneg %p183
      %p555 = pneg %p180
      %p556 = pneg %p204
      %p557 = pneg %p201
      %p558 = pneg %p225
      %p559 = pneg %p222
      %p560 = pneg %p246
      %p561 = pneg %p243
      %p562 = pneg %p267
      %p563 = pneg %p264
      %p564 = pneg %p288
      %p565 = pneg %p285
      %p566 = pneg %p309
      %p567 = pneg %p306
      %p568 = pneg %p330
      %p569 = pneg %p327
      %p570 = pneg %p351
      %p571 = pneg %p348
      %p572 = pneg %p372
      %p573 = pneg %p369
      %p574 = pneg %p393
      %p575 = pneg %p390
      %p576 = pneg %p414
      %p577 = pneg %p411
      %p578 = pneg %p440
      %p579 = pneg %p437
      %p580 = scmp.lt.s32.totalorder %s31, 1
      %s581 = scalar_select %p580, %s31, 1
      %s582 = scalar_lea.vmem %s18, %s581
      %s583 = smul.u32 64, %s31
      %p584 = scmp.lt.s32.totalorder %s583, 127
      %s585 = scalar_select %p584, %s583, 127
      %s586 = smul.addr %s585, 4
      %s587 = scalar_lea.vmem %s0, %s586
      %s588 = smul.u32 64, %s31
      %s589 = smul.u32 16, %s31
      %p590 = scmp.lt.s32.totalorder %s589, 31
      %s591 = scalar_select %p590, %s589, 31
      %s592 = smul.addr %s591, 4
      %s593 = scalar_lea.vmem %s1, %s592
      %s594 = smul.u32 16, %s31
      %p595 = scmp.lt.s32.totalorder %s31, 1
      %s596 = scalar_select %p595, %s31, 1
      %s597 = scalar_lea.vmem %s18, %s596
      %v599 = vld [vmem:[%s587] sm:$0xf]
      %v600 = vld [vmem:[%s587 + $0x4] sm:$0xf]
      %v601 = vld [vmem:[%s587 + $0x8] sm:$0xf]
      %v602 = vld [vmem:[%s587 + $0xc] sm:$0xf]
      %v603 = vld [vmem:[%s587 + $0x10] sm:$0xf]
      %v604 = vld [vmem:[%s587 + $0x14] sm:$0xf]
      %v605 = vld [vmem:[%s587 + $0x18] sm:$0xf]
      %v606 = vld [vmem:[%s587 + $0x1c] sm:$0xf]
      %v607 = vld [vmem:[%s587 + $0x20] sm:$0xf]
      %v608 = vld [vmem:[%s587 + $0x24] sm:$0xf]
      %v609 = vld [vmem:[%s587 + $0x28] sm:$0xf]
      %v610 = vld [vmem:[%s587 + $0x2c] sm:$0xf]
      %v611 = vld [vmem:[%s587 + $0x30] sm:$0xf]
      %v612 = vld [vmem:[%s587 + $0x34] sm:$0xf]
      %v613 = vld [vmem:[%s587 + $0x38] sm:$0xf]
      %v614 = vld [vmem:[%s587 + $0x3c] sm:$0xf]
      %v615 = vld [vmem:[%s587 + $0x40] sm:$0xf]
      %v616 = vld [vmem:[%s587 + $0x44] sm:$0xf]
      %v617 = vld [vmem:[%s587 + $0x48] sm:$0xf]
      %v618 = vld [vmem:[%s587 + $0x4c] sm:$0xf]
      %v619 = vld [vmem:[%s587 + $0x50] sm:$0xf]
      %v620 = vld [vmem:[%s587 + $0x54] sm:$0xf]
      %v621 = vld [vmem:[%s587 + $0x58] sm:$0xf]
      %v622 = vld [vmem:[%s587 + $0x5c] sm:$0xf]
      %v623 = vld [vmem:[%s587 + $0x60] sm:$0xf]
      %v624 = vld [vmem:[%s587 + $0x64] sm:$0xf]
      %v625 = vld [vmem:[%s587 + $0x68] sm:$0xf]
      %v626 = vld [vmem:[%s587 + $0x6c] sm:$0xf]
      %v627 = vld [vmem:[%s587 + $0x70] sm:$0xf]
      %v628 = vld [vmem:[%s587 + $0x74] sm:$0xf]
      %v629 = vld [vmem:[%s587 + $0x78] sm:$0xf]
      %v630 = vld [vmem:[%s587 + $0x7c] sm:$0xf]
      %v631 = vld [vmem:[%s587 + $0x80] sm:$0xf]
      %v632 = vld [vmem:[%s587 + $0x84] sm:$0xf]
      %v633 = vld [vmem:[%s587 + $0x88] sm:$0xf]
      %v634 = vld [vmem:[%s587 + $0x8c] sm:$0xf]
      %v635 = vld [vmem:[%s587 + $0x90] sm:$0xf]
      %v636 = vld [vmem:[%s587 + $0x94] sm:$0xf]
      %v637 = vld [vmem:[%s587 + $0x98] sm:$0xf]
      %v638 = vld [vmem:[%s587 + $0x9c] sm:$0xf]
      %v639 = vld [vmem:[%s587 + $0xa0] sm:$0xf]
      %v640 = vld [vmem:[%s587 + $0xa4] sm:$0xf]
      %v641 = vld [vmem:[%s587 + $0xa8] sm:$0xf]
      %v642 = vld [vmem:[%s587 + $0xac] sm:$0xf]
      %v643 = vld [vmem:[%s587 + $0xb0] sm:$0xf]
      %v644 = vld [vmem:[%s587 + $0xb4] sm:$0xf]
      %v645 = vld [vmem:[%s587 + $0xb8] sm:$0xf]
      %v646 = vld [vmem:[%s587 + $0xbc] sm:$0xf]
      %v647 = vld [vmem:[%s587 + $0xc0] sm:$0xf]
      %v648 = vld [vmem:[%s587 + $0xc4] sm:$0xf]
      %v649 = vld [vmem:[%s587 + $0xc8] sm:$0xf]
      %v650 = vld [vmem:[%s587 + $0xcc] sm:$0xf]
      %v651 = vld [vmem:[%s587 + $0xd0] sm:$0xf]
      %v652 = vld [vmem:[%s587 + $0xd4] sm:$0xf]
      %v653 = vld [vmem:[%s587 + $0xd8] sm:$0xf]
      %v654 = vld [vmem:[%s587 + $0xdc] sm:$0xf]
      %v655 = vld [vmem:[%s587 + $0xe0] sm:$0xf]
      %v656 = vld [vmem:[%s587 + $0xe4] sm:$0xf]
      %v657 = vld [vmem:[%s587 + $0xe8] sm:$0xf]
      %v658 = vld [vmem:[%s587 + $0xec] sm:$0xf]
      %v659 = vld [vmem:[%s587 + $0xf0] sm:$0xf]
      %v660 = vld [vmem:[%s587 + $0xf4] sm:$0xf]
      %v661 = vld [vmem:[%s587 + $0xf8] sm:$0xf]
      %v662 = vld [vmem:[%s587 + $0xfc] sm:$0xf]
      %v663 = vld [vmem:[%s4] sm:$0xf]
      %v664 = vld [vmem:[%s4 + $0x4] sm:$0xf]
      %v665 = vld [vmem:[%s4 + $0x8] sm:$0xf]
      %v666 = vld [vmem:[%s4 + $0xc] sm:$0xf]
      %v731 = vunpack.c.l.b16 %v599
      %v732 = vunpack.c.l.b16 %v600
      %v733 = vunpack.c.l.b16 %v601
      %v734 = vunpack.c.l.b16 %v602
      %v735 = vunpack.c.l.b16 %v603
      %v736 = vunpack.c.l.b16 %v604
      %v737 = vunpack.c.l.b16 %v605
      %v738 = vunpack.c.l.b16 %v606
      %v739 = vunpack.c.l.b16 %v607
      %v740 = vunpack.c.l.b16 %v608
      %v741 = vunpack.c.l.b16 %v609
      %v742 = vunpack.c.l.b16 %v610
      %v743 = vunpack.c.l.b16 %v611
      %v744 = vunpack.c.l.b16 %v612
      %v745 = vunpack.c.l.b16 %v613
      %v746 = vunpack.c.l.b16 %v614
      %v747 = vunpack.c.l.b16 %v615
      %v748 = vunpack.c.l.b16 %v616
      %v749 = vunpack.c.l.b16 %v617
      %v750 = vunpack.c.l.b16 %v618
      %v751 = vunpack.c.l.b16 %v619
      %v752 = vunpack.c.l.b16 %v620
      %v753 = vunpack.c.l.b16 %v621
      %v754 = vunpack.c.l.b16 %v622
      %v755 = vunpack.c.l.b16 %v623
      %v756 = vunpack.c.l.b16 %v624
      %v757 = vunpack.c.l.b16 %v625
      %v758 = vunpack.c.l.b16 %v626
      %v759 = vunpack.c.l.b16 %v627
      %v760 = vunpack.c.l.b16 %v628
      %v761 = vunpack.c.l.b16 %v629
      %v762 = vunpack.c.l.b16 %v630
      %v763 = vunpack.c.l.b16 %v631
      %v764 = vunpack.c.l.b16 %v632
      %v765 = vunpack.c.l.b16 %v633
      %v766 = vunpack.c.l.b16 %v634
      %v767 = vunpack.c.l.b16 %v635
      %v768 = vunpack.c.l.b16 %v636
      %v769 = vunpack.c.l.b16 %v637
      %v770 = vunpack.c.l.b16 %v638
      %v771 = vunpack.c.l.b16 %v639
      %v772 = vunpack.c.l.b16 %v640
      %v773 = vunpack.c.l.b16 %v641
      %v774 = vunpack.c.l.b16 %v642
      %v775 = vunpack.c.l.b16 %v643
      %v776 = vunpack.c.l.b16 %v644
      %v777 = vunpack.c.l.b16 %v645
      %v778 = vunpack.c.l.b16 %v646
      %v779 = vunpack.c.l.b16 %v647
      %v780 = vunpack.c.l.b16 %v648
      %v781 = vunpack.c.l.b16 %v649
      %v782 = vunpack.c.l.b16 %v650
      %v783 = vunpack.c.l.b16 %v651
      %v784 = vunpack.c.l.b16 %v652
      %v785 = vunpack.c.l.b16 %v653
      %v786 = vunpack.c.l.b16 %v654
      %v787 = vunpack.c.l.b16 %v655
      %v788 = vunpack.c.l.b16 %v656
      %v789 = vunpack.c.l.b16 %v657
      %v790 = vunpack.c.l.b16 %v658
      %v791 = vunpack.c.l.b16 %v659
      %v792 = vunpack.c.l.b16 %v660
      %v793 = vunpack.c.l.b16 %v661
      %v794 = vunpack.c.l.b16 %v662
      %v795 = vpack.c.b16 %v732, %v731
      %v796 = vpack.c.b16 %v734, %v733
      %v797 = vpack.c.b16 %v736, %v735
      %v798 = vpack.c.b16 %v738, %v737
      %v799 = vpack.c.b16 %v740, %v739
      %v800 = vpack.c.b16 %v742, %v741
      %v801 = vpack.c.b16 %v744, %v743
      %v802 = vpack.c.b16 %v746, %v745
      %v803 = vpack.c.b16 %v748, %v747
      %v804 = vpack.c.b16 %v750, %v749
      %v805 = vpack.c.b16 %v752, %v751
      %v806 = vpack.c.b16 %v754, %v753
      %v807 = vpack.c.b16 %v756, %v755
      %v808 = vpack.c.b16 %v758, %v757
      %v809 = vpack.c.b16 %v760, %v759
      %v810 = vpack.c.b16 %v762, %v761
      %v811 = vpack.c.b16 %v764, %v763
      %v812 = vpack.c.b16 %v766, %v765
      %v813 = vpack.c.b16 %v768, %v767
      %v814 = vpack.c.b16 %v770, %v769
      %v815 = vpack.c.b16 %v772, %v771
      %v816 = vpack.c.b16 %v774, %v773
      %v817 = vpack.c.b16 %v776, %v775
      %v818 = vpack.c.b16 %v778, %v777
      %v819 = vpack.c.b16 %v780, %v779
      %v820 = vpack.c.b16 %v782, %v781
      %v821 = vpack.c.b16 %v784, %v783
      %v822 = vpack.c.b16 %v786, %v785
      %v823 = vpack.c.b16 %v788, %v787
      %v824 = vpack.c.b16 %v790, %v789
      %v825 = vpack.c.b16 %v792, %v791
      %v826 = vpack.c.b16 %v794, %v793
      %v831 = vunpack.c.l.b16 %v663
      %v832 = vunpack.c.l.b16 %v664
      %v833 = vunpack.c.l.b16 %v665
      %v834 = vunpack.c.l.b16 %v666
      %v835 = vpack.c.b16 %v832, %v831
      %v836 = vpack.c.b16 %v834, %v833
      %vm839 = vcmask 261120
      %v841 = vsel %vm839, %v795, 0
      %v844 = vsel %vm839, %v796, 0
      %v847 = vsel %vm839, %v797, 0
      %v850 = vsel %vm839, %v798, 0
      %v853 = vsel %vm839, %v799, 0
      %v856 = vsel %vm839, %v800, 0
      %v859 = vsel %vm839, %v801, 0
      %v862 = vsel %vm839, %v802, 0
      %v865 = vsel %vm839, %v803, 0
      %v868 = vsel %vm839, %v804, 0
      %v871 = vsel %vm839, %v805, 0
      %v874 = vsel %vm839, %v806, 0
      %v877 = vsel %vm839, %v807, 0
      %v880 = vsel %vm839, %v808, 0
      %v883 = vsel %vm839, %v809, 0
      %v886 = vsel %vm839, %v810, 0
      %v889 = vsel %vm839, %v811, 0
      %v892 = vsel %vm839, %v812, 0
      %v895 = vsel %vm839, %v813, 0
      %v898 = vsel %vm839, %v814, 0
      %v901 = vsel %vm839, %v815, 0
      %v904 = vsel %vm839, %v816, 0
      %v907 = vsel %vm839, %v817, 0
      %v910 = vsel %vm839, %v818, 0
      %v913 = vsel %vm839, %v819, 0
      %v916 = vsel %vm839, %v820, 0
      %v919 = vsel %vm839, %v821, 0
      %v922 = vsel %vm839, %v822, 0
      %v925 = vsel %vm839, %v823, 0
      %v928 = vsel %vm839, %v824, 0
      %v931 = vsel %vm839, %v825, 0
      %v934 = vsel %vm839, %v826, 0
      %936 = vmatprep.subr.bf16.mxu0 0
      %937 = vmatpush1.bf16.msra.mxu0 %v835
      %938 = vmatprep.subr.bf16.mxu0 0
      %939 = vmatpush1.bf16.msra.mxu0 %v836
      %940 = vmatprep.subr.bf16.mxu0 0
      %941 = vmatpush1.bf16.msra.mxu0 0
      %942 = vmatprep.subr.bf16.mxu0 0
      %943 = vmatpush1.bf16.msra.mxu0 0
      %944 = vmatprep.subr.bf16.mxu0 0
      %945 = vmatpush1.bf16.msra.mxu0 0
      %946 = vmatprep.subr.bf16.mxu0 0
      %947 = vmatpush1.bf16.msra.mxu0 0
      %948 = vmatprep.subr.bf16.mxu0 0
      %949 = vmatpush1.bf16.msra.mxu0 0
      %950 = vmatprep.subr.bf16.mxu0 0
      %951 = vmatpush1.bf16.msra.mxu0 0
      %952 = vmatprep.subr.bf16.mxu0 0
      %953 = vmatpush1.bf16.msra.mxu0 0
      %954 = vmatprep.subr.bf16.mxu0 0
      %955 = vmatpush1.bf16.msra.mxu0 0
      %956 = vmatprep.subr.bf16.mxu0 0
      %957 = vmatpush1.bf16.msra.mxu0 0
      %958 = vmatprep.subr.bf16.mxu0 0
      %959 = vmatpush1.bf16.msra.mxu0 0
      %960 = vmatprep.subr.bf16.mxu0 0
      %961 = vmatpush1.bf16.msra.mxu0 0
      %962 = vmatprep.subr.bf16.mxu0 0
      %963 = vmatpush1.bf16.msra.mxu0 0
      %964 = vmatprep.subr.bf16.mxu0 0
      %965 = vmatpush1.bf16.msra.mxu0 0
      %966 = vmatprep.subr.bf16.mxu0 0
      %967 = vmatpush1.bf16.msra.mxu0 0
      %968 = vmatprep.mubr.bf16.mxu0 0
      %969 = vmatmul.mubr.bf16.gmra.mrb[0].mxu0 %v841
      %v970 = vpop.f32.mrb[0].mxu0
      %v971 = vadd.f32 0.0, %v970
      %v972 = vpop.f32.mrb[0].mxu0
      %v973 = vpop.f32.mrb[0].mxu0
      %v974 = vadd.f32 0.0, %v973
      %v975 = vpop.f32.mrb[0].mxu0
      %976 = vmatprep.mubr.bf16.mxu0 0
      %977 = vmatmul.mubr.bf16.gmra.mrb[0].mxu0 %v844
      %v978 = vpop.f32.mrb[0].mxu0
      %v979 = vadd.f32 0.0, %v978
      %v980 = vpop.f32.mrb[0].mxu0
      %v981 = vpop.f32.mrb[0].mxu0
      %v982 = vadd.f32 0.0, %v981
      %v983 = vpop.f32.mrb[0].mxu0
      %984 = vmatprep.mubr.bf16.mxu0 0
      %985 = vmatmul.mubr.bf16.gmra.mrb[0].mxu0 %v847
      %v986 = vpop.f32.mrb[0].mxu0
      %v987 = vadd.f32 0.0, %v986
      %v988 = vpop.f32.mrb[0].mxu0
      %v989 = vpop.f32.mrb[0].mxu0
      %v990 = vadd.f32 0.0, %v989
      %v991 = vpop.f32.mrb[0].mxu0
      %992 = vmatprep.mubr.bf16.mxu0 0
      %993 = vmatmul.mubr.bf16.gmra.mrb[0].mxu0 %v850
      %v994 = vpop.f32.mrb[0].mxu0
      %v995 = vadd.f32 0.0, %v994
      %v996 = vpop.f32.mrb[0].mxu0
      %v997 = vpop.f32.mrb[0].mxu0
      %v998 = vadd.f32 0.0, %v997
      %v999 = vpop.f32.mrb[0].mxu0
      %1000 = vmatprep.mubr.bf16.mxu0 0
      %1001 = vmatmul.mubr.bf16.gmra.mrb[0].mxu0 %v853
      %v1002 = vpop.f32.mrb[0].mxu0
      %v1003 = vadd.f32 0.0, %v1002
      %v1004 = vpop.f32.mrb[0].mxu0
      %v1005 = vpop.f32.mrb[0].mxu0
      %v1006 = vadd.f32 0.0, %v1005
      %v1007 = vpop.f32.mrb[0].mxu0
      %1008 = vmatprep.mubr.bf16.mxu0 0
      %1009 = vmatmul.mubr.bf16.gmra.mrb[0].mxu0 %v856
      %v1010 = vpop.f32.mrb[0].mxu0
      %v1011 = vadd.f32 0.0, %v1010
      %v1012 = vpop.f32.mrb[0].mxu0
      %v1013 = vpop.f32.mrb[0].mxu0
      %v1014 = vadd.f32 0.0, %v1013
      %v1015 = vpop.f32.mrb[0].mxu0
      %1016 = vmatprep.mubr.bf16.mxu0 0
      %1017 = vmatmul.mubr.bf16.gmra.mrb[0].mxu0 %v859
      %v1018 = vpop.f32.mrb[0].mxu0
      %v1019 = vadd.f32 0.0, %v1018
      %v1020 = vpop.f32.mrb[0].mxu0
      %v1021 = vpop.f32.mrb[0].mxu0
      %v1022 = vadd.f32 0.0, %v1021
      %v1023 = vpop.f32.mrb[0].mxu0
      %1024 = vmatprep.mubr.bf16.mxu0 0
      %1025 = vmatmul.mubr.bf16.gmra.mrb[0].mxu0 %v862
      %v1026 = vpop.f32.mrb[0].mxu0
      %v1027 = vadd.f32 0.0, %v1026
      %v1028 = vpop.f32.mrb[0].mxu0
      %v1029 = vpop.f32.mrb[0].mxu0
      %v1030 = vadd.f32 0.0, %v1029
      %v1031 = vpop.f32.mrb[0].mxu0
      %1032 = vmatprep.mubr.bf16.mxu0 0
      %1033 = vmatmul.mubr.bf16.gmra.mrb[0].mxu0 %v865
      %v1034 = vpop.f32.mrb[0].mxu0
      %v1035 = vadd.f32 0.0, %v1034
      %v1036 = vpop.f32.mrb[0].mxu0
      %v1037 = vpop.f32.mrb[0].mxu0
      %v1038 = vadd.f32 0.0, %v1037
      %v1039 = vpop.f32.mrb[0].mxu0
      %1040 = vmatprep.mubr.bf16.mxu0 0
      %1041 = vmatmul.mubr.bf16.gmra.mrb[0].mxu0 %v868
      %v1042 = vpop.f32.mrb[0].mxu0
      %v1043 = vadd.f32 0.0, %v1042
      %v1044 = vpop.f32.mrb[0].mxu0
      %v1045 = vpop.f32.mrb[0].mxu0
      %v1046 = vadd.f32 0.0, %v1045
      %v1047 = vpop.f32.mrb[0].mxu0
      %1048 = vmatprep.mubr.bf16.mxu0 0
      %1049 = vmatmul.mubr.bf16.gmra.mrb[0].mxu0 %v871
      %v1050 = vpop.f32.mrb[0].mxu0
      %v1051 = vadd.f32 0.0, %v1050
      %v1052 = vpop.f32.mrb[0].mxu0
      %v1053 = vpop.f32.mrb[0].mxu0
      %v1054 = vadd.f32 0.0, %v1053
      %v1055 = vpop.f32.mrb[0].mxu0
      %1056 = vmatprep.mubr.bf16.mxu0 0
      %1057 = vmatmul.mubr.bf16.gmra.mrb[0].mxu0 %v874
      %v1058 = vpop.f32.mrb[0].mxu0
      %v1059 = vadd.f32 0.0, %v1058
      %v1060 = vpop.f32.mrb[0].mxu0
      %v1061 = vpop.f32.mrb[0].mxu0
      %v1062 = vadd.f32 0.0, %v1061
      %v1063 = vpop.f32.mrb[0].mxu0
      %1064 = vmatprep.mubr.bf16.mxu0 0
      %1065 = vmatmul.mubr.bf16.gmra.mrb[0].mxu0 %v877
      %v1066 = vpop.f32.mrb[0].mxu0
      %v1067 = vadd.f32 0.0, %v1066
      %v1068 = vpop.f32.mrb[0].mxu0
      %v1069 = vpop.f32.mrb[0].mxu0
      %v1070 = vadd.f32 0.0, %v1069
      %v1071 = vpop.f32.mrb[0].mxu0
      %1072 = vmatprep.mubr.bf16.mxu0 0
      %1073 = vmatmul.mubr.bf16.gmra.mrb[0].mxu0 %v880
      %v1074 = vpop.f32.mrb[0].mxu0
      %v1075 = vadd.f32 0.0, %v1074
      %v1076 = vpop.f32.mrb[0].mxu0
      %v1077 = vpop.f32.mrb[0].mxu0
      %v1078 = vadd.f32 0.0, %v1077
      %v1079 = vpop.f32.mrb[0].mxu0
      %1080 = vmatprep.mubr.bf16.mxu0 0
      %1081 = vmatmul.mubr.bf16.gmra.mrb[0].mxu0 %v883
      %v1082 = vpop.f32.mrb[0].mxu0
      %v1083 = vadd.f32 0.0, %v1082
      %v1084 = vpop.f32.mrb[0].mxu0
      %v1085 = vpop.f32.mrb[0].mxu0
      %v1086 = vadd.f32 0.0, %v1085
      %v1087 = vpop.f32.mrb[0].mxu0
      %1088 = vmatprep.mubr.bf16.mxu0 0
      %1089 = vmatmul.mubr.bf16.gmra.mrb[0].mxu0 %v886
      %v1090 = vpop.f32.mrb[0].mxu0
      %v1091 = vadd.f32 0.0, %v1090
      %v1092 = vpop.f32.mrb[0].mxu0
      %v1093 = vpop.f32.mrb[0].mxu0
      %v1094 = vadd.f32 0.0, %v1093
      %v1095 = vpop.f32.mrb[0].mxu0
      %1096 = vmatprep.mubr.bf16.mxu0 0
      %1097 = vmatmul.mubr.bf16.gmra.mrb[0].mxu0 %v889
      %v1098 = vpop.f32.mrb[0].mxu0
      %v1099 = vadd.f32 0.0, %v1098
      %v1100 = vpop.f32.mrb[0].mxu0
      %v1101 = vpop.f32.mrb[0].mxu0
      %v1102 = vadd.f32 0.0, %v1101
      %v1103 = vpop.f32.mrb[0].mxu0
      %1104 = vmatprep.mubr.bf16.mxu0 0
      %1105 = vmatmul.mubr.bf16.gmra.mrb[0].mxu0 %v892
      %v1106 = vpop.f32.mrb[0].mxu0
      %v1107 = vadd.f32 0.0, %v1106
      %v1108 = vpop.f32.mrb[0].mxu0
      %v1109 = vpop.f32.mrb[0].mxu0
      %v1110 = vadd.f32 0.0, %v1109
      %v1111 = vpop.f32.mrb[0].mxu0
      %1112 = vmatprep.mubr.bf16.mxu0 0
      %1113 = vmatmul.mubr.bf16.gmra.mrb[0].mxu0 %v895
      %v1114 = vpop.f32.mrb[0].mxu0
      %v1115 = vadd.f32 0.0, %v1114
      %v1116 = vpop.f32.mrb[0].mxu0
      %v1117 = vpop.f32.mrb[0].mxu0
      %v1118 = vadd.f32 0.0, %v1117
      %v1119 = vpop.f32.mrb[0].mxu0
      %1120 = vmatprep.mubr.bf16.mxu0 0
      %1121 = vmatmul.mubr.bf16.gmra.mrb[0].mxu0 %v898
      %v1122 = vpop.f32.mrb[0].mxu0
      %v1123 = vadd.f32 0.0, %v1122
      %v1124 = vpop.f32.mrb[0].mxu0
      %v1125 = vpop.f32.mrb[0].mxu0
      %v1126 = vadd.f32 0.0, %v1125
      %v1127 = vpop.f32.mrb[0].mxu0
      %1128 = vmatprep.mubr.bf16.mxu0 0
      %1129 = vmatmul.mubr.bf16.gmra.mrb[0].mxu0 %v901
      %v1130 = vpop.f32.mrb[0].mxu0
      %v1131 = vadd.f32 0.0, %v1130
      %v1132 = vpop.f32.mrb[0].mxu0
      %v1133 = vpop.f32.mrb[0].mxu0
      %v1134 = vadd.f32 0.0, %v1133
      %v1135 = vpop.f32.mrb[0].mxu0
      %1136 = vmatprep.mubr.bf16.mxu0 0
      %1137 = vmatmul.mubr.bf16.gmra.mrb[0].mxu0 %v904
      %v1138 = vpop.f32.mrb[0].mxu0
      %v1139 = vadd.f32 0.0, %v1138
      %v1140 = vpop.f32.mrb[0].mxu0
      %v1141 = vpop.f32.mrb[0].mxu0
      %v1142 = vadd.f32 0.0, %v1141
      %v1143 = vpop.f32.mrb[0].mxu0
      %1144 = vmatprep.mubr.bf16.mxu0 0
      %1145 = vmatmul.mubr.bf16.gmra.mrb[0].mxu0 %v907
      %v1146 = vpop.f32.mrb[0].mxu0
      %v1147 = vadd.f32 0.0, %v1146
      %v1148 = vpop.f32.mrb[0].mxu0
      %v1149 = vpop.f32.mrb[0].mxu0
      %v1150 = vadd.f32 0.0, %v1149
      %v1151 = vpop.f32.mrb[0].mxu0
      %1152 = vmatprep.mubr.bf16.mxu0 0
      %1153 = vmatmul.mubr.bf16.gmra.mrb[0].mxu0 %v910
      %v1154 = vpop.f32.mrb[0].mxu0
      %v1155 = vadd.f32 0.0, %v1154
      %v1156 = vpop.f32.mrb[0].mxu0
      %v1157 = vpop.f32.mrb[0].mxu0
      %v1158 = vadd.f32 0.0, %v1157
      %v1159 = vpop.f32.mrb[0].mxu0
      %1160 = vmatprep.mubr.bf16.mxu0 0
      %1161 = vmatmul.mubr.bf16.gmra.mrb[0].mxu0 %v913
      %v1162 = vpop.f32.mrb[0].mxu0
      %v1163 = vadd.f32 0.0, %v1162
      %v1164 = vpop.f32.mrb[0].mxu0
      %v1165 = vpop.f32.mrb[0].mxu0
      %v1166 = vadd.f32 0.0, %v1165
      %v1167 = vpop.f32.mrb[0].mxu0
      %1168 = vmatprep.mubr.bf16.mxu0 0
      %1169 = vmatmul.mubr.bf16.gmra.mrb[0].mxu0 %v916
      %v1170 = vpop.f32.mrb[0].mxu0
      %v1171 = vadd.f32 0.0, %v1170
      %v1172 = vpop.f32.mrb[0].mxu0
      %v1173 = vpop.f32.mrb[0].mxu0
      %v1174 = vadd.f32 0.0, %v1173
      %v1175 = vpop.f32.mrb[0].mxu0
      %1176 = vmatprep.mubr.bf16.mxu0 0
      %1177 = vmatmul.mubr.bf16.gmra.mrb[0].mxu0 %v919
      %v1178 = vpop.f32.mrb[0].mxu0
      %v1179 = vadd.f32 0.0, %v1178
      %v1180 = vpop.f32.mrb[0].mxu0
      %v1181 = vpop.f32.mrb[0].mxu0
      %v1182 = vadd.f32 0.0, %v1181
      %v1183 = vpop.f32.mrb[0].mxu0
      %1184 = vmatprep.mubr.bf16.mxu0 0
      %1185 = vmatmul.mubr.bf16.gmra.mrb[0].mxu0 %v922
      %v1186 = vpop.f32.mrb[0].mxu0
      %v1187 = vadd.f32 0.0, %v1186
      %v1188 = vpop.f32.mrb[0].mxu0
      %v1189 = vpop.f32.mrb[0].mxu0
      %v1190 = vadd.f32 0.0, %v1189
      %v1191 = vpop.f32.mrb[0].mxu0
      %1192 = vmatprep.mubr.bf16.mxu0 0
      %1193 = vmatmul.mubr.bf16.gmra.mrb[0].mxu0 %v925
      %v1194 = vpop.f32.mrb[0].mxu0
      %v1195 = vadd.f32 0.0, %v1194
      %v1196 = vpop.f32.mrb[0].mxu0
      %v1197 = vpop.f32.mrb[0].mxu0
      %v1198 = vadd.f32 0.0, %v1197
      %v1199 = vpop.f32.mrb[0].mxu0
      %1200 = vmatprep.mubr.bf16.mxu0 0
      %1201 = vmatmul.mubr.bf16.gmra.mrb[0].mxu0 %v928
      %v1202 = vpop.f32.mrb[0].mxu0
      %v1203 = vadd.f32 0.0, %v1202
      %v1204 = vpop.f32.mrb[0].mxu0
      %v1205 = vpop.f32.mrb[0].mxu0
      %v1206 = vadd.f32 0.0, %v1205
      %v1207 = vpop.f32.mrb[0].mxu0
      %1208 = vmatprep.mubr.bf16.mxu0 0
      %1209 = vmatmul.mubr.bf16.gmra.mrb[0].mxu0 %v931
      %v1210 = vpop.f32.mrb[0].mxu0
      %v1211 = vadd.f32 0.0, %v1210
      %v1212 = vpop.f32.mrb[0].mxu0
      %v1213 = vpop.f32.mrb[0].mxu0
      %v1214 = vadd.f32 0.0, %v1213
      %v1215 = vpop.f32.mrb[0].mxu0
      %1216 = vmatprep.mubr.bf16.mxu0 0
      %1217 = vmatmul.mubr.bf16.gmra.mrb[0].mxu0 %v934
      %v1218 = vpop.f32.mrb[0].mxu0
      %v1219 = vadd.f32 0.0, %v1218
      %v1220 = vpop.f32.mrb[0].mxu0
      %v1221 = vpop.f32.mrb[0].mxu0
      %v1222 = vadd.f32 0.0, %v1221
      %v1223 = vpop.f32.mrb[0].mxu0
      %1224 = vdwg.mxu0
      %v1225 = vld [vmem:[%s5] sm:$0x1]
      %v1227 = vlaneseq
      %v1228 = vshrl.u32 %v1227, 7
      %v1229 = vsub.s32 0, %v1228
      %v1230 = vrot.slane %v1225, %v1229
      %v1232 = vadd.f32 %v971, %v1230
      %v1233 = vadd.f32 %v974, %v1230
      %v1234 = vadd.f32 %v979, %v1230
      %v1235 = vadd.f32 %v982, %v1230
      %v1236 = vadd.f32 %v987, %v1230
      %v1237 = vadd.f32 %v990, %v1230
      %v1238 = vadd.f32 %v995, %v1230
      %v1239 = vadd.f32 %v998, %v1230
      %v1240 = vadd.f32 %v1003, %v1230
      %v1241 = vadd.f32 %v1006, %v1230
      %v1242 = vadd.f32 %v1011, %v1230
      %v1243 = vadd.f32 %v1014, %v1230
      %v1244 = vadd.f32 %v1019, %v1230
      %v1245 = vadd.f32 %v1022, %v1230
      %v1246 = vadd.f32 %v1027, %v1230
      %v1247 = vadd.f32 %v1030, %v1230
      %v1248 = vadd.f32 %v1035, %v1230
      %v1249 = vadd.f32 %v1038, %v1230
      %v1250 = vadd.f32 %v1043, %v1230
      %v1251 = vadd.f32 %v1046, %v1230
      %v1252 = vadd.f32 %v1051, %v1230
      %v1253 = vadd.f32 %v1054, %v1230
      %v1254 = vadd.f32 %v1059, %v1230
      %v1255 = vadd.f32 %v1062, %v1230
      %v1256 = vadd.f32 %v1067, %v1230
      %v1257 = vadd.f32 %v1070, %v1230
      %v1258 = vadd.f32 %v1075, %v1230
      %v1259 = vadd.f32 %v1078, %v1230
      %v1260 = vadd.f32 %v1083, %v1230
      %v1261 = vadd.f32 %v1086, %v1230
      %v1262 = vadd.f32 %v1091, %v1230
      %v1263 = vadd.f32 %v1094, %v1230
      %v1264 = vadd.f32 %v1099, %v1230
      %v1265 = vadd.f32 %v1102, %v1230
      %v1266 = vadd.f32 %v1107, %v1230
      %v1267 = vadd.f32 %v1110, %v1230
      %v1268 = vadd.f32 %v1115, %v1230
      %v1269 = vadd.f32 %v1118, %v1230
      %v1270 = vadd.f32 %v1123, %v1230
      %v1271 = vadd.f32 %v1126, %v1230
      %v1272 = vadd.f32 %v1131, %v1230
      %v1273 = vadd.f32 %v1134, %v1230
      %v1274 = vadd.f32 %v1139, %v1230
      %v1275 = vadd.f32 %v1142, %v1230
      %v1276 = vadd.f32 %v1147, %v1230
      %v1277 = vadd.f32 %v1150, %v1230
      %v1278 = vadd.f32 %v1155, %v1230
      %v1279 = vadd.f32 %v1158, %v1230
      %v1280 = vadd.f32 %v1163, %v1230
      %v1281 = vadd.f32 %v1166, %v1230
      %v1282 = vadd.f32 %v1171, %v1230
      %v1283 = vadd.f32 %v1174, %v1230
      %v1284 = vadd.f32 %v1179, %v1230
      %v1285 = vadd.f32 %v1182, %v1230
      %v1286 = vadd.f32 %v1187, %v1230
      %v1287 = vadd.f32 %v1190, %v1230
      %v1288 = vadd.f32 %v1195, %v1230
      %v1289 = vadd.f32 %v1198, %v1230
      %v1290 = vadd.f32 %v1203, %v1230
      %v1291 = vadd.f32 %v1206, %v1230
      %v1292 = vadd.f32 %v1211, %v1230
      %v1293 = vadd.f32 %v1214, %v1230
      %v1294 = vadd.f32 %v1219, %v1230
      %v1295 = vadd.f32 %v1222, %v1230
      %v1296 = vsel %vm839, %v1232, 0.0
      %v1297 = vsel %vm839, %v1233, 0.0
      %v1298 = vadd.f32 %v1296, %v1297
      %v1299 = vsel %vm839, %v1234, 0.0
      %v1300 = vadd.f32 %v1298, %v1299
      %v1301 = vsel %vm839, %v1235, 0.0
      %v1302 = vadd.f32 %v1300, %v1301
      %v1303 = vsel %vm839, %v1236, 0.0
      %v1304 = vadd.f32 %v1302, %v1303
      %v1305 = vsel %vm839, %v1237, 0.0
      %v1306 = vadd.f32 %v1304, %v1305
      %v1307 = vsel %vm839, %v1238, 0.0
      %v1308 = vadd.f32 %v1306, %v1307
      %v1309 = vsel %vm839, %v1239, 0.0
      %v1310 = vadd.f32 %v1308, %v1309
      %v1311 = vsel %vm839, %v1240, 0.0
      %v1312 = vadd.f32 %v1310, %v1311
      %v1313 = vsel %vm839, %v1241, 0.0
      %v1314 = vadd.f32 %v1312, %v1313
      %v1315 = vsel %vm839, %v1242, 0.0
      %v1316 = vadd.f32 %v1314, %v1315
      %v1317 = vsel %vm839, %v1243, 0.0
      %v1318 = vadd.f32 %v1316, %v1317
      %v1319 = vsel %vm839, %v1244, 0.0
      %v1320 = vadd.f32 %v1318, %v1319
      %v1321 = vsel %vm839, %v1245, 0.0
      %v1322 = vadd.f32 %v1320, %v1321
      %v1323 = vsel %vm839, %v1246, 0.0
      %v1324 = vadd.f32 %v1322, %v1323
      %v1325 = vsel %vm839, %v1247, 0.0
      %v1326 = vadd.f32 %v1324, %v1325
      %v1327 = vsel %vm839, %v1248, 0.0
      %v1328 = vadd.f32 %v1326, %v1327
      %v1329 = vsel %vm839, %v1249, 0.0
      %v1330 = vadd.f32 %v1328, %v1329
      %v1331 = vsel %vm839, %v1250, 0.0
      %v1332 = vadd.f32 %v1330, %v1331
      %v1333 = vsel %vm839, %v1251, 0.0
      %v1334 = vadd.f32 %v1332, %v1333
      %v1335 = vsel %vm839, %v1252, 0.0
      %v1336 = vadd.f32 %v1334, %v1335
      %v1337 = vsel %vm839, %v1253, 0.0
      %v1338 = vadd.f32 %v1336, %v1337
      %v1339 = vsel %vm839, %v1254, 0.0
      %v1340 = vadd.f32 %v1338, %v1339
      %v1341 = vsel %vm839, %v1255, 0.0
      %v1342 = vadd.f32 %v1340, %v1341
      %v1343 = vsel %vm839, %v1256, 0.0
      %v1344 = vadd.f32 %v1342, %v1343
      %v1345 = vsel %vm839, %v1257, 0.0
      %v1346 = vadd.f32 %v1344, %v1345
      %v1347 = vsel %vm839, %v1258, 0.0
      %v1348 = vadd.f32 %v1346, %v1347
      %v1349 = vsel %vm839, %v1259, 0.0
      %v1350 = vadd.f32 %v1348, %v1349
      %v1351 = vsel %vm839, %v1260, 0.0
      %v1352 = vadd.f32 %v1350, %v1351
      %v1353 = vsel %vm839, %v1261, 0.0
      %v1354 = vadd.f32 %v1352, %v1353
      %v1355 = vsel %vm839, %v1262, 0.0
      %v1356 = vadd.f32 %v1354, %v1355
      %v1357 = vsel %vm839, %v1263, 0.0
      %v1358 = vadd.f32 %v1356, %v1357
      %v1359 = vrot.slane %v1358, 4
      %v1360 = vadd.f32 %v1358, %v1359
      %v1361 = vrot.slane %v1360, 2
      %v1362 = vadd.f32 %v1360, %v1361
      %v1363 = vrot.slane %v1362, 1
      %v1364 = vadd.f32 %v1362, %v1363
      %v1365 = vrcp.pop 256.0
      %v1366 = vmul.f32 %v1364, %v1365
      %v1367 = vsub.f32 %v1232, %v1366
      %v1368 = vsub.f32 %v1233, %v1366
      %v1369 = vsub.f32 %v1234, %v1366
      %v1370 = vsub.f32 %v1235, %v1366
      %v1371 = vsub.f32 %v1236, %v1366
      %v1372 = vsub.f32 %v1237, %v1366
      %v1373 = vsub.f32 %v1238, %v1366
      %v1374 = vsub.f32 %v1239, %v1366
      %v1375 = vsub.f32 %v1240, %v1366
      %v1376 = vsub.f32 %v1241, %v1366
      %v1377 = vsub.f32 %v1242, %v1366
      %v1378 = vsub.f32 %v1243, %v1366
      %v1379 = vsub.f32 %v1244, %v1366
      %v1380 = vsub.f32 %v1245, %v1366
      %v1381 = vsub.f32 %v1246, %v1366
      %v1382 = vsub.f32 %v1247, %v1366
      %v1383 = vsub.f32 %v1248, %v1366
      %v1384 = vsub.f32 %v1249, %v1366
      %v1385 = vsub.f32 %v1250, %v1366
      %v1386 = vsub.f32 %v1251, %v1366
      %v1387 = vsub.f32 %v1252, %v1366
      %v1388 = vsub.f32 %v1253, %v1366
      %v1389 = vsub.f32 %v1254, %v1366
      %v1390 = vsub.f32 %v1255, %v1366
      %v1391 = vsub.f32 %v1256, %v1366
      %v1392 = vsub.f32 %v1257, %v1366
      %v1393 = vsub.f32 %v1258, %v1366
      %v1394 = vsub.f32 %v1259, %v1366
      %v1395 = vsub.f32 %v1260, %v1366
      %v1396 = vsub.f32 %v1261, %v1366
      %v1397 = vsub.f32 %v1262, %v1366
      %v1398 = vsub.f32 %v1263, %v1366
      %v1399 = vmul.f32 %v1367, %v1367
      %v1400 = vmul.f32 %v1368, %v1368
      %v1401 = vmul.f32 %v1369, %v1369
      %v1402 = vmul.f32 %v1370, %v1370
      %v1403 = vmul.f32 %v1371, %v1371
      %v1404 = vmul.f32 %v1372, %v1372
      %v1405 = vmul.f32 %v1373, %v1373
      %v1406 = vmul.f32 %v1374, %v1374
      %v1407 = vmul.f32 %v1375, %v1375
      %v1408 = vmul.f32 %v1376, %v1376
      %v1409 = vmul.f32 %v1377, %v1377
      %v1410 = vmul.f32 %v1378, %v1378
      %v1411 = vmul.f32 %v1379, %v1379
      %v1412 = vmul.f32 %v1380, %v1380
      %v1413 = vmul.f32 %v1381, %v1381
      %v1414 = vmul.f32 %v1382, %v1382
      %v1415 = vmul.f32 %v1383, %v1383
      %v1416 = vmul.f32 %v1384, %v1384
      %v1417 = vmul.f32 %v1385, %v1385
      %v1418 = vmul.f32 %v1386, %v1386
      %v1419 = vmul.f32 %v1387, %v1387
      %v1420 = vmul.f32 %v1388, %v1388
      %v1421 = vmul.f32 %v1389, %v1389
      %v1422 = vmul.f32 %v1390, %v1390
      %v1423 = vmul.f32 %v1391, %v1391
      %v1424 = vmul.f32 %v1392, %v1392
      %v1425 = vmul.f32 %v1393, %v1393
      %v1426 = vmul.f32 %v1394, %v1394
      %v1427 = vmul.f32 %v1395, %v1395
      %v1428 = vmul.f32 %v1396, %v1396
      %v1429 = vmul.f32 %v1397, %v1397
      %v1430 = vmul.f32 %v1398, %v1398
      %v1431 = vsel %vm839, %v1399, 0.0
      %v1432 = vsel %vm839, %v1400, 0.0
      %v1433 = vadd.f32 %v1431, %v1432
      %v1434 = vsel %vm839, %v1401, 0.0
      %v1435 = vadd.f32 %v1433, %v1434
      %v1436 = vsel %vm839, %v1402, 0.0
      %v1437 = vadd.f32 %v1435, %v1436
      %v1438 = vsel %vm839, %v1403, 0.0
      %v1439 = vadd.f32 %v1437, %v1438
      %v1440 = vsel %vm839, %v1404, 0.0
      %v1441 = vadd.f32 %v1439, %v1440
      %v1442 = vsel %vm839, %v1405, 0.0
      %v1443 = vadd.f32 %v1441, %v1442
      %v1444 = vsel %vm839, %v1406, 0.0
      %v1445 = vadd.f32 %v1443, %v1444
      %v1446 = vsel %vm839, %v1407, 0.0
      %v1447 = vadd.f32 %v1445, %v1446
      %v1448 = vsel %vm839, %v1408, 0.0
      %v1449 = vadd.f32 %v1447, %v1448
      %v1450 = vsel %vm839, %v1409, 0.0
      %v1451 = vadd.f32 %v1449, %v1450
      %v1452 = vsel %vm839, %v1410, 0.0
      %v1453 = vadd.f32 %v1451, %v1452
      %v1454 = vsel %vm839, %v1411, 0.0
      %v1455 = vadd.f32 %v1453, %v1454
      %v1456 = vsel %vm839, %v1412, 0.0
      %v1457 = vadd.f32 %v1455, %v1456
      %v1458 = vsel %vm839, %v1413, 0.0
      %v1459 = vadd.f32 %v1457, %v1458
      %v1460 = vsel %vm839, %v1414, 0.0
      %v1461 = vadd.f32 %v1459, %v1460
      %v1462 = vsel %vm839, %v1415, 0.0
      %v1463 = vadd.f32 %v1461, %v1462
      %v1464 = vsel %vm839, %v1416, 0.0
      %v1465 = vadd.f32 %v1463, %v1464
      %v1466 = vsel %vm839, %v1417, 0.0
      %v1467 = vadd.f32 %v1465, %v1466
      %v1468 = vsel %vm839, %v1418, 0.0
      %v1469 = vadd.f32 %v1467, %v1468
      %v1470 = vsel %vm839, %v1419, 0.0
      %v1471 = vadd.f32 %v1469, %v1470
      %v1472 = vsel %vm839, %v1420, 0.0
      %v1473 = vadd.f32 %v1471, %v1472
      %v1474 = vsel %vm839, %v1421, 0.0
      %v1475 = vadd.f32 %v1473, %v1474
      %v1476 = vsel %vm839, %v1422, 0.0
      %v1477 = vadd.f32 %v1475, %v1476
      %v1478 = vsel %vm839, %v1423, 0.0
      %v1479 = vadd.f32 %v1477, %v1478
      %v1480 = vsel %vm839, %v1424, 0.0
      %v1481 = vadd.f32 %v1479, %v1480
      %v1482 = vsel %vm839, %v1425, 0.0
      %v1483 = vadd.f32 %v1481, %v1482
      %v1484 = vsel %vm839, %v1426, 0.0
      %v1485 = vadd.f32 %v1483, %v1484
      %v1486 = vsel %vm839, %v1427, 0.0
      %v1487 = vadd.f32 %v1485, %v1486
      %v1488 = vsel %vm839, %v1428, 0.0
      %v1489 = vadd.f32 %v1487, %v1488
      %v1490 = vsel %vm839, %v1429, 0.0
      %v1491 = vadd.f32 %v1489, %v1490
      %v1492 = vsel %vm839, %v1430, 0.0
      %v1493 = vadd.f32 %v1491, %v1492
      %v1494 = vrot.slane %v1493, 4
      %v1495 = vadd.f32 %v1493, %v1494
      %v1496 = vrot.slane %v1495, 2
      %v1497 = vadd.f32 %v1495, %v1496
      %v1498 = vrot.slane %v1497, 1
      %v1499 = vadd.f32 %v1497, %v1498
      %v1500 = vmul.f32 %v1499, %v1365
      %v1501 = vadd.f32 %v1500, 1e-05
      %v1502 = vrsqrt.pop %v1501
      %v1503 = vmul.f32 %v1367, %v1502
      %v1504 = vmul.f32 %v1368, %v1502
      %v1505 = vmul.f32 %v1369, %v1502
      %v1506 = vmul.f32 %v1370, %v1502
      %v1507 = vmul.f32 %v1371, %v1502
      %v1508 = vmul.f32 %v1372, %v1502
      %v1509 = vmul.f32 %v1373, %v1502
      %v1510 = vmul.f32 %v1374, %v1502
      %v1511 = vmul.f32 %v1375, %v1502
      %v1512 = vmul.f32 %v1376, %v1502
      %v1513 = vmul.f32 %v1377, %v1502
      %v1514 = vmul.f32 %v1378, %v1502
      %v1515 = vmul.f32 %v1379, %v1502
      %v1516 = vmul.f32 %v1380, %v1502
      %v1517 = vmul.f32 %v1381, %v1502
      %v1518 = vmul.f32 %v1382, %v1502
      %v1519 = vmul.f32 %v1383, %v1502
      %v1520 = vmul.f32 %v1384, %v1502
      %v1521 = vmul.f32 %v1385, %v1502
      %v1522 = vmul.f32 %v1386, %v1502
      %v1523 = vmul.f32 %v1387, %v1502
      %v1524 = vmul.f32 %v1388, %v1502
      %v1525 = vmul.f32 %v1389, %v1502
      %v1526 = vmul.f32 %v1390, %v1502
      %v1527 = vmul.f32 %v1391, %v1502
      %v1528 = vmul.f32 %v1392, %v1502
      %v1529 = vmul.f32 %v1393, %v1502
      %v1530 = vmul.f32 %v1394, %v1502
      %v1531 = vmul.f32 %v1395, %v1502
      %v1532 = vmul.f32 %v1396, %v1502
      %v1533 = vmul.f32 %v1397, %v1502
      %v1534 = vmul.f32 %v1398, %v1502
      %vm1535 = vcmp.gt.f32.partialorder %v1503, 0.0
      %vm1536 = vcmp.gt.f32.partialorder %v1504, 0.0
      %vm1537 = vcmp.gt.f32.partialorder %v1505, 0.0
      %vm1538 = vcmp.gt.f32.partialorder %v1506, 0.0
      %vm1539 = vcmp.gt.f32.partialorder %v1507, 0.0
      %vm1540 = vcmp.gt.f32.partialorder %v1508, 0.0
      %vm1541 = vcmp.gt.f32.partialorder %v1509, 0.0
      %vm1542 = vcmp.gt.f32.partialorder %v1510, 0.0
      %vm1543 = vcmp.gt.f32.partialorder %v1511, 0.0
      %vm1544 = vcmp.gt.f32.partialorder %v1512, 0.0
      %vm1545 = vcmp.gt.f32.partialorder %v1513, 0.0
      %vm1546 = vcmp.gt.f32.partialorder %v1514, 0.0
      %vm1547 = vcmp.gt.f32.partialorder %v1515, 0.0
      %vm1548 = vcmp.gt.f32.partialorder %v1516, 0.0
      %vm1549 = vcmp.gt.f32.partialorder %v1517, 0.0
      %vm1550 = vcmp.gt.f32.partialorder %v1518, 0.0
      %vm1551 = vcmp.gt.f32.partialorder %v1519, 0.0
      %vm1552 = vcmp.gt.f32.partialorder %v1520, 0.0
      %vm1553 = vcmp.gt.f32.partialorder %v1521, 0.0
      %vm1554 = vcmp.gt.f32.partialorder %v1522, 0.0
      %vm1555 = vcmp.gt.f32.partialorder %v1523, 0.0
      %vm1556 = vcmp.gt.f32.partialorder %v1524, 0.0
      %vm1557 = vcmp.gt.f32.partialorder %v1525, 0.0
      %vm1558 = vcmp.gt.f32.partialorder %v1526, 0.0
      %vm1559 = vcmp.gt.f32.partialorder %v1527, 0.0
      %vm1560 = vcmp.gt.f32.partialorder %v1528, 0.0
      %vm1561 = vcmp.gt.f32.partialorder %v1529, 0.0
      %vm1562 = vcmp.gt.f32.partialorder %v1530, 0.0
      %vm1563 = vcmp.gt.f32.partialorder %v1531, 0.0
      %vm1564 = vcmp.gt.f32.partialorder %v1532, 0.0
      %vm1565 = vcmp.gt.f32.partialorder %v1533, 0.0
      %vm1566 = vcmp.gt.f32.partialorder %v1534, 0.0
      %v1567 = vmul.f32 %v1503, 0.2
      %v1568 = vmul.f32 %v1504, 0.2
      %v1569 = vmul.f32 %v1505, 0.2
      %v1570 = vmul.f32 %v1506, 0.2
      %v1571 = vmul.f32 %v1507, 0.2
      %v1572 = vmul.f32 %v1508, 0.2
      %v1573 = vmul.f32 %v1509, 0.2
      %v1574 = vmul.f32 %v1510, 0.2
      %v1575 = vmul.f32 %v1511, 0.2
      %v1576 = vmul.f32 %v1512, 0.2
      %v1577 = vmul.f32 %v1513, 0.2
      %v1578 = vmul.f32 %v1514, 0.2
      %v1579 = vmul.f32 %v1515, 0.2
      %v1580 = vmul.f32 %v1516, 0.2
      %v1581 = vmul.f32 %v1517, 0.2
      %v1582 = vmul.f32 %v1518, 0.2
      %v1583 = vmul.f32 %v1519, 0.2
      %v1584 = vmul.f32 %v1520, 0.2
      %v1585 = vmul.f32 %v1521, 0.2
      %v1586 = vmul.f32 %v1522, 0.2
      %v1587 = vmul.f32 %v1523, 0.2
      %v1588 = vmul.f32 %v1524, 0.2
      %v1589 = vmul.f32 %v1525, 0.2
      %v1590 = vmul.f32 %v1526, 0.2
      %v1591 = vmul.f32 %v1527, 0.2
      %v1592 = vmul.f32 %v1528, 0.2
      %v1593 = vmul.f32 %v1529, 0.2
      %v1594 = vmul.f32 %v1530, 0.2
      %v1595 = vmul.f32 %v1531, 0.2
      %v1596 = vmul.f32 %v1532, 0.2
      %v1597 = vmul.f32 %v1533, 0.2
      %v1598 = vmul.f32 %v1534, 0.2
      %v1599 = vsel %vm1535, %v1503, %v1567
      %v1600 = vsel %vm1536, %v1504, %v1568
      %v1601 = vsel %vm1537, %v1505, %v1569
      %v1602 = vsel %vm1538, %v1506, %v1570
      %v1603 = vsel %vm1539, %v1507, %v1571
      %v1604 = vsel %vm1540, %v1508, %v1572
      %v1605 = vsel %vm1541, %v1509, %v1573
      %v1606 = vsel %vm1542, %v1510, %v1574
      %v1607 = vsel %vm1543, %v1511, %v1575
      %v1608 = vsel %vm1544, %v1512, %v1576
      %v1609 = vsel %vm1545, %v1513, %v1577
      %v1610 = vsel %vm1546, %v1514, %v1578
      %v1611 = vsel %vm1547, %v1515, %v1579
      %v1612 = vsel %vm1548, %v1516, %v1580
      %v1613 = vsel %vm1549, %v1517, %v1581
      %v1614 = vsel %vm1550, %v1518, %v1582
      %v1615 = vsel %vm1551, %v1519, %v1583
      %v1616 = vsel %vm1552, %v1520, %v1584
      %v1617 = vsel %vm1553, %v1521, %v1585
      %v1618 = vsel %vm1554, %v1522, %v1586
      %v1619 = vsel %vm1555, %v1523, %v1587
      %v1620 = vsel %vm1556, %v1524, %v1588
      %v1621 = vsel %vm1557, %v1525, %v1589
      %v1622 = vsel %vm1558, %v1526, %v1590
      %v1623 = vsel %vm1559, %v1527, %v1591
      %v1624 = vsel %vm1560, %v1528, %v1592
      %v1625 = vsel %vm1561, %v1529, %v1593
      %v1626 = vsel %vm1562, %v1530, %v1594
      %v1627 = vsel %vm1563, %v1531, %v1595
      %v1628 = vsel %vm1564, %v1532, %v1596
      %v1629 = vsel %vm1565, %v1533, %v1597
      %v1630 = vsel %vm1566, %v1534, %v1598
      %v1631 = vsel %vm839, %v1264, 0.0
      %v1632 = vsel %vm839, %v1265, 0.0
      %v1633 = vadd.f32 %v1631, %v1632
      %v1634 = vsel %vm839, %v1266, 0.0
      %v1635 = vadd.f32 %v1633, %v1634
      %v1636 = vsel %vm839, %v1267, 0.0
      %v1637 = vadd.f32 %v1635, %v1636
      %v1638 = vsel %vm839, %v1268, 0.0
      %v1639 = vadd.f32 %v1637, %v1638
      %v1640 = vsel %vm839, %v1269, 0.0
      %v1641 = vadd.f32 %v1639, %v1640
      %v1642 = vsel %vm839, %v1270, 0.0
      %v1643 = vadd.f32 %v1641, %v1642
      %v1644 = vsel %vm839, %v1271, 0.0
      %v1645 = vadd.f32 %v1643, %v1644
      %v1646 = vsel %vm839, %v1272, 0.0
      %v1647 = vadd.f32 %v1645, %v1646
      %v1648 = vsel %vm839, %v1273, 0.0
      %v1649 = vadd.f32 %v1647, %v1648
      %v1650 = vsel %vm839, %v1274, 0.0
      %v1651 = vadd.f32 %v1649, %v1650
      %v1652 = vsel %vm839, %v1275, 0.0
      %v1653 = vadd.f32 %v1651, %v1652
      %v1654 = vsel %vm839, %v1276, 0.0
      %v1655 = vadd.f32 %v1653, %v1654
      %v1656 = vsel %vm839, %v1277, 0.0
      %v1657 = vadd.f32 %v1655, %v1656
      %v1658 = vsel %vm839, %v1278, 0.0
      %v1659 = vadd.f32 %v1657, %v1658
      %v1660 = vsel %vm839, %v1279, 0.0
      %v1661 = vadd.f32 %v1659, %v1660
      %v1662 = vsel %vm839, %v1280, 0.0
      %v1663 = vadd.f32 %v1661, %v1662
      %v1664 = vsel %vm839, %v1281, 0.0
      %v1665 = vadd.f32 %v1663, %v1664
      %v1666 = vsel %vm839, %v1282, 0.0
      %v1667 = vadd.f32 %v1665, %v1666
      %v1668 = vsel %vm839, %v1283, 0.0
      %v1669 = vadd.f32 %v1667, %v1668
      %v1670 = vsel %vm839, %v1284, 0.0
      %v1671 = vadd.f32 %v1669, %v1670
      %v1672 = vsel %vm839, %v1285, 0.0
      %v1673 = vadd.f32 %v1671, %v1672
      %v1674 = vsel %vm839, %v1286, 0.0
      %v1675 = vadd.f32 %v1673, %v1674
      %v1676 = vsel %vm839, %v1287, 0.0
      %v1677 = vadd.f32 %v1675, %v1676
      %v1678 = vsel %vm839, %v1288, 0.0
      %v1679 = vadd.f32 %v1677, %v1678
      %v1680 = vsel %vm839, %v1289, 0.0
      %v1681 = vadd.f32 %v1679, %v1680
      %v1682 = vsel %vm839, %v1290, 0.0
      %v1683 = vadd.f32 %v1681, %v1682
      %v1684 = vsel %vm839, %v1291, 0.0
      %v1685 = vadd.f32 %v1683, %v1684
      %v1686 = vsel %vm839, %v1292, 0.0
      %v1687 = vadd.f32 %v1685, %v1686
      %v1688 = vsel %vm839, %v1293, 0.0
      %v1689 = vadd.f32 %v1687, %v1688
      %v1690 = vsel %vm839, %v1294, 0.0
      %v1691 = vadd.f32 %v1689, %v1690
      %v1692 = vsel %vm839, %v1295, 0.0
      %v1693 = vadd.f32 %v1691, %v1692
      %v1694 = vrot.slane %v1693, 4
      %v1695 = vadd.f32 %v1693, %v1694
      %v1696 = vrot.slane %v1695, 2
      %v1697 = vadd.f32 %v1695, %v1696
      %v1698 = vrot.slane %v1697, 1
      %v1699 = vadd.f32 %v1697, %v1698
      %v1700 = vmul.f32 %v1699, %v1365
      %v1701 = vsub.f32 %v1264, %v1700
      %v1702 = vsub.f32 %v1265, %v1700
      %v1703 = vsub.f32 %v1266, %v1700
      %v1704 = vsub.f32 %v1267, %v1700
      %v1705 = vsub.f32 %v1268, %v1700
      %v1706 = vsub.f32 %v1269, %v1700
      %v1707 = vsub.f32 %v1270, %v1700
      %v1708 = vsub.f32 %v1271, %v1700
      %v1709 = vsub.f32 %v1272, %v1700
      %v1710 = vsub.f32 %v1273, %v1700
      %v1711 = vsub.f32 %v1274, %v1700
      %v1712 = vsub.f32 %v1275, %v1700
      %v1713 = vsub.f32 %v1276, %v1700
      %v1714 = vsub.f32 %v1277, %v1700
      %v1715 = vsub.f32 %v1278, %v1700
      %v1716 = vsub.f32 %v1279, %v1700
      %v1717 = vsub.f32 %v1280, %v1700
      %v1718 = vsub.f32 %v1281, %v1700
      %v1719 = vsub.f32 %v1282, %v1700
      %v1720 = vsub.f32 %v1283, %v1700
      %v1721 = vsub.f32 %v1284, %v1700
      %v1722 = vsub.f32 %v1285, %v1700
      %v1723 = vsub.f32 %v1286, %v1700
      %v1724 = vsub.f32 %v1287, %v1700
      %v1725 = vsub.f32 %v1288, %v1700
      %v1726 = vsub.f32 %v1289, %v1700
      %v1727 = vsub.f32 %v1290, %v1700
      %v1728 = vsub.f32 %v1291, %v1700
      %v1729 = vsub.f32 %v1292, %v1700
      %v1730 = vsub.f32 %v1293, %v1700
      %v1731 = vsub.f32 %v1294, %v1700
      %v1732 = vsub.f32 %v1295, %v1700
      %v1733 = vmul.f32 %v1701, %v1701
      %v1734 = vmul.f32 %v1702, %v1702
      %v1735 = vmul.f32 %v1703, %v1703
      %v1736 = vmul.f32 %v1704, %v1704
      %v1737 = vmul.f32 %v1705, %v1705
      %v1738 = vmul.f32 %v1706, %v1706
      %v1739 = vmul.f32 %v1707, %v1707
      %v1740 = vmul.f32 %v1708, %v1708
      %v1741 = vmul.f32 %v1709, %v1709
      %v1742 = vmul.f32 %v1710, %v1710
      %v1743 = vmul.f32 %v1711, %v1711
      %v1744 = vmul.f32 %v1712, %v1712
      %v1745 = vmul.f32 %v1713, %v1713
      %v1746 = vmul.f32 %v1714, %v1714
      %v1747 = vmul.f32 %v1715, %v1715
      %v1748 = vmul.f32 %v1716, %v1716
      %v1749 = vmul.f32 %v1717, %v1717
      %v1750 = vmul.f32 %v1718, %v1718
      %v1751 = vmul.f32 %v1719, %v1719
      %v1752 = vmul.f32 %v1720, %v1720
      %v1753 = vmul.f32 %v1721, %v1721
      %v1754 = vmul.f32 %v1722, %v1722
      %v1755 = vmul.f32 %v1723, %v1723
      %v1756 = vmul.f32 %v1724, %v1724
      %v1757 = vmul.f32 %v1725, %v1725
      %v1758 = vmul.f32 %v1726, %v1726
      %v1759 = vmul.f32 %v1727, %v1727
      %v1760 = vmul.f32 %v1728, %v1728
      %v1761 = vmul.f32 %v1729, %v1729
      %v1762 = vmul.f32 %v1730, %v1730
      %v1763 = vmul.f32 %v1731, %v1731
      %v1764 = vmul.f32 %v1732, %v1732
      %v1765 = vsel %vm839, %v1733, 0.0
      %v1766 = vsel %vm839, %v1734, 0.0
      %v1767 = vadd.f32 %v1765, %v1766
      %v1768 = vsel %vm839, %v1735, 0.0
      %v1769 = vadd.f32 %v1767, %v1768
      %v1770 = vsel %vm839, %v1736, 0.0
      %v1771 = vadd.f32 %v1769, %v1770
      %v1772 = vsel %vm839, %v1737, 0.0
      %v1773 = vadd.f32 %v1771, %v1772
      %v1774 = vsel %vm839, %v1738, 0.0
      %v1775 = vadd.f32 %v1773, %v1774
      %v1776 = vsel %vm839, %v1739, 0.0
      %v1777 = vadd.f32 %v1775, %v1776
      %v1778 = vsel %vm839, %v1740, 0.0
      %v1779 = vadd.f32 %v1777, %v1778
      %v1780 = vsel %vm839, %v1741, 0.0
      %v1781 = vadd.f32 %v1779, %v1780
      %v1782 = vsel %vm839, %v1742, 0.0
      %v1783 = vadd.f32 %v1781, %v1782
      %v1784 = vsel %vm839, %v1743, 0.0
      %v1785 = vadd.f32 %v1783, %v1784
      %v1786 = vsel %vm839, %v1744, 0.0
      %v1787 = vadd.f32 %v1785, %v1786
      %v1788 = vsel %vm839, %v1745, 0.0
      %v1789 = vadd.f32 %v1787, %v1788
      %v1790 = vsel %vm839, %v1746, 0.0
      %v1791 = vadd.f32 %v1789, %v1790
      %v1792 = vsel %vm839, %v1747, 0.0
      %v1793 = vadd.f32 %v1791, %v1792
      %v1794 = vsel %vm839, %v1748, 0.0
      %v1795 = vadd.f32 %v1793, %v1794
      %v1796 = vsel %vm839, %v1749, 0.0
      %v1797 = vadd.f32 %v1795, %v1796
      %v1798 = vsel %vm839, %v1750, 0.0
      %v1799 = vadd.f32 %v1797, %v1798
      %v1800 = vsel %vm839, %v1751, 0.0
      %v1801 = vadd.f32 %v1799, %v1800
      %v1802 = vsel %vm839, %v1752, 0.0
      %v1803 = vadd.f32 %v1801, %v1802
      %v1804 = vsel %vm839, %v1753, 0.0
      %v1805 = vadd.f32 %v1803, %v1804
      %v1806 = vsel %vm839, %v1754, 0.0
      %v1807 = vadd.f32 %v1805, %v1806
      %v1808 = vsel %vm839, %v1755, 0.0
      %v1809 = vadd.f32 %v1807, %v1808
      %v1810 = vsel %vm839, %v1756, 0.0
      %v1811 = vadd.f32 %v1809, %v1810
      %v1812 = vsel %vm839, %v1757, 0.0
      %v1813 = vadd.f32 %v1811, %v1812
      %v1814 = vsel %vm839, %v1758, 0.0
      %v1815 = vadd.f32 %v1813, %v1814
      %v1816 = vsel %vm839, %v1759, 0.0
      %v1817 = vadd.f32 %v1815, %v1816
      %v1818 = vsel %vm839, %v1760, 0.0
      %v1819 = vadd.f32 %v1817, %v1818
      %v1820 = vsel %vm839, %v1761, 0.0
      %v1821 = vadd.f32 %v1819, %v1820
      %v1822 = vsel %vm839, %v1762, 0.0
      %v1823 = vadd.f32 %v1821, %v1822
      %v1824 = vsel %vm839, %v1763, 0.0
      %v1825 = vadd.f32 %v1823, %v1824
      %v1826 = vsel %vm839, %v1764, 0.0
      %v1827 = vadd.f32 %v1825, %v1826
      %v1828 = vrot.slane %v1827, 4
      %v1829 = vadd.f32 %v1827, %v1828
      %v1830 = vrot.slane %v1829, 2
      %v1831 = vadd.f32 %v1829, %v1830
      %v1832 = vrot.slane %v1831, 1
      %v1833 = vadd.f32 %v1831, %v1832
      %v1834 = vmul.f32 %v1833, %v1365
      %v1835 = vadd.f32 %v1834, 1e-05
      %v1836 = vrsqrt.pop %v1835
      %v1837 = vmul.f32 %v1701, %v1836
      %v1838 = vmul.f32 %v1702, %v1836
      %v1839 = vmul.f32 %v1703, %v1836
      %v1840 = vmul.f32 %v1704, %v1836
      %v1841 = vmul.f32 %v1705, %v1836
      %v1842 = vmul.f32 %v1706, %v1836
      %v1843 = vmul.f32 %v1707, %v1836
      %v1844 = vmul.f32 %v1708, %v1836
      %v1845 = vmul.f32 %v1709, %v1836
      %v1846 = vmul.f32 %v1710, %v1836
      %v1847 = vmul.f32 %v1711, %v1836
      %v1848 = vmul.f32 %v1712, %v1836
      %v1849 = vmul.f32 %v1713, %v1836
      %v1850 = vmul.f32 %v1714, %v1836
      %v1851 = vmul.f32 %v1715, %v1836
      %v1852 = vmul.f32 %v1716, %v1836
      %v1853 = vmul.f32 %v1717, %v1836
      %v1854 = vmul.f32 %v1718, %v1836
      %v1855 = vmul.f32 %v1719, %v1836
      %v1856 = vmul.f32 %v1720, %v1836
      %v1857 = vmul.f32 %v1721, %v1836
      %v1858 = vmul.f32 %v1722, %v1836
      %v1859 = vmul.f32 %v1723, %v1836
      %v1860 = vmul.f32 %v1724, %v1836
      %v1861 = vmul.f32 %v1725, %v1836
      %v1862 = vmul.f32 %v1726, %v1836
      %v1863 = vmul.f32 %v1727, %v1836
      %v1864 = vmul.f32 %v1728, %v1836
      %v1865 = vmul.f32 %v1729, %v1836
      %v1866 = vmul.f32 %v1730, %v1836
      %v1867 = vmul.f32 %v1731, %v1836
      %v1868 = vmul.f32 %v1732, %v1836
      %vm1869 = vcmp.gt.f32.partialorder %v1837, 0.0
      %vm1870 = vcmp.gt.f32.partialorder %v1838, 0.0
      %vm1871 = vcmp.gt.f32.partialorder %v1839, 0.0
      %vm1872 = vcmp.gt.f32.partialorder %v1840, 0.0
      %vm1873 = vcmp.gt.f32.partialorder %v1841, 0.0
      %vm1874 = vcmp.gt.f32.partialorder %v1842, 0.0
      %vm1875 = vcmp.gt.f32.partialorder %v1843, 0.0
      %vm1876 = vcmp.gt.f32.partialorder %v1844, 0.0
      %vm1877 = vcmp.gt.f32.partialorder %v1845, 0.0
      %vm1878 = vcmp.gt.f32.partialorder %v1846, 0.0
      %vm1879 = vcmp.gt.f32.partialorder %v1847, 0.0
      %vm1880 = vcmp.gt.f32.partialorder %v1848, 0.0
      %vm1881 = vcmp.gt.f32.partialorder %v1849, 0.0
      %vm1882 = vcmp.gt.f32.partialorder %v1850, 0.0
      %vm1883 = vcmp.gt.f32.partialorder %v1851, 0.0
      %vm1884 = vcmp.gt.f32.partialorder %v1852, 0.0
      %vm1885 = vcmp.gt.f32.partialorder %v1853, 0.0
      %vm1886 = vcmp.gt.f32.partialorder %v1854, 0.0
      %vm1887 = vcmp.gt.f32.partialorder %v1855, 0.0
      %vm1888 = vcmp.gt.f32.partialorder %v1856, 0.0
      %vm1889 = vcmp.gt.f32.partialorder %v1857, 0.0
      %vm1890 = vcmp.gt.f32.partialorder %v1858, 0.0
      %vm1891 = vcmp.gt.f32.partialorder %v1859, 0.0
      %vm1892 = vcmp.gt.f32.partialorder %v1860, 0.0
      %vm1893 = vcmp.gt.f32.partialorder %v1861, 0.0
      %vm1894 = vcmp.gt.f32.partialorder %v1862, 0.0
      %vm1895 = vcmp.gt.f32.partialorder %v1863, 0.0
      %vm1896 = vcmp.gt.f32.partialorder %v1864, 0.0
      %vm1897 = vcmp.gt.f32.partialorder %v1865, 0.0
      %vm1898 = vcmp.gt.f32.partialorder %v1866, 0.0
      %vm1899 = vcmp.gt.f32.partialorder %v1867, 0.0
      %vm1900 = vcmp.gt.f32.partialorder %v1868, 0.0
      %v1901 = vmul.f32 %v1837, 0.2
      %v1902 = vmul.f32 %v1838, 0.2
      %v1903 = vmul.f32 %v1839, 0.2
      %v1904 = vmul.f32 %v1840, 0.2
      %v1905 = vmul.f32 %v1841, 0.2
      %v1906 = vmul.f32 %v1842, 0.2
      %v1907 = vmul.f32 %v1843, 0.2
      %v1908 = vmul.f32 %v1844, 0.2
      %v1909 = vmul.f32 %v1845, 0.2
      %v1910 = vmul.f32 %v1846, 0.2
      %v1911 = vmul.f32 %v1847, 0.2
      %v1912 = vmul.f32 %v1848, 0.2
      %v1913 = vmul.f32 %v1849, 0.2
      %v1914 = vmul.f32 %v1850, 0.2
      %v1915 = vmul.f32 %v1851, 0.2
      %v1916 = vmul.f32 %v1852, 0.2
      %v1917 = vmul.f32 %v1853, 0.2
      %v1918 = vmul.f32 %v1854, 0.2
      %v1919 = vmul.f32 %v1855, 0.2
      %v1920 = vmul.f32 %v1856, 0.2
      %v1921 = vmul.f32 %v1857, 0.2
      %v1922 = vmul.f32 %v1858, 0.2
      %v1923 = vmul.f32 %v1859, 0.2
      %v1924 = vmul.f32 %v1860, 0.2
      %v1925 = vmul.f32 %v1861, 0.2
      %v1926 = vmul.f32 %v1862, 0.2
      %v1927 = vmul.f32 %v1863, 0.2
      %v1928 = vmul.f32 %v1864, 0.2
      %v1929 = vmul.f32 %v1865, 0.2
      %v1930 = vmul.f32 %v1866, 0.2
      %v1931 = vmul.f32 %v1867, 0.2
      %v1932 = vmul.f32 %v1868, 0.2
      %v1933 = vsel %vm1869, %v1837, %v1901
      %v1934 = vsel %vm1870, %v1838, %v1902
      %v1935 = vsel %vm1871, %v1839, %v1903
      %v1936 = vsel %vm1872, %v1840, %v1904
      %v1937 = vsel %vm1873, %v1841, %v1905
      %v1938 = vsel %vm1874, %v1842, %v1906
      %v1939 = vsel %vm1875, %v1843, %v1907
      %v1940 = vsel %vm1876, %v1844, %v1908
      %v1941 = vsel %vm1877, %v1845, %v1909
      %v1942 = vsel %vm1878, %v1846, %v1910
      %v1943 = vsel %vm1879, %v1847, %v1911
      %v1944 = vsel %vm1880, %v1848, %v1912
      %v1945 = vsel %vm1881, %v1849, %v1913
      %v1946 = vsel %vm1882, %v1850, %v1914
      %v1947 = vsel %vm1883, %v1851, %v1915
      %v1948 = vsel %vm1884, %v1852, %v1916
      %v1949 = vsel %vm1885, %v1853, %v1917
      %v1950 = vsel %vm1886, %v1854, %v1918
      %v1951 = vsel %vm1887, %v1855, %v1919
      %v1952 = vsel %vm1888, %v1856, %v1920
      %v1953 = vsel %vm1889, %v1857, %v1921
      %v1954 = vsel %vm1890, %v1858, %v1922
      %v1955 = vsel %vm1891, %v1859, %v1923
      %v1956 = vsel %vm1892, %v1860, %v1924
      %v1957 = vsel %vm1893, %v1861, %v1925
      %v1958 = vsel %vm1894, %v1862, %v1926
      %v1959 = vsel %vm1895, %v1863, %v1927
      %v1960 = vsel %vm1896, %v1864, %v1928
      %v1961 = vsel %vm1897, %v1865, %v1929
      %v1962 = vsel %vm1898, %v1866, %v1930
      %v1963 = vsel %vm1899, %v1867, %v1931
      %v1964 = vsel %vm1900, %v1868, %v1932
      %1965 = vst.msk [vmem:[#allocation2 + $0x18] sm:$0xff] %vm839, %v1599
      %1966 = vst.msk [vmem:[#allocation2 + $0x20] sm:$0xff] %vm839, %v1600
      %1967 = vst.msk [vmem:[#allocation2 + $0x28] sm:$0xff] %vm839, %v1601
      %1968 = vst.msk [vmem:[#allocation2 + $0x30] sm:$0xff] %vm839, %v1602
      %1969 = vst.msk [vmem:[#allocation2 + $0x38] sm:$0xff] %vm839, %v1603
      %1970 = vst.msk [vmem:[#allocation2 + $0x40] sm:$0xff] %vm839, %v1604
      %1971 = vst.msk [vmem:[#allocation2 + $0x48] sm:$0xff] %vm839, %v1605
      %1972 = vst.msk [vmem:[#allocation2 + $0x50] sm:$0xff] %vm839, %v1606
      %1973 = vst.msk [vmem:[#allocation2 + $0x58] sm:$0xff] %vm839, %v1607
      %1974 = vst.msk [vmem:[#allocation2 + $0x60] sm:$0xff] %vm839, %v1608
      %1975 = vst.msk [vmem:[#allocation2 + $0x68] sm:$0xff] %vm839, %v1609
      %1976 = vst.msk [vmem:[#allocation2 + $0x70] sm:$0xff] %vm839, %v1610
      %1977 = vst.msk [vmem:[#allocation2 + $0x78] sm:$0xff] %vm839, %v1611
      %1978 = vst.msk [vmem:[#allocation2 + $0x80] sm:$0xff] %vm839, %v1612
      %1979 = vst.msk [vmem:[#allocation2 + $0x88] sm:$0xff] %vm839, %v1613
      %1980 = vst.msk [vmem:[#allocation2 + $0x90] sm:$0xff] %vm839, %v1614
      %1981 = vst.msk [vmem:[#allocation2 + $0x98] sm:$0xff] %vm839, %v1615
      %1982 = vst.msk [vmem:[#allocation2 + $0xa0] sm:$0xff] %vm839, %v1616
      %1983 = vst.msk [vmem:[#allocation2 + $0xa8] sm:$0xff] %vm839, %v1617
      %1984 = vst.msk [vmem:[#allocation2 + $0xb0] sm:$0xff] %vm839, %v1618
      %1985 = vst.msk [vmem:[#allocation2 + $0xb8] sm:$0xff] %vm839, %v1619
      %1986 = vst.msk [vmem:[#allocation2 + $0xc0] sm:$0xff] %vm839, %v1620
      %1987 = vst.msk [vmem:[#allocation2 + $0xc8] sm:$0xff] %vm839, %v1621
      %1988 = vst.msk [vmem:[#allocation2 + $0xd0] sm:$0xff] %vm839, %v1622
      %1989 = vst.msk [vmem:[#allocation2 + $0xd8] sm:$0xff] %vm839, %v1623
      %1990 = vst.msk [vmem:[#allocation2 + $0xe0] sm:$0xff] %vm839, %v1624
      %1991 = vst.msk [vmem:[#allocation2 + $0xe8] sm:$0xff] %vm839, %v1625
      %1992 = vst.msk [vmem:[#allocation2 + $0xf0] sm:$0xff] %vm839, %v1626
      %1993 = vst.msk [vmem:[#allocation2 + $0xf8] sm:$0xff] %vm839, %v1627
      %1994 = vst.msk [vmem:[#allocation2 + $0x100] sm:$0xff] %vm839, %v1628
      %1995 = vst.msk [vmem:[#allocation2 + $0x108] sm:$0xff] %vm839, %v1629
      %1996 = vst.msk [vmem:[#allocation2 + $0x110] sm:$0xff] %vm839, %v1630
      %1997 = vst.msk [vmem:[#allocation2 + $0x148] sm:$0xff] %vm839, %v1933
      %1998 = vst.msk [vmem:[#allocation2 + $0x150] sm:$0xff] %vm839, %v1934
      %1999 = vst.msk [vmem:[#allocation2 + $0x158] sm:$0xff] %vm839, %v1935
      %2000 = vst.msk [vmem:[#allocation2 + $0x160] sm:$0xff] %vm839, %v1936
      %2001 = vst.msk [vmem:[#allocation2 + $0x168] sm:$0xff] %vm839, %v1937
      %2002 = vst.msk [vmem:[#allocation2 + $0x170] sm:$0xff] %vm839, %v1938
      %2003 = vst.msk [vmem:[#allocation2 + $0x178] sm:$0xff] %vm839, %v1939
      %2004 = vst.msk [vmem:[#allocation2 + $0x180] sm:$0xff] %vm839, %v1940
      %2005 = vst.msk [vmem:[#allocation2 + $0x188] sm:$0xff] %vm839, %v1941
      %2006 = vst.msk [vmem:[#allocation2 + $0x190] sm:$0xff] %vm839, %v1942
      %2007 = vst.msk [vmem:[#allocation2 + $0x198] sm:$0xff] %vm839, %v1943
      %2008 = vst.msk [vmem:[#allocation2 + $0x1a0] sm:$0xff] %vm839, %v1944
      %2009 = vst.msk [vmem:[#allocation2 + $0x1a8] sm:$0xff] %vm839, %v1945
      %2010 = vst.msk [vmem:[#allocation2 + $0x1b0] sm:$0xff] %vm839, %v1946
      %2011 = vst.msk [vmem:[#allocation2 + $0x1b8] sm:$0xff] %vm839, %v1947
      %2012 = vst.msk [vmem:[#allocation2 + $0x1c0] sm:$0xff] %vm839, %v1948
      %2013 = vst.msk [vmem:[#allocation2 + $0x1c8] sm:$0xff] %vm839, %v1949
      %2014 = vst.msk [vmem:[#allocation2 + $0x1d0] sm:$0xff] %vm839, %v1950
      %2015 = vst.msk [vmem:[#allocation2 + $0x1d8] sm:$0xff] %vm839, %v1951
      %2016 = vst.msk [vmem:[#allocation2 + $0x1e0] sm:$0xff] %vm839, %v1952
      %2017 = vst.msk [vmem:[#allocation2 + $0x1e8] sm:$0xff] %vm839, %v1953
      %2018 = vst.msk [vmem:[#allocation2 + $0x1f0] sm:$0xff] %vm839, %v1954
      %2019 = vst.msk [vmem:[#allocation2 + $0x1f8] sm:$0xff] %vm839, %v1955
      %2020 = vst.msk [vmem:[#allocation2 + $0x200] sm:$0xff] %vm839, %v1956
      %2021 = vst.msk [vmem:[#allocation2 + $0x208] sm:$0xff] %vm839, %v1957
      %2022 = vst.msk [vmem:[#allocation2 + $0x210] sm:$0xff] %vm839, %v1958
      %2023 = vst.msk [vmem:[#allocation2 + $0x218] sm:$0xff] %vm839, %v1959
      %2024 = vst.msk [vmem:[#allocation2 + $0x220] sm:$0xff] %vm839, %v1960
      %2025 = vst.msk [vmem:[#allocation2 + $0x228] sm:$0xff] %vm839, %v1961
      %2026 = vst.msk [vmem:[#allocation2 + $0x230] sm:$0xff] %vm839, %v1962
      %2027 = vst.msk [vmem:[#allocation2 + $0x238] sm:$0xff] %vm839, %v1963
      %2028 = vst.msk [vmem:[#allocation2 + $0x240] sm:$0xff] %vm839, %v1964
      %v2029 = vlaneseq
      %v2030 = vshrl.u32 %v2029, 7
      %v2031 = vadd.s32 %v2030, 8
      %v2032 = vadd.s32 %v2030, 16
      %v2033 = vadd.s32 %v2030, 24
      %v2034 = vadd.s32 %v2030, 32
      %v2035 = vadd.s32 %v2030, 40
      %v2036 = vadd.s32 %v2030, 48
      %v2037 = vadd.s32 %v2030, 56
      %v2038 = vadd.s32 %v2030, 64
      %v2039 = vadd.s32 %v2030, 72
      %v2040 = vadd.s32 %v2030, 80
      %v2041 = vadd.s32 %v2030, 88
      %v2042 = vadd.s32 %v2030, 96
      %v2043 = vadd.s32 %v2030, 104
      %v2044 = vadd.s32 %v2030, 112
      %v2045 = vadd.s32 %v2030, 120
      %v2046 = vadd.s32 %v2030, 128
      %v2047 = vadd.s32 %v2030, 136
      %v2048 = vadd.s32 %v2030, 144
      %v2049 = vadd.s32 %v2030, 152
      %v2050 = vadd.s32 %v2030, 160
      %v2051 = vadd.s32 %v2030, 168
      %v2052 = vadd.s32 %v2030, 176
      %v2053 = vadd.s32 %v2030, 184
      %v2054 = vadd.s32 %v2030, 192
      %v2055 = vadd.s32 %v2030, 200
      %v2056 = vadd.s32 %v2030, 208
      %v2057 = vadd.s32 %v2030, 216
      %v2058 = vadd.s32 %v2030, 224
      %v2059 = vadd.s32 %v2030, 232
      %v2060 = vadd.s32 %v2030, 240
      %v2061 = vadd.s32 %v2030, 248
      %v2062 = vadd.s32 %v2030, 256
      %v2063 = vadd.s32 %v2030, 264
      %v2064 = vadd.s32 %v2030, 272
      %v2065 = vadd.s32 %v2030, 280
      %v2066 = vadd.s32 %v2030, 288
      %v2067 = vadd.s32 %v2030, 296
      %v2068 = vadd.s32 %v2030, 304
      %v2069 = vadd.s32 %v2030, 312
      %v2070 = vadd.s32 %v2030, 320
      %v2071 = vadd.s32 %v2030, 328
      %v2072 = vadd.s32 %v2030, 336
      %v2073 = vadd.s32 %v2030, 344
      %v2074 = vadd.s32 %v2030, 352
      %v2075 = vadd.s32 %v2030, 360
      %v2076 = vadd.s32 %v2030, 368
      %v2077 = vadd.s32 %v2030, 376
      %v2078 = vadd.s32 %v2030, 384
      %v2079 = vadd.s32 %v2030, 392
      %v2080 = vadd.s32 %v2030, 400
      %v2081 = vadd.s32 %v2030, 408
      %v2082 = vadd.s32 %v2030, 416
      %v2083 = vadd.s32 %v2030, 424
      %v2084 = vadd.s32 %v2030, 432
      %v2085 = vadd.s32 %v2030, 440
      %v2086 = vadd.s32 %v2030, 448
      %v2087 = vadd.s32 %v2030, 456
      %v2088 = vadd.s32 %v2030, 464
      %v2089 = vadd.s32 %v2030, 472
      %v2090 = vadd.s32 %v2030, 480
      %v2091 = vadd.s32 %v2030, 488
      %v2092 = vadd.s32 %v2030, 496
      %v2093 = vadd.s32 %v2030, 504
      %v2094 = vand.u32 %v2030, 255
      %v2095 = vand.u32 %v2031, 255
      %v2096 = vand.u32 %v2032, 255
      %v2097 = vand.u32 %v2033, 255
      %v2098 = vand.u32 %v2034, 255
      %v2099 = vand.u32 %v2035, 255
      %v2100 = vand.u32 %v2036, 255
      %v2101 = vand.u32 %v2037, 255
      %v2102 = vand.u32 %v2038, 255
      %v2103 = vand.u32 %v2039, 255
      %v2104 = vand.u32 %v2040, 255
      %v2105 = vand.u32 %v2041, 255
      %v2106 = vand.u32 %v2042, 255
      %v2107 = vand.u32 %v2043, 255
      %v2108 = vand.u32 %v2044, 255
      %v2109 = vand.u32 %v2045, 255
      %v2110 = vand.u32 %v2046, 255
      %v2111 = vand.u32 %v2047, 255
      %v2112 = vand.u32 %v2048, 255
      %v2113 = vand.u32 %v2049, 255
      %v2114 = vand.u32 %v2050, 255
      %v2115 = vand.u32 %v2051, 255
      %v2116 = vand.u32 %v2052, 255
      %v2117 = vand.u32 %v2053, 255
      %v2118 = vand.u32 %v2054, 255
      %v2119 = vand.u32 %v2055, 255
      %v2120 = vand.u32 %v2056, 255
      %v2121 = vand.u32 %v2057, 255
      %v2122 = vand.u32 %v2058, 255
      %v2123 = vand.u32 %v2059, 255
      %v2124 = vand.u32 %v2060, 255
      %v2125 = vand.u32 %v2061, 255
      %v2126 = vand.u32 %v2062, 255
      %v2127 = vand.u32 %v2063, 255
      %v2128 = vand.u32 %v2064, 255
      %v2129 = vand.u32 %v2065, 255
      %v2130 = vand.u32 %v2066, 255
      %v2131 = vand.u32 %v2067, 255
      %v2132 = vand.u32 %v2068, 255
      %v2133 = vand.u32 %v2069, 255
      %v2134 = vand.u32 %v2070, 255
      %v2135 = vand.u32 %v2071, 255
      %v2136 = vand.u32 %v2072, 255
      %v2137 = vand.u32 %v2073, 255
      %v2138 = vand.u32 %v2074, 255
      %v2139 = vand.u32 %v2075, 255
      %v2140 = vand.u32 %v2076, 255
      %v2141 = vand.u32 %v2077, 255
      %v2142 = vand.u32 %v2078, 255
      %v2143 = vand.u32 %v2079, 255
      %v2144 = vand.u32 %v2080, 255
      %v2145 = vand.u32 %v2081, 255
      %v2146 = vand.u32 %v2082, 255
      %v2147 = vand.u32 %v2083, 255
      %v2148 = vand.u32 %v2084, 255
      %v2149 = vand.u32 %v2085, 255
      %v2150 = vand.u32 %v2086, 255
      %v2151 = vand.u32 %v2087, 255
      %v2152 = vand.u32 %v2088, 255
      %v2153 = vand.u32 %v2089, 255
      %v2154 = vand.u32 %v2090, 255
      %v2155 = vand.u32 %v2091, 255
      %v2156 = vand.u32 %v2092, 255
      %v2157 = vand.u32 %v2093, 255
      %v2158 = vand.u32 %v2030, 15
      %v2159 = vand.u32 %v2031, 15
      %v2160 = vand.u32 %v2032, 15
      %v2161 = vand.u32 %v2033, 15
      %v2162 = vand.u32 %v2034, 15
      %v2163 = vand.u32 %v2035, 15
      %v2164 = vand.u32 %v2036, 15
      %v2165 = vand.u32 %v2037, 15
      %v2166 = vand.u32 %v2038, 15
      %v2167 = vand.u32 %v2039, 15
      %v2168 = vand.u32 %v2040, 15
      %v2169 = vand.u32 %v2041, 15
      %v2170 = vand.u32 %v2042, 15
      %v2171 = vand.u32 %v2043, 15
      %v2172 = vand.u32 %v2044, 15
      %v2173 = vand.u32 %v2045, 15
      %v2174 = vand.u32 %v2046, 15
      %v2175 = vand.u32 %v2047, 15
      %v2176 = vand.u32 %v2048, 15
      %v2177 = vand.u32 %v2049, 15
      %v2178 = vand.u32 %v2050, 15
      %v2179 = vand.u32 %v2051, 15
      %v2180 = vand.u32 %v2052, 15
      %v2181 = vand.u32 %v2053, 15
      %v2182 = vand.u32 %v2054, 15
      %v2183 = vand.u32 %v2055, 15
      %v2184 = vand.u32 %v2056, 15
      %v2185 = vand.u32 %v2057, 15
      %v2186 = vand.u32 %v2058, 15
      %v2187 = vand.u32 %v2059, 15
      %v2188 = vand.u32 %v2060, 15
      %v2189 = vand.u32 %v2061, 15
      %v2190 = vand.u32 %v2062, 15
      %v2191 = vand.u32 %v2063, 15
      %v2192 = vand.u32 %v2064, 15
      %v2193 = vand.u32 %v2065, 15
      %v2194 = vand.u32 %v2066, 15
      %v2195 = vand.u32 %v2067, 15
      %v2196 = vand.u32 %v2068, 15
      %v2197 = vand.u32 %v2069, 15
      %v2198 = vand.u32 %v2070, 15
      %v2199 = vand.u32 %v2071, 15
      %v2200 = vand.u32 %v2072, 15
      %v2201 = vand.u32 %v2073, 15
      %v2202 = vand.u32 %v2074, 15
      %v2203 = vand.u32 %v2075, 15
      %v2204 = vand.u32 %v2076, 15
      %v2205 = vand.u32 %v2077, 15
      %v2206 = vand.u32 %v2078, 15
      %v2207 = vand.u32 %v2079, 15
      %v2208 = vand.u32 %v2080, 15
      %v2209 = vand.u32 %v2081, 15
      %v2210 = vand.u32 %v2082, 15
      %v2211 = vand.u32 %v2083, 15
      %v2212 = vand.u32 %v2084, 15
      %v2213 = vand.u32 %v2085, 15
      %v2214 = vand.u32 %v2086, 15
      %v2215 = vand.u32 %v2087, 15
      %v2216 = vand.u32 %v2088, 15
      %v2217 = vand.u32 %v2089, 15
      %v2218 = vand.u32 %v2090, 15
      %v2219 = vand.u32 %v2091, 15
      %v2220 = vand.u32 %v2092, 15
      %v2221 = vand.u32 %v2093, 15
      %vm2222 = vcmp.ge.s32.totalorder %v2094, 16
      %vm2223 = vcmp.ge.s32.totalorder %v2095, 16
      %vm2224 = vcmp.ge.s32.totalorder %v2096, 16
      %vm2225 = vcmp.ge.s32.totalorder %v2097, 16
      %vm2226 = vcmp.ge.s32.totalorder %v2098, 16
      %vm2227 = vcmp.ge.s32.totalorder %v2099, 16
      %vm2228 = vcmp.ge.s32.totalorder %v2100, 16
      %vm2229 = vcmp.ge.s32.totalorder %v2101, 16
      %vm2230 = vcmp.ge.s32.totalorder %v2102, 16
      %vm2231 = vcmp.ge.s32.totalorder %v2103, 16
      %vm2232 = vcmp.ge.s32.totalorder %v2104, 16
      %vm2233 = vcmp.ge.s32.totalorder %v2105, 16
      %vm2234 = vcmp.ge.s32.totalorder %v2106, 16
      %vm2235 = vcmp.ge.s32.totalorder %v2107, 16
      %vm2236 = vcmp.ge.s32.totalorder %v2108, 16
      %vm2237 = vcmp.ge.s32.totalorder %v2109, 16
      %vm2238 = vcmp.ge.s32.totalorder %v2110, 16
      %vm2239 = vcmp.ge.s32.totalorder %v2111, 16
      %vm2240 = vcmp.ge.s32.totalorder %v2112, 16
      %vm2241 = vcmp.ge.s32.totalorder %v2113, 16
      %vm2242 = vcmp.ge.s32.totalorder %v2114, 16
      %vm2243 = vcmp.ge.s32.totalorder %v2115, 16
      %vm2244 = vcmp.ge.s32.totalorder %v2116, 16
      %vm2245 = vcmp.ge.s32.totalorder %v2117, 16
      %vm2246 = vcmp.ge.s32.totalorder %v2118, 16
      %vm2247 = vcmp.ge.s32.totalorder %v2119, 16
      %vm2248 = vcmp.ge.s32.totalorder %v2120, 16
      %vm2249 = vcmp.ge.s32.totalorder %v2121, 16
      %vm2250 = vcmp.ge.s32.totalorder %v2122, 16
      %vm2251 = vcmp.ge.s32.totalorder %v2123, 16
      %vm2252 = vcmp.ge.s32.totalorder %v2124, 16
      %vm2253 = vcmp.ge.s32.totalorder %v2125, 16
      %vm2254 = vcmp.ge.s32.totalorder %v2126, 16
      %vm2255 = vcmp.ge.s32.totalorder %v2127, 16
      %vm2256 = vcmp.ge.s32.totalorder %v2128, 16
      %vm2257 = vcmp.ge.s32.totalorder %v2129, 16
      %vm2258 = vcmp.ge.s32.totalorder %v2130, 16
      %vm2259 = vcmp.ge.s32.totalorder %v2131, 16
      %vm2260 = vcmp.ge.s32.totalorder %v2132, 16
      %vm2261 = vcmp.ge.s32.totalorder %v2133, 16
      %vm2262 = vcmp.ge.s32.totalorder %v2134, 16
      %vm2263 = vcmp.ge.s32.totalorder %v2135, 16
      %vm2264 = vcmp.ge.s32.totalorder %v2136, 16
      %vm2265 = vcmp.ge.s32.totalorder %v2137, 16
      %vm2266 = vcmp.ge.s32.totalorder %v2138, 16
      %vm2267 = vcmp.ge.s32.totalorder %v2139, 16
      %vm2268 = vcmp.ge.s32.totalorder %v2140, 16
      %vm2269 = vcmp.ge.s32.totalorder %v2141, 16
      %vm2270 = vcmp.ge.s32.totalorder %v2142, 16
      %vm2271 = vcmp.ge.s32.totalorder %v2143, 16
      %vm2272 = vcmp.ge.s32.totalorder %v2144, 16
      %vm2273 = vcmp.ge.s32.totalorder %v2145, 16
      %vm2274 = vcmp.ge.s32.totalorder %v2146, 16
      %vm2275 = vcmp.ge.s32.totalorder %v2147, 16
      %vm2276 = vcmp.ge.s32.totalorder %v2148, 16
      %vm2277 = vcmp.ge.s32.totalorder %v2149, 16
      %vm2278 = vcmp.ge.s32.totalorder %v2150, 16
      %vm2279 = vcmp.ge.s32.totalorder %v2151, 16
      %vm2280 = vcmp.ge.s32.totalorder %v2152, 16
      %vm2281 = vcmp.ge.s32.totalorder %v2153, 16
      %vm2282 = vcmp.ge.s32.totalorder %v2154, 16
      %vm2283 = vcmp.ge.s32.totalorder %v2155, 16
      %vm2284 = vcmp.ge.s32.totalorder %v2156, 16
      %vm2285 = vcmp.ge.s32.totalorder %v2157, 16
      %vm2286 = vcmp.lt.s32.totalorder %v2094, 240
      %vm2287 = vcmp.lt.s32.totalorder %v2095, 240
      %vm2288 = vcmp.lt.s32.totalorder %v2096, 240
      %vm2289 = vcmp.lt.s32.totalorder %v2097, 240
      %vm2290 = vcmp.lt.s32.totalorder %v2098, 240
      %vm2291 = vcmp.lt.s32.totalorder %v2099, 240
      %vm2292 = vcmp.lt.s32.totalorder %v2100, 240
      %vm2293 = vcmp.lt.s32.totalorder %v2101, 240
      %vm2294 = vcmp.lt.s32.totalorder %v2102, 240
      %vm2295 = vcmp.lt.s32.totalorder %v2103, 240
      %vm2296 = vcmp.lt.s32.totalorder %v2104, 240
      %vm2297 = vcmp.lt.s32.totalorder %v2105, 240
      %vm2298 = vcmp.lt.s32.totalorder %v2106, 240
      %vm2299 = vcmp.lt.s32.totalorder %v2107, 240
      %vm2300 = vcmp.lt.s32.totalorder %v2108, 240
      %vm2301 = vcmp.lt.s32.totalorder %v2109, 240
      %vm2302 = vcmp.lt.s32.totalorder %v2110, 240
      %vm2303 = vcmp.lt.s32.totalorder %v2111, 240
      %vm2304 = vcmp.lt.s32.totalorder %v2112, 240
      %vm2305 = vcmp.lt.s32.totalorder %v2113, 240
      %vm2306 = vcmp.lt.s32.totalorder %v2114, 240
      %vm2307 = vcmp.lt.s32.totalorder %v2115, 240
      %vm2308 = vcmp.lt.s32.totalorder %v2116, 240
      %vm2309 = vcmp.lt.s32.totalorder %v2117, 240
      %vm2310 = vcmp.lt.s32.totalorder %v2118, 240
      %vm2311 = vcmp.lt.s32.totalorder %v2119, 240
      %vm2312 = vcmp.lt.s32.totalorder %v2120, 240
      %vm2313 = vcmp.lt.s32.totalorder %v2121, 240
      %vm2314 = vcmp.lt.s32.totalorder %v2122, 240
      %vm2315 = vcmp.lt.s32.totalorder %v2123, 240
      %vm2316 = vcmp.lt.s32.totalorder %v2124, 240
      %vm2317 = vcmp.lt.s32.totalorder %v2125, 240
      %vm2318 = vcmp.lt.s32.totalorder %v2126, 240
      %vm2319 = vcmp.lt.s32.totalorder %v2127, 240
      %vm2320 = vcmp.lt.s32.totalorder %v2128, 240
      %vm2321 = vcmp.lt.s32.totalorder %v2129, 240
      %vm2322 = vcmp.lt.s32.totalorder %v2130, 240
      %vm2323 = vcmp.lt.s32.totalorder %v2131, 240
      %vm2324 = vcmp.lt.s32.totalorder %v2132, 240
      %vm2325 = vcmp.lt.s32.totalorder %v2133, 240
      %vm2326 = vcmp.lt.s32.totalorder %v2134, 240
      %vm2327 = vcmp.lt.s32.totalorder %v2135, 240
      %vm2328 = vcmp.lt.s32.totalorder %v2136, 240
      %vm2329 = vcmp.lt.s32.totalorder %v2137, 240
      %vm2330 = vcmp.lt.s32.totalorder %v2138, 240
      %vm2331 = vcmp.lt.s32.totalorder %v2139, 240
      %vm2332 = vcmp.lt.s32.totalorder %v2140, 240
      %vm2333 = vcmp.lt.s32.totalorder %v2141, 240
      %vm2334 = vcmp.lt.s32.totalorder %v2142, 240
      %vm2335 = vcmp.lt.s32.totalorder %v2143, 240
      %vm2336 = vcmp.lt.s32.totalorder %v2144, 240
      %vm2337 = vcmp.lt.s32.totalorder %v2145, 240
      %vm2338 = vcmp.lt.s32.totalorder %v2146, 240
      %vm2339 = vcmp.lt.s32.totalorder %v2147, 240
      %vm2340 = vcmp.lt.s32.totalorder %v2148, 240
      %vm2341 = vcmp.lt.s32.totalorder %v2149, 240
      %vm2342 = vcmp.lt.s32.totalorder %v2150, 240
      %vm2343 = vcmp.lt.s32.totalorder %v2151, 240
      %vm2344 = vcmp.lt.s32.totalorder %v2152, 240
      %vm2345 = vcmp.lt.s32.totalorder %v2153, 240
      %vm2346 = vcmp.lt.s32.totalorder %v2154, 240
      %vm2347 = vcmp.lt.s32.totalorder %v2155, 240
      %vm2348 = vcmp.lt.s32.totalorder %v2156, 240
      %vm2349 = vcmp.lt.s32.totalorder %v2157, 240
      %vm2350 = vcmp.ge.s32.totalorder %v2158, 1
      %vm2351 = vcmp.ge.s32.totalorder %v2159, 1
      %vm2352 = vcmp.ge.s32.totalorder %v2160, 1
      %vm2353 = vcmp.ge.s32.totalorder %v2161, 1
      %vm2354 = vcmp.ge.s32.totalorder %v2162, 1
      %vm2355 = vcmp.ge.s32.totalorder %v2163, 1
      %vm2356 = vcmp.ge.s32.totalorder %v2164, 1
      %vm2357 = vcmp.ge.s32.totalorder %v2165, 1
      %vm2358 = vcmp.ge.s32.totalorder %v2166, 1
      %vm2359 = vcmp.ge.s32.totalorder %v2167, 1
      %vm2360 = vcmp.ge.s32.totalorder %v2168, 1
      %vm2361 = vcmp.ge.s32.totalorder %v2169, 1
      %vm2362 = vcmp.ge.s32.totalorder %v2170, 1
      %vm2363 = vcmp.ge.s32.totalorder %v2171, 1
      %vm2364 = vcmp.ge.s32.totalorder %v2172, 1
      %vm2365 = vcmp.ge.s32.totalorder %v2173, 1
      %vm2366 = vcmp.ge.s32.totalorder %v2174, 1
      %vm2367 = vcmp.ge.s32.totalorder %v2175, 1
      %vm2368 = vcmp.ge.s32.totalorder %v2176, 1
      %vm2369 = vcmp.ge.s32.totalorder %v2177, 1
      %vm2370 = vcmp.ge.s32.totalorder %v2178, 1
      %vm2371 = vcmp.ge.s32.totalorder %v2179, 1
      %vm2372 = vcmp.ge.s32.totalorder %v2180, 1
      %vm2373 = vcmp.ge.s32.totalorder %v2181, 1
      %vm2374 = vcmp.ge.s32.totalorder %v2182, 1
      %vm2375 = vcmp.ge.s32.totalorder %v2183, 1
      %vm2376 = vcmp.ge.s32.totalorder %v2184, 1
      %vm2377 = vcmp.ge.s32.totalorder %v2185, 1
      %vm2378 = vcmp.ge.s32.totalorder %v2186, 1
      %vm2379 = vcmp.ge.s32.totalorder %v2187, 1
      %vm2380 = vcmp.ge.s32.totalorder %v2188, 1
      %vm2381 = vcmp.ge.s32.totalorder %v2189, 1
      %vm2382 = vcmp.ge.s32.totalorder %v2190, 1
      %vm2383 = vcmp.ge.s32.totalorder %v2191, 1
      %vm2384 = vcmp.ge.s32.totalorder %v2192, 1
      %vm2385 = vcmp.ge.s32.totalorder %v2193, 1
      %vm2386 = vcmp.ge.s32.totalorder %v2194, 1
      %vm2387 = vcmp.ge.s32.totalorder %v2195, 1
      %vm2388 = vcmp.ge.s32.totalorder %v2196, 1
      %vm2389 = vcmp.ge.s32.totalorder %v2197, 1
      %vm2390 = vcmp.ge.s32.totalorder %v2198, 1
      %vm2391 = vcmp.ge.s32.totalorder %v2199, 1
      %vm2392 = vcmp.ge.s32.totalorder %v2200, 1
      %vm2393 = vcmp.ge.s32.totalorder %v2201, 1
      %vm2394 = vcmp.ge.s32.totalorder %v2202, 1
      %vm2395 = vcmp.ge.s32.totalorder %v2203, 1
      %vm2396 = vcmp.ge.s32.totalorder %v2204, 1
      %vm2397 = vcmp.ge.s32.totalorder %v2205, 1
      %vm2398 = vcmp.ge.s32.totalorder %v2206, 1
      %vm2399 = vcmp.ge.s32.totalorder %v2207, 1
      %vm2400 = vcmp.ge.s32.totalorder %v2208, 1
      %vm2401 = vcmp.ge.s32.totalorder %v2209, 1
      %vm2402 = vcmp.ge.s32.totalorder %v2210, 1
      %vm2403 = vcmp.ge.s32.totalorder %v2211, 1
      %vm2404 = vcmp.ge.s32.totalorder %v2212, 1
      %vm2405 = vcmp.ge.s32.totalorder %v2213, 1
      %vm2406 = vcmp.ge.s32.totalorder %v2214, 1
      %vm2407 = vcmp.ge.s32.totalorder %v2215, 1
      %vm2408 = vcmp.ge.s32.totalorder %v2216, 1
      %vm2409 = vcmp.ge.s32.totalorder %v2217, 1
      %vm2410 = vcmp.ge.s32.totalorder %v2218, 1
      %vm2411 = vcmp.ge.s32.totalorder %v2219, 1
      %vm2412 = vcmp.ge.s32.totalorder %v2220, 1
      %vm2413 = vcmp.ge.s32.totalorder %v2221, 1
      %vm2414 = vcmp.le.s32.totalorder %v2158, 14
      %vm2415 = vcmp.le.s32.totalorder %v2159, 14
      %vm2416 = vcmp.le.s32.totalorder %v2160, 14
      %vm2417 = vcmp.le.s32.totalorder %v2161, 14
      %vm2418 = vcmp.le.s32.totalorder %v2162, 14
      %vm2419 = vcmp.le.s32.totalorder %v2163, 14
      %vm2420 = vcmp.le.s32.totalorder %v2164, 14
      %vm2421 = vcmp.le.s32.totalorder %v2165, 14
      %vm2422 = vcmp.le.s32.totalorder %v2166, 14
      %vm2423 = vcmp.le.s32.totalorder %v2167, 14
      %vm2424 = vcmp.le.s32.totalorder %v2168, 14
      %vm2425 = vcmp.le.s32.totalorder %v2169, 14
      %vm2426 = vcmp.le.s32.totalorder %v2170, 14
      %vm2427 = vcmp.le.s32.totalorder %v2171, 14
      %vm2428 = vcmp.le.s32.totalorder %v2172, 14
      %vm2429 = vcmp.le.s32.totalorder %v2173, 14
      %vm2430 = vcmp.le.s32.totalorder %v2174, 14
      %vm2431 = vcmp.le.s32.totalorder %v2175, 14
      %vm2432 = vcmp.le.s32.totalorder %v2176, 14
      %vm2433 = vcmp.le.s32.totalorder %v2177, 14
      %vm2434 = vcmp.le.s32.totalorder %v2178, 14
      %vm2435 = vcmp.le.s32.totalorder %v2179, 14
      %vm2436 = vcmp.le.s32.totalorder %v2180, 14
      %vm2437 = vcmp.le.s32.totalorder %v2181, 14
      %vm2438 = vcmp.le.s32.totalorder %v2182, 14
      %vm2439 = vcmp.le.s32.totalorder %v2183, 14
      %vm2440 = vcmp.le.s32.totalorder %v2184, 14
      %vm2441 = vcmp.le.s32.totalorder %v2185, 14
      %vm2442 = vcmp.le.s32.totalorder %v2186, 14
      %vm2443 = vcmp.le.s32.totalorder %v2187, 14
      %vm2444 = vcmp.le.s32.totalorder %v2188, 14
      %vm2445 = vcmp.le.s32.totalorder %v2189, 14
      %vm2446 = vcmp.le.s32.totalorder %v2190, 14
      %vm2447 = vcmp.le.s32.totalorder %v2191, 14
      %vm2448 = vcmp.le.s32.totalorder %v2192, 14
      %vm2449 = vcmp.le.s32.totalorder %v2193, 14
      %vm2450 = vcmp.le.s32.totalorder %v2194, 14
      %vm2451 = vcmp.le.s32.totalorder %v2195, 14
      %vm2452 = vcmp.le.s32.totalorder %v2196, 14
      %vm2453 = vcmp.le.s32.totalorder %v2197, 14
      %vm2454 = vcmp.le.s32.totalorder %v2198, 14
      %vm2455 = vcmp.le.s32.totalorder %v2199, 14
      %vm2456 = vcmp.le.s32.totalorder %v2200, 14
      %vm2457 = vcmp.le.s32.totalorder %v2201, 14
      %vm2458 = vcmp.le.s32.totalorder %v2202, 14
      %vm2459 = vcmp.le.s32.totalorder %v2203, 14
      %vm2460 = vcmp.le.s32.totalorder %v2204, 14
      %vm2461 = vcmp.le.s32.totalorder %v2205, 14
      %vm2462 = vcmp.le.s32.totalorder %v2206, 14
      %vm2463 = vcmp.le.s32.totalorder %v2207, 14
      %vm2464 = vcmp.le.s32.totalorder %v2208, 14
      %vm2465 = vcmp.le.s32.totalorder %v2209, 14
      %vm2466 = vcmp.le.s32.totalorder %v2210, 14
      %vm2467 = vcmp.le.s32.totalorder %v2211, 14
      %vm2468 = vcmp.le.s32.totalorder %v2212, 14
      %vm2469 = vcmp.le.s32.totalorder %v2213, 14
      %vm2470 = vcmp.le.s32.totalorder %v2214, 14
      %vm2471 = vcmp.le.s32.totalorder %v2215, 14
      %vm2472 = vcmp.le.s32.totalorder %v2216, 14
      %vm2473 = vcmp.le.s32.totalorder %v2217, 14
      %vm2474 = vcmp.le.s32.totalorder %v2218, 14
      %vm2475 = vcmp.le.s32.totalorder %v2219, 14
      %vm2476 = vcmp.le.s32.totalorder %v2220, 14
      %vm2477 = vcmp.le.s32.totalorder %v2221, 14
      %v2478 = vld [vmem:[#allocation2 + $0x7] sm:$0xff]
      %v2479 = vld [vmem:[#allocation2 + $0xf] sm:$0xff]
      %v2480 = vld [vmem:[#allocation2 + $0x17] sm:$0xff]
      %v2481 = vld [vmem:[#allocation2 + $0x1f] sm:$0xff]
      %v2482 = vld [vmem:[#allocation2 + $0x27] sm:$0xff]
      %v2483 = vld [vmem:[#allocation2 + $0x2f] sm:$0xff]
      %v2484 = vld [vmem:[#allocation2 + $0x37] sm:$0xff]
      %v2485 = vld [vmem:[#allocation2 + $0x3f] sm:$0xff]
      %v2486 = vld [vmem:[#allocation2 + $0x47] sm:$0xff]
      %v2487 = vld [vmem:[#allocation2 + $0x4f] sm:$0xff]
      %v2488 = vld [vmem:[#allocation2 + $0x57] sm:$0xff]
      %v2489 = vld [vmem:[#allocation2 + $0x5f] sm:$0xff]
      %v2490 = vld [vmem:[#allocation2 + $0x67] sm:$0xff]
      %v2491 = vld [vmem:[#allocation2 + $0x6f] sm:$0xff]
      %v2492 = vld [vmem:[#allocation2 + $0x77] sm:$0xff]
      %v2493 = vld [vmem:[#allocation2 + $0x7f] sm:$0xff]
      %v2494 = vld [vmem:[#allocation2 + $0x87] sm:$0xff]
      %v2495 = vld [vmem:[#allocation2 + $0x8f] sm:$0xff]
      %v2496 = vld [vmem:[#allocation2 + $0x97] sm:$0xff]
      %v2497 = vld [vmem:[#allocation2 + $0x9f] sm:$0xff]
      %v2498 = vld [vmem:[#allocation2 + $0xa7] sm:$0xff]
      %v2499 = vld [vmem:[#allocation2 + $0xaf] sm:$0xff]
      %v2500 = vld [vmem:[#allocation2 + $0xb7] sm:$0xff]
      %v2501 = vld [vmem:[#allocation2 + $0xbf] sm:$0xff]
      %v2502 = vld [vmem:[#allocation2 + $0xc7] sm:$0xff]
      %v2503 = vld [vmem:[#allocation2 + $0xcf] sm:$0xff]
      %v2504 = vld [vmem:[#allocation2 + $0xd7] sm:$0xff]
      %v2505 = vld [vmem:[#allocation2 + $0xdf] sm:$0xff]
      %v2506 = vld [vmem:[#allocation2 + $0xe7] sm:$0xff]
      %v2507 = vld [vmem:[#allocation2 + $0xef] sm:$0xff]
      %v2508 = vld [vmem:[#allocation2 + $0xf7] sm:$0xff]
      %v2509 = vld [vmem:[#allocation2 + $0xff] sm:$0xff]
      %v2510 = vld [vmem:[#allocation2 + $0x137] sm:$0xff]
      %v2511 = vld [vmem:[#allocation2 + $0x13f] sm:$0xff]
      %v2512 = vld [vmem:[#allocation2 + $0x147] sm:$0xff]
      %v2513 = vld [vmem:[#allocation2 + $0x14f] sm:$0xff]
      %v2514 = vld [vmem:[#allocation2 + $0x157] sm:$0xff]
      %v2515 = vld [vmem:[#allocation2 + $0x15f] sm:$0xff]
      %v2516 = vld [vmem:[#allocation2 + $0x167] sm:$0xff]
      %v2517 = vld [vmem:[#allocation2 + $0x16f] sm:$0xff]
      %v2518 = vld [vmem:[#allocation2 + $0x177] sm:$0xff]
      %v2519 = vld [vmem:[#allocation2 + $0x17f] sm:$0xff]
      %v2520 = vld [vmem:[#allocation2 + $0x187] sm:$0xff]
      %v2521 = vld [vmem:[#allocation2 + $0x18f] sm:$0xff]
      %v2522 = vld [vmem:[#allocation2 + $0x197] sm:$0xff]
      %v2523 = vld [vmem:[#allocation2 + $0x19f] sm:$0xff]
      %v2524 = vld [vmem:[#allocation2 + $0x1a7] sm:$0xff]
      %v2525 = vld [vmem:[#allocation2 + $0x1af] sm:$0xff]
      %v2526 = vld [vmem:[#allocation2 + $0x1b7] sm:$0xff]
      %v2527 = vld [vmem:[#allocation2 + $0x1bf] sm:$0xff]
      %v2528 = vld [vmem:[#allocation2 + $0x1c7] sm:$0xff]
      %v2529 = vld [vmem:[#allocation2 + $0x1cf] sm:$0xff]
      %v2530 = vld [vmem:[#allocation2 + $0x1d7] sm:$0xff]
      %v2531 = vld [vmem:[#allocation2 + $0x1df] sm:$0xff]
      %v2532 = vld [vmem:[#allocation2 + $0x1e7] sm:$0xff]
      %v2533 = vld [vmem:[#allocation2 + $0x1ef] sm:$0xff]
      %v2534 = vld [vmem:[#allocation2 + $0x1f7] sm:$0xff]
      %v2535 = vld [vmem:[#allocation2 + $0x1ff] sm:$0xff]
      %v2536 = vld [vmem:[#allocation2 + $0x207] sm:$0xff]
      %v2537 = vld [vmem:[#allocation2 + $0x20f] sm:$0xff]
      %v2538 = vld [vmem:[#allocation2 + $0x217] sm:$0xff]
      %v2539 = vld [vmem:[#allocation2 + $0x21f] sm:$0xff]
      %v2540 = vld [vmem:[#allocation2 + $0x227] sm:$0xff]
      %v2541 = vld [vmem:[#allocation2 + $0x22f] sm:$0xff]
      %vm2542 = vmand %vm2222, %vm2350
      %vm2543 = vmand %vm2223, %vm2351
      %vm2544 = vmand %vm2224, %vm2352
      %vm2545 = vmand %vm2225, %vm2353
      %vm2546 = vmand %vm2226, %vm2354
      %vm2547 = vmand %vm2227, %vm2355
      %vm2548 = vmand %vm2228, %vm2356
      %vm2549 = vmand %vm2229, %vm2357
      %vm2550 = vmand %vm2230, %vm2358
      %vm2551 = vmand %vm2231, %vm2359
      %vm2552 = vmand %vm2232, %vm2360
      %vm2553 = vmand %vm2233, %vm2361
      %vm2554 = vmand %vm2234, %vm2362
      %vm2555 = vmand %vm2235, %vm2363
      %vm2556 = vmand %vm2236, %vm2364
      %vm2557 = vmand %vm2237, %vm2365
      %vm2558 = vmand %vm2238, %vm2366
      %vm2559 = vmand %vm2239, %vm2367
      %vm2560 = vmand %vm2240, %vm2368
      %vm2561 = vmand %vm2241, %vm2369
      %vm2562 = vmand %vm2242, %vm2370
      %vm2563 = vmand %vm2243, %vm2371
      %vm2564 = vmand %vm2244, %vm2372
      %vm2565 = vmand %vm2245, %vm2373
      %vm2566 = vmand %vm2246, %vm2374
      %vm2567 = vmand %vm2247, %vm2375
      %vm2568 = vmand %vm2248, %vm2376
      %vm2569 = vmand %vm2249, %vm2377
      %vm2570 = vmand %vm2250, %vm2378
      %vm2571 = vmand %vm2251, %vm2379
      %vm2572 = vmand %vm2252, %vm2380
      %vm2573 = vmand %vm2253, %vm2381
      %vm2574 = vmand %vm2254, %vm2382
      %vm2575 = vmand %vm2255, %vm2383
      %vm2576 = vmand %vm2256, %vm2384
      %vm2577 = vmand %vm2257, %vm2385
      %vm2578 = vmand %vm2258, %vm2386
      %vm2579 = vmand %vm2259, %vm2387
      %vm2580 = vmand %vm2260, %vm2388
      %vm2581 = vmand %vm2261, %vm2389
      %vm2582 = vmand %vm2262, %vm2390
      %vm2583 = vmand %vm2263, %vm2391
      %vm2584 = vmand %vm2264, %vm2392
      %vm2585 = vmand %vm2265, %vm2393
      %vm2586 = vmand %vm2266, %vm2394
      %vm2587 = vmand %vm2267, %vm2395
      %vm2588 = vmand %vm2268, %vm2396
      %vm2589 = vmand %vm2269, %vm2397
      %vm2590 = vmand %vm2270, %vm2398
      %vm2591 = vmand %vm2271, %vm2399
      %vm2592 = vmand %vm2272, %vm2400
      %vm2593 = vmand %vm2273, %vm2401
      %vm2594 = vmand %vm2274, %vm2402
      %vm2595 = vmand %vm2275, %vm2403
      %vm2596 = vmand %vm2276, %vm2404
      %vm2597 = vmand %vm2277, %vm2405
      %vm2598 = vmand %vm2278, %vm2406
      %vm2599 = vmand %vm2279, %vm2407
      %vm2600 = vmand %vm2280, %vm2408
      %vm2601 = vmand %vm2281, %vm2409
      %vm2602 = vmand %vm2282, %vm2410
      %vm2603 = vmand %vm2283, %vm2411
      %vm2604 = vmand %vm2284, %vm2412
      %vm2605 = vmand %vm2285, %vm2413
      %v2606 = vsel %vm2542, 1, 0
      %v2607 = vsel %vm2543, 1, 0
      %v2608 = vsel %vm2544, 1, 0
      %v2609 = vsel %vm2545, 1, 0
      %v2610 = vsel %vm2546, 1, 0
      %v2611 = vsel %vm2547, 1, 0
      %v2612 = vsel %vm2548, 1, 0
      %v2613 = vsel %vm2549, 1, 0
      %v2614 = vsel %vm2550, 1, 0
      %v2615 = vsel %vm2551, 1, 0
      %v2616 = vsel %vm2552, 1, 0
      %v2617 = vsel %vm2553, 1, 0
      %v2618 = vsel %vm2554, 1, 0
      %v2619 = vsel %vm2555, 1, 0
      %v2620 = vsel %vm2556, 1, 0
      %v2621 = vsel %vm2557, 1, 0
      %v2622 = vsel %vm2558, 1, 0
      %v2623 = vsel %vm2559, 1, 0
      %v2624 = vsel %vm2560, 1, 0
      %v2625 = vsel %vm2561, 1, 0
      %v2626 = vsel %vm2562, 1, 0
      %v2627 = vsel %vm2563, 1, 0
      %v2628 = vsel %vm2564, 1, 0
      %v2629 = vsel %vm2565, 1, 0
      %v2630 = vsel %vm2566, 1, 0
      %v2631 = vsel %vm2567, 1, 0
      %v2632 = vsel %vm2568, 1, 0
      %v2633 = vsel %vm2569, 1, 0
      %v2634 = vsel %vm2570, 1, 0
      %v2635 = vsel %vm2571, 1, 0
      %v2636 = vsel %vm2572, 1, 0
      %v2637 = vsel %vm2573, 1, 0
      %v2638 = vsel %vm2574, 1, 0
      %v2639 = vsel %vm2575, 1, 0
      %v2640 = vsel %vm2576, 1, 0
      %v2641 = vsel %vm2577, 1, 0
      %v2642 = vsel %vm2578, 1, 0
      %v2643 = vsel %vm2579, 1, 0
      %v2644 = vsel %vm2580, 1, 0
      %v2645 = vsel %vm2581, 1, 0
      %v2646 = vsel %vm2582, 1, 0
      %v2647 = vsel %vm2583, 1, 0
      %v2648 = vsel %vm2584, 1, 0
      %v2649 = vsel %vm2585, 1, 0
      %v2650 = vsel %vm2586, 1, 0
      %v2651 = vsel %vm2587, 1, 0
      %v2652 = vsel %vm2588, 1, 0
      %v2653 = vsel %vm2589, 1, 0
      %v2654 = vsel %vm2590, 1, 0
      %v2655 = vsel %vm2591, 1, 0
      %v2656 = vsel %vm2592, 1, 0
      %v2657 = vsel %vm2593, 1, 0
      %v2658 = vsel %vm2594, 1, 0
      %v2659 = vsel %vm2595, 1, 0
      %v2660 = vsel %vm2596, 1, 0
      %v2661 = vsel %vm2597, 1, 0
      %v2662 = vsel %vm2598, 1, 0
      %v2663 = vsel %vm2599, 1, 0
      %v2664 = vsel %vm2600, 1, 0
      %v2665 = vsel %vm2601, 1, 0
      %v2666 = vsel %vm2602, 1, 0
      %v2667 = vsel %vm2603, 1, 0
      %v2668 = vsel %vm2604, 1, 0
      %v2669 = vsel %vm2605, 1, 0
      %vm2670 = vcmp.eq.s32.totalorder %v2606, 1
      %vm2671 = vcmp.eq.s32.totalorder %v2607, 1
      %vm2672 = vcmp.eq.s32.totalorder %v2608, 1
      %vm2673 = vcmp.eq.s32.totalorder %v2609, 1
      %vm2674 = vcmp.eq.s32.totalorder %v2610, 1
      %vm2675 = vcmp.eq.s32.totalorder %v2611, 1
      %vm2676 = vcmp.eq.s32.totalorder %v2612, 1
      %vm2677 = vcmp.eq.s32.totalorder %v2613, 1
      %vm2678 = vcmp.eq.s32.totalorder %v2614, 1
      %vm2679 = vcmp.eq.s32.totalorder %v2615, 1
      %vm2680 = vcmp.eq.s32.totalorder %v2616, 1
      %vm2681 = vcmp.eq.s32.totalorder %v2617, 1
      %vm2682 = vcmp.eq.s32.totalorder %v2618, 1
      %vm2683 = vcmp.eq.s32.totalorder %v2619, 1
      %vm2684 = vcmp.eq.s32.totalorder %v2620, 1
      %vm2685 = vcmp.eq.s32.totalorder %v2621, 1
      %vm2686 = vcmp.eq.s32.totalorder %v2622, 1
      %vm2687 = vcmp.eq.s32.totalorder %v2623, 1
      %vm2688 = vcmp.eq.s32.totalorder %v2624, 1
      %vm2689 = vcmp.eq.s32.totalorder %v2625, 1
      %vm2690 = vcmp.eq.s32.totalorder %v2626, 1
      %vm2691 = vcmp.eq.s32.totalorder %v2627, 1
      %vm2692 = vcmp.eq.s32.totalorder %v2628, 1
      %vm2693 = vcmp.eq.s32.totalorder %v2629, 1
      %vm2694 = vcmp.eq.s32.totalorder %v2630, 1
      %vm2695 = vcmp.eq.s32.totalorder %v2631, 1
      %vm2696 = vcmp.eq.s32.totalorder %v2632, 1
      %vm2697 = vcmp.eq.s32.totalorder %v2633, 1
      %vm2698 = vcmp.eq.s32.totalorder %v2634, 1
      %vm2699 = vcmp.eq.s32.totalorder %v2635, 1
      %vm2700 = vcmp.eq.s32.totalorder %v2636, 1
      %vm2701 = vcmp.eq.s32.totalorder %v2637, 1
      %vm2702 = vcmp.eq.s32.totalorder %v2638, 1
      %vm2703 = vcmp.eq.s32.totalorder %v2639, 1
      %vm2704 = vcmp.eq.s32.totalorder %v2640, 1
      %vm2705 = vcmp.eq.s32.totalorder %v2641, 1
      %vm2706 = vcmp.eq.s32.totalorder %v2642, 1
      %vm2707 = vcmp.eq.s32.totalorder %v2643, 1
      %vm2708 = vcmp.eq.s32.totalorder %v2644, 1
      %vm2709 = vcmp.eq.s32.totalorder %v2645, 1
      %vm2710 = vcmp.eq.s32.totalorder %v2646, 1
      %vm2711 = vcmp.eq.s32.totalorder %v2647, 1
      %vm2712 = vcmp.eq.s32.totalorder %v2648, 1
      %vm2713 = vcmp.eq.s32.totalorder %v2649, 1
      %vm2714 = vcmp.eq.s32.totalorder %v2650, 1
      %vm2715 = vcmp.eq.s32.totalorder %v2651, 1
      %vm2716 = vcmp.eq.s32.totalorder %v2652, 1
      %vm2717 = vcmp.eq.s32.totalorder %v2653, 1
      %vm2718 = vcmp.eq.s32.totalorder %v2654, 1
      %vm2719 = vcmp.eq.s32.totalorder %v2655, 1
      %vm2720 = vcmp.eq.s32.totalorder %v2656, 1
      %vm2721 = vcmp.eq.s32.totalorder %v2657, 1
      %vm2722 = vcmp.eq.s32.totalorder %v2658, 1
      %vm2723 = vcmp.eq.s32.totalorder %v2659, 1
      %vm2724 = vcmp.eq.s32.totalorder %v2660, 1
      %vm2725 = vcmp.eq.s32.totalorder %v2661, 1
      %vm2726 = vcmp.eq.s32.totalorder %v2662, 1
      %vm2727 = vcmp.eq.s32.totalorder %v2663, 1
      %vm2728 = vcmp.eq.s32.totalorder %v2664, 1
      %vm2729 = vcmp.eq.s32.totalorder %v2665, 1
      %vm2730 = vcmp.eq.s32.totalorder %v2666, 1
      %vm2731 = vcmp.eq.s32.totalorder %v2667, 1
      %vm2732 = vcmp.eq.s32.totalorder %v2668, 1
      %vm2733 = vcmp.eq.s32.totalorder %v2669, 1
      %v2734 = vsel %vm2670, %v2478, 0.0
      %v2735 = vsel %vm2671, %v2479, 0.0
      %v2736 = vsel %vm2672, %v2480, 0.0
      %v2737 = vsel %vm2673, %v2481, 0.0
      %v2738 = vsel %vm2674, %v2482, 0.0
      %v2739 = vsel %vm2675, %v2483, 0.0
      %v2740 = vsel %vm2676, %v2484, 0.0
      %v2741 = vsel %vm2677, %v2485, 0.0
      %v2742 = vsel %vm2678, %v2486, 0.0
      %v2743 = vsel %vm2679, %v2487, 0.0
      %v2744 = vsel %vm2680, %v2488, 0.0
      %v2745 = vsel %vm2681, %v2489, 0.0
      %v2746 = vsel %vm2682, %v2490, 0.0
      %v2747 = vsel %vm2683, %v2491, 0.0
      %v2748 = vsel %vm2684, %v2492, 0.0
      %v2749 = vsel %vm2685, %v2493, 0.0
      %v2750 = vsel %vm2686, %v2494, 0.0
      %v2751 = vsel %vm2687, %v2495, 0.0
      %v2752 = vsel %vm2688, %v2496, 0.0
      %v2753 = vsel %vm2689, %v2497, 0.0
      %v2754 = vsel %vm2690, %v2498, 0.0
      %v2755 = vsel %vm2691, %v2499, 0.0
      %v2756 = vsel %vm2692, %v2500, 0.0
      %v2757 = vsel %vm2693, %v2501, 0.0
      %v2758 = vsel %vm2694, %v2502, 0.0
      %v2759 = vsel %vm2695, %v2503, 0.0
      %v2760 = vsel %vm2696, %v2504, 0.0
      %v2761 = vsel %vm2697, %v2505, 0.0
      %v2762 = vsel %vm2698, %v2506, 0.0
      %v2763 = vsel %vm2699, %v2507, 0.0
      %v2764 = vsel %vm2700, %v2508, 0.0
      %v2765 = vsel %vm2701, %v2509, 0.0
      %v2766 = vsel %vm2702, %v2510, 0.0
      %v2767 = vsel %vm2703, %v2511, 0.0
      %v2768 = vsel %vm2704, %v2512, 0.0
      %v2769 = vsel %vm2705, %v2513, 0.0
      %v2770 = vsel %vm2706, %v2514, 0.0
      %v2771 = vsel %vm2707, %v2515, 0.0
      %v2772 = vsel %vm2708, %v2516, 0.0
      %v2773 = vsel %vm2709, %v2517, 0.0
      %v2774 = vsel %vm2710, %v2518, 0.0
      %v2775 = vsel %vm2711, %v2519, 0.0
      %v2776 = vsel %vm2712, %v2520, 0.0
      %v2777 = vsel %vm2713, %v2521, 0.0
      %v2778 = vsel %vm2714, %v2522, 0.0
      %v2779 = vsel %vm2715, %v2523, 0.0
      %v2780 = vsel %vm2716, %v2524, 0.0
      %v2781 = vsel %vm2717, %v2525, 0.0
      %v2782 = vsel %vm2718, %v2526, 0.0
      %v2783 = vsel %vm2719, %v2527, 0.0
      %v2784 = vsel %vm2720, %v2528, 0.0
      %v2785 = vsel %vm2721, %v2529, 0.0
      %v2786 = vsel %vm2722, %v2530, 0.0
      %v2787 = vsel %vm2723, %v2531, 0.0
      %v2788 = vsel %vm2724, %v2532, 0.0
      %v2789 = vsel %vm2725, %v2533, 0.0
      %v2790 = vsel %vm2726, %v2534, 0.0
      %v2791 = vsel %vm2727, %v2535, 0.0
      %v2792 = vsel %vm2728, %v2536, 0.0
      %v2793 = vsel %vm2729, %v2537, 0.0
      %v2794 = vsel %vm2730, %v2538, 0.0
      %v2795 = vsel %vm2731, %v2539, 0.0
      %v2796 = vsel %vm2732, %v2540, 0.0
      %v2797 = vsel %vm2733, %v2541, 0.0
      %v2798 = vld [vmem:[#allocation2 + $0x8] sm:$0xff]
      %v2799 = vld [vmem:[#allocation2 + $0x10] sm:$0xff]
      %v2800 = vld [vmem:[#allocation2 + $0x18] sm:$0xff]
      %v2801 = vld [vmem:[#allocation2 + $0x20] sm:$0xff]
      %v2802 = vld [vmem:[#allocation2 + $0x28] sm:$0xff]
      %v2803 = vld [vmem:[#allocation2 + $0x30] sm:$0xff]
      %v2804 = vld [vmem:[#allocation2 + $0x38] sm:$0xff]
      %v2805 = vld [vmem:[#allocation2 + $0x40] sm:$0xff]
      %v2806 = vld [vmem:[#allocation2 + $0x48] sm:$0xff]
      %v2807 = vld [vmem:[#allocation2 + $0x50] sm:$0xff]
      %v2808 = vld [vmem:[#allocation2 + $0x58] sm:$0xff]
      %v2809 = vld [vmem:[#allocation2 + $0x60] sm:$0xff]
      %v2810 = vld [vmem:[#allocation2 + $0x68] sm:$0xff]
      %v2811 = vld [vmem:[#allocation2 + $0x70] sm:$0xff]
      %v2812 = vld [vmem:[#allocation2 + $0x78] sm:$0xff]
      %v2813 = vld [vmem:[#allocation2 + $0x80] sm:$0xff]
      %v2814 = vld [vmem:[#allocation2 + $0x88] sm:$0xff]
      %v2815 = vld [vmem:[#allocation2 + $0x90] sm:$0xff]
      %v2816 = vld [vmem:[#allocation2 + $0x98] sm:$0xff]
      %v2817 = vld [vmem:[#allocation2 + $0xa0] sm:$0xff]
      %v2818 = vld [vmem:[#allocation2 + $0xa8] sm:$0xff]
      %v2819 = vld [vmem:[#allocation2 + $0xb0] sm:$0xff]
      %v2820 = vld [vmem:[#allocation2 + $0xb8] sm:$0xff]
      %v2821 = vld [vmem:[#allocation2 + $0xc0] sm:$0xff]
      %v2822 = vld [vmem:[#allocation2 + $0xc8] sm:$0xff]
      %v2823 = vld [vmem:[#allocation2 + $0xd0] sm:$0xff]
      %v2824 = vld [vmem:[#allocation2 + $0xd8] sm:$0xff]
      %v2825 = vld [vmem:[#allocation2 + $0xe0] sm:$0xff]
      %v2826 = vld [vmem:[#allocation2 + $0xe8] sm:$0xff]
      %v2827 = vld [vmem:[#allocation2 + $0xf0] sm:$0xff]
      %v2828 = vld [vmem:[#allocation2 + $0xf8] sm:$0xff]
      %v2829 = vld [vmem:[#allocation2 + $0x100] sm:$0xff]
      %v2830 = vld [vmem:[#allocation2 + $0x138] sm:$0xff]
      %v2831 = vld [vmem:[#allocation2 + $0x140] sm:$0xff]
      %v2832 = vld [vmem:[#allocation2 + $0x148] sm:$0xff]
      %v2833 = vld [vmem:[#allocation2 + $0x150] sm:$0xff]
      %v2834 = vld [vmem:[#allocation2 + $0x158] sm:$0xff]
      %v2835 = vld [vmem:[#allocation2 + $0x160] sm:$0xff]
      %v2836 = vld [vmem:[#allocation2 + $0x168] sm:$0xff]
      %v2837 = vld [vmem:[#allocation2 + $0x170] sm:$0xff]
      %v2838 = vld [vmem:[#allocation2 + $0x178] sm:$0xff]
      %v2839 = vld [vmem:[#allocation2 + $0x180] sm:$0xff]
      %v2840 = vld [vmem:[#allocation2 + $0x188] sm:$0xff]
      %v2841 = vld [vmem:[#allocation2 + $0x190] sm:$0xff]
      %v2842 = vld [vmem:[#allocation2 + $0x198] sm:$0xff]
      %v2843 = vld [vmem:[#allocation2 + $0x1a0] sm:$0xff]
      %v2844 = vld [vmem:[#allocation2 + $0x1a8] sm:$0xff]
      %v2845 = vld [vmem:[#allocation2 + $0x1b0] sm:$0xff]
      %v2846 = vld [vmem:[#allocation2 + $0x1b8] sm:$0xff]
      %v2847 = vld [vmem:[#allocation2 + $0x1c0] sm:$0xff]
      %v2848 = vld [vmem:[#allocation2 + $0x1c8] sm:$0xff]
      %v2849 = vld [vmem:[#allocation2 + $0x1d0] sm:$0xff]
      %v2850 = vld [vmem:[#allocation2 + $0x1d8] sm:$0xff]
      %v2851 = vld [vmem:[#allocation2 + $0x1e0] sm:$0xff]
      %v2852 = vld [vmem:[#allocation2 + $0x1e8] sm:$0xff]
      %v2853 = vld [vmem:[#allocation2 + $0x1f0] sm:$0xff]
      %v2854 = vld [vmem:[#allocation2 + $0x1f8] sm:$0xff]
      %v2855 = vld [vmem:[#allocation2 + $0x200] sm:$0xff]
      %v2856 = vld [vmem:[#allocation2 + $0x208] sm:$0xff]
      %v2857 = vld [vmem:[#allocation2 + $0x210] sm:$0xff]
      %v2858 = vld [vmem:[#allocation2 + $0x218] sm:$0xff]
      %v2859 = vld [vmem:[#allocation2 + $0x220] sm:$0xff]
      %v2860 = vld [vmem:[#allocation2 + $0x228] sm:$0xff]
      %v2861 = vld [vmem:[#allocation2 + $0x230] sm:$0xff]
      %v2862 = vsel %vm2222, 1, 0
      %v2863 = vsel %vm2223, 1, 0
      %v2864 = vsel %vm2224, 1, 0
      %v2865 = vsel %vm2225, 1, 0
      %v2866 = vsel %vm2226, 1, 0
      %v2867 = vsel %vm2227, 1, 0
      %v2868 = vsel %vm2228, 1, 0
      %v2869 = vsel %vm2229, 1, 0
      %v2870 = vsel %vm2230, 1, 0
      %v2871 = vsel %vm2231, 1, 0
      %v2872 = vsel %vm2232, 1, 0
      %v2873 = vsel %vm2233, 1, 0
      %v2874 = vsel %vm2234, 1, 0
      %v2875 = vsel %vm2235, 1, 0
      %v2876 = vsel %vm2236, 1, 0
      %v2877 = vsel %vm2237, 1, 0
      %v2878 = vsel %vm2238, 1, 0
      %v2879 = vsel %vm2239, 1, 0
      %v2880 = vsel %vm2240, 1, 0
      %v2881 = vsel %vm2241, 1, 0
      %v2882 = vsel %vm2242, 1, 0
      %v2883 = vsel %vm2243, 1, 0
      %v2884 = vsel %vm2244, 1, 0
      %v2885 = vsel %vm2245, 1, 0
      %v2886 = vsel %vm2246, 1, 0
      %v2887 = vsel %vm2247, 1, 0
      %v2888 = vsel %vm2248, 1, 0
      %v2889 = vsel %vm2249, 1, 0
      %v2890 = vsel %vm2250, 1, 0
      %v2891 = vsel %vm2251, 1, 0
      %v2892 = vsel %vm2252, 1, 0
      %v2893 = vsel %vm2253, 1, 0
      %v2894 = vsel %vm2254, 1, 0
      %v2895 = vsel %vm2255, 1, 0
      %v2896 = vsel %vm2256, 1, 0
      %v2897 = vsel %vm2257, 1, 0
      %v2898 = vsel %vm2258, 1, 0
      %v2899 = vsel %vm2259, 1, 0
      %v2900 = vsel %vm2260, 1, 0
      %v2901 = vsel %vm2261, 1, 0
      %v2902 = vsel %vm2262, 1, 0
      %v2903 = vsel %vm2263, 1, 0
      %v2904 = vsel %vm2264, 1, 0
      %v2905 = vsel %vm2265, 1, 0
      %v2906 = vsel %vm2266, 1, 0
      %v2907 = vsel %vm2267, 1, 0
      %v2908 = vsel %vm2268, 1, 0
      %v2909 = vsel %vm2269, 1, 0
      %v2910 = vsel %vm2270, 1, 0
      %v2911 = vsel %vm2271, 1, 0
      %v2912 = vsel %vm2272, 1, 0
      %v2913 = vsel %vm2273, 1, 0
      %v2914 = vsel %vm2274, 1, 0
      %v2915 = vsel %vm2275, 1, 0
      %v2916 = vsel %vm2276, 1, 0
      %v2917 = vsel %vm2277, 1, 0
      %v2918 = vsel %vm2278, 1, 0
      %v2919 = vsel %vm2279, 1, 0
      %v2920 = vsel %vm2280, 1, 0
      %v2921 = vsel %vm2281, 1, 0
      %v2922 = vsel %vm2282, 1, 0
      %v2923 = vsel %vm2283, 1, 0
      %v2924 = vsel %vm2284, 1, 0
      %v2925 = vsel %vm2285, 1, 0
      %vm2926 = vcmp.eq.s32.totalorder %v2862, 1
      %vm2927 = vcmp.eq.s32.totalorder %v2863, 1
      %vm2928 = vcmp.eq.s32.totalorder %v2864, 1
      %vm2929 = vcmp.eq.s32.totalorder %v2865, 1
      %vm2930 = vcmp.eq.s32.totalorder %v2866, 1
      %vm2931 = vcmp.eq.s32.totalorder %v2867, 1
      %vm2932 = vcmp.eq.s32.totalorder %v2868, 1
      %vm2933 = vcmp.eq.s32.totalorder %v2869, 1
      %vm2934 = vcmp.eq.s32.totalorder %v2870, 1
      %vm2935 = vcmp.eq.s32.totalorder %v2871, 1
      %vm2936 = vcmp.eq.s32.totalorder %v2872, 1
      %vm2937 = vcmp.eq.s32.totalorder %v2873, 1
      %vm2938 = vcmp.eq.s32.totalorder %v2874, 1
      %vm2939 = vcmp.eq.s32.totalorder %v2875, 1
      %vm2940 = vcmp.eq.s32.totalorder %v2876, 1
      %vm2941 = vcmp.eq.s32.totalorder %v2877, 1
      %vm2942 = vcmp.eq.s32.totalorder %v2878, 1
      %vm2943 = vcmp.eq.s32.totalorder %v2879, 1
      %vm2944 = vcmp.eq.s32.totalorder %v2880, 1
      %vm2945 = vcmp.eq.s32.totalorder %v2881, 1
      %vm2946 = vcmp.eq.s32.totalorder %v2882, 1
      %vm2947 = vcmp.eq.s32.totalorder %v2883, 1
      %vm2948 = vcmp.eq.s32.totalorder %v2884, 1
      %vm2949 = vcmp.eq.s32.totalorder %v2885, 1
      %vm2950 = vcmp.eq.s32.totalorder %v2886, 1
      %vm2951 = vcmp.eq.s32.totalorder %v2887, 1
      %vm2952 = vcmp.eq.s32.totalorder %v2888, 1
      %vm2953 = vcmp.eq.s32.totalorder %v2889, 1
      %vm2954 = vcmp.eq.s32.totalorder %v2890, 1
      %vm2955 = vcmp.eq.s32.totalorder %v2891, 1
      %vm2956 = vcmp.eq.s32.totalorder %v2892, 1
      %vm2957 = vcmp.eq.s32.totalorder %v2893, 1
      %vm2958 = vcmp.eq.s32.totalorder %v2894, 1
      %vm2959 = vcmp.eq.s32.totalorder %v2895, 1
      %vm2960 = vcmp.eq.s32.totalorder %v2896, 1
      %vm2961 = vcmp.eq.s32.totalorder %v2897, 1
      %vm2962 = vcmp.eq.s32.totalorder %v2898, 1
      %vm2963 = vcmp.eq.s32.totalorder %v2899, 1
      %vm2964 = vcmp.eq.s32.totalorder %v2900, 1
      %vm2965 = vcmp.eq.s32.totalorder %v2901, 1
      %vm2966 = vcmp.eq.s32.totalorder %v2902, 1
      %vm2967 = vcmp.eq.s32.totalorder %v2903, 1
      %vm2968 = vcmp.eq.s32.totalorder %v2904, 1
      %vm2969 = vcmp.eq.s32.totalorder %v2905, 1
      %vm2970 = vcmp.eq.s32.totalorder %v2906, 1
      %vm2971 = vcmp.eq.s32.totalorder %v2907, 1
      %vm2972 = vcmp.eq.s32.totalorder %v2908, 1
      %vm2973 = vcmp.eq.s32.totalorder %v2909, 1
      %vm2974 = vcmp.eq.s32.totalorder %v2910, 1
      %vm2975 = vcmp.eq.s32.totalorder %v2911, 1
      %vm2976 = vcmp.eq.s32.totalorder %v2912, 1
      %vm2977 = vcmp.eq.s32.totalorder %v2913, 1
      %vm2978 = vcmp.eq.s32.totalorder %v2914, 1
      %vm2979 = vcmp.eq.s32.totalorder %v2915, 1
      %vm2980 = vcmp.eq.s32.totalorder %v2916, 1
      %vm2981 = vcmp.eq.s32.totalorder %v2917, 1
      %vm2982 = vcmp.eq.s32.totalorder %v2918, 1
      %vm2983 = vcmp.eq.s32.totalorder %v2919, 1
      %vm2984 = vcmp.eq.s32.totalorder %v2920, 1
      %vm2985 = vcmp.eq.s32.totalorder %v2921, 1
      %vm2986 = vcmp.eq.s32.totalorder %v2922, 1
      %vm2987 = vcmp.eq.s32.totalorder %v2923, 1
      %vm2988 = vcmp.eq.s32.totalorder %v2924, 1
      %vm2989 = vcmp.eq.s32.totalorder %v2925, 1
      %v2990 = vsel %vm2926, %v2798, 0.0
      %v2991 = vsel %vm2927, %v2799, 0.0
      %v2992 = vsel %vm2928, %v2800, 0.0
      %v2993 = vsel %vm2929, %v2801, 0.0
      %v2994 = vsel %vm2930, %v2802, 0.0
      %v2995 = vsel %vm2931, %v2803, 0.0
      %v2996 = vsel %vm2932, %v2804, 0.0
      %v2997 = vsel %vm2933, %v2805, 0.0
      %v2998 = vsel %vm2934, %v2806, 0.0
      %v2999 = vsel %vm2935, %v2807, 0.0
      %v3000 = vsel %vm2936, %v2808, 0.0
      %v3001 = vsel %vm2937, %v2809, 0.0
      %v3002 = vsel %vm2938, %v2810, 0.0
      %v3003 = vsel %vm2939, %v2811, 0.0
      %v3004 = vsel %vm2940, %v2812, 0.0
      %v3005 = vsel %vm2941, %v2813, 0.0
      %v3006 = vsel %vm2942, %v2814, 0.0
      %v3007 = vsel %vm2943, %v2815, 0.0
      %v3008 = vsel %vm2944, %v2816, 0.0
      %v3009 = vsel %vm2945, %v2817, 0.0
      %v3010 = vsel %vm2946, %v2818, 0.0
      %v3011 = vsel %vm2947, %v2819, 0.0
      %v3012 = vsel %vm2948, %v2820, 0.0
      %v3013 = vsel %vm2949, %v2821, 0.0
      %v3014 = vsel %vm2950, %v2822, 0.0
      %v3015 = vsel %vm2951, %v2823, 0.0
      %v3016 = vsel %vm2952, %v2824, 0.0
      %v3017 = vsel %vm2953, %v2825, 0.0
      %v3018 = vsel %vm2954, %v2826, 0.0
      %v3019 = vsel %vm2955, %v2827, 0.0
      %v3020 = vsel %vm2956, %v2828, 0.0
      %v3021 = vsel %vm2957, %v2829, 0.0
      %v3022 = vsel %vm2958, %v2830, 0.0
      %v3023 = vsel %vm2959, %v2831, 0.0
      %v3024 = vsel %vm2960, %v2832, 0.0
      %v3025 = vsel %vm2961, %v2833, 0.0
      %v3026 = vsel %vm2962, %v2834, 0.0
      %v3027 = vsel %vm2963, %v2835, 0.0
      %v3028 = vsel %vm2964, %v2836, 0.0
      %v3029 = vsel %vm2965, %v2837, 0.0
      %v3030 = vsel %vm2966, %v2838, 0.0
      %v3031 = vsel %vm2967, %v2839, 0.0
      %v3032 = vsel %vm2968, %v2840, 0.0
      %v3033 = vsel %vm2969, %v2841, 0.0
      %v3034 = vsel %vm2970, %v2842, 0.0
      %v3035 = vsel %vm2971, %v2843, 0.0
      %v3036 = vsel %vm2972, %v2844, 0.0
      %v3037 = vsel %vm2973, %v2845, 0.0
      %v3038 = vsel %vm2974, %v2846, 0.0
      %v3039 = vsel %vm2975, %v2847, 0.0
      %v3040 = vsel %vm2976, %v2848, 0.0
      %v3041 = vsel %vm2977, %v2849, 0.0
      %v3042 = vsel %vm2978, %v2850, 0.0
      %v3043 = vsel %vm2979, %v2851, 0.0
      %v3044 = vsel %vm2980, %v2852, 0.0
      %v3045 = vsel %vm2981, %v2853, 0.0
      %v3046 = vsel %vm2982, %v2854, 0.0
      %v3047 = vsel %vm2983, %v2855, 0.0
      %v3048 = vsel %vm2984, %v2856, 0.0
      %v3049 = vsel %vm2985, %v2857, 0.0
      %v3050 = vsel %vm2986, %v2858, 0.0
      %v3051 = vsel %vm2987, %v2859, 0.0
      %v3052 = vsel %vm2988, %v2860, 0.0
      %v3053 = vsel %vm2989, %v2861, 0.0
      %v3054 = vld [vmem:[#allocation2 + $0x9] sm:$0xff]
      %v3055 = vld [vmem:[#allocation2 + $0x11] sm:$0xff]
      %v3056 = vld [vmem:[#allocation2 + $0x19] sm:$0xff]
      %v3057 = vld [vmem:[#allocation2 + $0x21] sm:$0xff]
      %v3058 = vld [vmem:[#allocation2 + $0x29] sm:$0xff]
      %v3059 = vld [vmem:[#allocation2 + $0x31] sm:$0xff]
      %v3060 = vld [vmem:[#allocation2 + $0x39] sm:$0xff]
      %v3061 = vld [vmem:[#allocation2 + $0x41] sm:$0xff]
      %v3062 = vld [vmem:[#allocation2 + $0x49] sm:$0xff]
      %v3063 = vld [vmem:[#allocation2 + $0x51] sm:$0xff]
      %v3064 = vld [vmem:[#allocation2 + $0x59] sm:$0xff]
      %v3065 = vld [vmem:[#allocation2 + $0x61] sm:$0xff]
      %v3066 = vld [vmem:[#allocation2 + $0x69] sm:$0xff]
      %v3067 = vld [vmem:[#allocation2 + $0x71] sm:$0xff]
      %v3068 = vld [vmem:[#allocation2 + $0x79] sm:$0xff]
      %v3069 = vld [vmem:[#allocation2 + $0x81] sm:$0xff]
      %v3070 = vld [vmem:[#allocation2 + $0x89] sm:$0xff]
      %v3071 = vld [vmem:[#allocation2 + $0x91] sm:$0xff]
      %v3072 = vld [vmem:[#allocation2 + $0x99] sm:$0xff]
      %v3073 = vld [vmem:[#allocation2 + $0xa1] sm:$0xff]
      %v3074 = vld [vmem:[#allocation2 + $0xa9] sm:$0xff]
      %v3075 = vld [vmem:[#allocation2 + $0xb1] sm:$0xff]
      %v3076 = vld [vmem:[#allocation2 + $0xb9] sm:$0xff]
      %v3077 = vld [vmem:[#allocation2 + $0xc1] sm:$0xff]
      %v3078 = vld [vmem:[#allocation2 + $0xc9] sm:$0xff]
      %v3079 = vld [vmem:[#allocation2 + $0xd1] sm:$0xff]
      %v3080 = vld [vmem:[#allocation2 + $0xd9] sm:$0xff]
      %v3081 = vld [vmem:[#allocation2 + $0xe1] sm:$0xff]
      %v3082 = vld [vmem:[#allocation2 + $0xe9] sm:$0xff]
      %v3083 = vld [vmem:[#allocation2 + $0xf1] sm:$0xff]
      %v3084 = vld [vmem:[#allocation2 + $0xf9] sm:$0xff]
      %v3085 = vld [vmem:[#allocation2 + $0x101] sm:$0xff]
      %v3086 = vld [vmem:[#allocation2 + $0x139] sm:$0xff]
      %v3087 = vld [vmem:[#allocation2 + $0x141] sm:$0xff]
      %v3088 = vld [vmem:[#allocation2 + $0x149] sm:$0xff]
      %v3089 = vld [vmem:[#allocation2 + $0x151] sm:$0xff]
      %v3090 = vld [vmem:[#allocation2 + $0x159] sm:$0xff]
      %v3091 = vld [vmem:[#allocation2 + $0x161] sm:$0xff]
      %v3092 = vld [vmem:[#allocation2 + $0x169] sm:$0xff]
      %v3093 = vld [vmem:[#allocation2 + $0x171] sm:$0xff]
      %v3094 = vld [vmem:[#allocation2 + $0x179] sm:$0xff]
      %v3095 = vld [vmem:[#allocation2 + $0x181] sm:$0xff]
      %v3096 = vld [vmem:[#allocation2 + $0x189] sm:$0xff]
      %v3097 = vld [vmem:[#allocation2 + $0x191] sm:$0xff]
      %v3098 = vld [vmem:[#allocation2 + $0x199] sm:$0xff]
      %v3099 = vld [vmem:[#allocation2 + $0x1a1] sm:$0xff]
      %v3100 = vld [vmem:[#allocation2 + $0x1a9] sm:$0xff]
      %v3101 = vld [vmem:[#allocation2 + $0x1b1] sm:$0xff]
      %v3102 = vld [vmem:[#allocation2 + $0x1b9] sm:$0xff]
      %v3103 = vld [vmem:[#allocation2 + $0x1c1] sm:$0xff]
      %v3104 = vld [vmem:[#allocation2 + $0x1c9] sm:$0xff]
      %v3105 = vld [vmem:[#allocation2 + $0x1d1] sm:$0xff]
      %v3106 = vld [vmem:[#allocation2 + $0x1d9] sm:$0xff]
      %v3107 = vld [vmem:[#allocation2 + $0x1e1] sm:$0xff]
      %v3108 = vld [vmem:[#allocation2 + $0x1e9] sm:$0xff]
      %v3109 = vld [vmem:[#allocation2 + $0x1f1] sm:$0xff]
      %v3110 = vld [vmem:[#allocation2 + $0x1f9] sm:$0xff]
      %v3111 = vld [vmem:[#allocation2 + $0x201] sm:$0xff]
      %v3112 = vld [vmem:[#allocation2 + $0x209] sm:$0xff]
      %v3113 = vld [vmem:[#allocation2 + $0x211] sm:$0xff]
      %v3114 = vld [vmem:[#allocation2 + $0x219] sm:$0xff]
      %v3115 = vld [vmem:[#allocation2 + $0x221] sm:$0xff]
      %v3116 = vld [vmem:[#allocation2 + $0x229] sm:$0xff]
      %v3117 = vld [vmem:[#allocation2 + $0x231] sm:$0xff]
      %vm3118 = vmand %vm2222, %vm2414
      %vm3119 = vmand %vm2223, %vm2415
      %vm3120 = vmand %vm2224, %vm2416
      %vm3121 = vmand %vm2225, %vm2417
      %vm3122 = vmand %vm2226, %vm2418
      %vm3123 = vmand %vm2227, %vm2419
      %vm3124 = vmand %vm2228, %vm2420
      %vm3125 = vmand %vm2229, %vm2421
      %vm3126 = vmand %vm2230, %vm2422
      %vm3127 = vmand %vm2231, %vm2423
      %vm3128 = vmand %vm2232, %vm2424
      %vm3129 = vmand %vm2233, %vm2425
      %vm3130 = vmand %vm2234, %vm2426
      %vm3131 = vmand %vm2235, %vm2427
      %vm3132 = vmand %vm2236, %vm2428
      %vm3133 = vmand %vm2237, %vm2429
      %vm3134 = vmand %vm2238, %vm2430
      %vm3135 = vmand %vm2239, %vm2431
      %vm3136 = vmand %vm2240, %vm2432
      %vm3137 = vmand %vm2241, %vm2433
      %vm3138 = vmand %vm2242, %vm2434
      %vm3139 = vmand %vm2243, %vm2435
      %vm3140 = vmand %vm2244, %vm2436
      %vm3141 = vmand %vm2245, %vm2437
      %vm3142 = vmand %vm2246, %vm2438
      %vm3143 = vmand %vm2247, %vm2439
      %vm3144 = vmand %vm2248, %vm2440
      %vm3145 = vmand %vm2249, %vm2441
      %vm3146 = vmand %vm2250, %vm2442
      %vm3147 = vmand %vm2251, %vm2443
      %vm3148 = vmand %vm2252, %vm2444
      %vm3149 = vmand %vm2253, %vm2445
      %vm3150 = vmand %vm2254, %vm2446
      %vm3151 = vmand %vm2255, %vm2447
      %vm3152 = vmand %vm2256, %vm2448
      %vm3153 = vmand %vm2257, %vm2449
      %vm3154 = vmand %vm2258, %vm2450
      %vm3155 = vmand %vm2259, %vm2451
      %vm3156 = vmand %vm2260, %vm2452
      %vm3157 = vmand %vm2261, %vm2453
      %vm3158 = vmand %vm2262, %vm2454
      %vm3159 = vmand %vm2263, %vm2455
      %vm3160 = vmand %vm2264, %vm2456
      %vm3161 = vmand %vm2265, %vm2457
      %vm3162 = vmand %vm2266, %vm2458
      %vm3163 = vmand %vm2267, %vm2459
      %vm3164 = vmand %vm2268, %vm2460
      %vm3165 = vmand %vm2269, %vm2461
      %vm3166 = vmand %vm2270, %vm2462
      %vm3167 = vmand %vm2271, %vm2463
      %vm3168 = vmand %vm2272, %vm2464
      %vm3169 = vmand %vm2273, %vm2465
      %vm3170 = vmand %vm2274, %vm2466
      %vm3171 = vmand %vm2275, %vm2467
      %vm3172 = vmand %vm2276, %vm2468
      %vm3173 = vmand %vm2277, %vm2469
      %vm3174 = vmand %vm2278, %vm2470
      %vm3175 = vmand %vm2279, %vm2471
      %vm3176 = vmand %vm2280, %vm2472
      %vm3177 = vmand %vm2281, %vm2473
      %vm3178 = vmand %vm2282, %vm2474
      %vm3179 = vmand %vm2283, %vm2475
      %vm3180 = vmand %vm2284, %vm2476
      %vm3181 = vmand %vm2285, %vm2477
      %v3182 = vsel %vm3118, 1, 0
      %v3183 = vsel %vm3119, 1, 0
      %v3184 = vsel %vm3120, 1, 0
      %v3185 = vsel %vm3121, 1, 0
      %v3186 = vsel %vm3122, 1, 0
      %v3187 = vsel %vm3123, 1, 0
      %v3188 = vsel %vm3124, 1, 0
      %v3189 = vsel %vm3125, 1, 0
      %v3190 = vsel %vm3126, 1, 0
      %v3191 = vsel %vm3127, 1, 0
      %v3192 = vsel %vm3128, 1, 0
      %v3193 = vsel %vm3129, 1, 0
      %v3194 = vsel %vm3130, 1, 0
      %v3195 = vsel %vm3131, 1, 0
      %v3196 = vsel %vm3132, 1, 0
      %v3197 = vsel %vm3133, 1, 0
      %v3198 = vsel %vm3134, 1, 0
      %v3199 = vsel %vm3135, 1, 0
      %v3200 = vsel %vm3136, 1, 0
      %v3201 = vsel %vm3137, 1, 0
      %v3202 = vsel %vm3138, 1, 0
      %v3203 = vsel %vm3139, 1, 0
      %v3204 = vsel %vm3140, 1, 0
      %v3205 = vsel %vm3141, 1, 0
      %v3206 = vsel %vm3142, 1, 0
      %v3207 = vsel %vm3143, 1, 0
      %v3208 = vsel %vm3144, 1, 0
      %v3209 = vsel %vm3145, 1, 0
      %v3210 = vsel %vm3146, 1, 0
      %v3211 = vsel %vm3147, 1, 0
      %v3212 = vsel %vm3148, 1, 0
      %v3213 = vsel %vm3149, 1, 0
      %v3214 = vsel %vm3150, 1, 0
      %v3215 = vsel %vm3151, 1, 0
      %v3216 = vsel %vm3152, 1, 0
      %v3217 = vsel %vm3153, 1, 0
      %v3218 = vsel %vm3154, 1, 0
      %v3219 = vsel %vm3155, 1, 0
      %v3220 = vsel %vm3156, 1, 0
      %v3221 = vsel %vm3157, 1, 0
      %v3222 = vsel %vm3158, 1, 0
      %v3223 = vsel %vm3159, 1, 0
      %v3224 = vsel %vm3160, 1, 0
      %v3225 = vsel %vm3161, 1, 0
      %v3226 = vsel %vm3162, 1, 0
      %v3227 = vsel %vm3163, 1, 0
      %v3228 = vsel %vm3164, 1, 0
      %v3229 = vsel %vm3165, 1, 0
      %v3230 = vsel %vm3166, 1, 0
      %v3231 = vsel %vm3167, 1, 0
      %v3232 = vsel %vm3168, 1, 0
      %v3233 = vsel %vm3169, 1, 0
      %v3234 = vsel %vm3170, 1, 0
      %v3235 = vsel %vm3171, 1, 0
      %v3236 = vsel %vm3172, 1, 0
      %v3237 = vsel %vm3173, 1, 0
      %v3238 = vsel %vm3174, 1, 0
      %v3239 = vsel %vm3175, 1, 0
      %v3240 = vsel %vm3176, 1, 0
      %v3241 = vsel %vm3177, 1, 0
      %v3242 = vsel %vm3178, 1, 0
      %v3243 = vsel %vm3179, 1, 0
      %v3244 = vsel %vm3180, 1, 0
      %v3245 = vsel %vm3181, 1, 0
      %vm3246 = vcmp.eq.s32.totalorder %v3182, 1
      %vm3247 = vcmp.eq.s32.totalorder %v3183, 1
      %vm3248 = vcmp.eq.s32.totalorder %v3184, 1
      %vm3249 = vcmp.eq.s32.totalorder %v3185, 1
      %vm3250 = vcmp.eq.s32.totalorder %v3186, 1
      %vm3251 = vcmp.eq.s32.totalorder %v3187, 1
      %vm3252 = vcmp.eq.s32.totalorder %v3188, 1
      %vm3253 = vcmp.eq.s32.totalorder %v3189, 1
      %vm3254 = vcmp.eq.s32.totalorder %v3190, 1
      %vm3255 = vcmp.eq.s32.totalorder %v3191, 1
      %vm3256 = vcmp.eq.s32.totalorder %v3192, 1
      %vm3257 = vcmp.eq.s32.totalorder %v3193, 1
      %vm3258 = vcmp.eq.s32.totalorder %v3194, 1
      %vm3259 = vcmp.eq.s32.totalorder %v3195, 1
      %vm3260 = vcmp.eq.s32.totalorder %v3196, 1
      %vm3261 = vcmp.eq.s32.totalorder %v3197, 1
      %vm3262 = vcmp.eq.s32.totalorder %v3198, 1
      %vm3263 = vcmp.eq.s32.totalorder %v3199, 1
      %vm3264 = vcmp.eq.s32.totalorder %v3200, 1
      %vm3265 = vcmp.eq.s32.totalorder %v3201, 1
      %vm3266 = vcmp.eq.s32.totalorder %v3202, 1
      %vm3267 = vcmp.eq.s32.totalorder %v3203, 1
      %vm3268 = vcmp.eq.s32.totalorder %v3204, 1
      %vm3269 = vcmp.eq.s32.totalorder %v3205, 1
      %vm3270 = vcmp.eq.s32.totalorder %v3206, 1
      %vm3271 = vcmp.eq.s32.totalorder %v3207, 1
      %vm3272 = vcmp.eq.s32.totalorder %v3208, 1
      %vm3273 = vcmp.eq.s32.totalorder %v3209, 1
      %vm3274 = vcmp.eq.s32.totalorder %v3210, 1
      %vm3275 = vcmp.eq.s32.totalorder %v3211, 1
      %vm3276 = vcmp.eq.s32.totalorder %v3212, 1
      %vm3277 = vcmp.eq.s32.totalorder %v3213, 1
      %vm3278 = vcmp.eq.s32.totalorder %v3214, 1
      %vm3279 = vcmp.eq.s32.totalorder %v3215, 1
      %vm3280 = vcmp.eq.s32.totalorder %v3216, 1
      %vm3281 = vcmp.eq.s32.totalorder %v3217, 1
      %vm3282 = vcmp.eq.s32.totalorder %v3218, 1
      %vm3283 = vcmp.eq.s32.totalorder %v3219, 1
      %vm3284 = vcmp.eq.s32.totalorder %v3220, 1
      %vm3285 = vcmp.eq.s32.totalorder %v3221, 1
      %vm3286 = vcmp.eq.s32.totalorder %v3222, 1
      %vm3287 = vcmp.eq.s32.totalorder %v3223, 1
      %vm3288 = vcmp.eq.s32.totalorder %v3224, 1
      %vm3289 = vcmp.eq.s32.totalorder %v3225, 1
      %vm3290 = vcmp.eq.s32.totalorder %v3226, 1
      %vm3291 = vcmp.eq.s32.totalorder %v3227, 1
      %vm3292 = vcmp.eq.s32.totalorder %v3228, 1
      %vm3293 = vcmp.eq.s32.totalorder %v3229, 1
      %vm3294 = vcmp.eq.s32.totalorder %v3230, 1
      %vm3295 = vcmp.eq.s32.totalorder %v3231, 1
      %vm3296 = vcmp.eq.s32.totalorder %v3232, 1
      %vm3297 = vcmp.eq.s32.totalorder %v3233, 1
      %vm3298 = vcmp.eq.s32.totalorder %v3234, 1
      %vm3299 = vcmp.eq.s32.totalorder %v3235, 1
      %vm3300 = vcmp.eq.s32.totalorder %v3236, 1
      %vm3301 = vcmp.eq.s32.totalorder %v3237, 1
      %vm3302 = vcmp.eq.s32.totalorder %v3238, 1
      %vm3303 = vcmp.eq.s32.totalorder %v3239, 1
      %vm3304 = vcmp.eq.s32.totalorder %v3240, 1
      %vm3305 = vcmp.eq.s32.totalorder %v3241, 1
      %vm3306 = vcmp.eq.s32.totalorder %v3242, 1
      %vm3307 = vcmp.eq.s32.totalorder %v3243, 1
      %vm3308 = vcmp.eq.s32.totalorder %v3244, 1
      %vm3309 = vcmp.eq.s32.totalorder %v3245, 1
      %v3310 = vsel %vm3246, %v3054, 0.0
      %v3311 = vsel %vm3247, %v3055, 0.0
      %v3312 = vsel %vm3248, %v3056, 0.0
      %v3313 = vsel %vm3249, %v3057, 0.0
      %v3314 = vsel %vm3250, %v3058, 0.0
      %v3315 = vsel %vm3251, %v3059, 0.0
      %v3316 = vsel %vm3252, %v3060, 0.0
      %v3317 = vsel %vm3253, %v3061, 0.0
      %v3318 = vsel %vm3254, %v3062, 0.0
      %v3319 = vsel %vm3255, %v3063, 0.0
      %v3320 = vsel %vm3256, %v3064, 0.0
      %v3321 = vsel %vm3257, %v3065, 0.0
      %v3322 = vsel %vm3258, %v3066, 0.0
      %v3323 = vsel %vm3259, %v3067, 0.0
      %v3324 = vsel %vm3260, %v3068, 0.0
      %v3325 = vsel %vm3261, %v3069, 0.0
      %v3326 = vsel %vm3262, %v3070, 0.0
      %v3327 = vsel %vm3263, %v3071, 0.0
      %v3328 = vsel %vm3264, %v3072, 0.0
      %v3329 = vsel %vm3265, %v3073, 0.0
      %v3330 = vsel %vm3266, %v3074, 0.0
      %v3331 = vsel %vm3267, %v3075, 0.0
      %v3332 = vsel %vm3268, %v3076, 0.0
      %v3333 = vsel %vm3269, %v3077, 0.0
      %v3334 = vsel %vm3270, %v3078, 0.0
      %v3335 = vsel %vm3271, %v3079, 0.0
      %v3336 = vsel %vm3272, %v3080, 0.0
      %v3337 = vsel %vm3273, %v3081, 0.0
      %v3338 = vsel %vm3274, %v3082, 0.0
      %v3339 = vsel %vm3275, %v3083, 0.0
      %v3340 = vsel %vm3276, %v3084, 0.0
      %v3341 = vsel %vm3277, %v3085, 0.0
      %v3342 = vsel %vm3278, %v3086, 0.0
      %v3343 = vsel %vm3279, %v3087, 0.0
      %v3344 = vsel %vm3280, %v3088, 0.0
      %v3345 = vsel %vm3281, %v3089, 0.0
      %v3346 = vsel %vm3282, %v3090, 0.0
      %v3347 = vsel %vm3283, %v3091, 0.0
      %v3348 = vsel %vm3284, %v3092, 0.0
      %v3349 = vsel %vm3285, %v3093, 0.0
      %v3350 = vsel %vm3286, %v3094, 0.0
      %v3351 = vsel %vm3287, %v3095, 0.0
      %v3352 = vsel %vm3288, %v3096, 0.0
      %v3353 = vsel %vm3289, %v3097, 0.0
      %v3354 = vsel %vm3290, %v3098, 0.0
      %v3355 = vsel %vm3291, %v3099, 0.0
      %v3356 = vsel %vm3292, %v3100, 0.0
      %v3357 = vsel %vm3293, %v3101, 0.0
      %v3358 = vsel %vm3294, %v3102, 0.0
      %v3359 = vsel %vm3295, %v3103, 0.0
      %v3360 = vsel %vm3296, %v3104, 0.0
      %v3361 = vsel %vm3297, %v3105, 0.0
      %v3362 = vsel %vm3298, %v3106, 0.0
      %v3363 = vsel %vm3299, %v3107, 0.0
      %v3364 = vsel %vm3300, %v3108, 0.0
      %v3365 = vsel %vm3301, %v3109, 0.0
      %v3366 = vsel %vm3302, %v3110, 0.0
      %v3367 = vsel %vm3303, %v3111, 0.0
      %v3368 = vsel %vm3304, %v3112, 0.0
      %v3369 = vsel %vm3305, %v3113, 0.0
      %v3370 = vsel %vm3306, %v3114, 0.0
      %v3371 = vsel %vm3307, %v3115, 0.0
      %v3372 = vsel %vm3308, %v3116, 0.0
      %v3373 = vsel %vm3309, %v3117, 0.0
      %v3374 = vld [vmem:[#allocation2 + $0x107] sm:$0xff]
      %v3375 = vld [vmem:[#allocation2 + $0x10f] sm:$0xff]
      %v3376 = vld [vmem:[#allocation2 + $0x237] sm:$0xff]
      %v3377 = vld [vmem:[#allocation2 + $0x23f] sm:$0xff]
      %v3378 = vsel %vm2350, 1, 0
      %v3379 = vsel %vm2351, 1, 0
      %v3380 = vsel %vm2352, 1, 0
      %v3381 = vsel %vm2353, 1, 0
      %v3382 = vsel %vm2354, 1, 0
      %v3383 = vsel %vm2355, 1, 0
      %v3384 = vsel %vm2356, 1, 0
      %v3385 = vsel %vm2357, 1, 0
      %v3386 = vsel %vm2358, 1, 0
      %v3387 = vsel %vm2359, 1, 0
      %v3388 = vsel %vm2360, 1, 0
      %v3389 = vsel %vm2361, 1, 0
      %v3390 = vsel %vm2362, 1, 0
      %v3391 = vsel %vm2363, 1, 0
      %v3392 = vsel %vm2364, 1, 0
      %v3393 = vsel %vm2365, 1, 0
      %v3394 = vsel %vm2366, 1, 0
      %v3395 = vsel %vm2367, 1, 0
      %v3396 = vsel %vm2368, 1, 0
      %v3397 = vsel %vm2369, 1, 0
      %v3398 = vsel %vm2370, 1, 0
      %v3399 = vsel %vm2371, 1, 0
      %v3400 = vsel %vm2372, 1, 0
      %v3401 = vsel %vm2373, 1, 0
      %v3402 = vsel %vm2374, 1, 0
      %v3403 = vsel %vm2375, 1, 0
      %v3404 = vsel %vm2376, 1, 0
      %v3405 = vsel %vm2377, 1, 0
      %v3406 = vsel %vm2378, 1, 0
      %v3407 = vsel %vm2379, 1, 0
      %v3408 = vsel %vm2380, 1, 0
      %v3409 = vsel %vm2381, 1, 0
      %v3410 = vsel %vm2382, 1, 0
      %v3411 = vsel %vm2383, 1, 0
      %v3412 = vsel %vm2384, 1, 0
      %v3413 = vsel %vm2385, 1, 0
      %v3414 = vsel %vm2386, 1, 0
      %v3415 = vsel %vm2387, 1, 0
      %v3416 = vsel %vm2388, 1, 0
      %v3417 = vsel %vm2389, 1, 0
      %v3418 = vsel %vm2390, 1, 0
      %v3419 = vsel %vm2391, 1, 0
      %v3420 = vsel %vm2392, 1, 0
      %v3421 = vsel %vm2393, 1, 0
      %v3422 = vsel %vm2394, 1, 0
      %v3423 = vsel %vm2395, 1, 0
      %v3424 = vsel %vm2396, 1, 0
      %v3425 = vsel %vm2397, 1, 0
      %v3426 = vsel %vm2398, 1, 0
      %v3427 = vsel %vm2399, 1, 0
      %v3428 = vsel %vm2400, 1, 0
      %v3429 = vsel %vm2401, 1, 0
      %v3430 = vsel %vm2402, 1, 0
      %v3431 = vsel %vm2403, 1, 0
      %v3432 = vsel %vm2404, 1, 0
      %v3433 = vsel %vm2405, 1, 0
      %v3434 = vsel %vm2406, 1, 0
      %v3435 = vsel %vm2407, 1, 0
      %v3436 = vsel %vm2408, 1, 0
      %v3437 = vsel %vm2409, 1, 0
      %v3438 = vsel %vm2410, 1, 0
      %v3439 = vsel %vm2411, 1, 0
      %v3440 = vsel %vm2412, 1, 0
      %v3441 = vsel %vm2413, 1, 0
      %vm3442 = vcmp.eq.s32.totalorder %v3378, 1
      %vm3443 = vcmp.eq.s32.totalorder %v3379, 1
      %vm3444 = vcmp.eq.s32.totalorder %v3380, 1
      %vm3445 = vcmp.eq.s32.totalorder %v3381, 1
      %vm3446 = vcmp.eq.s32.totalorder %v3382, 1
      %vm3447 = vcmp.eq.s32.totalorder %v3383, 1
      %vm3448 = vcmp.eq.s32.totalorder %v3384, 1
      %vm3449 = vcmp.eq.s32.totalorder %v3385, 1
      %vm3450 = vcmp.eq.s32.totalorder %v3386, 1
      %vm3451 = vcmp.eq.s32.totalorder %v3387, 1
      %vm3452 = vcmp.eq.s32.totalorder %v3388, 1
      %vm3453 = vcmp.eq.s32.totalorder %v3389, 1
      %vm3454 = vcmp.eq.s32.totalorder %v3390, 1
      %vm3455 = vcmp.eq.s32.totalorder %v3391, 1
      %vm3456 = vcmp.eq.s32.totalorder %v3392, 1
      %vm3457 = vcmp.eq.s32.totalorder %v3393, 1
      %vm3458 = vcmp.eq.s32.totalorder %v3394, 1
      %vm3459 = vcmp.eq.s32.totalorder %v3395, 1
      %vm3460 = vcmp.eq.s32.totalorder %v3396, 1
      %vm3461 = vcmp.eq.s32.totalorder %v3397, 1
      %vm3462 = vcmp.eq.s32.totalorder %v3398, 1
      %vm3463 = vcmp.eq.s32.totalorder %v3399, 1
      %vm3464 = vcmp.eq.s32.totalorder %v3400, 1
      %vm3465 = vcmp.eq.s32.totalorder %v3401, 1
      %vm3466 = vcmp.eq.s32.totalorder %v3402, 1
      %vm3467 = vcmp.eq.s32.totalorder %v3403, 1
      %vm3468 = vcmp.eq.s32.totalorder %v3404, 1
      %vm3469 = vcmp.eq.s32.totalorder %v3405, 1
      %vm3470 = vcmp.eq.s32.totalorder %v3406, 1
      %vm3471 = vcmp.eq.s32.totalorder %v3407, 1
      %vm3472 = vcmp.eq.s32.totalorder %v3408, 1
      %vm3473 = vcmp.eq.s32.totalorder %v3409, 1
      %vm3474 = vcmp.eq.s32.totalorder %v3410, 1
      %vm3475 = vcmp.eq.s32.totalorder %v3411, 1
      %vm3476 = vcmp.eq.s32.totalorder %v3412, 1
      %vm3477 = vcmp.eq.s32.totalorder %v3413, 1
      %vm3478 = vcmp.eq.s32.totalorder %v3414, 1
      %vm3479 = vcmp.eq.s32.totalorder %v3415, 1
      %vm3480 = vcmp.eq.s32.totalorder %v3416, 1
      %vm3481 = vcmp.eq.s32.totalorder %v3417, 1
      %vm3482 = vcmp.eq.s32.totalorder %v3418, 1
      %vm3483 = vcmp.eq.s32.totalorder %v3419, 1
      %vm3484 = vcmp.eq.s32.totalorder %v3420, 1
      %vm3485 = vcmp.eq.s32.totalorder %v3421, 1
      %vm3486 = vcmp.eq.s32.totalorder %v3422, 1
      %vm3487 = vcmp.eq.s32.totalorder %v3423, 1
      %vm3488 = vcmp.eq.s32.totalorder %v3424, 1
      %vm3489 = vcmp.eq.s32.totalorder %v3425, 1
      %vm3490 = vcmp.eq.s32.totalorder %v3426, 1
      %vm3491 = vcmp.eq.s32.totalorder %v3427, 1
      %vm3492 = vcmp.eq.s32.totalorder %v3428, 1
      %vm3493 = vcmp.eq.s32.totalorder %v3429, 1
      %vm3494 = vcmp.eq.s32.totalorder %v3430, 1
      %vm3495 = vcmp.eq.s32.totalorder %v3431, 1
      %vm3496 = vcmp.eq.s32.totalorder %v3432, 1
      %vm3497 = vcmp.eq.s32.totalorder %v3433, 1
      %vm3498 = vcmp.eq.s32.totalorder %v3434, 1
      %vm3499 = vcmp.eq.s32.totalorder %v3435, 1
      %vm3500 = vcmp.eq.s32.totalorder %v3436, 1
      %vm3501 = vcmp.eq.s32.totalorder %v3437, 1
      %vm3502 = vcmp.eq.s32.totalorder %v3438, 1
      %vm3503 = vcmp.eq.s32.totalorder %v3439, 1
      %vm3504 = vcmp.eq.s32.totalorder %v3440, 1
      %vm3505 = vcmp.eq.s32.totalorder %v3441, 1
      %v3506 = vsel %vm3442, %v2480, 0.0
      %v3507 = vsel %vm3443, %v2481, 0.0
      %v3508 = vsel %vm3444, %v2482, 0.0
      %v3509 = vsel %vm3445, %v2483, 0.0
      %v3510 = vsel %vm3446, %v2484, 0.0
      %v3511 = vsel %vm3447, %v2485, 0.0
      %v3512 = vsel %vm3448, %v2486, 0.0
      %v3513 = vsel %vm3449, %v2487, 0.0
      %v3514 = vsel %vm3450, %v2488, 0.0
      %v3515 = vsel %vm3451, %v2489, 0.0
      %v3516 = vsel %vm3452, %v2490, 0.0
      %v3517 = vsel %vm3453, %v2491, 0.0
      %v3518 = vsel %vm3454, %v2492, 0.0
      %v3519 = vsel %vm3455, %v2493, 0.0
      %v3520 = vsel %vm3456, %v2494, 0.0
      %v3521 = vsel %vm3457, %v2495, 0.0
      %v3522 = vsel %vm3458, %v2496, 0.0
      %v3523 = vsel %vm3459, %v2497, 0.0
      %v3524 = vsel %vm3460, %v2498, 0.0
      %v3525 = vsel %vm3461, %v2499, 0.0
      %v3526 = vsel %vm3462, %v2500, 0.0
      %v3527 = vsel %vm3463, %v2501, 0.0
      %v3528 = vsel %vm3464, %v2502, 0.0
      %v3529 = vsel %vm3465, %v2503, 0.0
      %v3530 = vsel %vm3466, %v2504, 0.0
      %v3531 = vsel %vm3467, %v2505, 0.0
      %v3532 = vsel %vm3468, %v2506, 0.0
      %v3533 = vsel %vm3469, %v2507, 0.0
      %v3534 = vsel %vm3470, %v2508, 0.0
      %v3535 = vsel %vm3471, %v2509, 0.0
      %v3536 = vsel %vm3472, %v3374, 0.0
      %v3537 = vsel %vm3473, %v3375, 0.0
      %v3538 = vsel %vm3474, %v2512, 0.0
      %v3539 = vsel %vm3475, %v2513, 0.0
      %v3540 = vsel %vm3476, %v2514, 0.0
      %v3541 = vsel %vm3477, %v2515, 0.0
      %v3542 = vsel %vm3478, %v2516, 0.0
      %v3543 = vsel %vm3479, %v2517, 0.0
      %v3544 = vsel %vm3480, %v2518, 0.0
      %v3545 = vsel %vm3481, %v2519, 0.0
      %v3546 = vsel %vm3482, %v2520, 0.0
      %v3547 = vsel %vm3483, %v2521, 0.0
      %v3548 = vsel %vm3484, %v2522, 0.0
      %v3549 = vsel %vm3485, %v2523, 0.0
      %v3550 = vsel %vm3486, %v2524, 0.0
      %v3551 = vsel %vm3487, %v2525, 0.0
      %v3552 = vsel %vm3488, %v2526, 0.0
      %v3553 = vsel %vm3489, %v2527, 0.0
      %v3554 = vsel %vm3490, %v2528, 0.0
      %v3555 = vsel %vm3491, %v2529, 0.0
      %v3556 = vsel %vm3492, %v2530, 0.0
      %v3557 = vsel %vm3493, %v2531, 0.0
      %v3558 = vsel %vm3494, %v2532, 0.0
      %v3559 = vsel %vm3495, %v2533, 0.0
      %v3560 = vsel %vm3496, %v2534, 0.0
      %v3561 = vsel %vm3497, %v2535, 0.0
      %v3562 = vsel %vm3498, %v2536, 0.0
      %v3563 = vsel %vm3499, %v2537, 0.0
      %v3564 = vsel %vm3500, %v2538, 0.0
      %v3565 = vsel %vm3501, %v2539, 0.0
      %v3566 = vsel %vm3502, %v2540, 0.0
      %v3567 = vsel %vm3503, %v2541, 0.0
      %v3568 = vsel %vm3504, %v3376, 0.0
      %v3569 = vsel %vm3505, %v3377, 0.0
      %v3570 = vld [vmem:[#allocation2 + $0x108] sm:$0xff]
      %v3571 = vld [vmem:[#allocation2 + $0x110] sm:$0xff]
      %v3572 = vld [vmem:[#allocation2 + $0x238] sm:$0xff]
      %v3573 = vld [vmem:[#allocation2 + $0x240] sm:$0xff]
      %v3574 = vld [vmem:[#allocation2 + $0x109] sm:$0xff]
      %v3575 = vld [vmem:[#allocation2 + $0x111] sm:$0xff]
      %v3576 = vld [vmem:[#allocation2 + $0x239] sm:$0xff]
      %v3577 = vld [vmem:[#allocation2 + $0x241] sm:$0xff]
      %v3578 = vsel %vm2414, 1, 0
      %v3579 = vsel %vm2415, 1, 0
      %v3580 = vsel %vm2416, 1, 0
      %v3581 = vsel %vm2417, 1, 0
      %v3582 = vsel %vm2418, 1, 0
      %v3583 = vsel %vm2419, 1, 0
      %v3584 = vsel %vm2420, 1, 0
      %v3585 = vsel %vm2421, 1, 0
      %v3586 = vsel %vm2422, 1, 0
      %v3587 = vsel %vm2423, 1, 0
      %v3588 = vsel %vm2424, 1, 0
      %v3589 = vsel %vm2425, 1, 0
      %v3590 = vsel %vm2426, 1, 0
      %v3591 = vsel %vm2427, 1, 0
      %v3592 = vsel %vm2428, 1, 0
      %v3593 = vsel %vm2429, 1, 0
      %v3594 = vsel %vm2430, 1, 0
      %v3595 = vsel %vm2431, 1, 0
      %v3596 = vsel %vm2432, 1, 0
      %v3597 = vsel %vm2433, 1, 0
      %v3598 = vsel %vm2434, 1, 0
      %v3599 = vsel %vm2435, 1, 0
      %v3600 = vsel %vm2436, 1, 0
      %v3601 = vsel %vm2437, 1, 0
      %v3602 = vsel %vm2438, 1, 0
      %v3603 = vsel %vm2439, 1, 0
      %v3604 = vsel %vm2440, 1, 0
      %v3605 = vsel %vm2441, 1, 0
      %v3606 = vsel %vm2442, 1, 0
      %v3607 = vsel %vm2443, 1, 0
      %v3608 = vsel %vm2444, 1, 0
      %v3609 = vsel %vm2445, 1, 0
      %v3610 = vsel %vm2446, 1, 0
      %v3611 = vsel %vm2447, 1, 0
      %v3612 = vsel %vm2448, 1, 0
      %v3613 = vsel %vm2449, 1, 0
      %v3614 = vsel %vm2450, 1, 0
      %v3615 = vsel %vm2451, 1, 0
      %v3616 = vsel %vm2452, 1, 0
      %v3617 = vsel %vm2453, 1, 0
      %v3618 = vsel %vm2454, 1, 0
      %v3619 = vsel %vm2455, 1, 0
      %v3620 = vsel %vm2456, 1, 0
      %v3621 = vsel %vm2457, 1, 0
      %v3622 = vsel %vm2458, 1, 0
      %v3623 = vsel %vm2459, 1, 0
      %v3624 = vsel %vm2460, 1, 0
      %v3625 = vsel %vm2461, 1, 0
      %v3626 = vsel %vm2462, 1, 0
      %v3627 = vsel %vm2463, 1, 0
      %v3628 = vsel %vm2464, 1, 0
      %v3629 = vsel %vm2465, 1, 0
      %v3630 = vsel %vm2466, 1, 0
      %v3631 = vsel %vm2467, 1, 0
      %v3632 = vsel %vm2468, 1, 0
      %v3633 = vsel %vm2469, 1, 0
      %v3634 = vsel %vm2470, 1, 0
      %v3635 = vsel %vm2471, 1, 0
      %v3636 = vsel %vm2472, 1, 0
      %v3637 = vsel %vm2473, 1, 0
      %v3638 = vsel %vm2474, 1, 0
      %v3639 = vsel %vm2475, 1, 0
      %v3640 = vsel %vm2476, 1, 0
      %v3641 = vsel %vm2477, 1, 0
      %vm3642 = vcmp.eq.s32.totalorder %v3578, 1
      %vm3643 = vcmp.eq.s32.totalorder %v3579, 1
      %vm3644 = vcmp.eq.s32.totalorder %v3580, 1
      %vm3645 = vcmp.eq.s32.totalorder %v3581, 1
      %vm3646 = vcmp.eq.s32.totalorder %v3582, 1
      %vm3647 = vcmp.eq.s32.totalorder %v3583, 1
      %vm3648 = vcmp.eq.s32.totalorder %v3584, 1
      %vm3649 = vcmp.eq.s32.totalorder %v3585, 1
      %vm3650 = vcmp.eq.s32.totalorder %v3586, 1
      %vm3651 = vcmp.eq.s32.totalorder %v3587, 1
      %vm3652 = vcmp.eq.s32.totalorder %v3588, 1
      %vm3653 = vcmp.eq.s32.totalorder %v3589, 1
      %vm3654 = vcmp.eq.s32.totalorder %v3590, 1
      %vm3655 = vcmp.eq.s32.totalorder %v3591, 1
      %vm3656 = vcmp.eq.s32.totalorder %v3592, 1
      %vm3657 = vcmp.eq.s32.totalorder %v3593, 1
      %vm3658 = vcmp.eq.s32.totalorder %v3594, 1
      %vm3659 = vcmp.eq.s32.totalorder %v3595, 1
      %vm3660 = vcmp.eq.s32.totalorder %v3596, 1
      %vm3661 = vcmp.eq.s32.totalorder %v3597, 1
      %vm3662 = vcmp.eq.s32.totalorder %v3598, 1
      %vm3663 = vcmp.eq.s32.totalorder %v3599, 1
      %vm3664 = vcmp.eq.s32.totalorder %v3600, 1
      %vm3665 = vcmp.eq.s32.totalorder %v3601, 1
      %vm3666 = vcmp.eq.s32.totalorder %v3602, 1
      %vm3667 = vcmp.eq.s32.totalorder %v3603, 1
      %vm3668 = vcmp.eq.s32.totalorder %v3604, 1
      %vm3669 = vcmp.eq.s32.totalorder %v3605, 1
      %vm3670 = vcmp.eq.s32.totalorder %v3606, 1
      %vm3671 = vcmp.eq.s32.totalorder %v3607, 1
      %vm3672 = vcmp.eq.s32.totalorder %v3608, 1
      %vm3673 = vcmp.eq.s32.totalorder %v3609, 1
      %vm3674 = vcmp.eq.s32.totalorder %v3610, 1
      %vm3675 = vcmp.eq.s32.totalorder %v3611, 1
      %vm3676 = vcmp.eq.s32.totalorder %v3612, 1
      %vm3677 = vcmp.eq.s32.totalorder %v3613, 1
      %vm3678 = vcmp.eq.s32.totalorder %v3614, 1
      %vm3679 = vcmp.eq.s32.totalorder %v3615, 1
      %vm3680 = vcmp.eq.s32.totalorder %v3616, 1
      %vm3681 = vcmp.eq.s32.totalorder %v3617, 1
      %vm3682 = vcmp.eq.s32.totalorder %v3618, 1
      %vm3683 = vcmp.eq.s32.totalorder %v3619, 1
      %vm3684 = vcmp.eq.s32.totalorder %v3620, 1
      %vm3685 = vcmp.eq.s32.totalorder %v3621, 1
      %vm3686 = vcmp.eq.s32.totalorder %v3622, 1
      %vm3687 = vcmp.eq.s32.totalorder %v3623, 1
      %vm3688 = vcmp.eq.s32.totalorder %v3624, 1
      %vm3689 = vcmp.eq.s32.totalorder %v3625, 1
      %vm3690 = vcmp.eq.s32.totalorder %v3626, 1
      %vm3691 = vcmp.eq.s32.totalorder %v3627, 1
      %vm3692 = vcmp.eq.s32.totalorder %v3628, 1
      %vm3693 = vcmp.eq.s32.totalorder %v3629, 1
      %vm3694 = vcmp.eq.s32.totalorder %v3630, 1
      %vm3695 = vcmp.eq.s32.totalorder %v3631, 1
      %vm3696 = vcmp.eq.s32.totalorder %v3632, 1
      %vm3697 = vcmp.eq.s32.totalorder %v3633, 1
      %vm3698 = vcmp.eq.s32.totalorder %v3634, 1
      %vm3699 = vcmp.eq.s32.totalorder %v3635, 1
      %vm3700 = vcmp.eq.s32.totalorder %v3636, 1
      %vm3701 = vcmp.eq.s32.totalorder %v3637, 1
      %vm3702 = vcmp.eq.s32.totalorder %v3638, 1
      %vm3703 = vcmp.eq.s32.totalorder %v3639, 1
      %vm3704 = vcmp.eq.s32.totalorder %v3640, 1
      %vm3705 = vcmp.eq.s32.totalorder %v3641, 1
      %v3706 = vsel %vm3642, %v3056, 0.0
      %v3707 = vsel %vm3643, %v3057, 0.0
      %v3708 = vsel %vm3644, %v3058, 0.0
      %v3709 = vsel %vm3645, %v3059, 0.0
      %v3710 = vsel %vm3646, %v3060, 0.0
      %v3711 = vsel %vm3647, %v3061, 0.0
      %v3712 = vsel %vm3648, %v3062, 0.0
      %v3713 = vsel %vm3649, %v3063, 0.0
      %v3714 = vsel %vm3650, %v3064, 0.0
      %v3715 = vsel %vm3651, %v3065, 0.0
      %v3716 = vsel %vm3652, %v3066, 0.0
      %v3717 = vsel %vm3653, %v3067, 0.0
      %v3718 = vsel %vm3654, %v3068, 0.0
      %v3719 = vsel %vm3655, %v3069, 0.0
      %v3720 = vsel %vm3656, %v3070, 0.0
      %v3721 = vsel %vm3657, %v3071, 0.0
      %v3722 = vsel %vm3658, %v3072, 0.0
      %v3723 = vsel %vm3659, %v3073, 0.0
      %v3724 = vsel %vm3660, %v3074, 0.0
      %v3725 = vsel %vm3661, %v3075, 0.0
      %v3726 = vsel %vm3662, %v3076, 0.0
      %v3727 = vsel %vm3663, %v3077, 0.0
      %v3728 = vsel %vm3664, %v3078, 0.0
      %v3729 = vsel %vm3665, %v3079, 0.0
      %v3730 = vsel %vm3666, %v3080, 0.0
      %v3731 = vsel %vm3667, %v3081, 0.0
      %v3732 = vsel %vm3668, %v3082, 0.0
      %v3733 = vsel %vm3669, %v3083, 0.0
      %v3734 = vsel %vm3670, %v3084, 0.0
      %v3735 = vsel %vm3671, %v3085, 0.0
      %v3736 = vsel %vm3672, %v3574, 0.0
      %v3737 = vsel %vm3673, %v3575, 0.0
      %v3738 = vsel %vm3674, %v3088, 0.0
      %v3739 = vsel %vm3675, %v3089, 0.0
      %v3740 = vsel %vm3676, %v3090, 0.0
      %v3741 = vsel %vm3677, %v3091, 0.0
      %v3742 = vsel %vm3678, %v3092, 0.0
      %v3743 = vsel %vm3679, %v3093, 0.0
      %v3744 = vsel %vm3680, %v3094, 0.0
      %v3745 = vsel %vm3681, %v3095, 0.0
      %v3746 = vsel %vm3682, %v3096, 0.0
      %v3747 = vsel %vm3683, %v3097, 0.0
      %v3748 = vsel %vm3684, %v3098, 0.0
      %v3749 = vsel %vm3685, %v3099, 0.0
      %v3750 = vsel %vm3686, %v3100, 0.0
      %v3751 = vsel %vm3687, %v3101, 0.0
      %v3752 = vsel %vm3688, %v3102, 0.0
      %v3753 = vsel %vm3689, %v3103, 0.0
      %v3754 = vsel %vm3690, %v3104, 0.0
      %v3755 = vsel %vm3691, %v3105, 0.0
      %v3756 = vsel %vm3692, %v3106, 0.0
      %v3757 = vsel %vm3693, %v3107, 0.0
      %v3758 = vsel %vm3694, %v3108, 0.0
      %v3759 = vsel %vm3695, %v3109, 0.0
      %v3760 = vsel %vm3696, %v3110, 0.0
      %v3761 = vsel %vm3697, %v3111, 0.0
      %v3762 = vsel %vm3698, %v3112, 0.0
      %v3763 = vsel %vm3699, %v3113, 0.0
      %v3764 = vsel %vm3700, %v3114, 0.0
      %v3765 = vsel %vm3701, %v3115, 0.0
      %v3766 = vsel %vm3702, %v3116, 0.0
      %v3767 = vsel %vm3703, %v3117, 0.0
      %v3768 = vsel %vm3704, %v3576, 0.0
      %v3769 = vsel %vm3705, %v3577, 0.0
      %v3770 = vld [vmem:[#allocation2 + $0x117] sm:$0xff]
      %v3771 = vld [vmem:[#allocation2 + $0x11f] sm:$0xff]
      %v3772 = vld [vmem:[#allocation2 + $0x247] sm:$0xff]
      %v3773 = vld [vmem:[#allocation2 + $0x24f] sm:$0xff]
      %vm3774 = vmand %vm2286, %vm2350
      %vm3775 = vmand %vm2287, %vm2351
      %vm3776 = vmand %vm2288, %vm2352
      %vm3777 = vmand %vm2289, %vm2353
      %vm3778 = vmand %vm2290, %vm2354
      %vm3779 = vmand %vm2291, %vm2355
      %vm3780 = vmand %vm2292, %vm2356
      %vm3781 = vmand %vm2293, %vm2357
      %vm3782 = vmand %vm2294, %vm2358
      %vm3783 = vmand %vm2295, %vm2359
      %vm3784 = vmand %vm2296, %vm2360
      %vm3785 = vmand %vm2297, %vm2361
      %vm3786 = vmand %vm2298, %vm2362
      %vm3787 = vmand %vm2299, %vm2363
      %vm3788 = vmand %vm2300, %vm2364
      %vm3789 = vmand %vm2301, %vm2365
      %vm3790 = vmand %vm2302, %vm2366
      %vm3791 = vmand %vm2303, %vm2367
      %vm3792 = vmand %vm2304, %vm2368
      %vm3793 = vmand %vm2305, %vm2369
      %vm3794 = vmand %vm2306, %vm2370
      %vm3795 = vmand %vm2307, %vm2371
      %vm3796 = vmand %vm2308, %vm2372
      %vm3797 = vmand %vm2309, %vm2373
      %vm3798 = vmand %vm2310, %vm2374
      %vm3799 = vmand %vm2311, %vm2375
      %vm3800 = vmand %vm2312, %vm2376
      %vm3801 = vmand %vm2313, %vm2377
      %vm3802 = vmand %vm2314, %vm2378
      %vm3803 = vmand %vm2315, %vm2379
      %vm3804 = vmand %vm2316, %vm2380
      %vm3805 = vmand %vm2317, %vm2381
      %vm3806 = vmand %vm2318, %vm2382
      %vm3807 = vmand %vm2319, %vm2383
      %vm3808 = vmand %vm2320, %vm2384
      %vm3809 = vmand %vm2321, %vm2385
      %vm3810 = vmand %vm2322, %vm2386
      %vm3811 = vmand %vm2323, %vm2387
      %vm3812 = vmand %vm2324, %vm2388
      %vm3813 = vmand %vm2325, %vm2389
      %vm3814 = vmand %vm2326, %vm2390
      %vm3815 = vmand %vm2327, %vm2391
      %vm3816 = vmand %vm2328, %vm2392
      %vm3817 = vmand %vm2329, %vm2393
      %vm3818 = vmand %vm2330, %vm2394
      %vm3819 = vmand %vm2331, %vm2395
      %vm3820 = vmand %vm2332, %vm2396
      %vm3821 = vmand %vm2333, %vm2397
      %vm3822 = vmand %vm2334, %vm2398
      %vm3823 = vmand %vm2335, %vm2399
      %vm3824 = vmand %vm2336, %vm2400
      %vm3825 = vmand %vm2337, %vm2401
      %vm3826 = vmand %vm2338, %vm2402
      %vm3827 = vmand %vm2339, %vm2403
      %vm3828 = vmand %vm2340, %vm2404
      %vm3829 = vmand %vm2341, %vm2405
      %vm3830 = vmand %vm2342, %vm2406
      %vm3831 = vmand %vm2343, %vm2407
      %vm3832 = vmand %vm2344, %vm2408
      %vm3833 = vmand %vm2345, %vm2409
      %vm3834 = vmand %vm2346, %vm2410
      %vm3835 = vmand %vm2347, %vm2411
      %vm3836 = vmand %vm2348, %vm2412
      %vm3837 = vmand %vm2349, %vm2413
      %v3838 = vsel %vm3774, 1, 0
      %v3839 = vsel %vm3775, 1, 0
      %v3840 = vsel %vm3776, 1, 0
      %v3841 = vsel %vm3777, 1, 0
      %v3842 = vsel %vm3778, 1, 0
      %v3843 = vsel %vm3779, 1, 0
      %v3844 = vsel %vm3780, 1, 0
      %v3845 = vsel %vm3781, 1, 0
      %v3846 = vsel %vm3782, 1, 0
      %v3847 = vsel %vm3783, 1, 0
      %v3848 = vsel %vm3784, 1, 0
      %v3849 = vsel %vm3785, 1, 0
      %v3850 = vsel %vm3786, 1, 0
      %v3851 = vsel %vm3787, 1, 0
      %v3852 = vsel %vm3788, 1, 0
      %v3853 = vsel %vm3789, 1, 0
      %v3854 = vsel %vm3790, 1, 0
      %v3855 = vsel %vm3791, 1, 0
      %v3856 = vsel %vm3792, 1, 0
      %v3857 = vsel %vm3793, 1, 0
      %v3858 = vsel %vm3794, 1, 0
      %v3859 = vsel %vm3795, 1, 0
      %v3860 = vsel %vm3796, 1, 0
      %v3861 = vsel %vm3797, 1, 0
      %v3862 = vsel %vm3798, 1, 0
      %v3863 = vsel %vm3799, 1, 0
      %v3864 = vsel %vm3800, 1, 0
      %v3865 = vsel %vm3801, 1, 0
      %v3866 = vsel %vm3802, 1, 0
      %v3867 = vsel %vm3803, 1, 0
      %v3868 = vsel %vm3804, 1, 0
      %v3869 = vsel %vm3805, 1, 0
      %v3870 = vsel %vm3806, 1, 0
      %v3871 = vsel %vm3807, 1, 0
      %v3872 = vsel %vm3808, 1, 0
      %v3873 = vsel %vm3809, 1, 0
      %v3874 = vsel %vm3810, 1, 0
      %v3875 = vsel %vm3811, 1, 0
      %v3876 = vsel %vm3812, 1, 0
      %v3877 = vsel %vm3813, 1, 0
      %v3878 = vsel %vm3814, 1, 0
      %v3879 = vsel %vm3815, 1, 0
      %v3880 = vsel %vm3816, 1, 0
      %v3881 = vsel %vm3817, 1, 0
      %v3882 = vsel %vm3818, 1, 0
      %v3883 = vsel %vm3819, 1, 0
      %v3884 = vsel %vm3820, 1, 0
      %v3885 = vsel %vm3821, 1, 0
      %v3886 = vsel %vm3822, 1, 0
      %v3887 = vsel %vm3823, 1, 0
      %v3888 = vsel %vm3824, 1, 0
      %v3889 = vsel %vm3825, 1, 0
      %v3890 = vsel %vm3826, 1, 0
      %v3891 = vsel %vm3827, 1, 0
      %v3892 = vsel %vm3828, 1, 0
      %v3893 = vsel %vm3829, 1, 0
      %v3894 = vsel %vm3830, 1, 0
      %v3895 = vsel %vm3831, 1, 0
      %v3896 = vsel %vm3832, 1, 0
      %v3897 = vsel %vm3833, 1, 0
      %v3898 = vsel %vm3834, 1, 0
      %v3899 = vsel %vm3835, 1, 0
      %v3900 = vsel %vm3836, 1, 0
      %v3901 = vsel %vm3837, 1, 0
      %vm3902 = vcmp.eq.s32.totalorder %v3838, 1
      %vm3903 = vcmp.eq.s32.totalorder %v3839, 1
      %vm3904 = vcmp.eq.s32.totalorder %v3840, 1
      %vm3905 = vcmp.eq.s32.totalorder %v3841, 1
      %vm3906 = vcmp.eq.s32.totalorder %v3842, 1
      %vm3907 = vcmp.eq.s32.totalorder %v3843, 1
      %vm3908 = vcmp.eq.s32.totalorder %v3844, 1
      %vm3909 = vcmp.eq.s32.totalorder %v3845, 1
      %vm3910 = vcmp.eq.s32.totalorder %v3846, 1
      %vm3911 = vcmp.eq.s32.totalorder %v3847, 1
      %vm3912 = vcmp.eq.s32.totalorder %v3848, 1
      %vm3913 = vcmp.eq.s32.totalorder %v3849, 1
      %vm3914 = vcmp.eq.s32.totalorder %v3850, 1
      %vm3915 = vcmp.eq.s32.totalorder %v3851, 1
      %vm3916 = vcmp.eq.s32.totalorder %v3852, 1
      %vm3917 = vcmp.eq.s32.totalorder %v3853, 1
      %vm3918 = vcmp.eq.s32.totalorder %v3854, 1
      %vm3919 = vcmp.eq.s32.totalorder %v3855, 1
      %vm3920 = vcmp.eq.s32.totalorder %v3856, 1
      %vm3921 = vcmp.eq.s32.totalorder %v3857, 1
      %vm3922 = vcmp.eq.s32.totalorder %v3858, 1
      %vm3923 = vcmp.eq.s32.totalorder %v3859, 1
      %vm3924 = vcmp.eq.s32.totalorder %v3860, 1
      %vm3925 = vcmp.eq.s32.totalorder %v3861, 1
      %vm3926 = vcmp.eq.s32.totalorder %v3862, 1
      %vm3927 = vcmp.eq.s32.totalorder %v3863, 1
      %vm3928 = vcmp.eq.s32.totalorder %v3864, 1
      %vm3929 = vcmp.eq.s32.totalorder %v3865, 1
      %vm3930 = vcmp.eq.s32.totalorder %v3866, 1
      %vm3931 = vcmp.eq.s32.totalorder %v3867, 1
      %vm3932 = vcmp.eq.s32.totalorder %v3868, 1
      %vm3933 = vcmp.eq.s32.totalorder %v3869, 1
      %vm3934 = vcmp.eq.s32.totalorder %v3870, 1
      %vm3935 = vcmp.eq.s32.totalorder %v3871, 1
      %vm3936 = vcmp.eq.s32.totalorder %v3872, 1
      %vm3937 = vcmp.eq.s32.totalorder %v3873, 1
      %vm3938 = vcmp.eq.s32.totalorder %v3874, 1
      %vm3939 = vcmp.eq.s32.totalorder %v3875, 1
      %vm3940 = vcmp.eq.s32.totalorder %v3876, 1
      %vm3941 = vcmp.eq.s32.totalorder %v3877, 1
      %vm3942 = vcmp.eq.s32.totalorder %v3878, 1
      %vm3943 = vcmp.eq.s32.totalorder %v3879, 1
      %vm3944 = vcmp.eq.s32.totalorder %v3880, 1
      %vm3945 = vcmp.eq.s32.totalorder %v3881, 1
      %vm3946 = vcmp.eq.s32.totalorder %v3882, 1
      %vm3947 = vcmp.eq.s32.totalorder %v3883, 1
      %vm3948 = vcmp.eq.s32.totalorder %v3884, 1
      %vm3949 = vcmp.eq.s32.totalorder %v3885, 1
      %vm3950 = vcmp.eq.s32.totalorder %v3886, 1
      %vm3951 = vcmp.eq.s32.totalorder %v3887, 1
      %vm3952 = vcmp.eq.s32.totalorder %v3888, 1
      %vm3953 = vcmp.eq.s32.totalorder %v3889, 1
      %vm3954 = vcmp.eq.s32.totalorder %v3890, 1
      %vm3955 = vcmp.eq.s32.totalorder %v3891, 1
      %vm3956 = vcmp.eq.s32.totalorder %v3892, 1
      %vm3957 = vcmp.eq.s32.totalorder %v3893, 1
      %vm3958 = vcmp.eq.s32.totalorder %v3894, 1
      %vm3959 = vcmp.eq.s32.totalorder %v3895, 1
      %vm3960 = vcmp.eq.s32.totalorder %v3896, 1
      %vm3961 = vcmp.eq.s32.totalorder %v3897, 1
      %vm3962 = vcmp.eq.s32.totalorder %v3898, 1
      %vm3963 = vcmp.eq.s32.totalorder %v3899, 1
      %vm3964 = vcmp.eq.s32.totalorder %v3900, 1
      %vm3965 = vcmp.eq.s32.totalorder %v3901, 1
      %v3966 = vsel %vm3902, %v2482, 0.0
      %v3967 = vsel %vm3903, %v2483, 0.0
      %v3968 = vsel %vm3904, %v2484, 0.0
      %v3969 = vsel %vm3905, %v2485, 0.0
      %v3970 = vsel %vm3906, %v2486, 0.0
      %v3971 = vsel %vm3907, %v2487, 0.0
      %v3972 = vsel %vm3908, %v2488, 0.0
      %v3973 = vsel %vm3909, %v2489, 0.0
      %v3974 = vsel %vm3910, %v2490, 0.0
      %v3975 = vsel %vm3911, %v2491, 0.0
      %v3976 = vsel %vm3912, %v2492, 0.0
      %v3977 = vsel %vm3913, %v2493, 0.0
      %v3978 = vsel %vm3914, %v2494, 0.0
      %v3979 = vsel %vm3915, %v2495, 0.0
      %v3980 = vsel %vm3916, %v2496, 0.0
      %v3981 = vsel %vm3917, %v2497, 0.0
      %v3982 = vsel %vm3918, %v2498, 0.0
      %v3983 = vsel %vm3919, %v2499, 0.0
      %v3984 = vsel %vm3920, %v2500, 0.0
      %v3985 = vsel %vm3921, %v2501, 0.0
      %v3986 = vsel %vm3922, %v2502, 0.0
      %v3987 = vsel %vm3923, %v2503, 0.0
      %v3988 = vsel %vm3924, %v2504, 0.0
      %v3989 = vsel %vm3925, %v2505, 0.0
      %v3990 = vsel %vm3926, %v2506, 0.0
      %v3991 = vsel %vm3927, %v2507, 0.0
      %v3992 = vsel %vm3928, %v2508, 0.0
      %v3993 = vsel %vm3929, %v2509, 0.0
      %v3994 = vsel %vm3930, %v3374, 0.0
      %v3995 = vsel %vm3931, %v3375, 0.0
      %v3996 = vsel %vm3932, %v3770, 0.0
      %v3997 = vsel %vm3933, %v3771, 0.0
      %v3998 = vsel %vm3934, %v2514, 0.0
      %v3999 = vsel %vm3935, %v2515, 0.0
      %v4000 = vsel %vm3936, %v2516, 0.0
      %v4001 = vsel %vm3937, %v2517, 0.0
      %v4002 = vsel %vm3938, %v2518, 0.0
      %v4003 = vsel %vm3939, %v2519, 0.0
      %v4004 = vsel %vm3940, %v2520, 0.0
      %v4005 = vsel %vm3941, %v2521, 0.0
      %v4006 = vsel %vm3942, %v2522, 0.0
      %v4007 = vsel %vm3943, %v2523, 0.0
      %v4008 = vsel %vm3944, %v2524, 0.0
      %v4009 = vsel %vm3945, %v2525, 0.0
      %v4010 = vsel %vm3946, %v2526, 0.0
      %v4011 = vsel %vm3947, %v2527, 0.0
      %v4012 = vsel %vm3948, %v2528, 0.0
      %v4013 = vsel %vm3949, %v2529, 0.0
      %v4014 = vsel %vm3950, %v2530, 0.0
      %v4015 = vsel %vm3951, %v2531, 0.0
      %v4016 = vsel %vm3952, %v2532, 0.0
      %v4017 = vsel %vm3953, %v2533, 0.0
      %v4018 = vsel %vm3954, %v2534, 0.0
      %v4019 = vsel %vm3955, %v2535, 0.0
      %v4020 = vsel %vm3956, %v2536, 0.0
      %v4021 = vsel %vm3957, %v2537, 0.0
      %v4022 = vsel %vm3958, %v2538, 0.0
      %v4023 = vsel %vm3959, %v2539, 0.0
      %v4024 = vsel %vm3960, %v2540, 0.0
      %v4025 = vsel %vm3961, %v2541, 0.0
      %v4026 = vsel %vm3962, %v3376, 0.0
      %v4027 = vsel %vm3963, %v3377, 0.0
      %v4028 = vsel %vm3964, %v3772, 0.0
      %v4029 = vsel %vm3965, %v3773, 0.0
      %v4030 = vld [vmem:[#allocation2 + $0x118] sm:$0xff]
      %v4031 = vld [vmem:[#allocation2 + $0x120] sm:$0xff]
      %v4032 = vld [vmem:[#allocation2 + $0x248] sm:$0xff]
      %v4033 = vld [vmem:[#allocation2 + $0x250] sm:$0xff]
      %v4034 = vsel %vm2286, 1, 0
      %v4035 = vsel %vm2287, 1, 0
      %v4036 = vsel %vm2288, 1, 0
      %v4037 = vsel %vm2289, 1, 0
      %v4038 = vsel %vm2290, 1, 0
      %v4039 = vsel %vm2291, 1, 0
      %v4040 = vsel %vm2292, 1, 0
      %v4041 = vsel %vm2293, 1, 0
      %v4042 = vsel %vm2294, 1, 0
      %v4043 = vsel %vm2295, 1, 0
      %v4044 = vsel %vm2296, 1, 0
      %v4045 = vsel %vm2297, 1, 0
      %v4046 = vsel %vm2298, 1, 0
      %v4047 = vsel %vm2299, 1, 0
      %v4048 = vsel %vm2300, 1, 0
      %v4049 = vsel %vm2301, 1, 0
      %v4050 = vsel %vm2302, 1, 0
      %v4051 = vsel %vm2303, 1, 0
      %v4052 = vsel %vm2304, 1, 0
      %v4053 = vsel %vm2305, 1, 0
      %v4054 = vsel %vm2306, 1, 0
      %v4055 = vsel %vm2307, 1, 0
      %v4056 = vsel %vm2308, 1, 0
      %v4057 = vsel %vm2309, 1, 0
      %v4058 = vsel %vm2310, 1, 0
      %v4059 = vsel %vm2311, 1, 0
      %v4060 = vsel %vm2312, 1, 0
      %v4061 = vsel %vm2313, 1, 0
      %v4062 = vsel %vm2314, 1, 0
      %v4063 = vsel %vm2315, 1, 0
      %v4064 = vsel %vm2316, 1, 0
      %v4065 = vsel %vm2317, 1, 0
      %v4066 = vsel %vm2318, 1, 0
      %v4067 = vsel %vm2319, 1, 0
      %v4068 = vsel %vm2320, 1, 0
      %v4069 = vsel %vm2321, 1, 0
      %v4070 = vsel %vm2322, 1, 0
      %v4071 = vsel %vm2323, 1, 0
      %v4072 = vsel %vm2324, 1, 0
      %v4073 = vsel %vm2325, 1, 0
      %v4074 = vsel %vm2326, 1, 0
      %v4075 = vsel %vm2327, 1, 0
      %v4076 = vsel %vm2328, 1, 0
      %v4077 = vsel %vm2329, 1, 0
      %v4078 = vsel %vm2330, 1, 0
      %v4079 = vsel %vm2331, 1, 0
      %v4080 = vsel %vm2332, 1, 0
      %v4081 = vsel %vm2333, 1, 0
      %v4082 = vsel %vm2334, 1, 0
      %v4083 = vsel %vm2335, 1, 0
      %v4084 = vsel %vm2336, 1, 0
      %v4085 = vsel %vm2337, 1, 0
      %v4086 = vsel %vm2338, 1, 0
      %v4087 = vsel %vm2339, 1, 0
      %v4088 = vsel %vm2340, 1, 0
      %v4089 = vsel %vm2341, 1, 0
      %v4090 = vsel %vm2342, 1, 0
      %v4091 = vsel %vm2343, 1, 0
      %v4092 = vsel %vm2344, 1, 0
      %v4093 = vsel %vm2345, 1, 0
      %v4094 = vsel %vm2346, 1, 0
      %v4095 = vsel %vm2347, 1, 0
      %v4096 = vsel %vm2348, 1, 0
      %v4097 = vsel %vm2349, 1, 0
      %vm4098 = vcmp.eq.s32.totalorder %v4034, 1
      %vm4099 = vcmp.eq.s32.totalorder %v4035, 1
      %vm4100 = vcmp.eq.s32.totalorder %v4036, 1
      %vm4101 = vcmp.eq.s32.totalorder %v4037, 1
      %vm4102 = vcmp.eq.s32.totalorder %v4038, 1
      %vm4103 = vcmp.eq.s32.totalorder %v4039, 1
      %vm4104 = vcmp.eq.s32.totalorder %v4040, 1
      %vm4105 = vcmp.eq.s32.totalorder %v4041, 1
      %vm4106 = vcmp.eq.s32.totalorder %v4042, 1
      %vm4107 = vcmp.eq.s32.totalorder %v4043, 1
      %vm4108 = vcmp.eq.s32.totalorder %v4044, 1
      %vm4109 = vcmp.eq.s32.totalorder %v4045, 1
      %vm4110 = vcmp.eq.s32.totalorder %v4046, 1
      %vm4111 = vcmp.eq.s32.totalorder %v4047, 1
      %vm4112 = vcmp.eq.s32.totalorder %v4048, 1
      %vm4113 = vcmp.eq.s32.totalorder %v4049, 1
      %vm4114 = vcmp.eq.s32.totalorder %v4050, 1
      %vm4115 = vcmp.eq.s32.totalorder %v4051, 1
      %vm4116 = vcmp.eq.s32.totalorder %v4052, 1
      %vm4117 = vcmp.eq.s32.totalorder %v4053, 1
      %vm4118 = vcmp.eq.s32.totalorder %v4054, 1
      %vm4119 = vcmp.eq.s32.totalorder %v4055, 1
      %vm4120 = vcmp.eq.s32.totalorder %v4056, 1
      %vm4121 = vcmp.eq.s32.totalorder %v4057, 1
      %vm4122 = vcmp.eq.s32.totalorder %v4058, 1
      %vm4123 = vcmp.eq.s32.totalorder %v4059, 1
      %vm4124 = vcmp.eq.s32.totalorder %v4060, 1
      %vm4125 = vcmp.eq.s32.totalorder %v4061, 1
      %vm4126 = vcmp.eq.s32.totalorder %v4062, 1
      %vm4127 = vcmp.eq.s32.totalorder %v4063, 1
      %vm4128 = vcmp.eq.s32.totalorder %v4064, 1
      %vm4129 = vcmp.eq.s32.totalorder %v4065, 1
      %vm4130 = vcmp.eq.s32.totalorder %v4066, 1
      %vm4131 = vcmp.eq.s32.totalorder %v4067, 1
      %vm4132 = vcmp.eq.s32.totalorder %v4068, 1
      %vm4133 = vcmp.eq.s32.totalorder %v4069, 1
      %vm4134 = vcmp.eq.s32.totalorder %v4070, 1
      %vm4135 = vcmp.eq.s32.totalorder %v4071, 1
      %vm4136 = vcmp.eq.s32.totalorder %v4072, 1
      %vm4137 = vcmp.eq.s32.totalorder %v4073, 1
      %vm4138 = vcmp.eq.s32.totalorder %v4074, 1
      %vm4139 = vcmp.eq.s32.totalorder %v4075, 1
      %vm4140 = vcmp.eq.s32.totalorder %v4076, 1
      %vm4141 = vcmp.eq.s32.totalorder %v4077, 1
      %vm4142 = vcmp.eq.s32.totalorder %v4078, 1
      %vm4143 = vcmp.eq.s32.totalorder %v4079, 1
      %vm4144 = vcmp.eq.s32.totalorder %v4080, 1
      %vm4145 = vcmp.eq.s32.totalorder %v4081, 1
      %vm4146 = vcmp.eq.s32.totalorder %v4082, 1
      %vm4147 = vcmp.eq.s32.totalorder %v4083, 1
      %vm4148 = vcmp.eq.s32.totalorder %v4084, 1
      %vm4149 = vcmp.eq.s32.totalorder %v4085, 1
      %vm4150 = vcmp.eq.s32.totalorder %v4086, 1
      %vm4151 = vcmp.eq.s32.totalorder %v4087, 1
      %vm4152 = vcmp.eq.s32.totalorder %v4088, 1
      %vm4153 = vcmp.eq.s32.totalorder %v4089, 1
      %vm4154 = vcmp.eq.s32.totalorder %v4090, 1
      %vm4155 = vcmp.eq.s32.totalorder %v4091, 1
      %vm4156 = vcmp.eq.s32.totalorder %v4092, 1
      %vm4157 = vcmp.eq.s32.totalorder %v4093, 1
      %vm4158 = vcmp.eq.s32.totalorder %v4094, 1
      %vm4159 = vcmp.eq.s32.totalorder %v4095, 1
      %vm4160 = vcmp.eq.s32.totalorder %v4096, 1
      %vm4161 = vcmp.eq.s32.totalorder %v4097, 1
      %v4162 = vsel %vm4098, %v2802, 0.0
      %v4163 = vsel %vm4099, %v2803, 0.0
      %v4164 = vsel %vm4100, %v2804, 0.0
      %v4165 = vsel %vm4101, %v2805, 0.0
      %v4166 = vsel %vm4102, %v2806, 0.0
      %v4167 = vsel %vm4103, %v2807, 0.0
      %v4168 = vsel %vm4104, %v2808, 0.0
      %v4169 = vsel %vm4105, %v2809, 0.0
      %v4170 = vsel %vm4106, %v2810, 0.0
      %v4171 = vsel %vm4107, %v2811, 0.0
      %v4172 = vsel %vm4108, %v2812, 0.0
      %v4173 = vsel %vm4109, %v2813, 0.0
      %v4174 = vsel %vm4110, %v2814, 0.0
      %v4175 = vsel %vm4111, %v2815, 0.0
      %v4176 = vsel %vm4112, %v2816, 0.0
      %v4177 = vsel %vm4113, %v2817, 0.0
      %v4178 = vsel %vm4114, %v2818, 0.0
      %v4179 = vsel %vm4115, %v2819, 0.0
      %v4180 = vsel %vm4116, %v2820, 0.0
      %v4181 = vsel %vm4117, %v2821, 0.0
      %v4182 = vsel %vm4118, %v2822, 0.0
      %v4183 = vsel %vm4119, %v2823, 0.0
      %v4184 = vsel %vm4120, %v2824, 0.0
      %v4185 = vsel %vm4121, %v2825, 0.0
      %v4186 = vsel %vm4122, %v2826, 0.0
      %v4187 = vsel %vm4123, %v2827, 0.0
      %v4188 = vsel %vm4124, %v2828, 0.0
      %v4189 = vsel %vm4125, %v2829, 0.0
      %v4190 = vsel %vm4126, %v3570, 0.0
      %v4191 = vsel %vm4127, %v3571, 0.0
      %v4192 = vsel %vm4128, %v4030, 0.0
      %v4193 = vsel %vm4129, %v4031, 0.0
      %v4194 = vsel %vm4130, %v2834, 0.0
      %v4195 = vsel %vm4131, %v2835, 0.0
      %v4196 = vsel %vm4132, %v2836, 0.0
      %v4197 = vsel %vm4133, %v2837, 0.0
      %v4198 = vsel %vm4134, %v2838, 0.0
      %v4199 = vsel %vm4135, %v2839, 0.0
      %v4200 = vsel %vm4136, %v2840, 0.0
      %v4201 = vsel %vm4137, %v2841, 0.0
      %v4202 = vsel %vm4138, %v2842, 0.0
      %v4203 = vsel %vm4139, %v2843, 0.0
      %v4204 = vsel %vm4140, %v2844, 0.0
      %v4205 = vsel %vm4141, %v2845, 0.0
      %v4206 = vsel %vm4142, %v2846, 0.0
      %v4207 = vsel %vm4143, %v2847, 0.0
      %v4208 = vsel %vm4144, %v2848, 0.0
      %v4209 = vsel %vm4145, %v2849, 0.0
      %v4210 = vsel %vm4146, %v2850, 0.0
      %v4211 = vsel %vm4147, %v2851, 0.0
      %v4212 = vsel %vm4148, %v2852, 0.0
      %v4213 = vsel %vm4149, %v2853, 0.0
      %v4214 = vsel %vm4150, %v2854, 0.0
      %v4215 = vsel %vm4151, %v2855, 0.0
      %v4216 = vsel %vm4152, %v2856, 0.0
      %v4217 = vsel %vm4153, %v2857, 0.0
      %v4218 = vsel %vm4154, %v2858, 0.0
      %v4219 = vsel %vm4155, %v2859, 0.0
      %v4220 = vsel %vm4156, %v2860, 0.0
      %v4221 = vsel %vm4157, %v2861, 0.0
      %v4222 = vsel %vm4158, %v3572, 0.0
      %v4223 = vsel %vm4159, %v3573, 0.0
      %v4224 = vsel %vm4160, %v4032, 0.0
      %v4225 = vsel %vm4161, %v4033, 0.0
      %v4226 = vld [vmem:[#allocation2 + $0x119] sm:$0xff]
      %v4227 = vld [vmem:[#allocation2 + $0x121] sm:$0xff]
      %v4228 = vld [vmem:[#allocation2 + $0x249] sm:$0xff]
      %v4229 = vld [vmem:[#allocation2 + $0x251] sm:$0xff]
      %vm4230 = vmand %vm2286, %vm2414
      %vm4231 = vmand %vm2287, %vm2415
      %vm4232 = vmand %vm2288, %vm2416
      %vm4233 = vmand %vm2289, %vm2417
      %vm4234 = vmand %vm2290, %vm2418
      %vm4235 = vmand %vm2291, %vm2419
      %vm4236 = vmand %vm2292, %vm2420
      %vm4237 = vmand %vm2293, %vm2421
      %vm4238 = vmand %vm2294, %vm2422
      %vm4239 = vmand %vm2295, %vm2423
      %vm4240 = vmand %vm2296, %vm2424
      %vm4241 = vmand %vm2297, %vm2425
      %vm4242 = vmand %vm2298, %vm2426
      %vm4243 = vmand %vm2299, %vm2427
      %vm4244 = vmand %vm2300, %vm2428
      %vm4245 = vmand %vm2301, %vm2429
      %vm4246 = vmand %vm2302, %vm2430
      %vm4247 = vmand %vm2303, %vm2431
      %vm4248 = vmand %vm2304, %vm2432
      %vm4249 = vmand %vm2305, %vm2433
      %vm4250 = vmand %vm2306, %vm2434
      %vm4251 = vmand %vm2307, %vm2435
      %vm4252 = vmand %vm2308, %vm2436
      %vm4253 = vmand %vm2309, %vm2437
      %vm4254 = vmand %vm2310, %vm2438
      %vm4255 = vmand %vm2311, %vm2439
      %vm4256 = vmand %vm2312, %vm2440
      %vm4257 = vmand %vm2313, %vm2441
      %vm4258 = vmand %vm2314, %vm2442
      %vm4259 = vmand %vm2315, %vm2443
      %vm4260 = vmand %vm2316, %vm2444
      %vm4261 = vmand %vm2317, %vm2445
      %vm4262 = vmand %vm2318, %vm2446
      %vm4263 = vmand %vm2319, %vm2447
      %vm4264 = vmand %vm2320, %vm2448
      %vm4265 = vmand %vm2321, %vm2449
      %vm4266 = vmand %vm2322, %vm2450
      %vm4267 = vmand %vm2323, %vm2451
      %vm4268 = vmand %vm2324, %vm2452
      %vm4269 = vmand %vm2325, %vm2453
      %vm4270 = vmand %vm2326, %vm2454
      %vm4271 = vmand %vm2327, %vm2455
      %vm4272 = vmand %vm2328, %vm2456
      %vm4273 = vmand %vm2329, %vm2457
      %vm4274 = vmand %vm2330, %vm2458
      %vm4275 = vmand %vm2331, %vm2459
      %vm4276 = vmand %vm2332, %vm2460
      %vm4277 = vmand %vm2333, %vm2461
      %vm4278 = vmand %vm2334, %vm2462
      %vm4279 = vmand %vm2335, %vm2463
      %vm4280 = vmand %vm2336, %vm2464
      %vm4281 = vmand %vm2337, %vm2465
      %vm4282 = vmand %vm2338, %vm2466
      %vm4283 = vmand %vm2339, %vm2467
      %vm4284 = vmand %vm2340, %vm2468
      %vm4285 = vmand %vm2341, %vm2469
      %vm4286 = vmand %vm2342, %vm2470
      %vm4287 = vmand %vm2343, %vm2471
      %vm4288 = vmand %vm2344, %vm2472
      %vm4289 = vmand %vm2345, %vm2473
      %vm4290 = vmand %vm2346, %vm2474
      %vm4291 = vmand %vm2347, %vm2475
      %vm4292 = vmand %vm2348, %vm2476
      %vm4293 = vmand %vm2349, %vm2477
      %v4294 = vsel %vm4230, 1, 0
      %v4295 = vsel %vm4231, 1, 0
      %v4296 = vsel %vm4232, 1, 0
      %v4297 = vsel %vm4233, 1, 0
      %v4298 = vsel %vm4234, 1, 0
      %v4299 = vsel %vm4235, 1, 0
      %v4300 = vsel %vm4236, 1, 0
      %v4301 = vsel %vm4237, 1, 0
      %v4302 = vsel %vm4238, 1, 0
      %v4303 = vsel %vm4239, 1, 0
      %v4304 = vsel %vm4240, 1, 0
      %v4305 = vsel %vm4241, 1, 0
      %v4306 = vsel %vm4242, 1, 0
      %v4307 = vsel %vm4243, 1, 0
      %v4308 = vsel %vm4244, 1, 0
      %v4309 = vsel %vm4245, 1, 0
      %v4310 = vsel %vm4246, 1, 0
      %v4311 = vsel %vm4247, 1, 0
      %v4312 = vsel %vm4248, 1, 0
      %v4313 = vsel %vm4249, 1, 0
      %v4314 = vsel %vm4250, 1, 0
      %v4315 = vsel %vm4251, 1, 0
      %v4316 = vsel %vm4252, 1, 0
      %v4317 = vsel %vm4253, 1, 0
      %v4318 = vsel %vm4254, 1, 0
      %v4319 = vsel %vm4255, 1, 0
      %v4320 = vsel %vm4256, 1, 0
      %v4321 = vsel %vm4257, 1, 0
      %v4322 = vsel %vm4258, 1, 0
      %v4323 = vsel %vm4259, 1, 0
      %v4324 = vsel %vm4260, 1, 0
      %v4325 = vsel %vm4261, 1, 0
      %v4326 = vsel %vm4262, 1, 0
      %v4327 = vsel %vm4263, 1, 0
      %v4328 = vsel %vm4264, 1, 0
      %v4329 = vsel %vm4265, 1, 0
      %v4330 = vsel %vm4266, 1, 0
      %v4331 = vsel %vm4267, 1, 0
      %v4332 = vsel %vm4268, 1, 0
      %v4333 = vsel %vm4269, 1, 0
      %v4334 = vsel %vm4270, 1, 0
      %v4335 = vsel %vm4271, 1, 0
      %v4336 = vsel %vm4272, 1, 0
      %v4337 = vsel %vm4273, 1, 0
      %v4338 = vsel %vm4274, 1, 0
      %v4339 = vsel %vm4275, 1, 0
      %v4340 = vsel %vm4276, 1, 0
      %v4341 = vsel %vm4277, 1, 0
      %v4342 = vsel %vm4278, 1, 0
      %v4343 = vsel %vm4279, 1, 0
      %v4344 = vsel %vm4280, 1, 0
      %v4345 = vsel %vm4281, 1, 0
      %v4346 = vsel %vm4282, 1, 0
      %v4347 = vsel %vm4283, 1, 0
      %v4348 = vsel %vm4284, 1, 0
      %v4349 = vsel %vm4285, 1, 0
      %v4350 = vsel %vm4286, 1, 0
      %v4351 = vsel %vm4287, 1, 0
      %v4352 = vsel %vm4288, 1, 0
      %v4353 = vsel %vm4289, 1, 0
      %v4354 = vsel %vm4290, 1, 0
      %v4355 = vsel %vm4291, 1, 0
      %v4356 = vsel %vm4292, 1, 0
      %v4357 = vsel %vm4293, 1, 0
      %vm4358 = vcmp.eq.s32.totalorder %v4294, 1
      %vm4359 = vcmp.eq.s32.totalorder %v4295, 1
      %vm4360 = vcmp.eq.s32.totalorder %v4296, 1
      %vm4361 = vcmp.eq.s32.totalorder %v4297, 1
      %vm4362 = vcmp.eq.s32.totalorder %v4298, 1
      %vm4363 = vcmp.eq.s32.totalorder %v4299, 1
      %vm4364 = vcmp.eq.s32.totalorder %v4300, 1
      %vm4365 = vcmp.eq.s32.totalorder %v4301, 1
      %vm4366 = vcmp.eq.s32.totalorder %v4302, 1
      %vm4367 = vcmp.eq.s32.totalorder %v4303, 1
      %vm4368 = vcmp.eq.s32.totalorder %v4304, 1
      %vm4369 = vcmp.eq.s32.totalorder %v4305, 1
      %vm4370 = vcmp.eq.s32.totalorder %v4306, 1
      %vm4371 = vcmp.eq.s32.totalorder %v4307, 1
      %vm4372 = vcmp.eq.s32.totalorder %v4308, 1
      %vm4373 = vcmp.eq.s32.totalorder %v4309, 1
      %vm4374 = vcmp.eq.s32.totalorder %v4310, 1
      %vm4375 = vcmp.eq.s32.totalorder %v4311, 1
      %vm4376 = vcmp.eq.s32.totalorder %v4312, 1
      %vm4377 = vcmp.eq.s32.totalorder %v4313, 1
      %vm4378 = vcmp.eq.s32.totalorder %v4314, 1
      %vm4379 = vcmp.eq.s32.totalorder %v4315, 1
      %vm4380 = vcmp.eq.s32.totalorder %v4316, 1
      %vm4381 = vcmp.eq.s32.totalorder %v4317, 1
      %vm4382 = vcmp.eq.s32.totalorder %v4318, 1
      %vm4383 = vcmp.eq.s32.totalorder %v4319, 1
      %vm4384 = vcmp.eq.s32.totalorder %v4320, 1
      %vm4385 = vcmp.eq.s32.totalorder %v4321, 1
      %vm4386 = vcmp.eq.s32.totalorder %v4322, 1
      %vm4387 = vcmp.eq.s32.totalorder %v4323, 1
      %vm4388 = vcmp.eq.s32.totalorder %v4324, 1
      %vm4389 = vcmp.eq.s32.totalorder %v4325, 1
      %vm4390 = vcmp.eq.s32.totalorder %v4326, 1
      %vm4391 = vcmp.eq.s32.totalorder %v4327, 1
      %vm4392 = vcmp.eq.s32.totalorder %v4328, 1
      %vm4393 = vcmp.eq.s32.totalorder %v4329, 1
      %vm4394 = vcmp.eq.s32.totalorder %v4330, 1
      %vm4395 = vcmp.eq.s32.totalorder %v4331, 1
      %vm4396 = vcmp.eq.s32.totalorder %v4332, 1
      %vm4397 = vcmp.eq.s32.totalorder %v4333, 1
      %vm4398 = vcmp.eq.s32.totalorder %v4334, 1
      %vm4399 = vcmp.eq.s32.totalorder %v4335, 1
      %vm4400 = vcmp.eq.s32.totalorder %v4336, 1
      %vm4401 = vcmp.eq.s32.totalorder %v4337, 1
      %vm4402 = vcmp.eq.s32.totalorder %v4338, 1
      %vm4403 = vcmp.eq.s32.totalorder %v4339, 1
      %vm4404 = vcmp.eq.s32.totalorder %v4340, 1
      %vm4405 = vcmp.eq.s32.totalorder %v4341, 1
      %vm4406 = vcmp.eq.s32.totalorder %v4342, 1
      %vm4407 = vcmp.eq.s32.totalorder %v4343, 1
      %vm4408 = vcmp.eq.s32.totalorder %v4344, 1
      %vm4409 = vcmp.eq.s32.totalorder %v4345, 1
      %vm4410 = vcmp.eq.s32.totalorder %v4346, 1
      %vm4411 = vcmp.eq.s32.totalorder %v4347, 1
      %vm4412 = vcmp.eq.s32.totalorder %v4348, 1
      %vm4413 = vcmp.eq.s32.totalorder %v4349, 1
      %vm4414 = vcmp.eq.s32.totalorder %v4350, 1
      %vm4415 = vcmp.eq.s32.totalorder %v4351, 1
      %vm4416 = vcmp.eq.s32.totalorder %v4352, 1
      %vm4417 = vcmp.eq.s32.totalorder %v4353, 1
      %vm4418 = vcmp.eq.s32.totalorder %v4354, 1
      %vm4419 = vcmp.eq.s32.totalorder %v4355, 1
      %vm4420 = vcmp.eq.s32.totalorder %v4356, 1
      %vm4421 = vcmp.eq.s32.totalorder %v4357, 1
      %v4422 = vsel %vm4358, %v3058, 0.0
      %v4423 = vsel %vm4359, %v3059, 0.0
      %v4424 = vsel %vm4360, %v3060, 0.0
      %v4425 = vsel %vm4361, %v3061, 0.0
      %v4426 = vsel %vm4362, %v3062, 0.0
      %v4427 = vsel %vm4363, %v3063, 0.0
      %v4428 = vsel %vm4364, %v3064, 0.0
      %v4429 = vsel %vm4365, %v3065, 0.0
      %v4430 = vsel %vm4366, %v3066, 0.0
      %v4431 = vsel %vm4367, %v3067, 0.0
      %v4432 = vsel %vm4368, %v3068, 0.0
      %v4433 = vsel %vm4369, %v3069, 0.0
      %v4434 = vsel %vm4370, %v3070, 0.0
      %v4435 = vsel %vm4371, %v3071, 0.0
      %v4436 = vsel %vm4372, %v3072, 0.0
      %v4437 = vsel %vm4373, %v3073, 0.0
      %v4438 = vsel %vm4374, %v3074, 0.0
      %v4439 = vsel %vm4375, %v3075, 0.0
      %v4440 = vsel %vm4376, %v3076, 0.0
      %v4441 = vsel %vm4377, %v3077, 0.0
      %v4442 = vsel %vm4378, %v3078, 0.0
      %v4443 = vsel %vm4379, %v3079, 0.0
      %v4444 = vsel %vm4380, %v3080, 0.0
      %v4445 = vsel %vm4381, %v3081, 0.0
      %v4446 = vsel %vm4382, %v3082, 0.0
      %v4447 = vsel %vm4383, %v3083, 0.0
      %v4448 = vsel %vm4384, %v3084, 0.0
      %v4449 = vsel %vm4385, %v3085, 0.0
      %v4450 = vsel %vm4386, %v3574, 0.0
      %v4451 = vsel %vm4387, %v3575, 0.0
      %v4452 = vsel %vm4388, %v4226, 0.0
      %v4453 = vsel %vm4389, %v4227, 0.0
      %v4454 = vsel %vm4390, %v3090, 0.0
      %v4455 = vsel %vm4391, %v3091, 0.0
      %v4456 = vsel %vm4392, %v3092, 0.0
      %v4457 = vsel %vm4393, %v3093, 0.0
      %v4458 = vsel %vm4394, %v3094, 0.0
      %v4459 = vsel %vm4395, %v3095, 0.0
      %v4460 = vsel %vm4396, %v3096, 0.0
      %v4461 = vsel %vm4397, %v3097, 0.0
      %v4462 = vsel %vm4398, %v3098, 0.0
      %v4463 = vsel %vm4399, %v3099, 0.0
      %v4464 = vsel %vm4400, %v3100, 0.0
      %v4465 = vsel %vm4401, %v3101, 0.0
      %v4466 = vsel %vm4402, %v3102, 0.0
      %v4467 = vsel %vm4403, %v3103, 0.0
      %v4468 = vsel %vm4404, %v3104, 0.0
      %v4469 = vsel %vm4405, %v3105, 0.0
      %v4470 = vsel %vm4406, %v3106, 0.0
      %v4471 = vsel %vm4407, %v3107, 0.0
      %v4472 = vsel %vm4408, %v3108, 0.0
      %v4473 = vsel %vm4409, %v3109, 0.0
      %v4474 = vsel %vm4410, %v3110, 0.0
      %v4475 = vsel %vm4411, %v3111, 0.0
      %v4476 = vsel %vm4412, %v3112, 0.0
      %v4477 = vsel %vm4413, %v3113, 0.0
      %v4478 = vsel %vm4414, %v3114, 0.0
      %v4479 = vsel %vm4415, %v3115, 0.0
      %v4480 = vsel %vm4416, %v3116, 0.0
      %v4481 = vsel %vm4417, %v3117, 0.0
      %v4482 = vsel %vm4418, %v3576, 0.0
      %v4483 = vsel %vm4419, %v3577, 0.0
      %v4484 = vsel %vm4420, %v4228, 0.0
      %v4485 = vsel %vm4421, %v4229, 0.0
      %4550 = vrot.lane.b32.xlu0 %v2990, 32
      %v4551 = vpop.permute.xlu0 %4550
      %4552 = vrot.lane.b32.xlu0 %v2991, 32
      %v4553 = vpop.permute.xlu0 %4552
      %4554 = vrot.lane.b32.xlu0 %v2992, 32
      %v4555 = vpop.permute.xlu0 %4554
      %4556 = vrot.lane.b32.xlu0 %v2993, 32
      %v4557 = vpop.permute.xlu0 %4556
      %4558 = vrot.lane.b32.xlu0 %v2994, 32
      %v4559 = vpop.permute.xlu0 %4558
      %4560 = vrot.lane.b32.xlu0 %v2995, 32
      %v4561 = vpop.permute.xlu0 %4560
      %4562 = vrot.lane.b32.xlu0 %v2996, 32
      %v4563 = vpop.permute.xlu0 %4562
      %4564 = vrot.lane.b32.xlu0 %v2997, 32
      %v4565 = vpop.permute.xlu0 %4564
      %4566 = vrot.lane.b32.xlu0 %v2998, 32
      %v4567 = vpop.permute.xlu0 %4566
      %4568 = vrot.lane.b32.xlu0 %v2999, 32
      %v4569 = vpop.permute.xlu0 %4568
      %4570 = vrot.lane.b32.xlu0 %v3000, 32
      %v4571 = vpop.permute.xlu0 %4570
      %4572 = vrot.lane.b32.xlu0 %v3001, 32
      %v4573 = vpop.permute.xlu0 %4572
      %4574 = vrot.lane.b32.xlu0 %v3002, 32
      %v4575 = vpop.permute.xlu0 %4574
      %4576 = vrot.lane.b32.xlu0 %v3003, 32
      %v4577 = vpop.permute.xlu0 %4576
      %4578 = vrot.lane.b32.xlu0 %v3004, 32
      %v4579 = vpop.permute.xlu0 %4578
      %4580 = vrot.lane.b32.xlu0 %v3005, 32
      %v4581 = vpop.permute.xlu0 %4580
      %4582 = vrot.lane.b32.xlu0 %v3006, 32
      %v4583 = vpop.permute.xlu0 %4582
      %4584 = vrot.lane.b32.xlu0 %v3007, 32
      %v4585 = vpop.permute.xlu0 %4584
      %4586 = vrot.lane.b32.xlu0 %v3008, 32
      %v4587 = vpop.permute.xlu0 %4586
      %4588 = vrot.lane.b32.xlu0 %v3009, 32
      %v4589 = vpop.permute.xlu0 %4588
      %4590 = vrot.lane.b32.xlu0 %v3010, 32
      %v4591 = vpop.permute.xlu0 %4590
      %4592 = vrot.lane.b32.xlu0 %v3011, 32
      %v4593 = vpop.permute.xlu0 %4592
      %4594 = vrot.lane.b32.xlu0 %v3012, 32
      %v4595 = vpop.permute.xlu0 %4594
      %4596 = vrot.lane.b32.xlu0 %v3013, 32
      %v4597 = vpop.permute.xlu0 %4596
      %4598 = vrot.lane.b32.xlu0 %v3014, 32
      %v4599 = vpop.permute.xlu0 %4598
      %4600 = vrot.lane.b32.xlu0 %v3015, 32
      %v4601 = vpop.permute.xlu0 %4600
      %4602 = vrot.lane.b32.xlu0 %v3016, 32
      %v4603 = vpop.permute.xlu0 %4602
      %4604 = vrot.lane.b32.xlu0 %v3017, 32
      %v4605 = vpop.permute.xlu0 %4604
      %4606 = vrot.lane.b32.xlu0 %v3018, 32
      %v4607 = vpop.permute.xlu0 %4606
      %4608 = vrot.lane.b32.xlu0 %v3019, 32
      %v4609 = vpop.permute.xlu0 %4608
      %4610 = vrot.lane.b32.xlu0 %v3020, 32
      %v4611 = vpop.permute.xlu0 %4610
      %4612 = vrot.lane.b32.xlu0 %v3021, 32
      %v4613 = vpop.permute.xlu0 %4612
      %4614 = vrot.lane.b32.xlu0 %v3022, 32
      %v4615 = vpop.permute.xlu0 %4614
      %4616 = vrot.lane.b32.xlu0 %v3023, 32
      %v4617 = vpop.permute.xlu0 %4616
      %4618 = vrot.lane.b32.xlu0 %v3024, 32
      %v4619 = vpop.permute.xlu0 %4618
      %4620 = vrot.lane.b32.xlu0 %v3025, 32
      %v4621 = vpop.permute.xlu0 %4620
      %4622 = vrot.lane.b32.xlu0 %v3026, 32
      %v4623 = vpop.permute.xlu0 %4622
      %4624 = vrot.lane.b32.xlu0 %v3027, 32
      %v4625 = vpop.permute.xlu0 %4624
      %4626 = vrot.lane.b32.xlu0 %v3028, 32
      %v4627 = vpop.permute.xlu0 %4626
      %4628 = vrot.lane.b32.xlu0 %v3029, 32
      %v4629 = vpop.permute.xlu0 %4628
      %4630 = vrot.lane.b32.xlu0 %v3030, 32
      %v4631 = vpop.permute.xlu0 %4630
      %4632 = vrot.lane.b32.xlu0 %v3031, 32
      %v4633 = vpop.permute.xlu0 %4632
      %4634 = vrot.lane.b32.xlu0 %v3032, 32
      %v4635 = vpop.permute.xlu0 %4634
      %4636 = vrot.lane.b32.xlu0 %v3033, 32
      %v4637 = vpop.permute.xlu0 %4636
      %4638 = vrot.lane.b32.xlu0 %v3034, 32
      %v4639 = vpop.permute.xlu0 %4638
      %4640 = vrot.lane.b32.xlu0 %v3035, 32
      %v4641 = vpop.permute.xlu0 %4640
      %4642 = vrot.lane.b32.xlu0 %v3036, 32
      %v4643 = vpop.permute.xlu0 %4642
      %4644 = vrot.lane.b32.xlu0 %v3037, 32
      %v4645 = vpop.permute.xlu0 %4644
      %4646 = vrot.lane.b32.xlu0 %v3038, 32
      %v4647 = vpop.permute.xlu0 %4646
      %4648 = vrot.lane.b32.xlu0 %v3039, 32
      %v4649 = vpop.permute.xlu0 %4648
      %4650 = vrot.lane.b32.xlu0 %v3040, 32
      %v4651 = vpop.permute.xlu0 %4650
      %4652 = vrot.lane.b32.xlu0 %v3041, 32
      %v4653 = vpop.permute.xlu0 %4652
      %4654 = vrot.lane.b32.xlu0 %v3042, 32
      %v4655 = vpop.permute.xlu0 %4654
      %4656 = vrot.lane.b32.xlu0 %v3043, 32
      %v4657 = vpop.permute.xlu0 %4656
      %4658 = vrot.lane.b32.xlu0 %v3044, 32
      %v4659 = vpop.permute.xlu0 %4658
      %4660 = vrot.lane.b32.xlu0 %v3045, 32
      %v4661 = vpop.permute.xlu0 %4660
      %4662 = vrot.lane.b32.xlu0 %v3046, 32
      %v4663 = vpop.permute.xlu0 %4662
      %4664 = vrot.lane.b32.xlu0 %v3047, 32
      %v4665 = vpop.permute.xlu0 %4664
      %4666 = vrot.lane.b32.xlu0 %v3048, 32
      %v4667 = vpop.permute.xlu0 %4666
      %4668 = vrot.lane.b32.xlu0 %v3049, 32
      %v4669 = vpop.permute.xlu0 %4668
      %4670 = vrot.lane.b32.xlu0 %v3050, 32
      %v4671 = vpop.permute.xlu0 %4670
      %4672 = vrot.lane.b32.xlu0 %v3051, 32
      %v4673 = vpop.permute.xlu0 %4672
      %4674 = vrot.lane.b32.xlu0 %v3052, 32
      %v4675 = vpop.permute.xlu0 %4674
      %4676 = vrot.lane.b32.xlu0 %v3053, 32
      %v4677 = vpop.permute.xlu0 %4676
      %4806 = vrot.lane.b32.xlu0 %v3310, 64
      %v4807 = vpop.permute.xlu0 %4806
      %4808 = vrot.lane.b32.xlu0 %v3311, 64
      %v4809 = vpop.permute.xlu0 %4808
      %4810 = vrot.lane.b32.xlu0 %v3312, 64
      %v4811 = vpop.permute.xlu0 %4810
      %4812 = vrot.lane.b32.xlu0 %v3313, 64
      %v4813 = vpop.permute.xlu0 %4812
      %4814 = vrot.lane.b32.xlu0 %v3314, 64
      %v4815 = vpop.permute.xlu0 %4814
      %4816 = vrot.lane.b32.xlu0 %v3315, 64
      %v4817 = vpop.permute.xlu0 %4816
      %4818 = vrot.lane.b32.xlu0 %v3316, 64
      %v4819 = vpop.permute.xlu0 %4818
      %4820 = vrot.lane.b32.xlu0 %v3317, 64
      %v4821 = vpop.permute.xlu0 %4820
      %4822 = vrot.lane.b32.xlu0 %v3318, 64
      %v4823 = vpop.permute.xlu0 %4822
      %4824 = vrot.lane.b32.xlu0 %v3319, 64
      %v4825 = vpop.permute.xlu0 %4824
      %4826 = vrot.lane.b32.xlu0 %v3320, 64
      %v4827 = vpop.permute.xlu0 %4826
      %4828 = vrot.lane.b32.xlu0 %v3321, 64
      %v4829 = vpop.permute.xlu0 %4828
      %4830 = vrot.lane.b32.xlu0 %v3322, 64
      %v4831 = vpop.permute.xlu0 %4830
      %4832 = vrot.lane.b32.xlu0 %v3323, 64
      %v4833 = vpop.permute.xlu0 %4832
      %4834 = vrot.lane.b32.xlu0 %v3324, 64
      %v4835 = vpop.permute.xlu0 %4834
      %4836 = vrot.lane.b32.xlu0 %v3325, 64
      %v4837 = vpop.permute.xlu0 %4836
      %4838 = vrot.lane.b32.xlu0 %v3326, 64
      %v4839 = vpop.permute.xlu0 %4838
      %4840 = vrot.lane.b32.xlu0 %v3327, 64
      %v4841 = vpop.permute.xlu0 %4840
      %4842 = vrot.lane.b32.xlu0 %v3328, 64
      %v4843 = vpop.permute.xlu0 %4842
      %4844 = vrot.lane.b32.xlu0 %v3329, 64
      %v4845 = vpop.permute.xlu0 %4844
      %4846 = vrot.lane.b32.xlu0 %v3330, 64
      %v4847 = vpop.permute.xlu0 %4846
      %4848 = vrot.lane.b32.xlu0 %v3331, 64
      %v4849 = vpop.permute.xlu0 %4848
      %4850 = vrot.lane.b32.xlu0 %v3332, 64
      %v4851 = vpop.permute.xlu0 %4850
      %4852 = vrot.lane.b32.xlu0 %v3333, 64
      %v4853 = vpop.permute.xlu0 %4852
      %4854 = vrot.lane.b32.xlu0 %v3334, 64
      %v4855 = vpop.permute.xlu0 %4854
      %4856 = vrot.lane.b32.xlu0 %v3335, 64
      %v4857 = vpop.permute.xlu0 %4856
      %4858 = vrot.lane.b32.xlu0 %v3336, 64
      %v4859 = vpop.permute.xlu0 %4858
      %4860 = vrot.lane.b32.xlu0 %v3337, 64
      %v4861 = vpop.permute.xlu0 %4860
      %4862 = vrot.lane.b32.xlu0 %v3338, 64
      %v4863 = vpop.permute.xlu0 %4862
      %4864 = vrot.lane.b32.xlu0 %v3339, 64
      %v4865 = vpop.permute.xlu0 %4864
      %4866 = vrot.lane.b32.xlu0 %v3340, 64
      %v4867 = vpop.permute.xlu0 %4866
      %4868 = vrot.lane.b32.xlu0 %v3341, 64
      %v4869 = vpop.permute.xlu0 %4868
      %4870 = vrot.lane.b32.xlu0 %v3342, 64
      %v4871 = vpop.permute.xlu0 %4870
      %4872 = vrot.lane.b32.xlu0 %v3343, 64
      %v4873 = vpop.permute.xlu0 %4872
      %4874 = vrot.lane.b32.xlu0 %v3344, 64
      %v4875 = vpop.permute.xlu0 %4874
      %4876 = vrot.lane.b32.xlu0 %v3345, 64
      %v4877 = vpop.permute.xlu0 %4876
      %4878 = vrot.lane.b32.xlu0 %v3346, 64
      %v4879 = vpop.permute.xlu0 %4878
      %4880 = vrot.lane.b32.xlu0 %v3347, 64
      %v4881 = vpop.permute.xlu0 %4880
      %4882 = vrot.lane.b32.xlu0 %v3348, 64
      %v4883 = vpop.permute.xlu0 %4882
      %4884 = vrot.lane.b32.xlu0 %v3349, 64
      %v4885 = vpop.permute.xlu0 %4884
      %4886 = vrot.lane.b32.xlu0 %v3350, 64
      %v4887 = vpop.permute.xlu0 %4886
      %4888 = vrot.lane.b32.xlu0 %v3351, 64
      %v4889 = vpop.permute.xlu0 %4888
      %4890 = vrot.lane.b32.xlu0 %v3352, 64
      %v4891 = vpop.permute.xlu0 %4890
      %4892 = vrot.lane.b32.xlu0 %v3353, 64
      %v4893 = vpop.permute.xlu0 %4892
      %4894 = vrot.lane.b32.xlu0 %v3354, 64
      %v4895 = vpop.permute.xlu0 %4894
      %4896 = vrot.lane.b32.xlu0 %v3355, 64
      %v4897 = vpop.permute.xlu0 %4896
      %4898 = vrot.lane.b32.xlu0 %v3356, 64
      %v4899 = vpop.permute.xlu0 %4898
      %4900 = vrot.lane.b32.xlu0 %v3357, 64
      %v4901 = vpop.permute.xlu0 %4900
      %4902 = vrot.lane.b32.xlu0 %v3358, 64
      %v4903 = vpop.permute.xlu0 %4902
      %4904 = vrot.lane.b32.xlu0 %v3359, 64
      %v4905 = vpop.permute.xlu0 %4904
      %4906 = vrot.lane.b32.xlu0 %v3360, 64
      %v4907 = vpop.permute.xlu0 %4906
      %4908 = vrot.lane.b32.xlu0 %v3361, 64
      %v4909 = vpop.permute.xlu0 %4908
      %4910 = vrot.lane.b32.xlu0 %v3362, 64
      %v4911 = vpop.permute.xlu0 %4910
      %4912 = vrot.lane.b32.xlu0 %v3363, 64
      %v4913 = vpop.permute.xlu0 %4912
      %4914 = vrot.lane.b32.xlu0 %v3364, 64
      %v4915 = vpop.permute.xlu0 %4914
      %4916 = vrot.lane.b32.xlu0 %v3365, 64
      %v4917 = vpop.permute.xlu0 %4916
      %4918 = vrot.lane.b32.xlu0 %v3366, 64
      %v4919 = vpop.permute.xlu0 %4918
      %4920 = vrot.lane.b32.xlu0 %v3367, 64
      %v4921 = vpop.permute.xlu0 %4920
      %4922 = vrot.lane.b32.xlu0 %v3368, 64
      %v4923 = vpop.permute.xlu0 %4922
      %4924 = vrot.lane.b32.xlu0 %v3369, 64
      %v4925 = vpop.permute.xlu0 %4924
      %4926 = vrot.lane.b32.xlu0 %v3370, 64
      %v4927 = vpop.permute.xlu0 %4926
      %4928 = vrot.lane.b32.xlu0 %v3371, 64
      %v4929 = vpop.permute.xlu0 %4928
      %4930 = vrot.lane.b32.xlu0 %v3372, 64
      %v4931 = vpop.permute.xlu0 %4930
      %4932 = vrot.lane.b32.xlu0 %v3373, 64
      %v4933 = vpop.permute.xlu0 %4932
      %5062 = vrot.lane.b32.xlu0 %v3506, 96
      %v5063 = vpop.permute.xlu0 %5062
      %5064 = vrot.lane.b32.xlu0 %v3507, 96
      %v5065 = vpop.permute.xlu0 %5064
      %5066 = vrot.lane.b32.xlu0 %v3508, 96
      %v5067 = vpop.permute.xlu0 %5066
      %5068 = vrot.lane.b32.xlu0 %v3509, 96
      %v5069 = vpop.permute.xlu0 %5068
      %5070 = vrot.lane.b32.xlu0 %v3510, 96
      %v5071 = vpop.permute.xlu0 %5070
      %5072 = vrot.lane.b32.xlu0 %v3511, 96
      %v5073 = vpop.permute.xlu0 %5072
      %5074 = vrot.lane.b32.xlu0 %v3512, 96
      %v5075 = vpop.permute.xlu0 %5074
      %5076 = vrot.lane.b32.xlu0 %v3513, 96
      %v5077 = vpop.permute.xlu0 %5076
      %5078 = vrot.lane.b32.xlu0 %v3514, 96
      %v5079 = vpop.permute.xlu0 %5078
      %5080 = vrot.lane.b32.xlu0 %v3515, 96
      %v5081 = vpop.permute.xlu0 %5080
      %5082 = vrot.lane.b32.xlu0 %v3516, 96
      %v5083 = vpop.permute.xlu0 %5082
      %5084 = vrot.lane.b32.xlu0 %v3517, 96
      %v5085 = vpop.permute.xlu0 %5084
      %5086 = vrot.lane.b32.xlu0 %v3518, 96
      %v5087 = vpop.permute.xlu0 %5086
      %5088 = vrot.lane.b32.xlu0 %v3519, 96
      %v5089 = vpop.permute.xlu0 %5088
      %5090 = vrot.lane.b32.xlu0 %v3520, 96
      %v5091 = vpop.permute.xlu0 %5090
      %5092 = vrot.lane.b32.xlu0 %v3521, 96
      %v5093 = vpop.permute.xlu0 %5092
      %5094 = vrot.lane.b32.xlu0 %v3522, 96
      %v5095 = vpop.permute.xlu0 %5094
      %5096 = vrot.lane.b32.xlu0 %v3523, 96
      %v5097 = vpop.permute.xlu0 %5096
      %5098 = vrot.lane.b32.xlu0 %v3524, 96
      %v5099 = vpop.permute.xlu0 %5098
      %5100 = vrot.lane.b32.xlu0 %v3525, 96
      %v5101 = vpop.permute.xlu0 %5100
      %5102 = vrot.lane.b32.xlu0 %v3526, 96
      %v5103 = vpop.permute.xlu0 %5102
      %5104 = vrot.lane.b32.xlu0 %v3527, 96
      %v5105 = vpop.permute.xlu0 %5104
      %5106 = vrot.lane.b32.xlu0 %v3528, 96
      %v5107 = vpop.permute.xlu0 %5106
      %5108 = vrot.lane.b32.xlu0 %v3529, 96
      %v5109 = vpop.permute.xlu0 %5108
      %5110 = vrot.lane.b32.xlu0 %v3530, 96
      %v5111 = vpop.permute.xlu0 %5110
      %5112 = vrot.lane.b32.xlu0 %v3531, 96
      %v5113 = vpop.permute.xlu0 %5112
      %5114 = vrot.lane.b32.xlu0 %v3532, 96
      %v5115 = vpop.permute.xlu0 %5114
      %5116 = vrot.lane.b32.xlu0 %v3533, 96
      %v5117 = vpop.permute.xlu0 %5116
      %5118 = vrot.lane.b32.xlu0 %v3534, 96
      %v5119 = vpop.permute.xlu0 %5118
      %5120 = vrot.lane.b32.xlu0 %v3535, 96
      %v5121 = vpop.permute.xlu0 %5120
      %5122 = vrot.lane.b32.xlu0 %v3536, 96
      %v5123 = vpop.permute.xlu0 %5122
      %5124 = vrot.lane.b32.xlu0 %v3537, 96
      %v5125 = vpop.permute.xlu0 %5124
      %5126 = vrot.lane.b32.xlu0 %v3538, 96
      %v5127 = vpop.permute.xlu0 %5126
      %5128 = vrot.lane.b32.xlu0 %v3539, 96
      %v5129 = vpop.permute.xlu0 %5128
      %5130 = vrot.lane.b32.xlu0 %v3540, 96
      %v5131 = vpop.permute.xlu0 %5130
      %5132 = vrot.lane.b32.xlu0 %v3541, 96
      %v5133 = vpop.permute.xlu0 %5132
      %5134 = vrot.lane.b32.xlu0 %v3542, 96
      %v5135 = vpop.permute.xlu0 %5134
      %5136 = vrot.lane.b32.xlu0 %v3543, 96
      %v5137 = vpop.permute.xlu0 %5136
      %5138 = vrot.lane.b32.xlu0 %v3544, 96
      %v5139 = vpop.permute.xlu0 %5138
      %5140 = vrot.lane.b32.xlu0 %v3545, 96
      %v5141 = vpop.permute.xlu0 %5140
      %5142 = vrot.lane.b32.xlu0 %v3546, 96
      %v5143 = vpop.permute.xlu0 %5142
      %5144 = vrot.lane.b32.xlu0 %v3547, 96
      %v5145 = vpop.permute.xlu0 %5144
      %5146 = vrot.lane.b32.xlu0 %v3548, 96
      %v5147 = vpop.permute.xlu0 %5146
      %5148 = vrot.lane.b32.xlu0 %v3549, 96
      %v5149 = vpop.permute.xlu0 %5148
      %5150 = vrot.lane.b32.xlu0 %v3550, 96
      %v5151 = vpop.permute.xlu0 %5150
      %5152 = vrot.lane.b32.xlu0 %v3551, 96
      %v5153 = vpop.permute.xlu0 %5152
      %5154 = vrot.lane.b32.xlu0 %v3552, 96
      %v5155 = vpop.permute.xlu0 %5154
      %5156 = vrot.lane.b32.xlu0 %v3553, 96
      %v5157 = vpop.permute.xlu0 %5156
      %5158 = vrot.lane.b32.xlu0 %v3554, 96
      %v5159 = vpop.permute.xlu0 %5158
      %5160 = vrot.lane.b32.xlu0 %v3555, 96
      %v5161 = vpop.permute.xlu0 %5160
      %5162 = vrot.lane.b32.xlu0 %v3556, 96
      %v5163 = vpop.permute.xlu0 %5162
      %5164 = vrot.lane.b32.xlu0 %v3557, 96
      %v5165 = vpop.permute.xlu0 %5164
      %5166 = vrot.lane.b32.xlu0 %v3558, 96
      %v5167 = vpop.permute.xlu0 %5166
      %5168 = vrot.lane.b32.xlu0 %v3559, 96
      %v5169 = vpop.permute.xlu0 %5168
      %5170 = vrot.lane.b32.xlu0 %v3560, 96
      %v5171 = vpop.permute.xlu0 %5170
      %5172 = vrot.lane.b32.xlu0 %v3561, 96
      %v5173 = vpop.permute.xlu0 %5172
      %5174 = vrot.lane.b32.xlu0 %v3562, 96
      %v5175 = vpop.permute.xlu0 %5174
      %5176 = vrot.lane.b32.xlu0 %v3563, 96
      %v5177 = vpop.permute.xlu0 %5176
      %5178 = vrot.lane.b32.xlu0 %v3564, 96
      %v5179 = vpop.permute.xlu0 %5178
      %5180 = vrot.lane.b32.xlu0 %v3565, 96
      %v5181 = vpop.permute.xlu0 %5180
      %5182 = vrot.lane.b32.xlu0 %v3566, 96
      %v5183 = vpop.permute.xlu0 %5182
      %5184 = vrot.lane.b32.xlu0 %v3567, 96
      %v5185 = vpop.permute.xlu0 %5184
      %5186 = vrot.lane.b32.xlu0 %v3568, 96
      %v5187 = vpop.permute.xlu0 %5186
      %5188 = vrot.lane.b32.xlu0 %v3569, 96
      %v5189 = vpop.permute.xlu0 %5188
      %5318 = vrot.lane.b32.xlu0 %v3706, 32
      %v5319 = vpop.permute.xlu0 %5318
      %5320 = vrot.lane.b32.xlu0 %v3707, 32
      %v5321 = vpop.permute.xlu0 %5320
      %5322 = vrot.lane.b32.xlu0 %v3708, 32
      %v5323 = vpop.permute.xlu0 %5322
      %5324 = vrot.lane.b32.xlu0 %v3709, 32
      %v5325 = vpop.permute.xlu0 %5324
      %5326 = vrot.lane.b32.xlu0 %v3710, 32
      %v5327 = vpop.permute.xlu0 %5326
      %5328 = vrot.lane.b32.xlu0 %v3711, 32
      %v5329 = vpop.permute.xlu0 %5328
      %5330 = vrot.lane.b32.xlu0 %v3712, 32
      %v5331 = vpop.permute.xlu0 %5330
      %5332 = vrot.lane.b32.xlu0 %v3713, 32
      %v5333 = vpop.permute.xlu0 %5332
      %5334 = vrot.lane.b32.xlu0 %v3714, 32
      %v5335 = vpop.permute.xlu0 %5334
      %5336 = vrot.lane.b32.xlu0 %v3715, 32
      %v5337 = vpop.permute.xlu0 %5336
      %5338 = vrot.lane.b32.xlu0 %v3716, 32
      %v5339 = vpop.permute.xlu0 %5338
      %5340 = vrot.lane.b32.xlu0 %v3717, 32
      %v5341 = vpop.permute.xlu0 %5340
      %5342 = vrot.lane.b32.xlu0 %v3718, 32
      %v5343 = vpop.permute.xlu0 %5342
      %5344 = vrot.lane.b32.xlu0 %v3719, 32
      %v5345 = vpop.permute.xlu0 %5344
      %5346 = vrot.lane.b32.xlu0 %v3720, 32
      %v5347 = vpop.permute.xlu0 %5346
      %5348 = vrot.lane.b32.xlu0 %v3721, 32
      %v5349 = vpop.permute.xlu0 %5348
      %5350 = vrot.lane.b32.xlu0 %v3722, 32
      %v5351 = vpop.permute.xlu0 %5350
      %5352 = vrot.lane.b32.xlu0 %v3723, 32
      %v5353 = vpop.permute.xlu0 %5352
      %5354 = vrot.lane.b32.xlu0 %v3724, 32
      %v5355 = vpop.permute.xlu0 %5354
      %5356 = vrot.lane.b32.xlu0 %v3725, 32
      %v5357 = vpop.permute.xlu0 %5356
      %5358 = vrot.lane.b32.xlu0 %v3726, 32
      %v5359 = vpop.permute.xlu0 %5358
      %5360 = vrot.lane.b32.xlu0 %v3727, 32
      %v5361 = vpop.permute.xlu0 %5360
      %5362 = vrot.lane.b32.xlu0 %v3728, 32
      %v5363 = vpop.permute.xlu0 %5362
      %5364 = vrot.lane.b32.xlu0 %v3729, 32
      %v5365 = vpop.permute.xlu0 %5364
      %5366 = vrot.lane.b32.xlu0 %v3730, 32
      %v5367 = vpop.permute.xlu0 %5366
      %5368 = vrot.lane.b32.xlu0 %v3731, 32
      %v5369 = vpop.permute.xlu0 %5368
      %5370 = vrot.lane.b32.xlu0 %v3732, 32
      %v5371 = vpop.permute.xlu0 %5370
      %5372 = vrot.lane.b32.xlu0 %v3733, 32
      %v5373 = vpop.permute.xlu0 %5372
      %5374 = vrot.lane.b32.xlu0 %v3734, 32
      %v5375 = vpop.permute.xlu0 %5374
      %5376 = vrot.lane.b32.xlu0 %v3735, 32
      %v5377 = vpop.permute.xlu0 %5376
      %5378 = vrot.lane.b32.xlu0 %v3736, 32
      %v5379 = vpop.permute.xlu0 %5378
      %5380 = vrot.lane.b32.xlu0 %v3737, 32
      %v5381 = vpop.permute.xlu0 %5380
      %5382 = vrot.lane.b32.xlu0 %v3738, 32
      %v5383 = vpop.permute.xlu0 %5382
      %5384 = vrot.lane.b32.xlu0 %v3739, 32
      %v5385 = vpop.permute.xlu0 %5384
      %5386 = vrot.lane.b32.xlu0 %v3740, 32
      %v5387 = vpop.permute.xlu0 %5386
      %5388 = vrot.lane.b32.xlu0 %v3741, 32
      %v5389 = vpop.permute.xlu0 %5388
      %5390 = vrot.lane.b32.xlu0 %v3742, 32
      %v5391 = vpop.permute.xlu0 %5390
      %5392 = vrot.lane.b32.xlu0 %v3743, 32
      %v5393 = vpop.permute.xlu0 %5392
      %5394 = vrot.lane.b32.xlu0 %v3744, 32
      %v5395 = vpop.permute.xlu0 %5394
      %5396 = vrot.lane.b32.xlu0 %v3745, 32
      %v5397 = vpop.permute.xlu0 %5396
      %5398 = vrot.lane.b32.xlu0 %v3746, 32
      %v5399 = vpop.permute.xlu0 %5398
      %5400 = vrot.lane.b32.xlu0 %v3747, 32
      %v5401 = vpop.permute.xlu0 %5400
      %5402 = vrot.lane.b32.xlu0 %v3748, 32
      %v5403 = vpop.permute.xlu0 %5402
      %5404 = vrot.lane.b32.xlu0 %v3749, 32
      %v5405 = vpop.permute.xlu0 %5404
      %5406 = vrot.lane.b32.xlu0 %v3750, 32
      %v5407 = vpop.permute.xlu0 %5406
      %5408 = vrot.lane.b32.xlu0 %v3751, 32
      %v5409 = vpop.permute.xlu0 %5408
      %5410 = vrot.lane.b32.xlu0 %v3752, 32
      %v5411 = vpop.permute.xlu0 %5410
      %5412 = vrot.lane.b32.xlu0 %v3753, 32
      %v5413 = vpop.permute.xlu0 %5412
      %5414 = vrot.lane.b32.xlu0 %v3754, 32
      %v5415 = vpop.permute.xlu0 %5414
      %5416 = vrot.lane.b32.xlu0 %v3755, 32
      %v5417 = vpop.permute.xlu0 %5416
      %5418 = vrot.lane.b32.xlu0 %v3756, 32
      %v5419 = vpop.permute.xlu0 %5418
      %5420 = vrot.lane.b32.xlu0 %v3757, 32
      %v5421 = vpop.permute.xlu0 %5420
      %5422 = vrot.lane.b32.xlu0 %v3758, 32
      %v5423 = vpop.permute.xlu0 %5422
      %5424 = vrot.lane.b32.xlu0 %v3759, 32
      %v5425 = vpop.permute.xlu0 %5424
      %5426 = vrot.lane.b32.xlu0 %v3760, 32
      %v5427 = vpop.permute.xlu0 %5426
      %5428 = vrot.lane.b32.xlu0 %v3761, 32
      %v5429 = vpop.permute.xlu0 %5428
      %5430 = vrot.lane.b32.xlu0 %v3762, 32
      %v5431 = vpop.permute.xlu0 %5430
      %5432 = vrot.lane.b32.xlu0 %v3763, 32
      %v5433 = vpop.permute.xlu0 %5432
      %5434 = vrot.lane.b32.xlu0 %v3764, 32
      %v5435 = vpop.permute.xlu0 %5434
      %5436 = vrot.lane.b32.xlu0 %v3765, 32
      %v5437 = vpop.permute.xlu0 %5436
      %5438 = vrot.lane.b32.xlu0 %v3766, 32
      %v5439 = vpop.permute.xlu0 %5438
      %5440 = vrot.lane.b32.xlu0 %v3767, 32
      %v5441 = vpop.permute.xlu0 %5440
      %5442 = vrot.lane.b32.xlu0 %v3768, 32
      %v5443 = vpop.permute.xlu0 %5442
      %5444 = vrot.lane.b32.xlu0 %v3769, 32
      %v5445 = vpop.permute.xlu0 %5444
      %5574 = vrot.lane.b32.xlu0 %v3966, 64
      %v5575 = vpop.permute.xlu0 %5574
      %5576 = vrot.lane.b32.xlu0 %v3967, 64
      %v5577 = vpop.permute.xlu0 %5576
      %5578 = vrot.lane.b32.xlu0 %v3968, 64
      %v5579 = vpop.permute.xlu0 %5578
      %5580 = vrot.lane.b32.xlu0 %v3969, 64
      %v5581 = vpop.permute.xlu0 %5580
      %5582 = vrot.lane.b32.xlu0 %v3970, 64
      %v5583 = vpop.permute.xlu0 %5582
      %5584 = vrot.lane.b32.xlu0 %v3971, 64
      %v5585 = vpop.permute.xlu0 %5584
      %5586 = vrot.lane.b32.xlu0 %v3972, 64
      %v5587 = vpop.permute.xlu0 %5586
      %5588 = vrot.lane.b32.xlu0 %v3973, 64
      %v5589 = vpop.permute.xlu0 %5588
      %5590 = vrot.lane.b32.xlu0 %v3974, 64
      %v5591 = vpop.permute.xlu0 %5590
      %5592 = vrot.lane.b32.xlu0 %v3975, 64
      %v5593 = vpop.permute.xlu0 %5592
      %5594 = vrot.lane.b32.xlu0 %v3976, 64
      %v5595 = vpop.permute.xlu0 %5594
      %5596 = vrot.lane.b32.xlu0 %v3977, 64
      %v5597 = vpop.permute.xlu0 %5596
      %5598 = vrot.lane.b32.xlu0 %v3978, 64
      %v5599 = vpop.permute.xlu0 %5598
      %5600 = vrot.lane.b32.xlu0 %v3979, 64
      %v5601 = vpop.permute.xlu0 %5600
      %5602 = vrot.lane.b32.xlu0 %v3980, 64
      %v5603 = vpop.permute.xlu0 %5602
      %5604 = vrot.lane.b32.xlu0 %v3981, 64
      %v5605 = vpop.permute.xlu0 %5604
      %5606 = vrot.lane.b32.xlu0 %v3982, 64
      %v5607 = vpop.permute.xlu0 %5606
      %5608 = vrot.lane.b32.xlu0 %v3983, 64
      %v5609 = vpop.permute.xlu0 %5608
      %5610 = vrot.lane.b32.xlu0 %v3984, 64
      %v5611 = vpop.permute.xlu0 %5610
      %5612 = vrot.lane.b32.xlu0 %v3985, 64
      %v5613 = vpop.permute.xlu0 %5612
      %5614 = vrot.lane.b32.xlu0 %v3986, 64
      %v5615 = vpop.permute.xlu0 %5614
      %5616 = vrot.lane.b32.xlu0 %v3987, 64
      %v5617 = vpop.permute.xlu0 %5616
      %5618 = vrot.lane.b32.xlu0 %v3988, 64
      %v5619 = vpop.permute.xlu0 %5618
      %5620 = vrot.lane.b32.xlu0 %v3989, 64
      %v5621 = vpop.permute.xlu0 %5620
      %5622 = vrot.lane.b32.xlu0 %v3990, 64
      %v5623 = vpop.permute.xlu0 %5622
      %5624 = vrot.lane.b32.xlu0 %v3991, 64
      %v5625 = vpop.permute.xlu0 %5624
      %5626 = vrot.lane.b32.xlu0 %v3992, 64
      %v5627 = vpop.permute.xlu0 %5626
      %5628 = vrot.lane.b32.xlu0 %v3993, 64
      %v5629 = vpop.permute.xlu0 %5628
      %5630 = vrot.lane.b32.xlu0 %v3994, 64
      %v5631 = vpop.permute.xlu0 %5630
      %5632 = vrot.lane.b32.xlu0 %v3995, 64
      %v5633 = vpop.permute.xlu0 %5632
      %5634 = vrot.lane.b32.xlu0 %v3996, 64
      %v5635 = vpop.permute.xlu0 %5634
      %5636 = vrot.lane.b32.xlu0 %v3997, 64
      %v5637 = vpop.permute.xlu0 %5636
      %5638 = vrot.lane.b32.xlu0 %v3998, 64
      %v5639 = vpop.permute.xlu0 %5638
      %5640 = vrot.lane.b32.xlu0 %v3999, 64
      %v5641 = vpop.permute.xlu0 %5640
      %5642 = vrot.lane.b32.xlu0 %v4000, 64
      %v5643 = vpop.permute.xlu0 %5642
      %5644 = vrot.lane.b32.xlu0 %v4001, 64
      %v5645 = vpop.permute.xlu0 %5644
      %5646 = vrot.lane.b32.xlu0 %v4002, 64
      %v5647 = vpop.permute.xlu0 %5646
      %5648 = vrot.lane.b32.xlu0 %v4003, 64
      %v5649 = vpop.permute.xlu0 %5648
      %5650 = vrot.lane.b32.xlu0 %v4004, 64
      %v5651 = vpop.permute.xlu0 %5650
      %5652 = vrot.lane.b32.xlu0 %v4005, 64
      %v5653 = vpop.permute.xlu0 %5652
      %5654 = vrot.lane.b32.xlu0 %v4006, 64
      %v5655 = vpop.permute.xlu0 %5654
      %5656 = vrot.lane.b32.xlu0 %v4007, 64
      %v5657 = vpop.permute.xlu0 %5656
      %5658 = vrot.lane.b32.xlu0 %v4008, 64
      %v5659 = vpop.permute.xlu0 %5658
      %5660 = vrot.lane.b32.xlu0 %v4009, 64
      %v5661 = vpop.permute.xlu0 %5660
      %5662 = vrot.lane.b32.xlu0 %v4010, 64
      %v5663 = vpop.permute.xlu0 %5662
      %5664 = vrot.lane.b32.xlu0 %v4011, 64
      %v5665 = vpop.permute.xlu0 %5664
      %5666 = vrot.lane.b32.xlu0 %v4012, 64
      %v5667 = vpop.permute.xlu0 %5666
      %5668 = vrot.lane.b32.xlu0 %v4013, 64
      %v5669 = vpop.permute.xlu0 %5668
      %5670 = vrot.lane.b32.xlu0 %v4014, 64
      %v5671 = vpop.permute.xlu0 %5670
      %5672 = vrot.lane.b32.xlu0 %v4015, 64
      %v5673 = vpop.permute.xlu0 %5672
      %5674 = vrot.lane.b32.xlu0 %v4016, 64
      %v5675 = vpop.permute.xlu0 %5674
      %5676 = vrot.lane.b32.xlu0 %v4017, 64
      %v5677 = vpop.permute.xlu0 %5676
      %5678 = vrot.lane.b32.xlu0 %v4018, 64
      %v5679 = vpop.permute.xlu0 %5678
      %5680 = vrot.lane.b32.xlu0 %v4019, 64
      %v5681 = vpop.permute.xlu0 %5680
      %5682 = vrot.lane.b32.xlu0 %v4020, 64
      %v5683 = vpop.permute.xlu0 %5682
      %5684 = vrot.lane.b32.xlu0 %v4021, 64
      %v5685 = vpop.permute.xlu0 %5684
      %5686 = vrot.lane.b32.xlu0 %v4022, 64
      %v5687 = vpop.permute.xlu0 %5686
      %5688 = vrot.lane.b32.xlu0 %v4023, 64
      %v5689 = vpop.permute.xlu0 %5688
      %5690 = vrot.lane.b32.xlu0 %v4024, 64
      %v5691 = vpop.permute.xlu0 %5690
      %5692 = vrot.lane.b32.xlu0 %v4025, 64
      %v5693 = vpop.permute.xlu0 %5692
      %5694 = vrot.lane.b32.xlu0 %v4026, 64
      %v5695 = vpop.permute.xlu0 %5694
      %5696 = vrot.lane.b32.xlu0 %v4027, 64
      %v5697 = vpop.permute.xlu0 %5696
      %5698 = vrot.lane.b32.xlu0 %v4028, 64
      %v5699 = vpop.permute.xlu0 %5698
      %5700 = vrot.lane.b32.xlu0 %v4029, 64
      %v5701 = vpop.permute.xlu0 %5700
      %5830 = vrot.lane.b32.xlu0 %v4162, 96
      %v5831 = vpop.permute.xlu0 %5830
      %5832 = vrot.lane.b32.xlu0 %v4163, 96
      %v5833 = vpop.permute.xlu0 %5832
      %5834 = vrot.lane.b32.xlu0 %v4164, 96
      %v5835 = vpop.permute.xlu0 %5834
      %5836 = vrot.lane.b32.xlu0 %v4165, 96
      %v5837 = vpop.permute.xlu0 %5836
      %5838 = vrot.lane.b32.xlu0 %v4166, 96
      %v5839 = vpop.permute.xlu0 %5838
      %5840 = vrot.lane.b32.xlu0 %v4167, 96
      %v5841 = vpop.permute.xlu0 %5840
      %5842 = vrot.lane.b32.xlu0 %v4168, 96
      %v5843 = vpop.permute.xlu0 %5842
      %5844 = vrot.lane.b32.xlu0 %v4169, 96
      %v5845 = vpop.permute.xlu0 %5844
      %5846 = vrot.lane.b32.xlu0 %v4170, 96
      %v5847 = vpop.permute.xlu0 %5846
      %5848 = vrot.lane.b32.xlu0 %v4171, 96
      %v5849 = vpop.permute.xlu0 %5848
      %5850 = vrot.lane.b32.xlu0 %v4172, 96
      %v5851 = vpop.permute.xlu0 %5850
      %5852 = vrot.lane.b32.xlu0 %v4173, 96
      %v5853 = vpop.permute.xlu0 %5852
      %5854 = vrot.lane.b32.xlu0 %v4174, 96
      %v5855 = vpop.permute.xlu0 %5854
      %5856 = vrot.lane.b32.xlu0 %v4175, 96
      %v5857 = vpop.permute.xlu0 %5856
      %5858 = vrot.lane.b32.xlu0 %v4176, 96
      %v5859 = vpop.permute.xlu0 %5858
      %5860 = vrot.lane.b32.xlu0 %v4177, 96
      %v5861 = vpop.permute.xlu0 %5860
      %5862 = vrot.lane.b32.xlu0 %v4178, 96
      %v5863 = vpop.permute.xlu0 %5862
      %5864 = vrot.lane.b32.xlu0 %v4179, 96
      %v5865 = vpop.permute.xlu0 %5864
      %5866 = vrot.lane.b32.xlu0 %v4180, 96
      %v5867 = vpop.permute.xlu0 %5866
      %5868 = vrot.lane.b32.xlu0 %v4181, 96
      %v5869 = vpop.permute.xlu0 %5868
      %5870 = vrot.lane.b32.xlu0 %v4182, 96
      %v5871 = vpop.permute.xlu0 %5870
      %5872 = vrot.lane.b32.xlu0 %v4183, 96
      %v5873 = vpop.permute.xlu0 %5872
      %5874 = vrot.lane.b32.xlu0 %v4184, 96
      %v5875 = vpop.permute.xlu0 %5874
      %5876 = vrot.lane.b32.xlu0 %v4185, 96
      %v5877 = vpop.permute.xlu0 %5876
      %5878 = vrot.lane.b32.xlu0 %v4186, 96
      %v5879 = vpop.permute.xlu0 %5878
      %5880 = vrot.lane.b32.xlu0 %v4187, 96
      %v5881 = vpop.permute.xlu0 %5880
      %5882 = vrot.lane.b32.xlu0 %v4188, 96
      %v5883 = vpop.permute.xlu0 %5882
      %5884 = vrot.lane.b32.xlu0 %v4189, 96
      %v5885 = vpop.permute.xlu0 %5884
      %5886 = vrot.lane.b32.xlu0 %v4190, 96
      %v5887 = vpop.permute.xlu0 %5886
      %5888 = vrot.lane.b32.xlu0 %v4191, 96
      %v5889 = vpop.permute.xlu0 %5888
      %5890 = vrot.lane.b32.xlu0 %v4192, 96
      %v5891 = vpop.permute.xlu0 %5890
      %5892 = vrot.lane.b32.xlu0 %v4193, 96
      %v5893 = vpop.permute.xlu0 %5892
      %5894 = vrot.lane.b32.xlu0 %v4194, 96
      %v5895 = vpop.permute.xlu0 %5894
      %5896 = vrot.lane.b32.xlu0 %v4195, 96
      %v5897 = vpop.permute.xlu0 %5896
      %5898 = vrot.lane.b32.xlu0 %v4196, 96
      %v5899 = vpop.permute.xlu0 %5898
      %5900 = vrot.lane.b32.xlu0 %v4197, 96
      %v5901 = vpop.permute.xlu0 %5900
      %5902 = vrot.lane.b32.xlu0 %v4198, 96
      %v5903 = vpop.permute.xlu0 %5902
      %5904 = vrot.lane.b32.xlu0 %v4199, 96
      %v5905 = vpop.permute.xlu0 %5904
      %5906 = vrot.lane.b32.xlu0 %v4200, 96
      %v5907 = vpop.permute.xlu0 %5906
      %5908 = vrot.lane.b32.xlu0 %v4201, 96
      %v5909 = vpop.permute.xlu0 %5908
      %5910 = vrot.lane.b32.xlu0 %v4202, 96
      %v5911 = vpop.permute.xlu0 %5910
      %5912 = vrot.lane.b32.xlu0 %v4203, 96
      %v5913 = vpop.permute.xlu0 %5912
      %5914 = vrot.lane.b32.xlu0 %v4204, 96
      %v5915 = vpop.permute.xlu0 %5914
      %5916 = vrot.lane.b32.xlu0 %v4205, 96
      %v5917 = vpop.permute.xlu0 %5916
      %5918 = vrot.lane.b32.xlu0 %v4206, 96
      %v5919 = vpop.permute.xlu0 %5918
      %5920 = vrot.lane.b32.xlu0 %v4207, 96
      %v5921 = vpop.permute.xlu0 %5920
      %5922 = vrot.lane.b32.xlu0 %v4208, 96
      %v5923 = vpop.permute.xlu0 %5922
      %5924 = vrot.lane.b32.xlu0 %v4209, 96
      %v5925 = vpop.permute.xlu0 %5924
      %5926 = vrot.lane.b32.xlu0 %v4210, 96
      %v5927 = vpop.permute.xlu0 %5926
      %5928 = vrot.lane.b32.xlu0 %v4211, 96
      %v5929 = vpop.permute.xlu0 %5928
      %5930 = vrot.lane.b32.xlu0 %v4212, 96
      %v5931 = vpop.permute.xlu0 %5930
      %5932 = vrot.lane.b32.xlu0 %v4213, 96
      %v5933 = vpop.permute.xlu0 %5932
      %5934 = vrot.lane.b32.xlu0 %v4214, 96
      %v5935 = vpop.permute.xlu0 %5934
      %5936 = vrot.lane.b32.xlu0 %v4215, 96
      %v5937 = vpop.permute.xlu0 %5936
      %5938 = vrot.lane.b32.xlu0 %v4216, 96
      %v5939 = vpop.permute.xlu0 %5938
      %5940 = vrot.lane.b32.xlu0 %v4217, 96
      %v5941 = vpop.permute.xlu0 %5940
      %5942 = vrot.lane.b32.xlu0 %v4218, 96
      %v5943 = vpop.permute.xlu0 %5942
      %5944 = vrot.lane.b32.xlu0 %v4219, 96
      %v5945 = vpop.permute.xlu0 %5944
      %5946 = vrot.lane.b32.xlu0 %v4220, 96
      %v5947 = vpop.permute.xlu0 %5946
      %5948 = vrot.lane.b32.xlu0 %v4221, 96
      %v5949 = vpop.permute.xlu0 %5948
      %5950 = vrot.lane.b32.xlu0 %v4222, 96
      %v5951 = vpop.permute.xlu0 %5950
      %5952 = vrot.lane.b32.xlu0 %v4223, 96
      %v5953 = vpop.permute.xlu0 %5952
      %5954 = vrot.lane.b32.xlu0 %v4224, 96
      %v5955 = vpop.permute.xlu0 %5954
      %5956 = vrot.lane.b32.xlu0 %v4225, 96
      %v5957 = vpop.permute.xlu0 %5956
      %v6022 = vsel %vm839, %v2734, %v4551
      %v6023 = vsel %vm839, %v2735, %v4553
      %v6024 = vsel %vm839, %v2736, %v4555
      %v6025 = vsel %vm839, %v2737, %v4557
      %v6026 = vsel %vm839, %v2738, %v4559
      %v6027 = vsel %vm839, %v2739, %v4561
      %v6028 = vsel %vm839, %v2740, %v4563
      %v6029 = vsel %vm839, %v2741, %v4565
      %v6030 = vsel %vm839, %v2742, %v4567
      %v6031 = vsel %vm839, %v2743, %v4569
      %v6032 = vsel %vm839, %v2744, %v4571
      %v6033 = vsel %vm839, %v2745, %v4573
      %v6034 = vsel %vm839, %v2746, %v4575
      %v6035 = vsel %vm839, %v2747, %v4577
      %v6036 = vsel %vm839, %v2748, %v4579
      %v6037 = vsel %vm839, %v2749, %v4581
      %v6038 = vsel %vm839, %v2750, %v4583
      %v6039 = vsel %vm839, %v2751, %v4585
      %v6040 = vsel %vm839, %v2752, %v4587
      %v6041 = vsel %vm839, %v2753, %v4589
      %v6042 = vsel %vm839, %v2754, %v4591
      %v6043 = vsel %vm839, %v2755, %v4593
      %v6044 = vsel %vm839, %v2756, %v4595
      %v6045 = vsel %vm839, %v2757, %v4597
      %v6046 = vsel %vm839, %v2758, %v4599
      %v6047 = vsel %vm839, %v2759, %v4601
      %v6048 = vsel %vm839, %v2760, %v4603
      %v6049 = vsel %vm839, %v2761, %v4605
      %v6050 = vsel %vm839, %v2762, %v4607
      %v6051 = vsel %vm839, %v2763, %v4609
      %v6052 = vsel %vm839, %v2764, %v4611
      %v6053 = vsel %vm839, %v2765, %v4613
      %v6054 = vsel %vm839, %v2766, %v4615
      %v6055 = vsel %vm839, %v2767, %v4617
      %v6056 = vsel %vm839, %v2768, %v4619
      %v6057 = vsel %vm839, %v2769, %v4621
      %v6058 = vsel %vm839, %v2770, %v4623
      %v6059 = vsel %vm839, %v2771, %v4625
      %v6060 = vsel %vm839, %v2772, %v4627
      %v6061 = vsel %vm839, %v2773, %v4629
      %v6062 = vsel %vm839, %v2774, %v4631
      %v6063 = vsel %vm839, %v2775, %v4633
      %v6064 = vsel %vm839, %v2776, %v4635
      %v6065 = vsel %vm839, %v2777, %v4637
      %v6066 = vsel %vm839, %v2778, %v4639
      %v6067 = vsel %vm839, %v2779, %v4641
      %v6068 = vsel %vm839, %v2780, %v4643
      %v6069 = vsel %vm839, %v2781, %v4645
      %v6070 = vsel %vm839, %v2782, %v4647
      %v6071 = vsel %vm839, %v2783, %v4649
      %v6072 = vsel %vm839, %v2784, %v4651
      %v6073 = vsel %vm839, %v2785, %v4653
      %v6074 = vsel %vm839, %v2786, %v4655
      %v6075 = vsel %vm839, %v2787, %v4657
      %v6076 = vsel %vm839, %v2788, %v4659
      %v6077 = vsel %vm839, %v2789, %v4661
      %v6078 = vsel %vm839, %v2790, %v4663
      %v6079 = vsel %vm839, %v2791, %v4665
      %v6080 = vsel %vm839, %v2792, %v4667
      %v6081 = vsel %vm839, %v2793, %v4669
      %v6082 = vsel %vm839, %v2794, %v4671
      %v6083 = vsel %vm839, %v2795, %v4673
      %v6084 = vsel %vm839, %v2796, %v4675
      %v6085 = vsel %vm839, %v2797, %v4677
      %vm6086 = vcmask 523264
      %v6087 = vsel %vm6086, %v6022, %v4807
      %v6088 = vsel %vm6086, %v6023, %v4809
      %v6089 = vsel %vm6086, %v6024, %v4811
      %v6090 = vsel %vm6086, %v6025, %v4813
      %v6091 = vsel %vm6086, %v6026, %v4815
      %v6092 = vsel %vm6086, %v6027, %v4817
      %v6093 = vsel %vm6086, %v6028, %v4819
      %v6094 = vsel %vm6086, %v6029, %v4821
      %v6095 = vsel %vm6086, %v6030, %v4823
      %v6096 = vsel %vm6086, %v6031, %v4825
      %v6097 = vsel %vm6086, %v6032, %v4827
      %v6098 = vsel %vm6086, %v6033, %v4829
      %v6099 = vsel %vm6086, %v6034, %v4831
      %v6100 = vsel %vm6086, %v6035, %v4833
      %v6101 = vsel %vm6086, %v6036, %v4835
      %v6102 = vsel %vm6086, %v6037, %v4837
      %v6103 = vsel %vm6086, %v6038, %v4839
      %v6104 = vsel %vm6086, %v6039, %v4841
      %v6105 = vsel %vm6086, %v6040, %v4843
      %v6106 = vsel %vm6086, %v6041, %v4845
      %v6107 = vsel %vm6086, %v6042, %v4847
      %v6108 = vsel %vm6086, %v6043, %v4849
      %v6109 = vsel %vm6086, %v6044, %v4851
      %v6110 = vsel %vm6086, %v6045, %v4853
      %v6111 = vsel %vm6086, %v6046, %v4855
      %v6112 = vsel %vm6086, %v6047, %v4857
      %v6113 = vsel %vm6086, %v6048, %v4859
      %v6114 = vsel %vm6086, %v6049, %v4861
      %v6115 = vsel %vm6086, %v6050, %v4863
      %v6116 = vsel %vm6086, %v6051, %v4865
      %v6117 = vsel %vm6086, %v6052, %v4867
      %v6118 = vsel %vm6086, %v6053, %v4869
      %v6119 = vsel %vm6086, %v6054, %v4871
      %v6120 = vsel %vm6086, %v6055, %v4873
      %v6121 = vsel %vm6086, %v6056, %v4875
      %v6122 = vsel %vm6086, %v6057, %v4877
      %v6123 = vsel %vm6086, %v6058, %v4879
      %v6124 = vsel %vm6086, %v6059, %v4881
      %v6125 = vsel %vm6086, %v6060, %v4883
      %v6126 = vsel %vm6086, %v6061, %v4885
      %v6127 = vsel %vm6086, %v6062, %v4887
      %v6128 = vsel %vm6086, %v6063, %v4889
      %v6129 = vsel %vm6086, %v6064, %v4891
      %v6130 = vsel %vm6086, %v6065, %v4893
      %v6131 = vsel %vm6086, %v6066, %v4895
      %v6132 = vsel %vm6086, %v6067, %v4897
      %v6133 = vsel %vm6086, %v6068, %v4899
      %v6134 = vsel %vm6086, %v6069, %v4901
      %v6135 = vsel %vm6086, %v6070, %v4903
      %v6136 = vsel %vm6086, %v6071, %v4905
      %v6137 = vsel %vm6086, %v6072, %v4907
      %v6138 = vsel %vm6086, %v6073, %v4909
      %v6139 = vsel %vm6086, %v6074, %v4911
      %v6140 = vsel %vm6086, %v6075, %v4913
      %v6141 = vsel %vm6086, %v6076, %v4915
      %v6142 = vsel %vm6086, %v6077, %v4917
      %v6143 = vsel %vm6086, %v6078, %v4919
      %v6144 = vsel %vm6086, %v6079, %v4921
      %v6145 = vsel %vm6086, %v6080, %v4923
      %v6146 = vsel %vm6086, %v6081, %v4925
      %v6147 = vsel %vm6086, %v6082, %v4927
      %v6148 = vsel %vm6086, %v6083, %v4929
      %v6149 = vsel %vm6086, %v6084, %v4931
      %v6150 = vsel %vm6086, %v6085, %v4933
      %vm6151 = vcmask 785408
      %v6152 = vsel %vm6151, %v6087, %v5063
      %v6153 = vsel %vm6151, %v6088, %v5065
      %v6154 = vsel %vm6151, %v6089, %v5067
      %v6155 = vsel %vm6151, %v6090, %v5069
      %v6156 = vsel %vm6151, %v6091, %v5071
      %v6157 = vsel %vm6151, %v6092, %v5073
      %v6158 = vsel %vm6151, %v6093, %v5075
      %v6159 = vsel %vm6151, %v6094, %v5077
      %v6160 = vsel %vm6151, %v6095, %v5079
      %v6161 = vsel %vm6151, %v6096, %v5081
      %v6162 = vsel %vm6151, %v6097, %v5083
      %v6163 = vsel %vm6151, %v6098, %v5085
      %v6164 = vsel %vm6151, %v6099, %v5087
      %v6165 = vsel %vm6151, %v6100, %v5089
      %v6166 = vsel %vm6151, %v6101, %v5091
      %v6167 = vsel %vm6151, %v6102, %v5093
      %v6168 = vsel %vm6151, %v6103, %v5095
      %v6169 = vsel %vm6151, %v6104, %v5097
      %v6170 = vsel %vm6151, %v6105, %v5099
      %v6171 = vsel %vm6151, %v6106, %v5101
      %v6172 = vsel %vm6151, %v6107, %v5103
      %v6173 = vsel %vm6151, %v6108, %v5105
      %v6174 = vsel %vm6151, %v6109, %v5107
      %v6175 = vsel %vm6151, %v6110, %v5109
      %v6176 = vsel %vm6151, %v6111, %v5111
      %v6177 = vsel %vm6151, %v6112, %v5113
      %v6178 = vsel %vm6151, %v6113, %v5115
      %v6179 = vsel %vm6151, %v6114, %v5117
      %v6180 = vsel %vm6151, %v6115, %v5119
      %v6181 = vsel %vm6151, %v6116, %v5121
      %v6182 = vsel %vm6151, %v6117, %v5123
      %v6183 = vsel %vm6151, %v6118, %v5125
      %v6184 = vsel %vm6151, %v6119, %v5127
      %v6185 = vsel %vm6151, %v6120, %v5129
      %v6186 = vsel %vm6151, %v6121, %v5131
      %v6187 = vsel %vm6151, %v6122, %v5133
      %v6188 = vsel %vm6151, %v6123, %v5135
      %v6189 = vsel %vm6151, %v6124, %v5137
      %v6190 = vsel %vm6151, %v6125, %v5139
      %v6191 = vsel %vm6151, %v6126, %v5141
      %v6192 = vsel %vm6151, %v6127, %v5143
      %v6193 = vsel %vm6151, %v6128, %v5145
      %v6194 = vsel %vm6151, %v6129, %v5147
      %v6195 = vsel %vm6151, %v6130, %v5149
      %v6196 = vsel %vm6151, %v6131, %v5151
      %v6197 = vsel %vm6151, %v6132, %v5153
      %v6198 = vsel %vm6151, %v6133, %v5155
      %v6199 = vsel %vm6151, %v6134, %v5157
      %v6200 = vsel %vm6151, %v6135, %v5159
      %v6201 = vsel %vm6151, %v6136, %v5161
      %v6202 = vsel %vm6151, %v6137, %v5163
      %v6203 = vsel %vm6151, %v6138, %v5165
      %v6204 = vsel %vm6151, %v6139, %v5167
      %v6205 = vsel %vm6151, %v6140, %v5169
      %v6206 = vsel %vm6151, %v6141, %v5171
      %v6207 = vsel %vm6151, %v6142, %v5173
      %v6208 = vsel %vm6151, %v6143, %v5175
      %v6209 = vsel %vm6151, %v6144, %v5177
      %v6210 = vsel %vm6151, %v6145, %v5179
      %v6211 = vsel %vm6151, %v6146, %v5181
      %v6212 = vsel %vm6151, %v6147, %v5183
      %v6213 = vsel %vm6151, %v6148, %v5185
      %v6214 = vsel %vm6151, %v6149, %v5187
      %v6215 = vsel %vm6151, %v6150, %v5189
      %v6216 = vsel %vm839, %v2800, %v5319
      %v6217 = vsel %vm839, %v2801, %v5321
      %v6218 = vsel %vm839, %v2802, %v5323
      %v6219 = vsel %vm839, %v2803, %v5325
      %v6220 = vsel %vm839, %v2804, %v5327
      %v6221 = vsel %vm839, %v2805, %v5329
      %v6222 = vsel %vm839, %v2806, %v5331
      %v6223 = vsel %vm839, %v2807, %v5333
      %v6224 = vsel %vm839, %v2808, %v5335
      %v6225 = vsel %vm839, %v2809, %v5337
      %v6226 = vsel %vm839, %v2810, %v5339
      %v6227 = vsel %vm839, %v2811, %v5341
      %v6228 = vsel %vm839, %v2812, %v5343
      %v6229 = vsel %vm839, %v2813, %v5345
      %v6230 = vsel %vm839, %v2814, %v5347
      %v6231 = vsel %vm839, %v2815, %v5349
      %v6232 = vsel %vm839, %v2816, %v5351
      %v6233 = vsel %vm839, %v2817, %v5353
      %v6234 = vsel %vm839, %v2818, %v5355
      %v6235 = vsel %vm839, %v2819, %v5357
      %v6236 = vsel %vm839, %v2820, %v5359
      %v6237 = vsel %vm839, %v2821, %v5361
      %v6238 = vsel %vm839, %v2822, %v5363
      %v6239 = vsel %vm839, %v2823, %v5365
      %v6240 = vsel %vm839, %v2824, %v5367
      %v6241 = vsel %vm839, %v2825, %v5369
      %v6242 = vsel %vm839, %v2826, %v5371
      %v6243 = vsel %vm839, %v2827, %v5373
      %v6244 = vsel %vm839, %v2828, %v5375
      %v6245 = vsel %vm839, %v2829, %v5377
      %v6246 = vsel %vm839, %v3570, %v5379
      %v6247 = vsel %vm839, %v3571, %v5381
      %v6248 = vsel %vm839, %v2832, %v5383
      %v6249 = vsel %vm839, %v2833, %v5385
      %v6250 = vsel %vm839, %v2834, %v5387
      %v6251 = vsel %vm839, %v2835, %v5389
      %v6252 = vsel %vm839, %v2836, %v5391
      %v6253 = vsel %vm839, %v2837, %v5393
      %v6254 = vsel %vm839, %v2838, %v5395
      %v6255 = vsel %vm839, %v2839, %v5397
      %v6256 = vsel %vm839, %v2840, %v5399
      %v6257 = vsel %vm839, %v2841, %v5401
      %v6258 = vsel %vm839, %v2842, %v5403
      %v6259 = vsel %vm839, %v2843, %v5405
      %v6260 = vsel %vm839, %v2844, %v5407
      %v6261 = vsel %vm839, %v2845, %v5409
      %v6262 = vsel %vm839, %v2846, %v5411
      %v6263 = vsel %vm839, %v2847, %v5413
      %v6264 = vsel %vm839, %v2848, %v5415
      %v6265 = vsel %vm839, %v2849, %v5417
      %v6266 = vsel %vm839, %v2850, %v5419
      %v6267 = vsel %vm839, %v2851, %v5421
      %v6268 = vsel %vm839, %v2852, %v5423
      %v6269 = vsel %vm839, %v2853, %v5425
      %v6270 = vsel %vm839, %v2854, %v5427
      %v6271 = vsel %vm839, %v2855, %v5429
      %v6272 = vsel %vm839, %v2856, %v5431
      %v6273 = vsel %vm839, %v2857, %v5433
      %v6274 = vsel %vm839, %v2858, %v5435
      %v6275 = vsel %vm839, %v2859, %v5437
      %v6276 = vsel %vm839, %v2860, %v5439
      %v6277 = vsel %vm839, %v2861, %v5441
      %v6278 = vsel %vm839, %v3572, %v5443
      %v6279 = vsel %vm839, %v3573, %v5445
      %v6280 = vsel %vm6086, %v6216, %v5575
      %v6281 = vsel %vm6086, %v6217, %v5577
      %v6282 = vsel %vm6086, %v6218, %v5579
      %v6283 = vsel %vm6086, %v6219, %v5581
      %v6284 = vsel %vm6086, %v6220, %v5583
      %v6285 = vsel %vm6086, %v6221, %v5585
      %v6286 = vsel %vm6086, %v6222, %v5587
      %v6287 = vsel %vm6086, %v6223, %v5589
      %v6288 = vsel %vm6086, %v6224, %v5591
      %v6289 = vsel %vm6086, %v6225, %v5593
      %v6290 = vsel %vm6086, %v6226, %v5595
      %v6291 = vsel %vm6086, %v6227, %v5597
      %v6292 = vsel %vm6086, %v6228, %v5599
      %v6293 = vsel %vm6086, %v6229, %v5601
      %v6294 = vsel %vm6086, %v6230, %v5603
      %v6295 = vsel %vm6086, %v6231, %v5605
      %v6296 = vsel %vm6086, %v6232, %v5607
      %v6297 = vsel %vm6086, %v6233, %v5609
      %v6298 = vsel %vm6086, %v6234, %v5611
      %v6299 = vsel %vm6086, %v6235, %v5613
      %v6300 = vsel %vm6086, %v6236, %v5615
      %v6301 = vsel %vm6086, %v6237, %v5617
      %v6302 = vsel %vm6086, %v6238, %v5619
      %v6303 = vsel %vm6086, %v6239, %v5621
      %v6304 = vsel %vm6086, %v6240, %v5623
      %v6305 = vsel %vm6086, %v6241, %v5625
      %v6306 = vsel %vm6086, %v6242, %v5627
      %v6307 = vsel %vm6086, %v6243, %v5629
      %v6308 = vsel %vm6086, %v6244, %v5631
      %v6309 = vsel %vm6086, %v6245, %v5633
      %v6310 = vsel %vm6086, %v6246, %v5635
      %v6311 = vsel %vm6086, %v6247, %v5637
      %v6312 = vsel %vm6086, %v6248, %v5639
      %v6313 = vsel %vm6086, %v6249, %v5641
      %v6314 = vsel %vm6086, %v6250, %v5643
      %v6315 = vsel %vm6086, %v6251, %v5645
      %v6316 = vsel %vm6086, %v6252, %v5647
      %v6317 = vsel %vm6086, %v6253, %v5649
      %v6318 = vsel %vm6086, %v6254, %v5651
      %v6319 = vsel %vm6086, %v6255, %v5653
      %v6320 = vsel %vm6086, %v6256, %v5655
      %v6321 = vsel %vm6086, %v6257, %v5657
      %v6322 = vsel %vm6086, %v6258, %v5659
      %v6323 = vsel %vm6086, %v6259, %v5661
      %v6324 = vsel %vm6086, %v6260, %v5663
      %v6325 = vsel %vm6086, %v6261, %v5665
      %v6326 = vsel %vm6086, %v6262, %v5667
      %v6327 = vsel %vm6086, %v6263, %v5669
      %v6328 = vsel %vm6086, %v6264, %v5671
      %v6329 = vsel %vm6086, %v6265, %v5673
      %v6330 = vsel %vm6086, %v6266, %v5675
      %v6331 = vsel %vm6086, %v6267, %v5677
      %v6332 = vsel %vm6086, %v6268, %v5679
      %v6333 = vsel %vm6086, %v6269, %v5681
      %v6334 = vsel %vm6086, %v6270, %v5683
      %v6335 = vsel %vm6086, %v6271, %v5685
      %v6336 = vsel %vm6086, %v6272, %v5687
      %v6337 = vsel %vm6086, %v6273, %v5689
      %v6338 = vsel %vm6086, %v6274, %v5691
      %v6339 = vsel %vm6086, %v6275, %v5693
      %v6340 = vsel %vm6086, %v6276, %v5695
      %v6341 = vsel %vm6086, %v6277, %v5697
      %v6342 = vsel %vm6086, %v6278, %v5699
      %v6343 = vsel %vm6086, %v6279, %v5701
      %v6344 = vsel %vm6151, %v6280, %v5831
      %v6345 = vsel %vm6151, %v6281, %v5833
      %v6346 = vsel %vm6151, %v6282, %v5835
      %v6347 = vsel %vm6151, %v6283, %v5837
      %v6348 = vsel %vm6151, %v6284, %v5839
      %v6349 = vsel %vm6151, %v6285, %v5841
      %v6350 = vsel %vm6151, %v6286, %v5843
      %v6351 = vsel %vm6151, %v6287, %v5845
      %v6352 = vsel %vm6151, %v6288, %v5847
      %v6353 = vsel %vm6151, %v6289, %v5849
      %v6354 = vsel %vm6151, %v6290, %v5851
      %v6355 = vsel %vm6151, %v6291, %v5853
      %v6356 = vsel %vm6151, %v6292, %v5855
      %v6357 = vsel %vm6151, %v6293, %v5857
      %v6358 = vsel %vm6151, %v6294, %v5859
      %v6359 = vsel %vm6151, %v6295, %v5861
      %v6360 = vsel %vm6151, %v6296, %v5863
      %v6361 = vsel %vm6151, %v6297, %v5865
      %v6362 = vsel %vm6151, %v6298, %v5867
      %v6363 = vsel %vm6151, %v6299, %v5869
      %v6364 = vsel %vm6151, %v6300, %v5871
      %v6365 = vsel %vm6151, %v6301, %v5873
      %v6366 = vsel %vm6151, %v6302, %v5875
      %v6367 = vsel %vm6151, %v6303, %v5877
      %v6368 = vsel %vm6151, %v6304, %v5879
      %v6369 = vsel %vm6151, %v6305, %v5881
      %v6370 = vsel %vm6151, %v6306, %v5883
      %v6371 = vsel %vm6151, %v6307, %v5885
      %v6372 = vsel %vm6151, %v6308, %v5887
      %v6373 = vsel %vm6151, %v6309, %v5889
      %v6374 = vsel %vm6151, %v6310, %v5891
      %v6375 = vsel %vm6151, %v6311, %v5893
      %v6376 = vsel %vm6151, %v6312, %v5895
      %v6377 = vsel %vm6151, %v6313, %v5897
      %v6378 = vsel %vm6151, %v6314, %v5899
      %v6379 = vsel %vm6151, %v6315, %v5901
      %v6380 = vsel %vm6151, %v6316, %v5903
      %v6381 = vsel %vm6151, %v6317, %v5905
      %v6382 = vsel %vm6151, %v6318, %v5907
      %v6383 = vsel %vm6151, %v6319, %v5909
      %v6384 = vsel %vm6151, %v6320, %v5911
      %v6385 = vsel %vm6151, %v6321, %v5913
      %v6386 = vsel %vm6151, %v6322, %v5915
      %v6387 = vsel %vm6151, %v6323, %v5917
      %v6388 = vsel %vm6151, %v6324, %v5919
      %v6389 = vsel %vm6151, %v6325, %v5921
      %v6390 = vsel %vm6151, %v6326, %v5923
      %v6391 = vsel %vm6151, %v6327, %v5925
      %v6392 = vsel %vm6151, %v6328, %v5927
      %v6393 = vsel %vm6151, %v6329, %v5929
      %v6394 = vsel %vm6151, %v6330, %v5931
      %v6395 = vsel %vm6151, %v6331, %v5933
      %v6396 = vsel %vm6151, %v6332, %v5935
      %v6397 = vsel %vm6151, %v6333, %v5937
      %v6398 = vsel %vm6151, %v6334, %v5939
      %v6399 = vsel %vm6151, %v6335, %v5941
      %v6400 = vsel %vm6151, %v6336, %v5943
      %v6401 = vsel %vm6151, %v6337, %v5945
      %v6402 = vsel %vm6151, %v6338, %v5947
      %v6403 = vsel %vm6151, %v6339, %v5949
      %v6404 = vsel %vm6151, %v6340, %v5951
      %v6405 = vsel %vm6151, %v6341, %v5953
      %v6406 = vsel %vm6151, %v6342, %v5955
      %v6407 = vsel %vm6151, %v6343, %v5957
      %v6408 = vpack.c.bf16 %v6153, %v6152
      %v6409 = vpack.c.bf16 %v6345, %v6344
      %v6410 = vpack.c.bf16 %v4423, %v4422
      %v6411 = vpack.c.bf16 %v6155, %v6154
      %v6412 = vpack.c.bf16 %v6347, %v6346
      %v6413 = vpack.c.bf16 %v4425, %v4424
      %v6414 = vpack.c.bf16 %v6157, %v6156
      %v6415 = vpack.c.bf16 %v6349, %v6348
      %v6416 = vpack.c.bf16 %v4427, %v4426
      %v6417 = vpack.c.bf16 %v6159, %v6158
      %v6418 = vpack.c.bf16 %v6351, %v6350
      %v6419 = vpack.c.bf16 %v4429, %v4428
      %v6420 = vpack.c.bf16 %v6161, %v6160
      %v6421 = vpack.c.bf16 %v6353, %v6352
      %v6422 = vpack.c.bf16 %v4431, %v4430
      %v6423 = vpack.c.bf16 %v6163, %v6162
      %v6424 = vpack.c.bf16 %v6355, %v6354
      %v6425 = vpack.c.bf16 %v4433, %v4432
      %v6426 = vpack.c.bf16 %v6165, %v6164
      %v6427 = vpack.c.bf16 %v6357, %v6356
      %v6428 = vpack.c.bf16 %v4435, %v4434
      %v6429 = vpack.c.bf16 %v6167, %v6166
      %v6430 = vpack.c.bf16 %v6359, %v6358
      %v6431 = vpack.c.bf16 %v4437, %v4436
      %v6432 = vpack.c.bf16 %v6169, %v6168
      %v6433 = vpack.c.bf16 %v6361, %v6360
      %v6434 = vpack.c.bf16 %v4439, %v4438
      %v6435 = vpack.c.bf16 %v6171, %v6170
      %v6436 = vpack.c.bf16 %v6363, %v6362
      %v6437 = vpack.c.bf16 %v4441, %v4440
      %v6438 = vpack.c.bf16 %v6173, %v6172
      %v6439 = vpack.c.bf16 %v6365, %v6364
      %v6440 = vpack.c.bf16 %v4443, %v4442
      %v6441 = vpack.c.bf16 %v6175, %v6174
      %v6442 = vpack.c.bf16 %v6367, %v6366
      %v6443 = vpack.c.bf16 %v4445, %v4444
      %v6444 = vpack.c.bf16 %v6177, %v6176
      %v6445 = vpack.c.bf16 %v6369, %v6368
      %v6446 = vpack.c.bf16 %v4447, %v4446
      %v6447 = vpack.c.bf16 %v6179, %v6178
      %v6448 = vpack.c.bf16 %v6371, %v6370
      %v6449 = vpack.c.bf16 %v4449, %v4448
      %v6450 = vpack.c.bf16 %v6181, %v6180
      %v6451 = vpack.c.bf16 %v6373, %v6372
      %v6452 = vpack.c.bf16 %v4451, %v4450
      %v6453 = vpack.c.bf16 %v6183, %v6182
      %v6454 = vpack.c.bf16 %v6375, %v6374
      %v6455 = vpack.c.bf16 %v4453, %v4452
      %v6456 = vpack.c.bf16 %v6185, %v6184
      %v6457 = vpack.c.bf16 %v6377, %v6376
      %v6458 = vpack.c.bf16 %v4455, %v4454
      %v6459 = vpack.c.bf16 %v6187, %v6186
      %v6460 = vpack.c.bf16 %v6379, %v6378
      %v6461 = vpack.c.bf16 %v4457, %v4456
      %v6462 = vpack.c.bf16 %v6189, %v6188
      %v6463 = vpack.c.bf16 %v6381, %v6380
      %v6464 = vpack.c.bf16 %v4459, %v4458
      %v6465 = vpack.c.bf16 %v6191, %v6190
      %v6466 = vpack.c.bf16 %v6383, %v6382
      %v6467 = vpack.c.bf16 %v4461, %v4460
      %v6468 = vpack.c.bf16 %v6193, %v6192
      %v6469 = vpack.c.bf16 %v6385, %v6384
      %v6470 = vpack.c.bf16 %v4463, %v4462
      %v6471 = vpack.c.bf16 %v6195, %v6194
      %v6472 = vpack.c.bf16 %v6387, %v6386
      %v6473 = vpack.c.bf16 %v4465, %v4464
      %v6474 = vpack.c.bf16 %v6197, %v6196
      %v6475 = vpack.c.bf16 %v6389, %v6388
      %v6476 = vpack.c.bf16 %v4467, %v4466
      %v6477 = vpack.c.bf16 %v6199, %v6198
      %v6478 = vpack.c.bf16 %v6391, %v6390
      %v6479 = vpack.c.bf16 %v4469, %v4468
      %v6480 = vpack.c.bf16 %v6201, %v6200
      %v6481 = vpack.c.bf16 %v6393, %v6392
      %v6482 = vpack.c.bf16 %v4471, %v4470
      %v6483 = vpack.c.bf16 %v6203, %v6202
      %v6484 = vpack.c.bf16 %v6395, %v6394
      %v6485 = vpack.c.bf16 %v4473, %v4472
      %v6486 = vpack.c.bf16 %v6205, %v6204
      %v6487 = vpack.c.bf16 %v6397, %v6396
      %v6488 = vpack.c.bf16 %v4475, %v4474
      %v6489 = vpack.c.bf16 %v6207, %v6206
      %v6490 = vpack.c.bf16 %v6399, %v6398
      %v6491 = vpack.c.bf16 %v4477, %v4476
      %v6492 = vpack.c.bf16 %v6209, %v6208
      %v6493 = vpack.c.bf16 %v6401, %v6400
      %v6494 = vpack.c.bf16 %v4479, %v4478
      %v6495 = vpack.c.bf16 %v6211, %v6210
      %v6496 = vpack.c.bf16 %v6403, %v6402
      %v6497 = vpack.c.bf16 %v4481, %v4480
      %v6498 = vpack.c.bf16 %v6213, %v6212
      %v6499 = vpack.c.bf16 %v6405, %v6404
      %v6500 = vpack.c.bf16 %v4483, %v4482
      %v6501 = vpack.c.bf16 %v6215, %v6214
      %v6502 = vpack.c.bf16 %v6407, %v6406
      %v6503 = vpack.c.bf16 %v4485, %v4484
      %v6504 = vld [vmem:[%s6] sm:$0xf]
      %v6505 = vld [vmem:[%s6 + $0x4] sm:$0xf]
      %v6506 = vld [vmem:[%s6 + $0x8] sm:$0xf]
      %v6507 = vld [vmem:[%s6 + $0xc] sm:$0xf]
      %v6508 = vld [vmem:[%s6 + $0x10] sm:$0xf]
      %v6509 = vld [vmem:[%s6 + $0x14] sm:$0xf]
      %v6510 = vld [vmem:[%s6 + $0x18] sm:$0xf]
      %v6511 = vld [vmem:[%s6 + $0x1c] sm:$0xf]
      %v6512 = vld [vmem:[%s6 + $0x20] sm:$0xf]
      %v6513 = vld [vmem:[%s6 + $0x24] sm:$0xf]
      %v6514 = vld [vmem:[%s6 + $0x28] sm:$0xf]
      %v6515 = vld [vmem:[%s6 + $0x2c] sm:$0xf]
      %v6516 = vld [vmem:[%s6 + $0x30] sm:$0xf]
      %v6517 = vld [vmem:[%s6 + $0x34] sm:$0xf]
      %v6518 = vld [vmem:[%s6 + $0x38] sm:$0xf]
      %v6519 = vld [vmem:[%s6 + $0x3c] sm:$0xf]
      %v6520 = vld [vmem:[%s6 + $0x40] sm:$0xf]
      %v6521 = vld [vmem:[%s6 + $0x44] sm:$0xf]
      %v6522 = vld [vmem:[%s6 + $0x48] sm:$0xf]
      %v6523 = vld [vmem:[%s6 + $0x4c] sm:$0xf]
      %v6524 = vld [vmem:[%s6 + $0x50] sm:$0xf]
      %v6525 = vld [vmem:[%s6 + $0x54] sm:$0xf]
      %v6526 = vld [vmem:[%s6 + $0x58] sm:$0xf]
      %v6527 = vld [vmem:[%s6 + $0x5c] sm:$0xf]
      %v6528 = vld [vmem:[%s6 + $0x60] sm:$0xf]
      %v6529 = vld [vmem:[%s6 + $0x64] sm:$0xf]
      %v6530 = vld [vmem:[%s6 + $0x68] sm:$0xf]
      %v6531 = vld [vmem:[%s6 + $0x6c] sm:$0xf]
      %v6532 = vld [vmem:[%s6 + $0x70] sm:$0xf]
      %v6533 = vld [vmem:[%s6 + $0x74] sm:$0xf]
      %v6534 = vld [vmem:[%s6 + $0x78] sm:$0xf]
      %v6535 = vld [vmem:[%s6 + $0x7c] sm:$0xf]
      %v6536 = vld [vmem:[%s6 + $0x80] sm:$0xf]
      %v6537 = vld [vmem:[%s6 + $0x84] sm:$0xf]
      %v6538 = vld [vmem:[%s6 + $0x88] sm:$0xf]
      %v6539 = vld [vmem:[%s6 + $0x8c] sm:$0xf]
      %v6540 = vld [vmem:[%s7] sm:$0x1]
      %v6542 = vlaneseq
      %v6543 = vshrl.u32 %v6542, 7
      %v6544 = vsub.s32 0, %v6543
      %v6545 = vrot.slane %v6540, %v6544
      %v6583 = vunpack.c.l.b16 %v6504
      %v6584 = vunpack.c.l.b16 %v6505
      %v6585 = vunpack.c.l.b16 %v6506
      %v6586 = vunpack.c.l.b16 %v6507
      %v6587 = vunpack.c.l.b16 %v6508
      %v6588 = vunpack.c.l.b16 %v6509
      %v6589 = vunpack.c.l.b16 %v6510
      %v6590 = vunpack.c.l.b16 %v6511
      %v6591 = vunpack.c.l.b16 %v6512
      %v6592 = vunpack.c.l.b16 %v6513
      %v6593 = vunpack.c.l.b16 %v6514
      %v6594 = vunpack.c.l.b16 %v6515
      %v6595 = vunpack.c.l.b16 %v6516
      %v6596 = vunpack.c.l.b16 %v6517
      %v6597 = vunpack.c.l.b16 %v6518
      %v6598 = vunpack.c.l.b16 %v6519
      %v6599 = vunpack.c.l.b16 %v6520
      %v6600 = vunpack.c.l.b16 %v6521
      %v6601 = vunpack.c.l.b16 %v6522
      %v6602 = vunpack.c.l.b16 %v6523
      %v6603 = vunpack.c.l.b16 %v6524
      %v6604 = vunpack.c.l.b16 %v6525
      %v6605 = vunpack.c.l.b16 %v6526
      %v6606 = vunpack.c.l.b16 %v6527
      %v6607 = vunpack.c.l.b16 %v6528
      %v6608 = vunpack.c.l.b16 %v6529
      %v6609 = vunpack.c.l.b16 %v6530
      %v6610 = vunpack.c.l.b16 %v6531
      %v6611 = vunpack.c.l.b16 %v6532
      %v6612 = vunpack.c.l.b16 %v6533
      %v6613 = vunpack.c.l.b16 %v6534
      %v6614 = vunpack.c.l.b16 %v6535
      %v6615 = vunpack.c.l.b16 %v6536
      %v6616 = vunpack.c.l.b16 %v6537
      %v6617 = vunpack.c.l.b16 %v6538
      %v6618 = vunpack.c.l.b16 %v6539
      %v6619 = vpack.c.b16 %v6584, %v6583
      %v6620 = vpack.c.b16 %v6586, %v6585
      %v6621 = vpack.c.b16 %v6588, %v6587
      %v6622 = vpack.c.b16 %v6590, %v6589
      %v6623 = vpack.c.b16 %v6592, %v6591
      %v6624 = vpack.c.b16 %v6594, %v6593
      %v6625 = vpack.c.b16 %v6596, %v6595
      %v6626 = vpack.c.b16 %v6598, %v6597
      %v6627 = vpack.c.b16 %v6600, %v6599
      %v6628 = vpack.c.b16 %v6602, %v6601
      %v6629 = vpack.c.b16 %v6604, %v6603
      %v6630 = vpack.c.b16 %v6606, %v6605
      %v6631 = vpack.c.b16 %v6608, %v6607
      %v6632 = vpack.c.b16 %v6610, %v6609
      %v6633 = vpack.c.b16 %v6612, %v6611
      %v6634 = vpack.c.b16 %v6614, %v6613
      %v6635 = vpack.c.b16 %v6616, %v6615
      %v6636 = vpack.c.b16 %v6618, %v6617
      %v6656 = vsel %vm839, %v6410, 0
      %v6659 = vsel %vm839, %v6413, 0
      %v6662 = vsel %vm839, %v6416, 0
      %v6665 = vsel %vm839, %v6419, 0
      %v6668 = vsel %vm839, %v6422, 0
      %v6671 = vsel %vm839, %v6425, 0
      %v6674 = vsel %vm839, %v6428, 0
      %v6677 = vsel %vm839, %v6431, 0
      %v6680 = vsel %vm839, %v6434, 0
      %v6683 = vsel %vm839, %v6437, 0
      %v6686 = vsel %vm839, %v6440, 0
      %v6689 = vsel %vm839, %v6443, 0
      %v6692 = vsel %vm839, %v6446, 0
      %v6695 = vsel %vm839, %v6449, 0
      %v6698 = vsel %vm839, %v6452, 0
      %v6701 = vsel %vm839, %v6455, 0
      %v6704 = vsel %vm839, %v6458, 0
      %v6707 = vsel %vm839, %v6461, 0
      %v6710 = vsel %vm839, %v6464, 0
      %v6713 = vsel %vm839, %v6467, 0
      %v6716 = vsel %vm839, %v6470, 0
      %v6719 = vsel %vm839, %v6473, 0
      %v6722 = vsel %vm839, %v6476, 0
      %v6725 = vsel %vm839, %v6479, 0
      %v6728 = vsel %vm839, %v6482, 0
      %v6731 = vsel %vm839, %v6485, 0
      %v6734 = vsel %vm839, %v6488, 0
      %v6737 = vsel %vm839, %v6491, 0
      %v6740 = vsel %vm839, %v6494, 0
      %v6743 = vsel %vm839, %v6497, 0
      %v6746 = vsel %vm839, %v6500, 0
      %v6749 = vsel %vm839, %v6503, 0
      %6751 = vmatprep.subr.bf16.mxu0 0
      %6752 = vmatpush1.bf16.msra.mxu0 %v6619
      %6753 = vmatprep.subr.bf16.mxu0 0
      %6754 = vmatpush1.bf16.msra.mxu0 %v6620
      %6755 = vmatprep.subr.bf16.mxu0 0
      %6756 = vmatpush1.bf16.msra.mxu0 %v6621
      %6757 = vmatprep.subr.bf16.mxu0 0
      %6758 = vmatpush1.bf16.msra.mxu0 %v6622
      %6759 = vmatprep.subr.bf16.mxu0 0
      %6760 = vmatpush1.bf16.msra.mxu0 %v6623
      %6761 = vmatprep.subr.bf16.mxu0 0
      %6762 = vmatpush1.bf16.msra.mxu0 %v6624
      %6763 = vmatprep.subr.bf16.mxu0 0
      %6764 = vmatpush1.bf16.msra.mxu0 %v6625
      %6765 = vmatprep.subr.bf16.mxu0 0
      %6766 = vmatpush1.bf16.msra.mxu0 %v6626
      %6767 = vmatprep.subr.bf16.mxu0 0
      %6768 = vmatpush1.bf16.msra.mxu0 %v6627
      %6769 = vmatprep.subr.bf16.mxu0 0
      %6770 = vmatpush1.bf16.msra.mxu0 %v6628
      %6771 = vmatprep.subr.bf16.mxu0 0
      %6772 = vmatpush1.bf16.msra.mxu0 %v6629
      %6773 = vmatprep.subr.bf16.mxu0 0
      %6774 = vmatpush1.bf16.msra.mxu0 %v6630
      %6775 = vmatprep.subr.bf16.mxu0 0
      %6776 = vmatpush1.bf16.msra.mxu0 %v6631
      %6777 = vmatprep.subr.bf16.mxu0 0
      %6778 = vmatpush1.bf16.msra.mxu0 %v6632
      %6779 = vmatprep.subr.bf16.mxu0 0
      %6780 = vmatpush1.bf16.msra.mxu0 %v6633
      %6781 = vmatprep.subr.bf16.mxu0 0
      %6782 = vmatpush1.bf16.msra.mxu0 %v6634
      %6783 = vmatprep.mubr.bf16.mxu0 %v6409
      %6784 = vmatmul.mubr.bf16.gmra.mrb[0].mxu0 %v6408
      %v6785 = vpop.f32.mrb[0].mxu0
      %v6786 = vadd.f32 %v6545, %v6785
      %v6787 = vpop.f32.mrb[0].mxu0
      %v6788 = vpop.f32.mrb[0].mxu0
      %v6789 = vadd.f32 %v6545, %v6788
      %v6790 = vpop.f32.mrb[0].mxu0
      %6791 = vmatprep.mubr.bf16.mxu0 %v6412
      %6792 = vmatmul.mubr.bf16.gmra.mrb[0].mxu0 %v6411
      %v6793 = vpop.f32.mrb[0].mxu0
      %v6794 = vadd.f32 %v6545, %v6793
      %v6795 = vpop.f32.mrb[0].mxu0
      %v6796 = vpop.f32.mrb[0].mxu0
      %v6797 = vadd.f32 %v6545, %v6796
      %v6798 = vpop.f32.mrb[0].mxu0
      %6799 = vmatprep.mubr.bf16.mxu0 %v6415
      %6800 = vmatmul.mubr.bf16.gmra.mrb[0].mxu0 %v6414
      %v6801 = vpop.f32.mrb[0].mxu0
      %v6802 = vadd.f32 %v6545, %v6801
      %v6803 = vpop.f32.mrb[0].mxu0
      %v6804 = vpop.f32.mrb[0].mxu0
      %v6805 = vadd.f32 %v6545, %v6804
      %v6806 = vpop.f32.mrb[0].mxu0
      %6807 = vmatprep.mubr.bf16.mxu0 %v6418
      %6808 = vmatmul.mubr.bf16.gmra.mrb[0].mxu0 %v6417
      %v6809 = vpop.f32.mrb[0].mxu0
      %v6810 = vadd.f32 %v6545, %v6809
      %v6811 = vpop.f32.mrb[0].mxu0
      %v6812 = vpop.f32.mrb[0].mxu0
      %v6813 = vadd.f32 %v6545, %v6812
      %v6814 = vpop.f32.mrb[0].mxu0
      %6815 = vmatprep.mubr.bf16.mxu0 %v6421
      %6816 = vmatmul.mubr.bf16.gmra.mrb[0].mxu0 %v6420
      %v6817 = vpop.f32.mrb[0].mxu0
      %v6818 = vadd.f32 %v6545, %v6817
      %v6819 = vpop.f32.mrb[0].mxu0
      %v6820 = vpop.f32.mrb[0].mxu0
      %v6821 = vadd.f32 %v6545, %v6820
      %v6822 = vpop.f32.mrb[0].mxu0
      %6823 = vmatprep.mubr.bf16.mxu0 %v6424
      %6824 = vmatmul.mubr.bf16.gmra.mrb[0].mxu0 %v6423
      %v6825 = vpop.f32.mrb[0].mxu0
      %v6826 = vadd.f32 %v6545, %v6825
      %v6827 = vpop.f32.mrb[0].mxu0
      %v6828 = vpop.f32.mrb[0].mxu0
      %v6829 = vadd.f32 %v6545, %v6828
      %v6830 = vpop.f32.mrb[0].mxu0
      %6831 = vmatprep.mubr.bf16.mxu0 %v6427
      %6832 = vmatmul.mubr.bf16.gmra.mrb[0].mxu0 %v6426
      %v6833 = vpop.f32.mrb[0].mxu0
      %v6834 = vadd.f32 %v6545, %v6833
      %v6835 = vpop.f32.mrb[0].mxu0
      %v6836 = vpop.f32.mrb[0].mxu0
      %v6837 = vadd.f32 %v6545, %v6836
      %v6838 = vpop.f32.mrb[0].mxu0
      %6839 = vmatprep.mubr.bf16.mxu0 %v6430
      %6840 = vmatmul.mubr.bf16.gmra.mrb[0].mxu0 %v6429
      %v6841 = vpop.f32.mrb[0].mxu0
      %v6842 = vadd.f32 %v6545, %v6841
      %v6843 = vpop.f32.mrb[0].mxu0
      %v6844 = vpop.f32.mrb[0].mxu0
      %v6845 = vadd.f32 %v6545, %v6844
      %v6846 = vpop.f32.mrb[0].mxu0
      %6847 = vmatprep.mubr.bf16.mxu0 %v6433
      %6848 = vmatmul.mubr.bf16.gmra.mrb[0].mxu0 %v6432
      %v6849 = vpop.f32.mrb[0].mxu0
      %v6850 = vadd.f32 %v6545, %v6849
      %v6851 = vpop.f32.mrb[0].mxu0
      %v6852 = vpop.f32.mrb[0].mxu0
      %v6853 = vadd.f32 %v6545, %v6852
      %v6854 = vpop.f32.mrb[0].mxu0
      %6855 = vmatprep.mubr.bf16.mxu0 %v6436
      %6856 = vmatmul.mubr.bf16.gmra.mrb[0].mxu0 %v6435
      %v6857 = vpop.f32.mrb[0].mxu0
      %v6858 = vadd.f32 %v6545, %v6857
      %v6859 = vpop.f32.mrb[0].mxu0
      %v6860 = vpop.f32.mrb[0].mxu0
      %v6861 = vadd.f32 %v6545, %v6860
      %v6862 = vpop.f32.mrb[0].mxu0
      %6863 = vmatprep.mubr.bf16.mxu0 %v6439
      %6864 = vmatmul.mubr.bf16.gmra.mrb[0].mxu0 %v6438
      %v6865 = vpop.f32.mrb[0].mxu0
      %v6866 = vadd.f32 %v6545, %v6865
      %v6867 = vpop.f32.mrb[0].mxu0
      %v6868 = vpop.f32.mrb[0].mxu0
      %v6869 = vadd.f32 %v6545, %v6868
      %v6870 = vpop.f32.mrb[0].mxu0
      %6871 = vmatprep.mubr.bf16.mxu0 %v6442
      %6872 = vmatmul.mubr.bf16.gmra.mrb[0].mxu0 %v6441
      %v6873 = vpop.f32.mrb[0].mxu0
      %v6874 = vadd.f32 %v6545, %v6873
      %v6875 = vpop.f32.mrb[0].mxu0
      %v6876 = vpop.f32.mrb[0].mxu0
      %v6877 = vadd.f32 %v6545, %v6876
      %v6878 = vpop.f32.mrb[0].mxu0
      %6879 = vmatprep.mubr.bf16.mxu0 %v6445
      %6880 = vmatmul.mubr.bf16.gmra.mrb[0].mxu0 %v6444
      %v6881 = vpop.f32.mrb[0].mxu0
      %v6882 = vadd.f32 %v6545, %v6881
      %v6883 = vpop.f32.mrb[0].mxu0
      %v6884 = vpop.f32.mrb[0].mxu0
      %v6885 = vadd.f32 %v6545, %v6884
      %v6886 = vpop.f32.mrb[0].mxu0
      %6887 = vmatprep.mubr.bf16.mxu0 %v6448
      %6888 = vmatmul.mubr.bf16.gmra.mrb[0].mxu0 %v6447
      %v6889 = vpop.f32.mrb[0].mxu0
      %v6890 = vadd.f32 %v6545, %v6889
      %v6891 = vpop.f32.mrb[0].mxu0
      %v6892 = vpop.f32.mrb[0].mxu0
      %v6893 = vadd.f32 %v6545, %v6892
      %v6894 = vpop.f32.mrb[0].mxu0
      %6895 = vmatprep.mubr.bf16.mxu0 %v6451
      %6896 = vmatmul.mubr.bf16.gmra.mrb[0].mxu0 %v6450
      %v6897 = vpop.f32.mrb[0].mxu0
      %v6898 = vadd.f32 %v6545, %v6897
      %v6899 = vpop.f32.mrb[0].mxu0
      %v6900 = vpop.f32.mrb[0].mxu0
      %v6901 = vadd.f32 %v6545, %v6900
      %v6902 = vpop.f32.mrb[0].mxu0
      %6903 = vmatprep.mubr.bf16.mxu0 %v6454
      %6904 = vmatmul.mubr.bf16.gmra.mrb[0].mxu0 %v6453
      %v6905 = vpop.f32.mrb[0].mxu0
      %v6906 = vadd.f32 %v6545, %v6905
      %v6907 = vpop.f32.mrb[0].mxu0
      %v6908 = vpop.f32.mrb[0].mxu0
      %v6909 = vadd.f32 %v6545, %v6908
      %v6910 = vpop.f32.mrb[0].mxu0
      %6911 = vmatprep.mubr.bf16.mxu0 %v6457
      %6912 = vmatmul.mubr.bf16.gmra.mrb[0].mxu0 %v6456
      %v6913 = vpop.f32.mrb[0].mxu0
      %v6914 = vadd.f32 %v6545, %v6913
      %v6915 = vpop.f32.mrb[0].mxu0
      %v6916 = vpop.f32.mrb[0].mxu0
      %v6917 = vadd.f32 %v6545, %v6916
      %v6918 = vpop.f32.mrb[0].mxu0
      %6919 = vmatprep.mubr.bf16.mxu0 %v6460
      %6920 = vmatmul.mubr.bf16.gmra.mrb[0].mxu0 %v6459
      %v6921 = vpop.f32.mrb[0].mxu0
      %v6922 = vadd.f32 %v6545, %v6921
      %v6923 = vpop.f32.mrb[0].mxu0
      %v6924 = vpop.f32.mrb[0].mxu0
      %v6925 = vadd.f32 %v6545, %v6924
      %v6926 = vpop.f32.mrb[0].mxu0
      %6927 = vmatprep.mubr.bf16.mxu0 %v6463
      %6928 = vmatmul.mubr.bf16.gmra.mrb[0].mxu0 %v6462
      %v6929 = vpop.f32.mrb[0].mxu0
      %v6930 = vadd.f32 %v6545, %v6929
      %v6931 = vpop.f32.mrb[0].mxu0
      %v6932 = vpop.f32.mrb[0].mxu0
      %v6933 = vadd.f32 %v6545, %v6932
      %v6934 = vpop.f32.mrb[0].mxu0
      %6935 = vmatprep.mubr.bf16.mxu0 %v6466
      %6936 = vmatmul.mubr.bf16.gmra.mrb[0].mxu0 %v6465
      %v6937 = vpop.f32.mrb[0].mxu0
      %v6938 = vadd.f32 %v6545, %v6937
      %v6939 = vpop.f32.mrb[0].mxu0
      %v6940 = vpop.f32.mrb[0].mxu0
      %v6941 = vadd.f32 %v6545, %v6940
      %v6942 = vpop.f32.mrb[0].mxu0
      %6943 = vmatprep.mubr.bf16.mxu0 %v6469
      %6944 = vmatmul.mubr.bf16.gmra.mrb[0].mxu0 %v6468
      %v6945 = vpop.f32.mrb[0].mxu0
      %v6946 = vadd.f32 %v6545, %v6945
      %v6947 = vpop.f32.mrb[0].mxu0
      %v6948 = vpop.f32.mrb[0].mxu0
      %v6949 = vadd.f32 %v6545, %v6948
      %v6950 = vpop.f32.mrb[0].mxu0
      %6951 = vmatprep.mubr.bf16.mxu0 %v6472
      %6952 = vmatmul.mubr.bf16.gmra.mrb[0].mxu0 %v6471
      %v6953 = vpop.f32.mrb[0].mxu0
      %v6954 = vadd.f32 %v6545, %v6953
      %v6955 = vpop.f32.mrb[0].mxu0
      %v6956 = vpop.f32.mrb[0].mxu0
      %v6957 = vadd.f32 %v6545, %v6956
      %v6958 = vpop.f32.mrb[0].mxu0
      %6959 = vmatprep.mubr.bf16.mxu0 %v6475
      %6960 = vmatmul.mubr.bf16.gmra.mrb[0].mxu0 %v6474
      %v6961 = vpop.f32.mrb[0].mxu0
      %v6962 = vadd.f32 %v6545, %v6961
      %v6963 = vpop.f32.mrb[0].mxu0
      %v6964 = vpop.f32.mrb[0].mxu0
      %v6965 = vadd.f32 %v6545, %v6964
      %v6966 = vpop.f32.mrb[0].mxu0
      %6967 = vmatprep.mubr.bf16.mxu0 %v6478
      %6968 = vmatmul.mubr.bf16.gmra.mrb[0].mxu0 %v6477
      %v6969 = vpop.f32.mrb[0].mxu0
      %v6970 = vadd.f32 %v6545, %v6969
      %v6971 = vpop.f32.mrb[0].mxu0
      %v6972 = vpop.f32.mrb[0].mxu0
      %v6973 = vadd.f32 %v6545, %v6972
      %v6974 = vpop.f32.mrb[0].mxu0
      %6975 = vmatprep.mubr.bf16.mxu0 %v6481
      %6976 = vmatmul.mubr.bf16.gmra.mrb[0].mxu0 %v6480
      %v6977 = vpop.f32.mrb[0].mxu0
      %v6978 = vadd.f32 %v6545, %v6977
      %v6979 = vpop.f32.mrb[0].mxu0
      %v6980 = vpop.f32.mrb[0].mxu0
      %v6981 = vadd.f32 %v6545, %v6980
      %v6982 = vpop.f32.mrb[0].mxu0
      %6983 = vmatprep.mubr.bf16.mxu0 %v6484
      %6984 = vmatmul.mubr.bf16.gmra.mrb[0].mxu0 %v6483
      %v6985 = vpop.f32.mrb[0].mxu0
      %v6986 = vadd.f32 %v6545, %v6985
      %v6987 = vpop.f32.mrb[0].mxu0
      %v6988 = vpop.f32.mrb[0].mxu0
      %v6989 = vadd.f32 %v6545, %v6988
      %v6990 = vpop.f32.mrb[0].mxu0
      %6991 = vmatprep.mubr.bf16.mxu0 %v6487
      %6992 = vmatmul.mubr.bf16.gmra.mrb[0].mxu0 %v6486
      %v6993 = vpop.f32.mrb[0].mxu0
      %v6994 = vadd.f32 %v6545, %v6993
      %v6995 = vpop.f32.mrb[0].mxu0
      %v6996 = vpop.f32.mrb[0].mxu0
      %v6997 = vadd.f32 %v6545, %v6996
      %v6998 = vpop.f32.mrb[0].mxu0
      %6999 = vmatprep.mubr.bf16.mxu0 %v6490
      %7000 = vmatmul.mubr.bf16.gmra.mrb[0].mxu0 %v6489
      %v7001 = vpop.f32.mrb[0].mxu0
      %v7002 = vadd.f32 %v6545, %v7001
      %v7003 = vpop.f32.mrb[0].mxu0
      %v7004 = vpop.f32.mrb[0].mxu0
      %v7005 = vadd.f32 %v6545, %v7004
      %v7006 = vpop.f32.mrb[0].mxu0
      %7007 = vmatprep.mubr.bf16.mxu0 %v6493
      %7008 = vmatmul.mubr.bf16.gmra.mrb[0].mxu0 %v6492
      %v7009 = vpop.f32.mrb[0].mxu0
      %v7010 = vadd.f32 %v6545, %v7009
      %v7011 = vpop.f32.mrb[0].mxu0
      %v7012 = vpop.f32.mrb[0].mxu0
      %v7013 = vadd.f32 %v6545, %v7012
      %v7014 = vpop.f32.mrb[0].mxu0
      %7015 = vmatprep.mubr.bf16.mxu0 %v6496
      %7016 = vmatmul.mubr.bf16.gmra.mrb[0].mxu0 %v6495
      %v7017 = vpop.f32.mrb[0].mxu0
      %v7018 = vadd.f32 %v6545, %v7017
      %v7019 = vpop.f32.mrb[0].mxu0
      %v7020 = vpop.f32.mrb[0].mxu0
      %v7021 = vadd.f32 %v6545, %v7020
      %v7022 = vpop.f32.mrb[0].mxu0
      %7023 = vmatprep.mubr.bf16.mxu0 %v6499
      %7024 = vmatmul.mubr.bf16.gmra.mrb[0].mxu0 %v6498
      %v7025 = vpop.f32.mrb[0].mxu0
      %v7026 = vadd.f32 %v6545, %v7025
      %v7027 = vpop.f32.mrb[0].mxu0
      %v7028 = vpop.f32.mrb[0].mxu0
      %v7029 = vadd.f32 %v6545, %v7028
      %v7030 = vpop.f32.mrb[0].mxu0
      %7031 = vmatprep.mubr.bf16.mxu0 %v6502
      %7032 = vmatmul.mubr.bf16.gmra.mrb[0].mxu0 %v6501
      %v7033 = vpop.f32.mrb[0].mxu0
      %v7034 = vadd.f32 %v6545, %v7033
      %v7035 = vpop.f32.mrb[0].mxu0
      %v7036 = vpop.f32.mrb[0].mxu0
      %v7037 = vadd.f32 %v6545, %v7036
      %v7038 = vpop.f32.mrb[0].mxu0
      %7039 = vdwg.mxu0
      %7040 = vmatprep.subr.bf16.mxu0 0
      %7041 = vmatpush1.bf16.msra.mxu0 %v6635
      %7042 = vmatprep.subr.bf16.mxu0 0
      %7043 = vmatpush1.bf16.msra.mxu0 %v6636
      %7044 = vmatprep.subr.bf16.mxu0 0
      %7045 = vmatpush1.bf16.msra.mxu0 0
      %7046 = vmatprep.subr.bf16.mxu0 0
      %7047 = vmatpush1.bf16.msra.mxu0 0
      %7048 = vmatprep.subr.bf16.mxu0 0
      %7049 = vmatpush1.bf16.msra.mxu0 0
      %7050 = vmatprep.subr.bf16.mxu0 0
      %7051 = vmatpush1.bf16.msra.mxu0 0
      %7052 = vmatprep.subr.bf16.mxu0 0
      %7053 = vmatpush1.bf16.msra.mxu0 0
      %7054 = vmatprep.subr.bf16.mxu0 0
      %7055 = vmatpush1.bf16.msra.mxu0 0
      %7056 = vmatprep.subr.bf16.mxu0 0
      %7057 = vmatpush1.bf16.msra.mxu0 0
      %7058 = vmatprep.subr.bf16.mxu0 0
      %7059 = vmatpush1.bf16.msra.mxu0 0
      %7060 = vmatprep.subr.bf16.mxu0 0
      %7061 = vmatpush1.bf16.msra.mxu0 0
      %7062 = vmatprep.subr.bf16.mxu0 0
      %7063 = vmatpush1.bf16.msra.mxu0 0
      %7064 = vmatprep.subr.bf16.mxu0 0
      %7065 = vmatpush1.bf16.msra.mxu0 0
      %7066 = vmatprep.subr.bf16.mxu0 0
      %7067 = vmatpush1.bf16.msra.mxu0 0
      %7068 = vmatprep.subr.bf16.mxu0 0
      %7069 = vmatpush1.bf16.msra.mxu0 0
      %7070 = vmatprep.subr.bf16.mxu0 0
      %7071 = vmatpush1.bf16.msra.mxu0 0
      %7072 = vmatprep.mubr.bf16.mxu0 0
      %7073 = vmatmul.mubr.bf16.gmra.mrb[0].mxu0 %v6656
      %v7074 = vpop.f32.mrb[0].mxu0
      %v7075 = vadd.f32 %v6786, %v7074
      %v7076 = vpop.f32.mrb[0].mxu0
      %v7077 = vpop.f32.mrb[0].mxu0
      %v7078 = vadd.f32 %v6789, %v7077
      %v7079 = vpop.f32.mrb[0].mxu0
      %7080 = vmatprep.mubr.bf16.mxu0 0
      %7081 = vmatmul.mubr.bf16.gmra.mrb[0].mxu0 %v6659
      %v7082 = vpop.f32.mrb[0].mxu0
      %v7083 = vadd.f32 %v6794, %v7082
      %v7084 = vpop.f32.mrb[0].mxu0
      %v7085 = vpop.f32.mrb[0].mxu0
      %v7086 = vadd.f32 %v6797, %v7085
      %v7087 = vpop.f32.mrb[0].mxu0
      %7088 = vmatprep.mubr.bf16.mxu0 0
      %7089 = vmatmul.mubr.bf16.gmra.mrb[0].mxu0 %v6662
      %v7090 = vpop.f32.mrb[0].mxu0
      %v7091 = vadd.f32 %v6802, %v7090
      %v7092 = vpop.f32.mrb[0].mxu0
      %v7093 = vpop.f32.mrb[0].mxu0
      %v7094 = vadd.f32 %v6805, %v7093
      %v7095 = vpop.f32.mrb[0].mxu0
      %7096 = vmatprep.mubr.bf16.mxu0 0
      %7097 = vmatmul.mubr.bf16.gmra.mrb[0].mxu0 %v6665
      %v7098 = vpop.f32.mrb[0].mxu0
      %v7099 = vadd.f32 %v6810, %v7098
      %v7100 = vpop.f32.mrb[0].mxu0
      %v7101 = vpop.f32.mrb[0].mxu0
      %v7102 = vadd.f32 %v6813, %v7101
      %v7103 = vpop.f32.mrb[0].mxu0
      %7104 = vmatprep.mubr.bf16.mxu0 0
      %7105 = vmatmul.mubr.bf16.gmra.mrb[0].mxu0 %v6668
      %v7106 = vpop.f32.mrb[0].mxu0
      %v7107 = vadd.f32 %v6818, %v7106
      %v7108 = vpop.f32.mrb[0].mxu0
      %v7109 = vpop.f32.mrb[0].mxu0
      %v7110 = vadd.f32 %v6821, %v7109
      %v7111 = vpop.f32.mrb[0].mxu0
      %7112 = vmatprep.mubr.bf16.mxu0 0
      %7113 = vmatmul.mubr.bf16.gmra.mrb[0].mxu0 %v6671
      %v7114 = vpop.f32.mrb[0].mxu0
      %v7115 = vadd.f32 %v6826, %v7114
      %v7116 = vpop.f32.mrb[0].mxu0
      %v7117 = vpop.f32.mrb[0].mxu0
      %v7118 = vadd.f32 %v6829, %v7117
      %v7119 = vpop.f32.mrb[0].mxu0
      %7120 = vmatprep.mubr.bf16.mxu0 0
      %7121 = vmatmul.mubr.bf16.gmra.mrb[0].mxu0 %v6674
      %v7122 = vpop.f32.mrb[0].mxu0
      %v7123 = vadd.f32 %v6834, %v7122
      %v7124 = vpop.f32.mrb[0].mxu0
      %v7125 = vpop.f32.mrb[0].mxu0
      %v7126 = vadd.f32 %v6837, %v7125
      %v7127 = vpop.f32.mrb[0].mxu0
      %7128 = vmatprep.mubr.bf16.mxu0 0
      %7129 = vmatmul.mubr.bf16.gmra.mrb[0].mxu0 %v6677
      %v7130 = vpop.f32.mrb[0].mxu0
      %v7131 = vadd.f32 %v6842, %v7130
      %v7132 = vpop.f32.mrb[0].mxu0
      %v7133 = vpop.f32.mrb[0].mxu0
      %v7134 = vadd.f32 %v6845, %v7133
      %v7135 = vpop.f32.mrb[0].mxu0
      %7136 = vmatprep.mubr.bf16.mxu0 0
      %7137 = vmatmul.mubr.bf16.gmra.mrb[0].mxu0 %v6680
      %v7138 = vpop.f32.mrb[0].mxu0
      %v7139 = vadd.f32 %v6850, %v7138
      %v7140 = vpop.f32.mrb[0].mxu0
      %v7141 = vpop.f32.mrb[0].mxu0
      %v7142 = vadd.f32 %v6853, %v7141
      %v7143 = vpop.f32.mrb[0].mxu0
      %7144 = vmatprep.mubr.bf16.mxu0 0
      %7145 = vmatmul.mubr.bf16.gmra.mrb[0].mxu0 %v6683
      %v7146 = vpop.f32.mrb[0].mxu0
      %v7147 = vadd.f32 %v6858, %v7146
      %v7148 = vpop.f32.mrb[0].mxu0
      %v7149 = vpop.f32.mrb[0].mxu0
      %v7150 = vadd.f32 %v6861, %v7149
      %v7151 = vpop.f32.mrb[0].mxu0
      %7152 = vmatprep.mubr.bf16.mxu0 0
      %7153 = vmatmul.mubr.bf16.gmra.mrb[0].mxu0 %v6686
      %v7154 = vpop.f32.mrb[0].mxu0
      %v7155 = vadd.f32 %v6866, %v7154
      %v7156 = vpop.f32.mrb[0].mxu0
      %v7157 = vpop.f32.mrb[0].mxu0
      %v7158 = vadd.f32 %v6869, %v7157
      %v7159 = vpop.f32.mrb[0].mxu0
      %7160 = vmatprep.mubr.bf16.mxu0 0
      %7161 = vmatmul.mubr.bf16.gmra.mrb[0].mxu0 %v6689
      %v7162 = vpop.f32.mrb[0].mxu0
      %v7163 = vadd.f32 %v6874, %v7162
      %v7164 = vpop.f32.mrb[0].mxu0
      %v7165 = vpop.f32.mrb[0].mxu0
      %v7166 = vadd.f32 %v6877, %v7165
      %v7167 = vpop.f32.mrb[0].mxu0
      %7168 = vmatprep.mubr.bf16.mxu0 0
      %7169 = vmatmul.mubr.bf16.gmra.mrb[0].mxu0 %v6692
      %v7170 = vpop.f32.mrb[0].mxu0
      %v7171 = vadd.f32 %v6882, %v7170
      %v7172 = vpop.f32.mrb[0].mxu0
      %v7173 = vpop.f32.mrb[0].mxu0
      %v7174 = vadd.f32 %v6885, %v7173
      %v7175 = vpop.f32.mrb[0].mxu0
      %7176 = vmatprep.mubr.bf16.mxu0 0
      %7177 = vmatmul.mubr.bf16.gmra.mrb[0].mxu0 %v6695
      %v7178 = vpop.f32.mrb[0].mxu0
      %v7179 = vadd.f32 %v6890, %v7178
      %v7180 = vpop.f32.mrb[0].mxu0
      %v7181 = vpop.f32.mrb[0].mxu0
      %v7182 = vadd.f32 %v6893, %v7181
      %v7183 = vpop.f32.mrb[0].mxu0
      %7184 = vmatprep.mubr.bf16.mxu0 0
      %7185 = vmatmul.mubr.bf16.gmra.mrb[0].mxu0 %v6698
      %v7186 = vpop.f32.mrb[0].mxu0
      %v7187 = vadd.f32 %v6898, %v7186
      %v7188 = vpop.f32.mrb[0].mxu0
      %v7189 = vpop.f32.mrb[0].mxu0
      %v7190 = vadd.f32 %v6901, %v7189
      %v7191 = vpop.f32.mrb[0].mxu0
      %7192 = vmatprep.mubr.bf16.mxu0 0
      %7193 = vmatmul.mubr.bf16.gmra.mrb[0].mxu0 %v6701
      %v7194 = vpop.f32.mrb[0].mxu0
      %v7195 = vadd.f32 %v6906, %v7194
      %v7196 = vpop.f32.mrb[0].mxu0
      %v7197 = vpop.f32.mrb[0].mxu0
      %v7198 = vadd.f32 %v6909, %v7197
      %v7199 = vpop.f32.mrb[0].mxu0
      %7200 = vmatprep.mubr.bf16.mxu0 0
      %7201 = vmatmul.mubr.bf16.gmra.mrb[0].mxu0 %v6704
      %v7202 = vpop.f32.mrb[0].mxu0
      %v7203 = vadd.f32 %v6914, %v7202
      %v7204 = vpop.f32.mrb[0].mxu0
      %v7205 = vpop.f32.mrb[0].mxu0
      %v7206 = vadd.f32 %v6917, %v7205
      %v7207 = vpop.f32.mrb[0].mxu0
      %7208 = vmatprep.mubr.bf16.mxu0 0
      %7209 = vmatmul.mubr.bf16.gmra.mrb[0].mxu0 %v6707
      %v7210 = vpop.f32.mrb[0].mxu0
      %v7211 = vadd.f32 %v6922, %v7210
      %v7212 = vpop.f32.mrb[0].mxu0
      %v7213 = vpop.f32.mrb[0].mxu0
      %v7214 = vadd.f32 %v6925, %v7213
      %v7215 = vpop.f32.mrb[0].mxu0
      %7216 = vmatprep.mubr.bf16.mxu0 0
      %7217 = vmatmul.mubr.bf16.gmra.mrb[0].mxu0 %v6710
      %v7218 = vpop.f32.mrb[0].mxu0
      %v7219 = vadd.f32 %v6930, %v7218
      %v7220 = vpop.f32.mrb[0].mxu0
      %v7221 = vpop.f32.mrb[0].mxu0
      %v7222 = vadd.f32 %v6933, %v7221
      %v7223 = vpop.f32.mrb[0].mxu0
      %7224 = vmatprep.mubr.bf16.mxu0 0
      %7225 = vmatmul.mubr.bf16.gmra.mrb[0].mxu0 %v6713
      %v7226 = vpop.f32.mrb[0].mxu0
      %v7227 = vadd.f32 %v6938, %v7226
      %v7228 = vpop.f32.mrb[0].mxu0
      %v7229 = vpop.f32.mrb[0].mxu0
      %v7230 = vadd.f32 %v6941, %v7229
      %v7231 = vpop.f32.mrb[0].mxu0
      %7232 = vmatprep.mubr.bf16.mxu0 0
      %7233 = vmatmul.mubr.bf16.gmra.mrb[0].mxu0 %v6716
      %v7234 = vpop.f32.mrb[0].mxu0
      %v7235 = vadd.f32 %v6946, %v7234
      %v7236 = vpop.f32.mrb[0].mxu0
      %v7237 = vpop.f32.mrb[0].mxu0
      %v7238 = vadd.f32 %v6949, %v7237
      %v7239 = vpop.f32.mrb[0].mxu0
      %7240 = vmatprep.mubr.bf16.mxu0 0
      %7241 = vmatmul.mubr.bf16.gmra.mrb[0].mxu0 %v6719
      %v7242 = vpop.f32.mrb[0].mxu0
      %v7243 = vadd.f32 %v6954, %v7242
      %v7244 = vpop.f32.mrb[0].mxu0
      %v7245 = vpop.f32.mrb[0].mxu0
      %v7246 = vadd.f32 %v6957, %v7245
      %v7247 = vpop.f32.mrb[0].mxu0
      %7248 = vmatprep.mubr.bf16.mxu0 0
      %7249 = vmatmul.mubr.bf16.gmra.mrb[0].mxu0 %v6722
      %v7250 = vpop.f32.mrb[0].mxu0
      %v7251 = vadd.f32 %v6962, %v7250
      %v7252 = vpop.f32.mrb[0].mxu0
      %v7253 = vpop.f32.mrb[0].mxu0
      %v7254 = vadd.f32 %v6965, %v7253
      %v7255 = vpop.f32.mrb[0].mxu0
      %7256 = vmatprep.mubr.bf16.mxu0 0
      %7257 = vmatmul.mubr.bf16.gmra.mrb[0].mxu0 %v6725
      %v7258 = vpop.f32.mrb[0].mxu0
      %v7259 = vadd.f32 %v6970, %v7258
      %v7260 = vpop.f32.mrb[0].mxu0
      %v7261 = vpop.f32.mrb[0].mxu0
      %v7262 = vadd.f32 %v6973, %v7261
      %v7263 = vpop.f32.mrb[0].mxu0
      %7264 = vmatprep.mubr.bf16.mxu0 0
      %7265 = vmatmul.mubr.bf16.gmra.mrb[0].mxu0 %v6728
      %v7266 = vpop.f32.mrb[0].mxu0
      %v7267 = vadd.f32 %v6978, %v7266
      %v7268 = vpop.f32.mrb[0].mxu0
      %v7269 = vpop.f32.mrb[0].mxu0
      %v7270 = vadd.f32 %v6981, %v7269
      %v7271 = vpop.f32.mrb[0].mxu0
      %7272 = vmatprep.mubr.bf16.mxu0 0
      %7273 = vmatmul.mubr.bf16.gmra.mrb[0].mxu0 %v6731
      %v7274 = vpop.f32.mrb[0].mxu0
      %v7275 = vadd.f32 %v6986, %v7274
      %v7276 = vpop.f32.mrb[0].mxu0
      %v7277 = vpop.f32.mrb[0].mxu0
      %v7278 = vadd.f32 %v6989, %v7277
      %v7279 = vpop.f32.mrb[0].mxu0
      %7280 = vmatprep.mubr.bf16.mxu0 0
      %7281 = vmatmul.mubr.bf16.gmra.mrb[0].mxu0 %v6734
      %v7282 = vpop.f32.mrb[0].mxu0
      %v7283 = vadd.f32 %v6994, %v7282
      %v7284 = vpop.f32.mrb[0].mxu0
      %v7285 = vpop.f32.mrb[0].mxu0
      %v7286 = vadd.f32 %v6997, %v7285
      %v7287 = vpop.f32.mrb[0].mxu0
      %7288 = vmatprep.mubr.bf16.mxu0 0
      %7289 = vmatmul.mubr.bf16.gmra.mrb[0].mxu0 %v6737
      %v7290 = vpop.f32.mrb[0].mxu0
      %v7291 = vadd.f32 %v7002, %v7290
      %v7292 = vpop.f32.mrb[0].mxu0
      %v7293 = vpop.f32.mrb[0].mxu0
      %v7294 = vadd.f32 %v7005, %v7293
      %v7295 = vpop.f32.mrb[0].mxu0
      %7296 = vmatprep.mubr.bf16.mxu0 0
      %7297 = vmatmul.mubr.bf16.gmra.mrb[0].mxu0 %v6740
      %v7298 = vpop.f32.mrb[0].mxu0
      %v7299 = vadd.f32 %v7010, %v7298
      %v7300 = vpop.f32.mrb[0].mxu0
      %v7301 = vpop.f32.mrb[0].mxu0
      %v7302 = vadd.f32 %v7013, %v7301
      %v7303 = vpop.f32.mrb[0].mxu0
      %7304 = vmatprep.mubr.bf16.mxu0 0
      %7305 = vmatmul.mubr.bf16.gmra.mrb[0].mxu0 %v6743
      %v7306 = vpop.f32.mrb[0].mxu0
      %v7307 = vadd.f32 %v7018, %v7306
      %v7308 = vpop.f32.mrb[0].mxu0
      %v7309 = vpop.f32.mrb[0].mxu0
      %v7310 = vadd.f32 %v7021, %v7309
      %v7311 = vpop.f32.mrb[0].mxu0
      %7312 = vmatprep.mubr.bf16.mxu0 0
      %7313 = vmatmul.mubr.bf16.gmra.mrb[0].mxu0 %v6746
      %v7314 = vpop.f32.mrb[0].mxu0
      %v7315 = vadd.f32 %v7026, %v7314
      %v7316 = vpop.f32.mrb[0].mxu0
      %v7317 = vpop.f32.mrb[0].mxu0
      %v7318 = vadd.f32 %v7029, %v7317
      %v7319 = vpop.f32.mrb[0].mxu0
      %7320 = vmatprep.mubr.bf16.mxu0 0
      %7321 = vmatmul.mubr.bf16.gmra.mrb[0].mxu0 %v6749
      %v7322 = vpop.f32.mrb[0].mxu0
      %v7323 = vadd.f32 %v7034, %v7322
      %v7324 = vpop.f32.mrb[0].mxu0
      %v7325 = vpop.f32.mrb[0].mxu0
      %v7326 = vadd.f32 %v7037, %v7325
      %v7327 = vpop.f32.mrb[0].mxu0
      %7328 = vdwg.mxu0
      %7393 = vrot.lane.b32.xlu0 %v971, 96
      %v7394 = vpop.permute.xlu0 %7393
      %7395 = vrot.lane.b32.xlu0 %v974, 96
      %v7396 = vpop.permute.xlu0 %7395
      %7397 = vrot.lane.b32.xlu0 %v979, 96
      %v7398 = vpop.permute.xlu0 %7397
      %7399 = vrot.lane.b32.xlu0 %v982, 96
      %v7400 = vpop.permute.xlu0 %7399
      %7401 = vrot.lane.b32.xlu0 %v987, 96
      %v7402 = vpop.permute.xlu0 %7401
      %7403 = vrot.lane.b32.xlu0 %v990, 96
      %v7404 = vpop.permute.xlu0 %7403
      %7405 = vrot.lane.b32.xlu0 %v995, 96
      %v7406 = vpop.permute.xlu0 %7405
      %7407 = vrot.lane.b32.xlu0 %v998, 96
      %v7408 = vpop.permute.xlu0 %7407
      %7409 = vrot.lane.b32.xlu0 %v1003, 96
      %v7410 = vpop.permute.xlu0 %7409
      %7411 = vrot.lane.b32.xlu0 %v1006, 96
      %v7412 = vpop.permute.xlu0 %7411
      %7413 = vrot.lane.b32.xlu0 %v1011, 96
      %v7414 = vpop.permute.xlu0 %7413
      %7415 = vrot.lane.b32.xlu0 %v1014, 96
      %v7416 = vpop.permute.xlu0 %7415
      %7417 = vrot.lane.b32.xlu0 %v1019, 96
      %v7418 = vpop.permute.xlu0 %7417
      %7419 = vrot.lane.b32.xlu0 %v1022, 96
      %v7420 = vpop.permute.xlu0 %7419
      %7421 = vrot.lane.b32.xlu0 %v1027, 96
      %v7422 = vpop.permute.xlu0 %7421
      %7423 = vrot.lane.b32.xlu0 %v1030, 96
      %v7424 = vpop.permute.xlu0 %7423
      %7425 = vrot.lane.b32.xlu0 %v1035, 96
      %v7426 = vpop.permute.xlu0 %7425
      %7427 = vrot.lane.b32.xlu0 %v1038, 96
      %v7428 = vpop.permute.xlu0 %7427
      %7429 = vrot.lane.b32.xlu0 %v1043, 96
      %v7430 = vpop.permute.xlu0 %7429
      %7431 = vrot.lane.b32.xlu0 %v1046, 96
      %v7432 = vpop.permute.xlu0 %7431
      %7433 = vrot.lane.b32.xlu0 %v1051, 96
      %v7434 = vpop.permute.xlu0 %7433
      %7435 = vrot.lane.b32.xlu0 %v1054, 96
      %v7436 = vpop.permute.xlu0 %7435
      %7437 = vrot.lane.b32.xlu0 %v1059, 96
      %v7438 = vpop.permute.xlu0 %7437
      %7439 = vrot.lane.b32.xlu0 %v1062, 96
      %v7440 = vpop.permute.xlu0 %7439
      %7441 = vrot.lane.b32.xlu0 %v1067, 96
      %v7442 = vpop.permute.xlu0 %7441
      %7443 = vrot.lane.b32.xlu0 %v1070, 96
      %v7444 = vpop.permute.xlu0 %7443
      %7445 = vrot.lane.b32.xlu0 %v1075, 96
      %v7446 = vpop.permute.xlu0 %7445
      %7447 = vrot.lane.b32.xlu0 %v1078, 96
      %v7448 = vpop.permute.xlu0 %7447
      %7449 = vrot.lane.b32.xlu0 %v1083, 96
      %v7450 = vpop.permute.xlu0 %7449
      %7451 = vrot.lane.b32.xlu0 %v1086, 96
      %v7452 = vpop.permute.xlu0 %7451
      %7453 = vrot.lane.b32.xlu0 %v1091, 96
      %v7454 = vpop.permute.xlu0 %7453
      %7455 = vrot.lane.b32.xlu0 %v1094, 96
      %v7456 = vpop.permute.xlu0 %7455
      %7457 = vrot.lane.b32.xlu0 %v1099, 96
      %v7458 = vpop.permute.xlu0 %7457
      %7459 = vrot.lane.b32.xlu0 %v1102, 96
      %v7460 = vpop.permute.xlu0 %7459
      %7461 = vrot.lane.b32.xlu0 %v1107, 96
      %v7462 = vpop.permute.xlu0 %7461
      %7463 = vrot.lane.b32.xlu0 %v1110, 96
      %v7464 = vpop.permute.xlu0 %7463
      %7465 = vrot.lane.b32.xlu0 %v1115, 96
      %v7466 = vpop.permute.xlu0 %7465
      %7467 = vrot.lane.b32.xlu0 %v1118, 96
      %v7468 = vpop.permute.xlu0 %7467
      %7469 = vrot.lane.b32.xlu0 %v1123, 96
      %v7470 = vpop.permute.xlu0 %7469
      %7471 = vrot.lane.b32.xlu0 %v1126, 96
      %v7472 = vpop.permute.xlu0 %7471
      %7473 = vrot.lane.b32.xlu0 %v1131, 96
      %v7474 = vpop.permute.xlu0 %7473
      %7475 = vrot.lane.b32.xlu0 %v1134, 96
      %v7476 = vpop.permute.xlu0 %7475
      %7477 = vrot.lane.b32.xlu0 %v1139, 96
      %v7478 = vpop.permute.xlu0 %7477
      %7479 = vrot.lane.b32.xlu0 %v1142, 96
      %v7480 = vpop.permute.xlu0 %7479
      %7481 = vrot.lane.b32.xlu0 %v1147, 96
      %v7482 = vpop.permute.xlu0 %7481
      %7483 = vrot.lane.b32.xlu0 %v1150, 96
      %v7484 = vpop.permute.xlu0 %7483
      %7485 = vrot.lane.b32.xlu0 %v1155, 96
      %v7486 = vpop.permute.xlu0 %7485
      %7487 = vrot.lane.b32.xlu0 %v1158, 96
      %v7488 = vpop.permute.xlu0 %7487
      %7489 = vrot.lane.b32.xlu0 %v1163, 96
      %v7490 = vpop.permute.xlu0 %7489
      %7491 = vrot.lane.b32.xlu0 %v1166, 96
      %v7492 = vpop.permute.xlu0 %7491
      %7493 = vrot.lane.b32.xlu0 %v1171, 96
      %v7494 = vpop.permute.xlu0 %7493
      %7495 = vrot.lane.b32.xlu0 %v1174, 96
      %v7496 = vpop.permute.xlu0 %7495
      %7497 = vrot.lane.b32.xlu0 %v1179, 96
      %v7498 = vpop.permute.xlu0 %7497
      %7499 = vrot.lane.b32.xlu0 %v1182, 96
      %v7500 = vpop.permute.xlu0 %7499
      %7501 = vrot.lane.b32.xlu0 %v1187, 96
      %v7502 = vpop.permute.xlu0 %7501
      %7503 = vrot.lane.b32.xlu0 %v1190, 96
      %v7504 = vpop.permute.xlu0 %7503
      %7505 = vrot.lane.b32.xlu0 %v1195, 96
      %v7506 = vpop.permute.xlu0 %7505
      %7507 = vrot.lane.b32.xlu0 %v1198, 96
      %v7508 = vpop.permute.xlu0 %7507
      %7509 = vrot.lane.b32.xlu0 %v1203, 96
      %v7510 = vpop.permute.xlu0 %7509
      %7511 = vrot.lane.b32.xlu0 %v1206, 96
      %v7512 = vpop.permute.xlu0 %7511
      %7513 = vrot.lane.b32.xlu0 %v1211, 96
      %v7514 = vpop.permute.xlu0 %7513
      %7515 = vrot.lane.b32.xlu0 %v1214, 96
      %v7516 = vpop.permute.xlu0 %7515
      %7517 = vrot.lane.b32.xlu0 %v1219, 96
      %v7518 = vpop.permute.xlu0 %7517
      %7519 = vrot.lane.b32.xlu0 %v1222, 96
      %v7520 = vpop.permute.xlu0 %7519
      %v7585 = vadd.f32 %v7075, %v7394
      %v7586 = vadd.f32 %v7078, %v7396
      %v7587 = vadd.f32 %v7083, %v7398
      %v7588 = vadd.f32 %v7086, %v7400
      %v7589 = vadd.f32 %v7091, %v7402
      %v7590 = vadd.f32 %v7094, %v7404
      %v7591 = vadd.f32 %v7099, %v7406
      %v7592 = vadd.f32 %v7102, %v7408
      %v7593 = vadd.f32 %v7107, %v7410
      %v7594 = vadd.f32 %v7110, %v7412
      %v7595 = vadd.f32 %v7115, %v7414
      %v7596 = vadd.f32 %v7118, %v7416
      %v7597 = vadd.f32 %v7123, %v7418
      %v7598 = vadd.f32 %v7126, %v7420
      %v7599 = vadd.f32 %v7131, %v7422
      %v7600 = vadd.f32 %v7134, %v7424
      %v7601 = vadd.f32 %v7139, %v7426
      %v7602 = vadd.f32 %v7142, %v7428
      %v7603 = vadd.f32 %v7147, %v7430
      %v7604 = vadd.f32 %v7150, %v7432
      %v7605 = vadd.f32 %v7155, %v7434
      %v7606 = vadd.f32 %v7158, %v7436
      %v7607 = vadd.f32 %v7163, %v7438
      %v7608 = vadd.f32 %v7166, %v7440
      %v7609 = vadd.f32 %v7171, %v7442
      %v7610 = vadd.f32 %v7174, %v7444
      %v7611 = vadd.f32 %v7179, %v7446
      %v7612 = vadd.f32 %v7182, %v7448
      %v7613 = vadd.f32 %v7187, %v7450
      %v7614 = vadd.f32 %v7190, %v7452
      %v7615 = vadd.f32 %v7195, %v7454
      %v7616 = vadd.f32 %v7198, %v7456
      %v7617 = vadd.f32 %v7203, %v7458
      %v7618 = vadd.f32 %v7206, %v7460
      %v7619 = vadd.f32 %v7211, %v7462
      %v7620 = vadd.f32 %v7214, %v7464
      %v7621 = vadd.f32 %v7219, %v7466
      %v7622 = vadd.f32 %v7222, %v7468
      %v7623 = vadd.f32 %v7227, %v7470
      %v7624 = vadd.f32 %v7230, %v7472
      %v7625 = vadd.f32 %v7235, %v7474
      %v7626 = vadd.f32 %v7238, %v7476
      %v7627 = vadd.f32 %v7243, %v7478
      %v7628 = vadd.f32 %v7246, %v7480
      %v7629 = vadd.f32 %v7251, %v7482
      %v7630 = vadd.f32 %v7254, %v7484
      %v7631 = vadd.f32 %v7259, %v7486
      %v7632 = vadd.f32 %v7262, %v7488
      %v7633 = vadd.f32 %v7267, %v7490
      %v7634 = vadd.f32 %v7270, %v7492
      %v7635 = vadd.f32 %v7275, %v7494
      %v7636 = vadd.f32 %v7278, %v7496
      %v7637 = vadd.f32 %v7283, %v7498
      %v7638 = vadd.f32 %v7286, %v7500
      %v7639 = vadd.f32 %v7291, %v7502
      %v7640 = vadd.f32 %v7294, %v7504
      %v7641 = vadd.f32 %v7299, %v7506
      %v7642 = vadd.f32 %v7302, %v7508
      %v7643 = vadd.f32 %v7307, %v7510
      %v7644 = vadd.f32 %v7310, %v7512
      %v7645 = vadd.f32 %v7315, %v7514
      %v7646 = vadd.f32 %v7318, %v7516
      %v7647 = vadd.f32 %v7323, %v7518
      %v7648 = vadd.f32 %v7326, %v7520
      %v7649 = vpack.c.bf16 %v7586, %v7585
      %v7650 = vpack.c.bf16 %v7588, %v7587
      %v7651 = vpack.c.bf16 %v7590, %v7589
      %v7652 = vpack.c.bf16 %v7592, %v7591
      %v7653 = vpack.c.bf16 %v7594, %v7593
      %v7654 = vpack.c.bf16 %v7596, %v7595
      %v7655 = vpack.c.bf16 %v7598, %v7597
      %v7656 = vpack.c.bf16 %v7600, %v7599
      %v7657 = vpack.c.bf16 %v7602, %v7601
      %v7658 = vpack.c.bf16 %v7604, %v7603
      %v7659 = vpack.c.bf16 %v7606, %v7605
      %v7660 = vpack.c.bf16 %v7608, %v7607
      %v7661 = vpack.c.bf16 %v7610, %v7609
      %v7662 = vpack.c.bf16 %v7612, %v7611
      %v7663 = vpack.c.bf16 %v7614, %v7613
      %v7664 = vpack.c.bf16 %v7616, %v7615
      %v7665 = vpack.c.bf16 %v7618, %v7617
      %v7666 = vpack.c.bf16 %v7620, %v7619
      %v7667 = vpack.c.bf16 %v7622, %v7621
      %v7668 = vpack.c.bf16 %v7624, %v7623
      %v7669 = vpack.c.bf16 %v7626, %v7625
      %v7670 = vpack.c.bf16 %v7628, %v7627
      %v7671 = vpack.c.bf16 %v7630, %v7629
      %v7672 = vpack.c.bf16 %v7632, %v7631
      %v7673 = vpack.c.bf16 %v7634, %v7633
      %v7674 = vpack.c.bf16 %v7636, %v7635
      %v7675 = vpack.c.bf16 %v7638, %v7637
      %v7676 = vpack.c.bf16 %v7640, %v7639
      %v7677 = vpack.c.bf16 %v7642, %v7641
      %v7678 = vpack.c.bf16 %v7644, %v7643
      %v7679 = vpack.c.bf16 %v7646, %v7645
      %v7680 = vpack.c.bf16 %v7648, %v7647
      %v7681 = vld [vmem:[%s2] sm:$0xff]
      %v7682 = vld [vmem:[%s2 + $0x8] sm:$0xff]
      %v7683 = vld [vmem:[%s2 + $0x10] sm:$0xff]
      %v7684 = vld [vmem:[%s2 + $0x18] sm:$0xff]
      %v7685 = vld [vmem:[%s2 + $0x20] sm:$0xff]
      %v7686 = vld [vmem:[%s2 + $0x28] sm:$0xff]
      %v7687 = vld [vmem:[%s2 + $0x30] sm:$0xff]
      %v7688 = vld [vmem:[%s2 + $0x38] sm:$0xff]
      %v7689 = vld [vmem:[%s2 + $0x40] sm:$0xff]
      %v7690 = vld [vmem:[%s2 + $0x48] sm:$0xff]
      %v7691 = vld [vmem:[%s2 + $0x50] sm:$0xff]
      %v7692 = vld [vmem:[%s2 + $0x58] sm:$0xff]
      %v7693 = vld [vmem:[%s2 + $0x60] sm:$0xff]
      %v7694 = vld [vmem:[%s2 + $0x68] sm:$0xff]
      %v7695 = vld [vmem:[%s2 + $0x70] sm:$0xff]
      %v7696 = vld [vmem:[%s2 + $0x78] sm:$0xff]
      %v7697 = vld [vmem:[%s2 + $0x80] sm:$0xff]
      %v7698 = vld [vmem:[%s2 + $0x88] sm:$0xff]
      %v7699 = vld [vmem:[%s2 + $0x90] sm:$0xff]
      %v7700 = vld [vmem:[%s2 + $0x98] sm:$0xff]
      %v7701 = vld [vmem:[%s2 + $0xa0] sm:$0xff]
      %v7702 = vld [vmem:[%s2 + $0xa8] sm:$0xff]
      %v7703 = vld [vmem:[%s2 + $0xb0] sm:$0xff]
      %v7704 = vld [vmem:[%s2 + $0xb8] sm:$0xff]
      %v7705 = vld [vmem:[%s2 + $0xc0] sm:$0xff]
      %v7706 = vld [vmem:[%s2 + $0xc8] sm:$0xff]
      %v7707 = vld [vmem:[%s2 + $0xd0] sm:$0xff]
      %v7708 = vld [vmem:[%s2 + $0xd8] sm:$0xff]
      %v7709 = vld [vmem:[%s2 + $0xe0] sm:$0xff]
      %v7710 = vld [vmem:[%s2 + $0xe8] sm:$0xff]
      %v7711 = vld [vmem:[%s2 + $0xf0] sm:$0xff]
      %v7712 = vld [vmem:[%s2 + $0xf8] sm:$0xff]
      %v7713 = vld [vmem:[%s8] sm:$0x1]
      %v7715 = vlaneseq
      %v7716 = vshrl.u32 %v7715, 7
      %v7717 = vsub.s32 0, %v7716
      %v7718 = vrot.slane %v7713, %v7717
      %v7752 = vunpack.c.l.b16 %v7681
      %v7753 = vunpack.c.h.b16 %v7681
      %v7754 = vunpack.c.l.b16 %v7682
      %v7755 = vunpack.c.h.b16 %v7682
      %v7756 = vunpack.c.l.b16 %v7683
      %v7757 = vunpack.c.h.b16 %v7683
      %v7758 = vunpack.c.l.b16 %v7684
      %v7759 = vunpack.c.h.b16 %v7684
      %v7760 = vunpack.c.l.b16 %v7685
      %v7761 = vunpack.c.h.b16 %v7685
      %v7762 = vunpack.c.l.b16 %v7686
      %v7763 = vunpack.c.h.b16 %v7686
      %v7764 = vunpack.c.l.b16 %v7687
      %v7765 = vunpack.c.h.b16 %v7687
      %v7766 = vunpack.c.l.b16 %v7688
      %v7767 = vunpack.c.h.b16 %v7688
      %v7768 = vunpack.c.l.b16 %v7689
      %v7769 = vunpack.c.h.b16 %v7689
      %v7770 = vunpack.c.l.b16 %v7690
      %v7771 = vunpack.c.h.b16 %v7690
      %v7772 = vunpack.c.l.b16 %v7691
      %v7773 = vunpack.c.h.b16 %v7691
      %v7774 = vunpack.c.l.b16 %v7692
      %v7775 = vunpack.c.h.b16 %v7692
      %v7776 = vunpack.c.l.b16 %v7693
      %v7777 = vunpack.c.h.b16 %v7693
      %v7778 = vunpack.c.l.b16 %v7694
      %v7779 = vunpack.c.h.b16 %v7694
      %v7780 = vunpack.c.l.b16 %v7695
      %v7781 = vunpack.c.h.b16 %v7695
      %v7782 = vunpack.c.l.b16 %v7696
      %v7783 = vunpack.c.h.b16 %v7696
      %v7784 = vunpack.c.l.b16 %v7697
      %v7785 = vunpack.c.h.b16 %v7697
      %v7786 = vunpack.c.l.b16 %v7698
      %v7787 = vunpack.c.h.b16 %v7698
      %v7788 = vunpack.c.l.b16 %v7699
      %v7789 = vunpack.c.h.b16 %v7699
      %v7790 = vunpack.c.l.b16 %v7700
      %v7791 = vunpack.c.h.b16 %v7700
      %v7792 = vunpack.c.l.b16 %v7701
      %v7793 = vunpack.c.h.b16 %v7701
      %v7794 = vunpack.c.l.b16 %v7702
      %v7795 = vunpack.c.h.b16 %v7702
      %v7796 = vunpack.c.l.b16 %v7703
      %v7797 = vunpack.c.h.b16 %v7703
      %v7798 = vunpack.c.l.b16 %v7704
      %v7799 = vunpack.c.h.b16 %v7704
      %v7800 = vunpack.c.l.b16 %v7705
      %v7801 = vunpack.c.h.b16 %v7705
      %v7802 = vunpack.c.l.b16 %v7706
      %v7803 = vunpack.c.h.b16 %v7706
      %v7804 = vunpack.c.l.b16 %v7707
      %v7805 = vunpack.c.h.b16 %v7707
      %v7806 = vunpack.c.l.b16 %v7708
      %v7807 = vunpack.c.h.b16 %v7708
      %v7808 = vunpack.c.l.b16 %v7709
      %v7809 = vunpack.c.h.b16 %v7709
      %v7810 = vunpack.c.l.b16 %v7710
      %v7811 = vunpack.c.h.b16 %v7710
      %v7812 = vunpack.c.l.b16 %v7711
      %v7813 = vunpack.c.h.b16 %v7711
      %v7814 = vunpack.c.l.b16 %v7712
      %v7815 = vunpack.c.h.b16 %v7712
      %v7816 = vpack.c.b16 %v7756, %v7752
      %v7817 = vpack.c.b16 %v7757, %v7753
      %v7818 = vpack.c.b16 %v7758, %v7754
      %v7819 = vpack.c.b16 %v7759, %v7755
      %v7820 = vpack.c.b16 %v7764, %v7760
      %v7821 = vpack.c.b16 %v7765, %v7761
      %v7822 = vpack.c.b16 %v7766, %v7762
      %v7823 = vpack.c.b16 %v7767, %v7763
      %v7824 = vpack.c.b16 %v7772, %v7768
      %v7825 = vpack.c.b16 %v7773, %v7769
      %v7826 = vpack.c.b16 %v7774, %v7770
      %v7827 = vpack.c.b16 %v7775, %v7771
      %v7828 = vpack.c.b16 %v7780, %v7776
      %v7829 = vpack.c.b16 %v7781, %v7777
      %v7830 = vpack.c.b16 %v7782, %v7778
      %v7831 = vpack.c.b16 %v7783, %v7779
      %v7832 = vpack.c.b16 %v7788, %v7784
      %v7833 = vpack.c.b16 %v7789, %v7785
      %v7834 = vpack.c.b16 %v7790, %v7786
      %v7835 = vpack.c.b16 %v7791, %v7787
      %v7836 = vpack.c.b16 %v7796, %v7792
      %v7837 = vpack.c.b16 %v7797, %v7793
      %v7838 = vpack.c.b16 %v7798, %v7794
      %v7839 = vpack.c.b16 %v7799, %v7795
      %v7840 = vpack.c.b16 %v7804, %v7800
      %v7841 = vpack.c.b16 %v7805, %v7801
      %v7842 = vpack.c.b16 %v7806, %v7802
      %v7843 = vpack.c.b16 %v7807, %v7803
      %v7844 = vpack.c.b16 %v7812, %v7808
      %v7845 = vpack.c.b16 %v7813, %v7809
      %v7846 = vpack.c.b16 %v7814, %v7810
      %v7847 = vpack.c.b16 %v7815, %v7811
      %7880 = vmatprep.subr.bf16.mxu0 0
      %7881 = vmatpush1.bf16.msra.mxu0 %v7649
      %7882 = vmatprep.subr.bf16.mxu0 0
      %7883 = vmatpush1.bf16.msra.mxu0 %v7650
      %7884 = vmatprep.subr.bf16.mxu0 0
      %7885 = vmatpush1.bf16.msra.mxu0 %v7651
      %7886 = vmatprep.subr.bf16.mxu0 0
      %7887 = vmatpush1.bf16.msra.mxu0 %v7652
      %7888 = vmatprep.subr.bf16.mxu0 0
      %7889 = vmatpush1.bf16.msra.mxu0 %v7653
      %7890 = vmatprep.subr.bf16.mxu0 0
      %7891 = vmatpush1.bf16.msra.mxu0 %v7654
      %7892 = vmatprep.subr.bf16.mxu0 0
      %7893 = vmatpush1.bf16.msra.mxu0 %v7655
      %7894 = vmatprep.subr.bf16.mxu0 0
      %7895 = vmatpush1.bf16.msra.mxu0 %v7656
      %7896 = vmatprep.subr.bf16.mxu0 0
      %7897 = vmatpush1.bf16.msra.mxu0 %v7657
      %7898 = vmatprep.subr.bf16.mxu0 0
      %7899 = vmatpush1.bf16.msra.mxu0 %v7658
      %7900 = vmatprep.subr.bf16.mxu0 0
      %7901 = vmatpush1.bf16.msra.mxu0 %v7659
      %7902 = vmatprep.subr.bf16.mxu0 0
      %7903 = vmatpush1.bf16.msra.mxu0 %v7660
      %7904 = vmatprep.subr.bf16.mxu0 0
      %7905 = vmatpush1.bf16.msra.mxu0 %v7661
      %7906 = vmatprep.subr.bf16.mxu0 0
      %7907 = vmatpush1.bf16.msra.mxu0 %v7662
      %7908 = vmatprep.subr.bf16.mxu0 0
      %7909 = vmatpush1.bf16.msra.mxu0 %v7663
      %7910 = vmatprep.subr.bf16.mxu0 0
      %7911 = vmatpush1.bf16.msra.mxu0 %v7664
      %7912 = vmatprep.mubr.bf16.mxu0 %v7817
      %7913 = vmatmul.mubr.bf16.gmra.mrb[0].mxu0 %v7816
      %v7914 = vpop.f32.mrb[0].mxu0
      %v7915 = vadd.f32 %v7718, %v7914
      %v7916 = vpop.f32.mrb[0].mxu0
      %v7917 = vpop.f32.mrb[0].mxu0
      %v7918 = vadd.f32 %v7718, %v7917
      %v7919 = vpop.f32.mrb[0].mxu0
      %7920 = vmatprep.mubr.bf16.mxu0 %v7821
      %7921 = vmatmul.mubr.bf16.gmra.mrb[0].mxu0 %v7820
      %v7922 = vpop.f32.mrb[0].mxu0
      %v7923 = vadd.f32 %v7718, %v7922
      %v7924 = vpop.f32.mrb[0].mxu0
      %v7925 = vpop.f32.mrb[0].mxu0
      %v7926 = vadd.f32 %v7718, %v7925
      %v7927 = vpop.f32.mrb[0].mxu0
      %7928 = vmatprep.mubr.bf16.mxu0 %v7825
      %7929 = vmatmul.mubr.bf16.gmra.mrb[0].mxu0 %v7824
      %v7930 = vpop.f32.mrb[0].mxu0
      %v7931 = vadd.f32 %v7718, %v7930
      %v7932 = vpop.f32.mrb[0].mxu0
      %v7933 = vpop.f32.mrb[0].mxu0
      %v7934 = vadd.f32 %v7718, %v7933
      %v7935 = vpop.f32.mrb[0].mxu0
      %7936 = vmatprep.mubr.bf16.mxu0 %v7829
      %7937 = vmatmul.mubr.bf16.gmra.mrb[0].mxu0 %v7828
      %v7938 = vpop.f32.mrb[0].mxu0
      %v7939 = vadd.f32 %v7718, %v7938
      %v7940 = vpop.f32.mrb[0].mxu0
      %v7941 = vpop.f32.mrb[0].mxu0
      %v7942 = vadd.f32 %v7718, %v7941
      %v7943 = vpop.f32.mrb[0].mxu0
      %7944 = vmatprep.mubr.bf16.mxu0 %v7833
      %7945 = vmatmul.mubr.bf16.gmra.mrb[0].mxu0 %v7832
      %v7946 = vpop.f32.mrb[0].mxu0
      %v7947 = vadd.f32 %v7718, %v7946
      %v7948 = vpop.f32.mrb[0].mxu0
      %v7949 = vpop.f32.mrb[0].mxu0
      %v7950 = vadd.f32 %v7718, %v7949
      %v7951 = vpop.f32.mrb[0].mxu0
      %7952 = vmatprep.mubr.bf16.mxu0 %v7837
      %7953 = vmatmul.mubr.bf16.gmra.mrb[0].mxu0 %v7836
      %v7954 = vpop.f32.mrb[0].mxu0
      %v7955 = vadd.f32 %v7718, %v7954
      %v7956 = vpop.f32.mrb[0].mxu0
      %v7957 = vpop.f32.mrb[0].mxu0
      %v7958 = vadd.f32 %v7718, %v7957
      %v7959 = vpop.f32.mrb[0].mxu0
      %7960 = vmatprep.mubr.bf16.mxu0 %v7841
      %7961 = vmatmul.mubr.bf16.gmra.mrb[0].mxu0 %v7840
      %v7962 = vpop.f32.mrb[0].mxu0
      %v7963 = vadd.f32 %v7718, %v7962
      %v7964 = vpop.f32.mrb[0].mxu0
      %v7965 = vpop.f32.mrb[0].mxu0
      %v7966 = vadd.f32 %v7718, %v7965
      %v7967 = vpop.f32.mrb[0].mxu0
      %7968 = vmatprep.mubr.bf16.mxu0 %v7845
      %7969 = vmatmul.mubr.bf16.gmra.mrb[0].mxu0 %v7844
      %v7970 = vpop.f32.mrb[0].mxu0
      %v7971 = vadd.f32 %v7718, %v7970
      %v7972 = vpop.f32.mrb[0].mxu0
      %v7973 = vpop.f32.mrb[0].mxu0
      %v7974 = vadd.f32 %v7718, %v7973
      %v7975 = vpop.f32.mrb[0].mxu0
      %7976 = vdwg.mxu0
      %7977 = vmatprep.subr.bf16.mxu0 0
      %7978 = vmatpush1.bf16.msra.mxu0 %v7665
      %7979 = vmatprep.subr.bf16.mxu0 0
      %7980 = vmatpush1.bf16.msra.mxu0 %v7666
      %7981 = vmatprep.subr.bf16.mxu0 0
      %7982 = vmatpush1.bf16.msra.mxu0 %v7667
      %7983 = vmatprep.subr.bf16.mxu0 0
      %7984 = vmatpush1.bf16.msra.mxu0 %v7668
      %7985 = vmatprep.subr.bf16.mxu0 0
      %7986 = vmatpush1.bf16.msra.mxu0 %v7669
      %7987 = vmatprep.subr.bf16.mxu0 0
      %7988 = vmatpush1.bf16.msra.mxu0 %v7670
      %7989 = vmatprep.subr.bf16.mxu0 0
      %7990 = vmatpush1.bf16.msra.mxu0 %v7671
      %7991 = vmatprep.subr.bf16.mxu0 0
      %7992 = vmatpush1.bf16.msra.mxu0 %v7672
      %7993 = vmatprep.subr.bf16.mxu0 0
      %7994 = vmatpush1.bf16.msra.mxu0 %v7673
      %7995 = vmatprep.subr.bf16.mxu0 0
      %7996 = vmatpush1.bf16.msra.mxu0 %v7674
      %7997 = vmatprep.subr.bf16.mxu0 0
      %7998 = vmatpush1.bf16.msra.mxu0 %v7675
      %7999 = vmatprep.subr.bf16.mxu0 0
      %8000 = vmatpush1.bf16.msra.mxu0 %v7676
      %8001 = vmatprep.subr.bf16.mxu0 0
      %8002 = vmatpush1.bf16.msra.mxu0 %v7677
      %8003 = vmatprep.subr.bf16.mxu0 0
      %8004 = vmatpush1.bf16.msra.mxu0 %v7678
      %8005 = vmatprep.subr.bf16.mxu0 0
      %8006 = vmatpush1.bf16.msra.mxu0 %v7679
      %8007 = vmatprep.subr.bf16.mxu0 0
      %8008 = vmatpush1.bf16.msra.mxu0 %v7680
      %8009 = vmatprep.mubr.bf16.mxu0 %v7819
      %8010 = vmatmul.mubr.bf16.gmra.mrb[0].mxu0 %v7818
      %v8011 = vpop.f32.mrb[0].mxu0
      %v8012 = vadd.f32 %v7915, %v8011
      %v8013 = vpop.f32.mrb[0].mxu0
      %v8014 = vpop.f32.mrb[0].mxu0
      %v8015 = vadd.f32 %v7918, %v8014
      %v8016 = vpop.f32.mrb[0].mxu0
      %8017 = vmatprep.mubr.bf16.mxu0 %v7823
      %8018 = vmatmul.mubr.bf16.gmra.mrb[0].mxu0 %v7822
      %v8019 = vpop.f32.mrb[0].mxu0
      %v8020 = vadd.f32 %v7923, %v8019
      %v8021 = vpop.f32.mrb[0].mxu0
      %v8022 = vpop.f32.mrb[0].mxu0
      %v8023 = vadd.f32 %v7926, %v8022
      %v8024 = vpop.f32.mrb[0].mxu0
      %8025 = vmatprep.mubr.bf16.mxu0 %v7827
      %8026 = vmatmul.mubr.bf16.gmra.mrb[0].mxu0 %v7826
      %v8027 = vpop.f32.mrb[0].mxu0
      %v8028 = vadd.f32 %v7931, %v8027
      %v8029 = vpop.f32.mrb[0].mxu0
      %v8030 = vpop.f32.mrb[0].mxu0
      %v8031 = vadd.f32 %v7934, %v8030
      %v8032 = vpop.f32.mrb[0].mxu0
      %8033 = vmatprep.mubr.bf16.mxu0 %v7831
      %8034 = vmatmul.mubr.bf16.gmra.mrb[0].mxu0 %v7830
      %v8035 = vpop.f32.mrb[0].mxu0
      %v8036 = vadd.f32 %v7939, %v8035
      %v8037 = vpop.f32.mrb[0].mxu0
      %v8038 = vpop.f32.mrb[0].mxu0
      %v8039 = vadd.f32 %v7942, %v8038
      %v8040 = vpop.f32.mrb[0].mxu0
      %8041 = vmatprep.mubr.bf16.mxu0 %v7835
      %8042 = vmatmul.mubr.bf16.gmra.mrb[0].mxu0 %v7834
      %v8043 = vpop.f32.mrb[0].mxu0
      %v8044 = vadd.f32 %v7947, %v8043
      %v8045 = vpop.f32.mrb[0].mxu0
      %v8046 = vpop.f32.mrb[0].mxu0
      %v8047 = vadd.f32 %v7950, %v8046
      %v8048 = vpop.f32.mrb[0].mxu0
      %8049 = vmatprep.mubr.bf16.mxu0 %v7839
      %8050 = vmatmul.mubr.bf16.gmra.mrb[0].mxu0 %v7838
      %v8051 = vpop.f32.mrb[0].mxu0
      %v8052 = vadd.f32 %v7955, %v8051
      %v8053 = vpop.f32.mrb[0].mxu0
      %v8054 = vpop.f32.mrb[0].mxu0
      %v8055 = vadd.f32 %v7958, %v8054
      %v8056 = vpop.f32.mrb[0].mxu0
      %8057 = vmatprep.mubr.bf16.mxu0 %v7843
      %8058 = vmatmul.mubr.bf16.gmra.mrb[0].mxu0 %v7842
      %v8059 = vpop.f32.mrb[0].mxu0
      %v8060 = vadd.f32 %v7963, %v8059
      %v8061 = vpop.f32.mrb[0].mxu0
      %v8062 = vpop.f32.mrb[0].mxu0
      %v8063 = vadd.f32 %v7966, %v8062
      %v8064 = vpop.f32.mrb[0].mxu0
      %8065 = vmatprep.mubr.bf16.mxu0 %v7847
      %8066 = vmatmul.mubr.bf16.gmra.mrb[0].mxu0 %v7846
      %v8067 = vpop.f32.mrb[0].mxu0
      %v8068 = vadd.f32 %v7971, %v8067
      %v8069 = vpop.f32.mrb[0].mxu0
      %v8070 = vpop.f32.mrb[0].mxu0
      %v8071 = vadd.f32 %v7974, %v8070
      %v8072 = vpop.f32.mrb[0].mxu0
      %8073 = vdwg.mxu0
      %vm8074 = vcmp.gt.f32.partialorder %v8012, 0.0
      %vm8075 = vcmp.gt.f32.partialorder %v8015, 0.0
      %vm8076 = vcmp.gt.f32.partialorder %v8020, 0.0
      %vm8077 = vcmp.gt.f32.partialorder %v8023, 0.0
      %vm8078 = vcmp.gt.f32.partialorder %v8028, 0.0
      %vm8079 = vcmp.gt.f32.partialorder %v8031, 0.0
      %vm8080 = vcmp.gt.f32.partialorder %v8036, 0.0
      %vm8081 = vcmp.gt.f32.partialorder %v8039, 0.0
      %vm8082 = vcmp.gt.f32.partialorder %v8044, 0.0
      %vm8083 = vcmp.gt.f32.partialorder %v8047, 0.0
      %vm8084 = vcmp.gt.f32.partialorder %v8052, 0.0
      %vm8085 = vcmp.gt.f32.partialorder %v8055, 0.0
      %vm8086 = vcmp.gt.f32.partialorder %v8060, 0.0
      %vm8087 = vcmp.gt.f32.partialorder %v8063, 0.0
      %vm8088 = vcmp.gt.f32.partialorder %v8068, 0.0
      %vm8089 = vcmp.gt.f32.partialorder %v8071, 0.0
      %v8090 = vmul.f32 %v8012, 0.2
      %v8091 = vmul.f32 %v8015, 0.2
      %v8092 = vmul.f32 %v8020, 0.2
      %v8093 = vmul.f32 %v8023, 0.2
      %v8094 = vmul.f32 %v8028, 0.2
      %v8095 = vmul.f32 %v8031, 0.2
      %v8096 = vmul.f32 %v8036, 0.2
      %v8097 = vmul.f32 %v8039, 0.2
      %v8098 = vmul.f32 %v8044, 0.2
      %v8099 = vmul.f32 %v8047, 0.2
      %v8100 = vmul.f32 %v8052, 0.2
      %v8101 = vmul.f32 %v8055, 0.2
      %v8102 = vmul.f32 %v8060, 0.2
      %v8103 = vmul.f32 %v8063, 0.2
      %v8104 = vmul.f32 %v8068, 0.2
      %v8105 = vmul.f32 %v8071, 0.2
      %v8106 = vsel %vm8074, %v8012, %v8090
      %v8107 = vsel %vm8075, %v8015, %v8091
      %v8108 = vsel %vm8076, %v8020, %v8092
      %v8109 = vsel %vm8077, %v8023, %v8093
      %v8110 = vsel %vm8078, %v8028, %v8094
      %v8111 = vsel %vm8079, %v8031, %v8095
      %v8112 = vsel %vm8080, %v8036, %v8096
      %v8113 = vsel %vm8081, %v8039, %v8097
      %v8114 = vsel %vm8082, %v8044, %v8098
      %v8115 = vsel %vm8083, %v8047, %v8099
      %v8116 = vsel %vm8084, %v8052, %v8100
      %v8117 = vsel %vm8085, %v8055, %v8101
      %v8118 = vsel %vm8086, %v8060, %v8102
      %v8119 = vsel %vm8087, %v8063, %v8103
      %v8120 = vsel %vm8088, %v8068, %v8104
      %v8121 = vsel %vm8089, %v8071, %v8105
      %8122 = vst.msk [vmem:[#allocation3 + $0x18] sm:$0xff] %vm839, %v8106
      %8123 = vst.msk [vmem:[#allocation3 + $0x20] sm:$0xff] %vm839, %v8107
      %8124 = vst.msk [vmem:[#allocation3 + $0x28] sm:$0xff] %vm839, %v8108
      %8125 = vst.msk [vmem:[#allocation3 + $0x30] sm:$0xff] %vm839, %v8109
      %8126 = vst.msk [vmem:[#allocation3 + $0x38] sm:$0xff] %vm839, %v8110
      %8127 = vst.msk [vmem:[#allocation3 + $0x40] sm:$0xff] %vm839, %v8111
      %8128 = vst.msk [vmem:[#allocation3 + $0x48] sm:$0xff] %vm839, %v8112
      %8129 = vst.msk [vmem:[#allocation3 + $0x50] sm:$0xff] %vm839, %v8113
      %8130 = vst.msk [vmem:[#allocation3 + $0x88] sm:$0xff] %vm839, %v8114
      %8131 = vst.msk [vmem:[#allocation3 + $0x90] sm:$0xff] %vm839, %v8115
      %8132 = vst.msk [vmem:[#allocation3 + $0x98] sm:$0xff] %vm839, %v8116
      %8133 = vst.msk [vmem:[#allocation3 + $0xa0] sm:$0xff] %vm839, %v8117
      %8134 = vst.msk [vmem:[#allocation3 + $0xa8] sm:$0xff] %vm839, %v8118
      %8135 = vst.msk [vmem:[#allocation3 + $0xb0] sm:$0xff] %vm839, %v8119
      %8136 = vst.msk [vmem:[#allocation3 + $0xb8] sm:$0xff] %vm839, %v8120
      %8137 = vst.msk [vmem:[#allocation3 + $0xc0] sm:$0xff] %vm839, %v8121
      %v8138 = vand.u32 %v2030, 63
      %v8139 = vand.u32 %v2031, 63
      %v8140 = vand.u32 %v2032, 63
      %v8141 = vand.u32 %v2033, 63
      %v8142 = vand.u32 %v2034, 63
      %v8143 = vand.u32 %v2035, 63
      %v8144 = vand.u32 %v2036, 63
      %v8145 = vand.u32 %v2037, 63
      %v8146 = vand.u32 %v2038, 63
      %v8147 = vand.u32 %v2039, 63
      %v8148 = vand.u32 %v2040, 63
      %v8149 = vand.u32 %v2041, 63
      %v8150 = vand.u32 %v2042, 63
      %v8151 = vand.u32 %v2043, 63
      %v8152 = vand.u32 %v2044, 63
      %v8153 = vand.u32 %v2045, 63
      %v8154 = vand.u32 %v2030, 7
      %v8155 = vand.u32 %v2031, 7
      %v8156 = vand.u32 %v2032, 7
      %v8157 = vand.u32 %v2033, 7
      %v8158 = vand.u32 %v2034, 7
      %v8159 = vand.u32 %v2035, 7
      %v8160 = vand.u32 %v2036, 7
      %v8161 = vand.u32 %v2037, 7
      %v8162 = vand.u32 %v2038, 7
      %v8163 = vand.u32 %v2039, 7
      %v8164 = vand.u32 %v2040, 7
      %v8165 = vand.u32 %v2041, 7
      %v8166 = vand.u32 %v2042, 7
      %v8167 = vand.u32 %v2043, 7
      %v8168 = vand.u32 %v2044, 7
      %v8169 = vand.u32 %v2045, 7
      %vm8170 = vcmp.ge.s32.totalorder %v8138, 8
      %vm8171 = vcmp.ge.s32.totalorder %v8139, 8
      %vm8172 = vcmp.ge.s32.totalorder %v8140, 8
      %vm8173 = vcmp.ge.s32.totalorder %v8141, 8
      %vm8174 = vcmp.ge.s32.totalorder %v8142, 8
      %vm8175 = vcmp.ge.s32.totalorder %v8143, 8
      %vm8176 = vcmp.ge.s32.totalorder %v8144, 8
      %vm8177 = vcmp.ge.s32.totalorder %v8145, 8
      %vm8178 = vcmp.ge.s32.totalorder %v8146, 8
      %vm8179 = vcmp.ge.s32.totalorder %v8147, 8
      %vm8180 = vcmp.ge.s32.totalorder %v8148, 8
      %vm8181 = vcmp.ge.s32.totalorder %v8149, 8
      %vm8182 = vcmp.ge.s32.totalorder %v8150, 8
      %vm8183 = vcmp.ge.s32.totalorder %v8151, 8
      %vm8184 = vcmp.ge.s32.totalorder %v8152, 8
      %vm8185 = vcmp.ge.s32.totalorder %v8153, 8
      %vm8186 = vcmp.lt.s32.totalorder %v8138, 56
      %vm8187 = vcmp.lt.s32.totalorder %v8139, 56
      %vm8188 = vcmp.lt.s32.totalorder %v8140, 56
      %vm8189 = vcmp.lt.s32.totalorder %v8141, 56
      %vm8190 = vcmp.lt.s32.totalorder %v8142, 56
      %vm8191 = vcmp.lt.s32.totalorder %v8143, 56
      %vm8192 = vcmp.lt.s32.totalorder %v8144, 56
      %vm8193 = vcmp.lt.s32.totalorder %v8145, 56
      %vm8194 = vcmp.lt.s32.totalorder %v8146, 56
      %vm8195 = vcmp.lt.s32.totalorder %v8147, 56
      %vm8196 = vcmp.lt.s32.totalorder %v8148, 56
      %vm8197 = vcmp.lt.s32.totalorder %v8149, 56
      %vm8198 = vcmp.lt.s32.totalorder %v8150, 56
      %vm8199 = vcmp.lt.s32.totalorder %v8151, 56
      %vm8200 = vcmp.lt.s32.totalorder %v8152, 56
      %vm8201 = vcmp.lt.s32.totalorder %v8153, 56
      %vm8202 = vcmp.ge.s32.totalorder %v8154, 1
      %vm8203 = vcmp.ge.s32.totalorder %v8155, 1
      %vm8204 = vcmp.ge.s32.totalorder %v8156, 1
      %vm8205 = vcmp.ge.s32.totalorder %v8157, 1
      %vm8206 = vcmp.ge.s32.totalorder %v8158, 1
      %vm8207 = vcmp.ge.s32.totalorder %v8159, 1
      %vm8208 = vcmp.ge.s32.totalorder %v8160, 1
      %vm8209 = vcmp.ge.s32.totalorder %v8161, 1
      %vm8210 = vcmp.ge.s32.totalorder %v8162, 1
      %vm8211 = vcmp.ge.s32.totalorder %v8163, 1
      %vm8212 = vcmp.ge.s32.totalorder %v8164, 1
      %vm8213 = vcmp.ge.s32.totalorder %v8165, 1
      %vm8214 = vcmp.ge.s32.totalorder %v8166, 1
      %vm8215 = vcmp.ge.s32.totalorder %v8167, 1
      %vm8216 = vcmp.ge.s32.totalorder %v8168, 1
      %vm8217 = vcmp.ge.s32.totalorder %v8169, 1
      %vm8218 = vcmp.le.s32.totalorder %v8154, 6
      %vm8219 = vcmp.le.s32.totalorder %v8155, 6
      %vm8220 = vcmp.le.s32.totalorder %v8156, 6
      %vm8221 = vcmp.le.s32.totalorder %v8157, 6
      %vm8222 = vcmp.le.s32.totalorder %v8158, 6
      %vm8223 = vcmp.le.s32.totalorder %v8159, 6
      %vm8224 = vcmp.le.s32.totalorder %v8160, 6
      %vm8225 = vcmp.le.s32.totalorder %v8161, 6
      %vm8226 = vcmp.le.s32.totalorder %v8162, 6
      %vm8227 = vcmp.le.s32.totalorder %v8163, 6
      %vm8228 = vcmp.le.s32.totalorder %v8164, 6
      %vm8229 = vcmp.le.s32.totalorder %v8165, 6
      %vm8230 = vcmp.le.s32.totalorder %v8166, 6
      %vm8231 = vcmp.le.s32.totalorder %v8167, 6
      %vm8232 = vcmp.le.s32.totalorder %v8168, 6
      %vm8233 = vcmp.le.s32.totalorder %v8169, 6
      %v8234 = vld [vmem:[#allocation3 + $0xf] sm:$0xff]
      %v8235 = vld [vmem:[#allocation3 + $0x17] sm:$0xff]
      %v8236 = vld [vmem:[#allocation3 + $0x1f] sm:$0xff]
      %v8237 = vld [vmem:[#allocation3 + $0x27] sm:$0xff]
      %v8238 = vld [vmem:[#allocation3 + $0x2f] sm:$0xff]
      %v8239 = vld [vmem:[#allocation3 + $0x37] sm:$0xff]
      %v8240 = vld [vmem:[#allocation3 + $0x3f] sm:$0xff]
      %v8241 = vld [vmem:[#allocation3 + $0x47] sm:$0xff]
      %v8242 = vld [vmem:[#allocation3 + $0x7f] sm:$0xff]
      %v8243 = vld [vmem:[#allocation3 + $0x87] sm:$0xff]
      %v8244 = vld [vmem:[#allocation3 + $0x8f] sm:$0xff]
      %v8245 = vld [vmem:[#allocation3 + $0x97] sm:$0xff]
      %v8246 = vld [vmem:[#allocation3 + $0x9f] sm:$0xff]
      %v8247 = vld [vmem:[#allocation3 + $0xa7] sm:$0xff]
      %v8248 = vld [vmem:[#allocation3 + $0xaf] sm:$0xff]
      %v8249 = vld [vmem:[#allocation3 + $0xb7] sm:$0xff]
      %vm8250 = vmand %vm8170, %vm8202
      %vm8251 = vmand %vm8171, %vm8203
      %vm8252 = vmand %vm8172, %vm8204
      %vm8253 = vmand %vm8173, %vm8205
      %vm8254 = vmand %vm8174, %vm8206
      %vm8255 = vmand %vm8175, %vm8207
      %vm8256 = vmand %vm8176, %vm8208
      %vm8257 = vmand %vm8177, %vm8209
      %vm8258 = vmand %vm8178, %vm8210
      %vm8259 = vmand %vm8179, %vm8211
      %vm8260 = vmand %vm8180, %vm8212
      %vm8261 = vmand %vm8181, %vm8213
      %vm8262 = vmand %vm8182, %vm8214
      %vm8263 = vmand %vm8183, %vm8215
      %vm8264 = vmand %vm8184, %vm8216
      %vm8265 = vmand %vm8185, %vm8217
      %v8266 = vsel %vm8250, 1, 0
      %v8267 = vsel %vm8251, 1, 0
      %v8268 = vsel %vm8252, 1, 0
      %v8269 = vsel %vm8253, 1, 0
      %v8270 = vsel %vm8254, 1, 0
      %v8271 = vsel %vm8255, 1, 0
      %v8272 = vsel %vm8256, 1, 0
      %v8273 = vsel %vm8257, 1, 0
      %v8274 = vsel %vm8258, 1, 0
      %v8275 = vsel %vm8259, 1, 0
      %v8276 = vsel %vm8260, 1, 0
      %v8277 = vsel %vm8261, 1, 0
      %v8278 = vsel %vm8262, 1, 0
      %v8279 = vsel %vm8263, 1, 0
      %v8280 = vsel %vm8264, 1, 0
      %v8281 = vsel %vm8265, 1, 0
      %vm8282 = vcmp.eq.s32.totalorder %v8266, 1
      %vm8283 = vcmp.eq.s32.totalorder %v8267, 1
      %vm8284 = vcmp.eq.s32.totalorder %v8268, 1
      %vm8285 = vcmp.eq.s32.totalorder %v8269, 1
      %vm8286 = vcmp.eq.s32.totalorder %v8270, 1
      %vm8287 = vcmp.eq.s32.totalorder %v8271, 1
      %vm8288 = vcmp.eq.s32.totalorder %v8272, 1
      %vm8289 = vcmp.eq.s32.totalorder %v8273, 1
      %vm8290 = vcmp.eq.s32.totalorder %v8274, 1
      %vm8291 = vcmp.eq.s32.totalorder %v8275, 1
      %vm8292 = vcmp.eq.s32.totalorder %v8276, 1
      %vm8293 = vcmp.eq.s32.totalorder %v8277, 1
      %vm8294 = vcmp.eq.s32.totalorder %v8278, 1
      %vm8295 = vcmp.eq.s32.totalorder %v8279, 1
      %vm8296 = vcmp.eq.s32.totalorder %v8280, 1
      %vm8297 = vcmp.eq.s32.totalorder %v8281, 1
      %v8298 = vsel %vm8282, %v8234, 0.0
      %v8299 = vsel %vm8283, %v8235, 0.0
      %v8300 = vsel %vm8284, %v8236, 0.0
      %v8301 = vsel %vm8285, %v8237, 0.0
      %v8302 = vsel %vm8286, %v8238, 0.0
      %v8303 = vsel %vm8287, %v8239, 0.0
      %v8304 = vsel %vm8288, %v8240, 0.0
      %v8305 = vsel %vm8289, %v8241, 0.0
      %v8306 = vsel %vm8290, %v8242, 0.0
      %v8307 = vsel %vm8291, %v8243, 0.0
      %v8308 = vsel %vm8292, %v8244, 0.0
      %v8309 = vsel %vm8293, %v8245, 0.0
      %v8310 = vsel %vm8294, %v8246, 0.0
      %v8311 = vsel %vm8295, %v8247, 0.0
      %v8312 = vsel %vm8296, %v8248, 0.0
      %v8313 = vsel %vm8297, %v8249, 0.0
      %v8314 = vld [vmem:[#allocation3 + $0x10] sm:$0xff]
      %v8315 = vld [vmem:[#allocation3 + $0x18] sm:$0xff]
      %v8316 = vld [vmem:[#allocation3 + $0x20] sm:$0xff]
      %v8317 = vld [vmem:[#allocation3 + $0x28] sm:$0xff]
      %v8318 = vld [vmem:[#allocation3 + $0x30] sm:$0xff]
      %v8319 = vld [vmem:[#allocation3 + $0x38] sm:$0xff]
      %v8320 = vld [vmem:[#allocation3 + $0x40] sm:$0xff]
      %v8321 = vld [vmem:[#allocation3 + $0x48] sm:$0xff]
      %v8322 = vld [vmem:[#allocation3 + $0x80] sm:$0xff]
      %v8323 = vld [vmem:[#allocation3 + $0x88] sm:$0xff]
      %v8324 = vld [vmem:[#allocation3 + $0x90] sm:$0xff]
      %v8325 = vld [vmem:[#allocation3 + $0x98] sm:$0xff]
      %v8326 = vld [vmem:[#allocation3 + $0xa0] sm:$0xff]
      %v8327 = vld [vmem:[#allocation3 + $0xa8] sm:$0xff]
      %v8328 = vld [vmem:[#allocation3 + $0xb0] sm:$0xff]
      %v8329 = vld [vmem:[#allocation3 + $0xb8] sm:$0xff]
      %v8330 = vsel %vm8170, 1, 0
      %v8331 = vsel %vm8171, 1, 0
      %v8332 = vsel %vm8172, 1, 0
      %v8333 = vsel %vm8173, 1, 0
      %v8334 = vsel %vm8174, 1, 0
      %v8335 = vsel %vm8175, 1, 0
      %v8336 = vsel %vm8176, 1, 0
      %v8337 = vsel %vm8177, 1, 0
      %v8338 = vsel %vm8178, 1, 0
      %v8339 = vsel %vm8179, 1, 0
      %v8340 = vsel %vm8180, 1, 0
      %v8341 = vsel %vm8181, 1, 0
      %v8342 = vsel %vm8182, 1, 0
      %v8343 = vsel %vm8183, 1, 0
      %v8344 = vsel %vm8184, 1, 0
      %v8345 = vsel %vm8185, 1, 0
      %vm8346 = vcmp.eq.s32.totalorder %v8330, 1
      %vm8347 = vcmp.eq.s32.totalorder %v8331, 1
      %vm8348 = vcmp.eq.s32.totalorder %v8332, 1
      %vm8349 = vcmp.eq.s32.totalorder %v8333, 1
      %vm8350 = vcmp.eq.s32.totalorder %v8334, 1
      %vm8351 = vcmp.eq.s32.totalorder %v8335, 1
      %vm8352 = vcmp.eq.s32.totalorder %v8336, 1
      %vm8353 = vcmp.eq.s32.totalorder %v8337, 1
      %vm8354 = vcmp.eq.s32.totalorder %v8338, 1
      %vm8355 = vcmp.eq.s32.totalorder %v8339, 1
      %vm8356 = vcmp.eq.s32.totalorder %v8340, 1
      %vm8357 = vcmp.eq.s32.totalorder %v8341, 1
      %vm8358 = vcmp.eq.s32.totalorder %v8342, 1
      %vm8359 = vcmp.eq.s32.totalorder %v8343, 1
      %vm8360 = vcmp.eq.s32.totalorder %v8344, 1
      %vm8361 = vcmp.eq.s32.totalorder %v8345, 1
      %v8362 = vsel %vm8346, %v8314, 0.0
      %v8363 = vsel %vm8347, %v8315, 0.0
      %v8364 = vsel %vm8348, %v8316, 0.0
      %v8365 = vsel %vm8349, %v8317, 0.0
      %v8366 = vsel %vm8350, %v8318, 0.0
      %v8367 = vsel %vm8351, %v8319, 0.0
      %v8368 = vsel %vm8352, %v8320, 0.0
      %v8369 = vsel %vm8353, %v8321, 0.0
      %v8370 = vsel %vm8354, %v8322, 0.0
      %v8371 = vsel %vm8355, %v8323, 0.0
      %v8372 = vsel %vm8356, %v8324, 0.0
      %v8373 = vsel %vm8357, %v8325, 0.0
      %v8374 = vsel %vm8358, %v8326, 0.0
      %v8375 = vsel %vm8359, %v8327, 0.0
      %v8376 = vsel %vm8360, %v8328, 0.0
      %v8377 = vsel %vm8361, %v8329, 0.0
      %v8378 = vld [vmem:[#allocation3 + $0x11] sm:$0xff]
      %v8379 = vld [vmem:[#allocation3 + $0x19] sm:$0xff]
      %v8380 = vld [vmem:[#allocation3 + $0x21] sm:$0xff]
      %v8381 = vld [vmem:[#allocation3 + $0x29] sm:$0xff]
      %v8382 = vld [vmem:[#allocation3 + $0x31] sm:$0xff]
      %v8383 = vld [vmem:[#allocation3 + $0x39] sm:$0xff]
      %v8384 = vld [vmem:[#allocation3 + $0x41] sm:$0xff]
      %v8385 = vld [vmem:[#allocation3 + $0x49] sm:$0xff]
      %v8386 = vld [vmem:[#allocation3 + $0x81] sm:$0xff]
      %v8387 = vld [vmem:[#allocation3 + $0x89] sm:$0xff]
      %v8388 = vld [vmem:[#allocation3 + $0x91] sm:$0xff]
      %v8389 = vld [vmem:[#allocation3 + $0x99] sm:$0xff]
      %v8390 = vld [vmem:[#allocation3 + $0xa1] sm:$0xff]
      %v8391 = vld [vmem:[#allocation3 + $0xa9] sm:$0xff]
      %v8392 = vld [vmem:[#allocation3 + $0xb1] sm:$0xff]
      %v8393 = vld [vmem:[#allocation3 + $0xb9] sm:$0xff]
      %vm8394 = vmand %vm8170, %vm8218
      %vm8395 = vmand %vm8171, %vm8219
      %vm8396 = vmand %vm8172, %vm8220
      %vm8397 = vmand %vm8173, %vm8221
      %vm8398 = vmand %vm8174, %vm8222
      %vm8399 = vmand %vm8175, %vm8223
      %vm8400 = vmand %vm8176, %vm8224
      %vm8401 = vmand %vm8177, %vm8225
      %vm8402 = vmand %vm8178, %vm8226
      %vm8403 = vmand %vm8179, %vm8227
      %vm8404 = vmand %vm8180, %vm8228
      %vm8405 = vmand %vm8181, %vm8229
      %vm8406 = vmand %vm8182, %vm8230
      %vm8407 = vmand %vm8183, %vm8231
      %vm8408 = vmand %vm8184, %vm8232
      %vm8409 = vmand %vm8185, %vm8233
      %v8410 = vsel %vm8394, 1, 0
      %v8411 = vsel %vm8395, 1, 0
      %v8412 = vsel %vm8396, 1, 0
      %v8413 = vsel %vm8397, 1, 0
      %v8414 = vsel %vm8398, 1, 0
      %v8415 = vsel %vm8399, 1, 0
      %v8416 = vsel %vm8400, 1, 0
      %v8417 = vsel %vm8401, 1, 0
      %v8418 = vsel %vm8402, 1, 0
      %v8419 = vsel %vm8403, 1, 0
      %v8420 = vsel %vm8404, 1, 0
      %v8421 = vsel %vm8405, 1, 0
      %v8422 = vsel %vm8406, 1, 0
      %v8423 = vsel %vm8407, 1, 0
      %v8424 = vsel %vm8408, 1, 0
      %v8425 = vsel %vm8409, 1, 0
      %vm8426 = vcmp.eq.s32.totalorder %v8410, 1
      %vm8427 = vcmp.eq.s32.totalorder %v8411, 1
      %vm8428 = vcmp.eq.s32.totalorder %v8412, 1
      %vm8429 = vcmp.eq.s32.totalorder %v8413, 1
      %vm8430 = vcmp.eq.s32.totalorder %v8414, 1
      %vm8431 = vcmp.eq.s32.totalorder %v8415, 1
      %vm8432 = vcmp.eq.s32.totalorder %v8416, 1
      %vm8433 = vcmp.eq.s32.totalorder %v8417, 1
      %vm8434 = vcmp.eq.s32.totalorder %v8418, 1
      %vm8435 = vcmp.eq.s32.totalorder %v8419, 1
      %vm8436 = vcmp.eq.s32.totalorder %v8420, 1
      %vm8437 = vcmp.eq.s32.totalorder %v8421, 1
      %vm8438 = vcmp.eq.s32.totalorder %v8422, 1
      %vm8439 = vcmp.eq.s32.totalorder %v8423, 1
      %vm8440 = vcmp.eq.s32.totalorder %v8424, 1
      %vm8441 = vcmp.eq.s32.totalorder %v8425, 1
      %v8442 = vsel %vm8426, %v8378, 0.0
      %v8443 = vsel %vm8427, %v8379, 0.0
      %v8444 = vsel %vm8428, %v8380, 0.0
      %v8445 = vsel %vm8429, %v8381, 0.0
      %v8446 = vsel %vm8430, %v8382, 0.0
      %v8447 = vsel %vm8431, %v8383, 0.0
      %v8448 = vsel %vm8432, %v8384, 0.0
      %v8449 = vsel %vm8433, %v8385, 0.0
      %v8450 = vsel %vm8434, %v8386, 0.0
      %v8451 = vsel %vm8435, %v8387, 0.0
      %v8452 = vsel %vm8436, %v8388, 0.0
      %v8453 = vsel %vm8437, %v8389, 0.0
      %v8454 = vsel %vm8438, %v8390, 0.0
      %v8455 = vsel %vm8439, %v8391, 0.0
      %v8456 = vsel %vm8440, %v8392, 0.0
      %v8457 = vsel %vm8441, %v8393, 0.0
      %v8458 = vld [vmem:[#allocation3 + $0x4f] sm:$0xff]
      %v8459 = vld [vmem:[#allocation3 + $0xbf] sm:$0xff]
      %v8460 = vsel %vm8202, 1, 0
      %v8461 = vsel %vm8203, 1, 0
      %v8462 = vsel %vm8204, 1, 0
      %v8463 = vsel %vm8205, 1, 0
      %v8464 = vsel %vm8206, 1, 0
      %v8465 = vsel %vm8207, 1, 0
      %v8466 = vsel %vm8208, 1, 0
      %v8467 = vsel %vm8209, 1, 0
      %v8468 = vsel %vm8210, 1, 0
      %v8469 = vsel %vm8211, 1, 0
      %v8470 = vsel %vm8212, 1, 0
      %v8471 = vsel %vm8213, 1, 0
      %v8472 = vsel %vm8214, 1, 0
      %v8473 = vsel %vm8215, 1, 0
      %v8474 = vsel %vm8216, 1, 0
      %v8475 = vsel %vm8217, 1, 0
      %vm8476 = vcmp.eq.s32.totalorder %v8460, 1
      %vm8477 = vcmp.eq.s32.totalorder %v8461, 1
      %vm8478 = vcmp.eq.s32.totalorder %v8462, 1
      %vm8479 = vcmp.eq.s32.totalorder %v8463, 1
      %vm8480 = vcmp.eq.s32.totalorder %v8464, 1
      %vm8481 = vcmp.eq.s32.totalorder %v8465, 1
      %vm8482 = vcmp.eq.s32.totalorder %v8466, 1
      %vm8483 = vcmp.eq.s32.totalorder %v8467, 1
      %vm8484 = vcmp.eq.s32.totalorder %v8468, 1
      %vm8485 = vcmp.eq.s32.totalorder %v8469, 1
      %vm8486 = vcmp.eq.s32.totalorder %v8470, 1
      %vm8487 = vcmp.eq.s32.totalorder %v8471, 1
      %vm8488 = vcmp.eq.s32.totalorder %v8472, 1
      %vm8489 = vcmp.eq.s32.totalorder %v8473, 1
      %vm8490 = vcmp.eq.s32.totalorder %v8474, 1
      %vm8491 = vcmp.eq.s32.totalorder %v8475, 1
      %v8492 = vsel %vm8476, %v8235, 0.0
      %v8493 = vsel %vm8477, %v8236, 0.0
      %v8494 = vsel %vm8478, %v8237, 0.0
      %v8495 = vsel %vm8479, %v8238, 0.0
      %v8496 = vsel %vm8480, %v8239, 0.0
      %v8497 = vsel %vm8481, %v8240, 0.0
      %v8498 = vsel %vm8482, %v8241, 0.0
      %v8499 = vsel %vm8483, %v8458, 0.0
      %v8500 = vsel %vm8484, %v8243, 0.0
      %v8501 = vsel %vm8485, %v8244, 0.0
      %v8502 = vsel %vm8486, %v8245, 0.0
      %v8503 = vsel %vm8487, %v8246, 0.0
      %v8504 = vsel %vm8488, %v8247, 0.0
      %v8505 = vsel %vm8489, %v8248, 0.0
      %v8506 = vsel %vm8490, %v8249, 0.0
      %v8507 = vsel %vm8491, %v8459, 0.0
      %v8508 = vld [vmem:[#allocation3 + $0x50] sm:$0xff]
      %v8509 = vld [vmem:[#allocation3 + $0xc0] sm:$0xff]
      %v8510 = vld [vmem:[#allocation3 + $0x51] sm:$0xff]
      %v8511 = vld [vmem:[#allocation3 + $0xc1] sm:$0xff]
      %v8512 = vsel %vm8218, 1, 0
      %v8513 = vsel %vm8219, 1, 0
      %v8514 = vsel %vm8220, 1, 0
      %v8515 = vsel %vm8221, 1, 0
      %v8516 = vsel %vm8222, 1, 0
      %v8517 = vsel %vm8223, 1, 0
      %v8518 = vsel %vm8224, 1, 0
      %v8519 = vsel %vm8225, 1, 0
      %v8520 = vsel %vm8226, 1, 0
      %v8521 = vsel %vm8227, 1, 0
      %v8522 = vsel %vm8228, 1, 0
      %v8523 = vsel %vm8229, 1, 0
      %v8524 = vsel %vm8230, 1, 0
      %v8525 = vsel %vm8231, 1, 0
      %v8526 = vsel %vm8232, 1, 0
      %v8527 = vsel %vm8233, 1, 0
      %vm8528 = vcmp.eq.s32.totalorder %v8512, 1
      %vm8529 = vcmp.eq.s32.totalorder %v8513, 1
      %vm8530 = vcmp.eq.s32.totalorder %v8514, 1
      %vm8531 = vcmp.eq.s32.totalorder %v8515, 1
      %vm8532 = vcmp.eq.s32.totalorder %v8516, 1
      %vm8533 = vcmp.eq.s32.totalorder %v8517, 1
      %vm8534 = vcmp.eq.s32.totalorder %v8518, 1
      %vm8535 = vcmp.eq.s32.totalorder %v8519, 1
      %vm8536 = vcmp.eq.s32.totalorder %v8520, 1
      %vm8537 = vcmp.eq.s32.totalorder %v8521, 1
      %vm8538 = vcmp.eq.s32.totalorder %v8522, 1
      %vm8539 = vcmp.eq.s32.totalorder %v8523, 1
      %vm8540 = vcmp.eq.s32.totalorder %v8524, 1
      %vm8541 = vcmp.eq.s32.totalorder %v8525, 1
      %vm8542 = vcmp.eq.s32.totalorder %v8526, 1
      %vm8543 = vcmp.eq.s32.totalorder %v8527, 1
      %v8544 = vsel %vm8528, %v8379, 0.0
      %v8545 = vsel %vm8529, %v8380, 0.0
      %v8546 = vsel %vm8530, %v8381, 0.0
      %v8547 = vsel %vm8531, %v8382, 0.0
      %v8548 = vsel %vm8532, %v8383, 0.0
      %v8549 = vsel %vm8533, %v8384, 0.0
      %v8550 = vsel %vm8534, %v8385, 0.0
      %v8551 = vsel %vm8535, %v8510, 0.0
      %v8552 = vsel %vm8536, %v8387, 0.0
      %v8553 = vsel %vm8537, %v8388, 0.0
      %v8554 = vsel %vm8538, %v8389, 0.0
      %v8555 = vsel %vm8539, %v8390, 0.0
      %v8556 = vsel %vm8540, %v8391, 0.0
      %v8557 = vsel %vm8541, %v8392, 0.0
      %v8558 = vsel %vm8542, %v8393, 0.0
      %v8559 = vsel %vm8543, %v8511, 0.0
      %v8560 = vld [vmem:[#allocation3 + $0x57] sm:$0xff]
      %v8561 = vld [vmem:[#allocation3 + $0xc7] sm:$0xff]
      %vm8562 = vmand %vm8186, %vm8202
      %vm8563 = vmand %vm8187, %vm8203
      %vm8564 = vmand %vm8188, %vm8204
      %vm8565 = vmand %vm8189, %vm8205
      %vm8566 = vmand %vm8190, %vm8206
      %vm8567 = vmand %vm8191, %vm8207
      %vm8568 = vmand %vm8192, %vm8208
      %vm8569 = vmand %vm8193, %vm8209
      %vm8570 = vmand %vm8194, %vm8210
      %vm8571 = vmand %vm8195, %vm8211
      %vm8572 = vmand %vm8196, %vm8212
      %vm8573 = vmand %vm8197, %vm8213
      %vm8574 = vmand %vm8198, %vm8214
      %vm8575 = vmand %vm8199, %vm8215
      %vm8576 = vmand %vm8200, %vm8216
      %vm8577 = vmand %vm8201, %vm8217
      %v8578 = vsel %vm8562, 1, 0
      %v8579 = vsel %vm8563, 1, 0
      %v8580 = vsel %vm8564, 1, 0
      %v8581 = vsel %vm8565, 1, 0
      %v8582 = vsel %vm8566, 1, 0
      %v8583 = vsel %vm8567, 1, 0
      %v8584 = vsel %vm8568, 1, 0
      %v8585 = vsel %vm8569, 1, 0
      %v8586 = vsel %vm8570, 1, 0
      %v8587 = vsel %vm8571, 1, 0
      %v8588 = vsel %vm8572, 1, 0
      %v8589 = vsel %vm8573, 1, 0
      %v8590 = vsel %vm8574, 1, 0
      %v8591 = vsel %vm8575, 1, 0
      %v8592 = vsel %vm8576, 1, 0
      %v8593 = vsel %vm8577, 1, 0
      %vm8594 = vcmp.eq.s32.totalorder %v8578, 1
      %vm8595 = vcmp.eq.s32.totalorder %v8579, 1
      %vm8596 = vcmp.eq.s32.totalorder %v8580, 1
      %vm8597 = vcmp.eq.s32.totalorder %v8581, 1
      %vm8598 = vcmp.eq.s32.totalorder %v8582, 1
      %vm8599 = vcmp.eq.s32.totalorder %v8583, 1
      %vm8600 = vcmp.eq.s32.totalorder %v8584, 1
      %vm8601 = vcmp.eq.s32.totalorder %v8585, 1
      %vm8602 = vcmp.eq.s32.totalorder %v8586, 1
      %vm8603 = vcmp.eq.s32.totalorder %v8587, 1
      %vm8604 = vcmp.eq.s32.totalorder %v8588, 1
      %vm8605 = vcmp.eq.s32.totalorder %v8589, 1
      %vm8606 = vcmp.eq.s32.totalorder %v8590, 1
      %vm8607 = vcmp.eq.s32.totalorder %v8591, 1
      %vm8608 = vcmp.eq.s32.totalorder %v8592, 1
      %vm8609 = vcmp.eq.s32.totalorder %v8593, 1
      %v8610 = vsel %vm8594, %v8236, 0.0
      %v8611 = vsel %vm8595, %v8237, 0.0
      %v8612 = vsel %vm8596, %v8238, 0.0
      %v8613 = vsel %vm8597, %v8239, 0.0
      %v8614 = vsel %vm8598, %v8240, 0.0
      %v8615 = vsel %vm8599, %v8241, 0.0
      %v8616 = vsel %vm8600, %v8458, 0.0
      %v8617 = vsel %vm8601, %v8560, 0.0
      %v8618 = vsel %vm8602, %v8244, 0.0
      %v8619 = vsel %vm8603, %v8245, 0.0
      %v8620 = vsel %vm8604, %v8246, 0.0
      %v8621 = vsel %vm8605, %v8247, 0.0
      %v8622 = vsel %vm8606, %v8248, 0.0
      %v8623 = vsel %vm8607, %v8249, 0.0
      %v8624 = vsel %vm8608, %v8459, 0.0
      %v8625 = vsel %vm8609, %v8561, 0.0
      %v8626 = vld [vmem:[#allocation3 + $0x58] sm:$0xff]
      %v8627 = vld [vmem:[#allocation3 + $0xc8] sm:$0xff]
      %v8628 = vsel %vm8186, 1, 0
      %v8629 = vsel %vm8187, 1, 0
      %v8630 = vsel %vm8188, 1, 0
      %v8631 = vsel %vm8189, 1, 0
      %v8632 = vsel %vm8190, 1, 0
      %v8633 = vsel %vm8191, 1, 0
      %v8634 = vsel %vm8192, 1, 0
      %v8635 = vsel %vm8193, 1, 0
      %v8636 = vsel %vm8194, 1, 0
      %v8637 = vsel %vm8195, 1, 0
      %v8638 = vsel %vm8196, 1, 0
      %v8639 = vsel %vm8197, 1, 0
      %v8640 = vsel %vm8198, 1, 0
      %v8641 = vsel %vm8199, 1, 0
      %v8642 = vsel %vm8200, 1, 0
      %v8643 = vsel %vm8201, 1, 0
      %vm8644 = vcmp.eq.s32.totalorder %v8628, 1
      %vm8645 = vcmp.eq.s32.totalorder %v8629, 1
      %vm8646 = vcmp.eq.s32.totalorder %v8630, 1
      %vm8647 = vcmp.eq.s32.totalorder %v8631, 1
      %vm8648 = vcmp.eq.s32.totalorder %v8632, 1
      %vm8649 = vcmp.eq.s32.totalorder %v8633, 1
      %vm8650 = vcmp.eq.s32.totalorder %v8634, 1
      %vm8651 = vcmp.eq.s32.totalorder %v8635, 1
      %vm8652 = vcmp.eq.s32.totalorder %v8636, 1
      %vm8653 = vcmp.eq.s32.totalorder %v8637, 1
      %vm8654 = vcmp.eq.s32.totalorder %v8638, 1
      %vm8655 = vcmp.eq.s32.totalorder %v8639, 1
      %vm8656 = vcmp.eq.s32.totalorder %v8640, 1
      %vm8657 = vcmp.eq.s32.totalorder %v8641, 1
      %vm8658 = vcmp.eq.s32.totalorder %v8642, 1
      %vm8659 = vcmp.eq.s32.totalorder %v8643, 1
      %v8660 = vsel %vm8644, %v8316, 0.0
      %v8661 = vsel %vm8645, %v8317, 0.0
      %v8662 = vsel %vm8646, %v8318, 0.0
      %v8663 = vsel %vm8647, %v8319, 0.0
      %v8664 = vsel %vm8648, %v8320, 0.0
      %v8665 = vsel %vm8649, %v8321, 0.0
      %v8666 = vsel %vm8650, %v8508, 0.0
      %v8667 = vsel %vm8651, %v8626, 0.0
      %v8668 = vsel %vm8652, %v8324, 0.0
      %v8669 = vsel %vm8653, %v8325, 0.0
      %v8670 = vsel %vm8654, %v8326, 0.0
      %v8671 = vsel %vm8655, %v8327, 0.0
      %v8672 = vsel %vm8656, %v8328, 0.0
      %v8673 = vsel %vm8657, %v8329, 0.0
      %v8674 = vsel %vm8658, %v8509, 0.0
      %v8675 = vsel %vm8659, %v8627, 0.0
      %v8676 = vld [vmem:[#allocation3 + $0x59] sm:$0xff]
      %v8677 = vld [vmem:[#allocation3 + $0xc9] sm:$0xff]
      %vm8678 = vmand %vm8186, %vm8218
      %vm8679 = vmand %vm8187, %vm8219
      %vm8680 = vmand %vm8188, %vm8220
      %vm8681 = vmand %vm8189, %vm8221
      %vm8682 = vmand %vm8190, %vm8222
      %vm8683 = vmand %vm8191, %vm8223
      %vm8684 = vmand %vm8192, %vm8224
      %vm8685 = vmand %vm8193, %vm8225
      %vm8686 = vmand %vm8194, %vm8226
      %vm8687 = vmand %vm8195, %vm8227
      %vm8688 = vmand %vm8196, %vm8228
      %vm8689 = vmand %vm8197, %vm8229
      %vm8690 = vmand %vm8198, %vm8230
      %vm8691 = vmand %vm8199, %vm8231
      %vm8692 = vmand %vm8200, %vm8232
      %vm8693 = vmand %vm8201, %vm8233
      %v8694 = vsel %vm8678, 1, 0
      %v8695 = vsel %vm8679, 1, 0
      %v8696 = vsel %vm8680, 1, 0
      %v8697 = vsel %vm8681, 1, 0
      %v8698 = vsel %vm8682, 1, 0
      %v8699 = vsel %vm8683, 1, 0
      %v8700 = vsel %vm8684, 1, 0
      %v8701 = vsel %vm8685, 1, 0
      %v8702 = vsel %vm8686, 1, 0
      %v8703 = vsel %vm8687, 1, 0
      %v8704 = vsel %vm8688, 1, 0
      %v8705 = vsel %vm8689, 1, 0
      %v8706 = vsel %vm8690, 1, 0
      %v8707 = vsel %vm8691, 1, 0
      %v8708 = vsel %vm8692, 1, 0
      %v8709 = vsel %vm8693, 1, 0
      %vm8710 = vcmp.eq.s32.totalorder %v8694, 1
      %vm8711 = vcmp.eq.s32.totalorder %v8695, 1
      %vm8712 = vcmp.eq.s32.totalorder %v8696, 1
      %vm8713 = vcmp.eq.s32.totalorder %v8697, 1
      %vm8714 = vcmp.eq.s32.totalorder %v8698, 1
      %vm8715 = vcmp.eq.s32.totalorder %v8699, 1
      %vm8716 = vcmp.eq.s32.totalorder %v8700, 1
      %vm8717 = vcmp.eq.s32.totalorder %v8701, 1
      %vm8718 = vcmp.eq.s32.totalorder %v8702, 1
      %vm8719 = vcmp.eq.s32.totalorder %v8703, 1
      %vm8720 = vcmp.eq.s32.totalorder %v8704, 1
      %vm8721 = vcmp.eq.s32.totalorder %v8705, 1
      %vm8722 = vcmp.eq.s32.totalorder %v8706, 1
      %vm8723 = vcmp.eq.s32.totalorder %v8707, 1
      %vm8724 = vcmp.eq.s32.totalorder %v8708, 1
      %vm8725 = vcmp.eq.s32.totalorder %v8709, 1
      %v8726 = vsel %vm8710, %v8380, 0.0
      %v8727 = vsel %vm8711, %v8381, 0.0
      %v8728 = vsel %vm8712, %v8382, 0.0
      %v8729 = vsel %vm8713, %v8383, 0.0
      %v8730 = vsel %vm8714, %v8384, 0.0
      %v8731 = vsel %vm8715, %v8385, 0.0
      %v8732 = vsel %vm8716, %v8510, 0.0
      %v8733 = vsel %vm8717, %v8676, 0.0
      %v8734 = vsel %vm8718, %v8388, 0.0
      %v8735 = vsel %vm8719, %v8389, 0.0
      %v8736 = vsel %vm8720, %v8390, 0.0
      %v8737 = vsel %vm8721, %v8391, 0.0
      %v8738 = vsel %vm8722, %v8392, 0.0
      %v8739 = vsel %vm8723, %v8393, 0.0
      %v8740 = vsel %vm8724, %v8511, 0.0
      %v8741 = vsel %vm8725, %v8677, 0.0
      %8758 = vrot.lane.b32.xlu0 %v8362, 32
      %v8759 = vpop.permute.xlu0 %8758
      %8760 = vrot.lane.b32.xlu0 %v8363, 32
      %v8761 = vpop.permute.xlu0 %8760
      %8762 = vrot.lane.b32.xlu0 %v8364, 32
      %v8763 = vpop.permute.xlu0 %8762
      %8764 = vrot.lane.b32.xlu0 %v8365, 32
      %v8765 = vpop.permute.xlu0 %8764
      %8766 = vrot.lane.b32.xlu0 %v8366, 32
      %v8767 = vpop.permute.xlu0 %8766
      %8768 = vrot.lane.b32.xlu0 %v8367, 32
      %v8769 = vpop.permute.xlu0 %8768
      %8770 = vrot.lane.b32.xlu0 %v8368, 32
      %v8771 = vpop.permute.xlu0 %8770
      %8772 = vrot.lane.b32.xlu0 %v8369, 32
      %v8773 = vpop.permute.xlu0 %8772
      %8774 = vrot.lane.b32.xlu0 %v8370, 32
      %v8775 = vpop.permute.xlu0 %8774
      %8776 = vrot.lane.b32.xlu0 %v8371, 32
      %v8777 = vpop.permute.xlu0 %8776
      %8778 = vrot.lane.b32.xlu0 %v8372, 32
      %v8779 = vpop.permute.xlu0 %8778
      %8780 = vrot.lane.b32.xlu0 %v8373, 32
      %v8781 = vpop.permute.xlu0 %8780
      %8782 = vrot.lane.b32.xlu0 %v8374, 32
      %v8783 = vpop.permute.xlu0 %8782
      %8784 = vrot.lane.b32.xlu0 %v8375, 32
      %v8785 = vpop.permute.xlu0 %8784
      %8786 = vrot.lane.b32.xlu0 %v8376, 32
      %v8787 = vpop.permute.xlu0 %8786
      %8788 = vrot.lane.b32.xlu0 %v8377, 32
      %v8789 = vpop.permute.xlu0 %8788
      %8822 = vrot.lane.b32.xlu0 %v8442, 64
      %v8823 = vpop.permute.xlu0 %8822
      %8824 = vrot.lane.b32.xlu0 %v8443, 64
      %v8825 = vpop.permute.xlu0 %8824
      %8826 = vrot.lane.b32.xlu0 %v8444, 64
      %v8827 = vpop.permute.xlu0 %8826
      %8828 = vrot.lane.b32.xlu0 %v8445, 64
      %v8829 = vpop.permute.xlu0 %8828
      %8830 = vrot.lane.b32.xlu0 %v8446, 64
      %v8831 = vpop.permute.xlu0 %8830
      %8832 = vrot.lane.b32.xlu0 %v8447, 64
      %v8833 = vpop.permute.xlu0 %8832
      %8834 = vrot.lane.b32.xlu0 %v8448, 64
      %v8835 = vpop.permute.xlu0 %8834
      %8836 = vrot.lane.b32.xlu0 %v8449, 64
      %v8837 = vpop.permute.xlu0 %8836
      %8838 = vrot.lane.b32.xlu0 %v8450, 64
      %v8839 = vpop.permute.xlu0 %8838
      %8840 = vrot.lane.b32.xlu0 %v8451, 64
      %v8841 = vpop.permute.xlu0 %8840
      %8842 = vrot.lane.b32.xlu0 %v8452, 64
      %v8843 = vpop.permute.xlu0 %8842
      %8844 = vrot.lane.b32.xlu0 %v8453, 64
      %v8845 = vpop.permute.xlu0 %8844
      %8846 = vrot.lane.b32.xlu0 %v8454, 64
      %v8847 = vpop.permute.xlu0 %8846
      %8848 = vrot.lane.b32.xlu0 %v8455, 64
      %v8849 = vpop.permute.xlu0 %8848
      %8850 = vrot.lane.b32.xlu0 %v8456, 64
      %v8851 = vpop.permute.xlu0 %8850
      %8852 = vrot.lane.b32.xlu0 %v8457, 64
      %v8853 = vpop.permute.xlu0 %8852
      %8886 = vrot.lane.b32.xlu0 %v8492, 96
      %v8887 = vpop.permute.xlu0 %8886
      %8888 = vrot.lane.b32.xlu0 %v8493, 96
      %v8889 = vpop.permute.xlu0 %8888
      %8890 = vrot.lane.b32.xlu0 %v8494, 96
      %v8891 = vpop.permute.xlu0 %8890
      %8892 = vrot.lane.b32.xlu0 %v8495, 96
      %v8893 = vpop.permute.xlu0 %8892
      %8894 = vrot.lane.b32.xlu0 %v8496, 96
      %v8895 = vpop.permute.xlu0 %8894
      %8896 = vrot.lane.b32.xlu0 %v8497, 96
      %v8897 = vpop.permute.xlu0 %8896
      %8898 = vrot.lane.b32.xlu0 %v8498, 96
      %v8899 = vpop.permute.xlu0 %8898
      %8900 = vrot.lane.b32.xlu0 %v8499, 96
      %v8901 = vpop.permute.xlu0 %8900
      %8902 = vrot.lane.b32.xlu0 %v8500, 96
      %v8903 = vpop.permute.xlu0 %8902
      %8904 = vrot.lane.b32.xlu0 %v8501, 96
      %v8905 = vpop.permute.xlu0 %8904
      %8906 = vrot.lane.b32.xlu0 %v8502, 96
      %v8907 = vpop.permute.xlu0 %8906
      %8908 = vrot.lane.b32.xlu0 %v8503, 96
      %v8909 = vpop.permute.xlu0 %8908
      %8910 = vrot.lane.b32.xlu0 %v8504, 96
      %v8911 = vpop.permute.xlu0 %8910
      %8912 = vrot.lane.b32.xlu0 %v8505, 96
      %v8913 = vpop.permute.xlu0 %8912
      %8914 = vrot.lane.b32.xlu0 %v8506, 96
      %v8915 = vpop.permute.xlu0 %8914
      %8916 = vrot.lane.b32.xlu0 %v8507, 96
      %v8917 = vpop.permute.xlu0 %8916
      %8950 = vrot.lane.b32.xlu0 %v8544, 32
      %v8951 = vpop.permute.xlu0 %8950
      %8952 = vrot.lane.b32.xlu0 %v8545, 32
      %v8953 = vpop.permute.xlu0 %8952
      %8954 = vrot.lane.b32.xlu0 %v8546, 32
      %v8955 = vpop.permute.xlu0 %8954
      %8956 = vrot.lane.b32.xlu0 %v8547, 32
      %v8957 = vpop.permute.xlu0 %8956
      %8958 = vrot.lane.b32.xlu0 %v8548, 32
      %v8959 = vpop.permute.xlu0 %8958
      %8960 = vrot.lane.b32.xlu0 %v8549, 32
      %v8961 = vpop.permute.xlu0 %8960
      %8962 = vrot.lane.b32.xlu0 %v8550, 32
      %v8963 = vpop.permute.xlu0 %8962
      %8964 = vrot.lane.b32.xlu0 %v8551, 32
      %v8965 = vpop.permute.xlu0 %8964
      %8966 = vrot.lane.b32.xlu0 %v8552, 32
      %v8967 = vpop.permute.xlu0 %8966
      %8968 = vrot.lane.b32.xlu0 %v8553, 32
      %v8969 = vpop.permute.xlu0 %8968
      %8970 = vrot.lane.b32.xlu0 %v8554, 32
      %v8971 = vpop.permute.xlu0 %8970
      %8972 = vrot.lane.b32.xlu0 %v8555, 32
      %v8973 = vpop.permute.xlu0 %8972
      %8974 = vrot.lane.b32.xlu0 %v8556, 32
      %v8975 = vpop.permute.xlu0 %8974
      %8976 = vrot.lane.b32.xlu0 %v8557, 32
      %v8977 = vpop.permute.xlu0 %8976
      %8978 = vrot.lane.b32.xlu0 %v8558, 32
      %v8979 = vpop.permute.xlu0 %8978
      %8980 = vrot.lane.b32.xlu0 %v8559, 32
      %v8981 = vpop.permute.xlu0 %8980
      %9014 = vrot.lane.b32.xlu0 %v8610, 64
      %v9015 = vpop.permute.xlu0 %9014
      %9016 = vrot.lane.b32.xlu0 %v8611, 64
      %v9017 = vpop.permute.xlu0 %9016
      %9018 = vrot.lane.b32.xlu0 %v8612, 64
      %v9019 = vpop.permute.xlu0 %9018
      %9020 = vrot.lane.b32.xlu0 %v8613, 64
      %v9021 = vpop.permute.xlu0 %9020
      %9022 = vrot.lane.b32.xlu0 %v8614, 64
      %v9023 = vpop.permute.xlu0 %9022
      %9024 = vrot.lane.b32.xlu0 %v8615, 64
      %v9025 = vpop.permute.xlu0 %9024
      %9026 = vrot.lane.b32.xlu0 %v8616, 64
      %v9027 = vpop.permute.xlu0 %9026
      %9028 = vrot.lane.b32.xlu0 %v8617, 64
      %v9029 = vpop.permute.xlu0 %9028
      %9030 = vrot.lane.b32.xlu0 %v8618, 64
      %v9031 = vpop.permute.xlu0 %9030
      %9032 = vrot.lane.b32.xlu0 %v8619, 64
      %v9033 = vpop.permute.xlu0 %9032
      %9034 = vrot.lane.b32.xlu0 %v8620, 64
      %v9035 = vpop.permute.xlu0 %9034
      %9036 = vrot.lane.b32.xlu0 %v8621, 64
      %v9037 = vpop.permute.xlu0 %9036
      %9038 = vrot.lane.b32.xlu0 %v8622, 64
      %v9039 = vpop.permute.xlu0 %9038
      %9040 = vrot.lane.b32.xlu0 %v8623, 64
      %v9041 = vpop.permute.xlu0 %9040
      %9042 = vrot.lane.b32.xlu0 %v8624, 64
      %v9043 = vpop.permute.xlu0 %9042
      %9044 = vrot.lane.b32.xlu0 %v8625, 64
      %v9045 = vpop.permute.xlu0 %9044
      %9078 = vrot.lane.b32.xlu0 %v8660, 96
      %v9079 = vpop.permute.xlu0 %9078
      %9080 = vrot.lane.b32.xlu0 %v8661, 96
      %v9081 = vpop.permute.xlu0 %9080
      %9082 = vrot.lane.b32.xlu0 %v8662, 96
      %v9083 = vpop.permute.xlu0 %9082
      %9084 = vrot.lane.b32.xlu0 %v8663, 96
      %v9085 = vpop.permute.xlu0 %9084
      %9086 = vrot.lane.b32.xlu0 %v8664, 96
      %v9087 = vpop.permute.xlu0 %9086
      %9088 = vrot.lane.b32.xlu0 %v8665, 96
      %v9089 = vpop.permute.xlu0 %9088
      %9090 = vrot.lane.b32.xlu0 %v8666, 96
      %v9091 = vpop.permute.xlu0 %9090
      %9092 = vrot.lane.b32.xlu0 %v8667, 96
      %v9093 = vpop.permute.xlu0 %9092
      %9094 = vrot.lane.b32.xlu0 %v8668, 96
      %v9095 = vpop.permute.xlu0 %9094
      %9096 = vrot.lane.b32.xlu0 %v8669, 96
      %v9097 = vpop.permute.xlu0 %9096
      %9098 = vrot.lane.b32.xlu0 %v8670, 96
      %v9099 = vpop.permute.xlu0 %9098
      %9100 = vrot.lane.b32.xlu0 %v8671, 96
      %v9101 = vpop.permute.xlu0 %9100
      %9102 = vrot.lane.b32.xlu0 %v8672, 96
      %v9103 = vpop.permute.xlu0 %9102
      %9104 = vrot.lane.b32.xlu0 %v8673, 96
      %v9105 = vpop.permute.xlu0 %9104
      %9106 = vrot.lane.b32.xlu0 %v8674, 96
      %v9107 = vpop.permute.xlu0 %9106
      %9108 = vrot.lane.b32.xlu0 %v8675, 96
      %v9109 = vpop.permute.xlu0 %9108
      %v9126 = vsel %vm839, %v8298, %v8759
      %v9127 = vsel %vm839, %v8299, %v8761
      %v9128 = vsel %vm839, %v8300, %v8763
      %v9129 = vsel %vm839, %v8301, %v8765
      %v9130 = vsel %vm839, %v8302, %v8767
      %v9131 = vsel %vm839, %v8303, %v8769
      %v9132 = vsel %vm839, %v8304, %v8771
      %v9133 = vsel %vm839, %v8305, %v8773
      %v9134 = vsel %vm839, %v8306, %v8775
      %v9135 = vsel %vm839, %v8307, %v8777
      %v9136 = vsel %vm839, %v8308, %v8779
      %v9137 = vsel %vm839, %v8309, %v8781
      %v9138 = vsel %vm839, %v8310, %v8783
      %v9139 = vsel %vm839, %v8311, %v8785
      %v9140 = vsel %vm839, %v8312, %v8787
      %v9141 = vsel %vm839, %v8313, %v8789
      %v9142 = vsel %vm6086, %v9126, %v8823
      %v9143 = vsel %vm6086, %v9127, %v8825
      %v9144 = vsel %vm6086, %v9128, %v8827
      %v9145 = vsel %vm6086, %v9129, %v8829
      %v9146 = vsel %vm6086, %v9130, %v8831
      %v9147 = vsel %vm6086, %v9131, %v8833
      %v9148 = vsel %vm6086, %v9132, %v8835
      %v9149 = vsel %vm6086, %v9133, %v8837
      %v9150 = vsel %vm6086, %v9134, %v8839
      %v9151 = vsel %vm6086, %v9135, %v8841
      %v9152 = vsel %vm6086, %v9136, %v8843
      %v9153 = vsel %vm6086, %v9137, %v8845
      %v9154 = vsel %vm6086, %v9138, %v8847
      %v9155 = vsel %vm6086, %v9139, %v8849
      %v9156 = vsel %vm6086, %v9140, %v8851
      %v9157 = vsel %vm6086, %v9141, %v8853
      %v9158 = vsel %vm6151, %v9142, %v8887
      %v9159 = vsel %vm6151, %v9143, %v8889
      %v9160 = vsel %vm6151, %v9144, %v8891
      %v9161 = vsel %vm6151, %v9145, %v8893
      %v9162 = vsel %vm6151, %v9146, %v8895
      %v9163 = vsel %vm6151, %v9147, %v8897
      %v9164 = vsel %vm6151, %v9148, %v8899
      %v9165 = vsel %vm6151, %v9149, %v8901
      %v9166 = vsel %vm6151, %v9150, %v8903
      %v9167 = vsel %vm6151, %v9151, %v8905
      %v9168 = vsel %vm6151, %v9152, %v8907
      %v9169 = vsel %vm6151, %v9153, %v8909
      %v9170 = vsel %vm6151, %v9154, %v8911
      %v9171 = vsel %vm6151, %v9155, %v8913
      %v9172 = vsel %vm6151, %v9156, %v8915
      %v9173 = vsel %vm6151, %v9157, %v8917
      %v9174 = vsel %vm839, %v8315, %v8951
      %v9175 = vsel %vm839, %v8316, %v8953
      %v9176 = vsel %vm839, %v8317, %v8955
      %v9177 = vsel %vm839, %v8318, %v8957
      %v9178 = vsel %vm839, %v8319, %v8959
      %v9179 = vsel %vm839, %v8320, %v8961
      %v9180 = vsel %vm839, %v8321, %v8963
      %v9181 = vsel %vm839, %v8508, %v8965
      %v9182 = vsel %vm839, %v8323, %v8967
      %v9183 = vsel %vm839, %v8324, %v8969
      %v9184 = vsel %vm839, %v8325, %v8971
      %v9185 = vsel %vm839, %v8326, %v8973
      %v9186 = vsel %vm839, %v8327, %v8975
      %v9187 = vsel %vm839, %v8328, %v8977
      %v9188 = vsel %vm839, %v8329, %v8979
      %v9189 = vsel %vm839, %v8509, %v8981
      %v9190 = vsel %vm6086, %v9174, %v9015
      %v9191 = vsel %vm6086, %v9175, %v9017
      %v9192 = vsel %vm6086, %v9176, %v9019
      %v9193 = vsel %vm6086, %v9177, %v9021
      %v9194 = vsel %vm6086, %v9178, %v9023
      %v9195 = vsel %vm6086, %v9179, %v9025
      %v9196 = vsel %vm6086, %v9180, %v9027
      %v9197 = vsel %vm6086, %v9181, %v9029
      %v9198 = vsel %vm6086, %v9182, %v9031
      %v9199 = vsel %vm6086, %v9183, %v9033
      %v9200 = vsel %vm6086, %v9184, %v9035
      %v9201 = vsel %vm6086, %v9185, %v9037
      %v9202 = vsel %vm6086, %v9186, %v9039
      %v9203 = vsel %vm6086, %v9187, %v9041
      %v9204 = vsel %vm6086, %v9188, %v9043
      %v9205 = vsel %vm6086, %v9189, %v9045
      %v9206 = vsel %vm6151, %v9190, %v9079
      %v9207 = vsel %vm6151, %v9191, %v9081
      %v9208 = vsel %vm6151, %v9192, %v9083
      %v9209 = vsel %vm6151, %v9193, %v9085
      %v9210 = vsel %vm6151, %v9194, %v9087
      %v9211 = vsel %vm6151, %v9195, %v9089
      %v9212 = vsel %vm6151, %v9196, %v9091
      %v9213 = vsel %vm6151, %v9197, %v9093
      %v9214 = vsel %vm6151, %v9198, %v9095
      %v9215 = vsel %vm6151, %v9199, %v9097
      %v9216 = vsel %vm6151, %v9200, %v9099
      %v9217 = vsel %vm6151, %v9201, %v9101
      %v9218 = vsel %vm6151, %v9202, %v9103
      %v9219 = vsel %vm6151, %v9203, %v9105
      %v9220 = vsel %vm6151, %v9204, %v9107
      %v9221 = vsel %vm6151, %v9205, %v9109
      %v9222 = vpack.c.bf16 %v9159, %v9158
      %v9223 = vpack.c.bf16 %v9207, %v9206
      %v9224 = vpack.c.bf16 %v8727, %v8726
      %v9225 = vpack.c.bf16 %v9161, %v9160
      %v9226 = vpack.c.bf16 %v9209, %v9208
      %v9227 = vpack.c.bf16 %v8729, %v8728
      %v9228 = vpack.c.bf16 %v9163, %v9162
      %v9229 = vpack.c.bf16 %v9211, %v9210
      %v9230 = vpack.c.bf16 %v8731, %v8730
      %v9231 = vpack.c.bf16 %v9165, %v9164
      %v9232 = vpack.c.bf16 %v9213, %v9212
      %v9233 = vpack.c.bf16 %v8733, %v8732
      %v9234 = vpack.c.bf16 %v9167, %v9166
      %v9235 = vpack.c.bf16 %v9215, %v9214
      %v9236 = vpack.c.bf16 %v8735, %v8734
      %v9237 = vpack.c.bf16 %v9169, %v9168
      %v9238 = vpack.c.bf16 %v9217, %v9216
      %v9239 = vpack.c.bf16 %v8737, %v8736
      %v9240 = vpack.c.bf16 %v9171, %v9170
      %v9241 = vpack.c.bf16 %v9219, %v9218
      %v9242 = vpack.c.bf16 %v8739, %v8738
      %v9243 = vpack.c.bf16 %v9173, %v9172
      %v9244 = vpack.c.bf16 %v9221, %v9220
      %v9245 = vpack.c.bf16 %v8741, %v8740
      %v9246 = vld [vmem:[%s9] sm:$0xf]
      %v9247 = vld [vmem:[%s9 + $0x4] sm:$0xf]
      %v9248 = vld [vmem:[%s9 + $0x8] sm:$0xf]
      %v9249 = vld [vmem:[%s9 + $0xc] sm:$0xf]
      %v9250 = vld [vmem:[%s9 + $0x10] sm:$0xf]
      %v9251 = vld [vmem:[%s9 + $0x14] sm:$0xf]
      %v9252 = vld [vmem:[%s9 + $0x18] sm:$0xf]
      %v9253 = vld [vmem:[%s9 + $0x1c] sm:$0xf]
      %v9254 = vld [vmem:[%s9 + $0x20] sm:$0xf]
      %v9255 = vld [vmem:[%s9 + $0x24] sm:$0xf]
      %v9256 = vld [vmem:[%s9 + $0x28] sm:$0xf]
      %v9257 = vld [vmem:[%s9 + $0x2c] sm:$0xf]
      %v9258 = vld [vmem:[%s9 + $0x30] sm:$0xf]
      %v9259 = vld [vmem:[%s9 + $0x34] sm:$0xf]
      %v9260 = vld [vmem:[%s9 + $0x38] sm:$0xf]
      %v9261 = vld [vmem:[%s9 + $0x3c] sm:$0xf]
      %v9262 = vld [vmem:[%s9 + $0x40] sm:$0xf]
      %v9263 = vld [vmem:[%s9 + $0x44] sm:$0xf]
      %v9264 = vld [vmem:[%s9 + $0x48] sm:$0xf]
      %v9265 = vld [vmem:[%s9 + $0x4c] sm:$0xf]
      %v9266 = vld [vmem:[%s9 + $0x50] sm:$0xf]
      %v9267 = vld [vmem:[%s9 + $0x54] sm:$0xf]
      %v9268 = vld [vmem:[%s9 + $0x58] sm:$0xf]
      %v9269 = vld [vmem:[%s9 + $0x5c] sm:$0xf]
      %v9270 = vld [vmem:[%s9 + $0x60] sm:$0xf]
      %v9271 = vld [vmem:[%s9 + $0x64] sm:$0xf]
      %v9272 = vld [vmem:[%s9 + $0x68] sm:$0xf]
      %v9273 = vld [vmem:[%s9 + $0x6c] sm:$0xf]
      %v9274 = vld [vmem:[%s9 + $0x70] sm:$0xf]
      %v9275 = vld [vmem:[%s9 + $0x74] sm:$0xf]
      %v9276 = vld [vmem:[%s9 + $0x78] sm:$0xf]
      %v9277 = vld [vmem:[%s9 + $0x7c] sm:$0xf]
      %v9278 = vld [vmem:[%s9 + $0x80] sm:$0xf]
      %v9279 = vld [vmem:[%s9 + $0x84] sm:$0xf]
      %v9280 = vld [vmem:[%s9 + $0x88] sm:$0xf]
      %v9281 = vld [vmem:[%s9 + $0x8c] sm:$0xf]
      %v9318 = vunpack.c.l.b16 %v9246
      %v9319 = vunpack.c.l.b16 %v9247
      %v9320 = vunpack.c.l.b16 %v9248
      %v9321 = vunpack.c.l.b16 %v9249
      %v9322 = vunpack.c.l.b16 %v9250
      %v9323 = vunpack.c.l.b16 %v9251
      %v9324 = vunpack.c.l.b16 %v9252
      %v9325 = vunpack.c.l.b16 %v9253
      %v9326 = vunpack.c.l.b16 %v9254
      %v9327 = vunpack.c.l.b16 %v9255
      %v9328 = vunpack.c.l.b16 %v9256
      %v9329 = vunpack.c.l.b16 %v9257
      %v9330 = vunpack.c.l.b16 %v9258
      %v9331 = vunpack.c.l.b16 %v9259
      %v9332 = vunpack.c.l.b16 %v9260
      %v9333 = vunpack.c.l.b16 %v9261
      %v9334 = vunpack.c.l.b16 %v9262
      %v9335 = vunpack.c.l.b16 %v9263
      %v9336 = vunpack.c.l.b16 %v9264
      %v9337 = vunpack.c.l.b16 %v9265
      %v9338 = vunpack.c.l.b16 %v9266
      %v9339 = vunpack.c.l.b16 %v9267
      %v9340 = vunpack.c.l.b16 %v9268
      %v9341 = vunpack.c.l.b16 %v9269
      %v9342 = vunpack.c.l.b16 %v9270
      %v9343 = vunpack.c.l.b16 %v9271
      %v9344 = vunpack.c.l.b16 %v9272
      %v9345 = vunpack.c.l.b16 %v9273
      %v9346 = vunpack.c.l.b16 %v9274
      %v9347 = vunpack.c.l.b16 %v9275
      %v9348 = vunpack.c.l.b16 %v9276
      %v9349 = vunpack.c.l.b16 %v9277
      %v9350 = vunpack.c.l.b16 %v9278
      %v9351 = vunpack.c.l.b16 %v9279
      %v9352 = vunpack.c.l.b16 %v9280
      %v9353 = vunpack.c.l.b16 %v9281
      %v9354 = vpack.c.b16 %v9319, %v9318
      %v9355 = vpack.c.b16 %v9321, %v9320
      %v9356 = vpack.c.b16 %v9323, %v9322
      %v9357 = vpack.c.b16 %v9325, %v9324
      %v9358 = vpack.c.b16 %v9327, %v9326
      %v9359 = vpack.c.b16 %v9329, %v9328
      %v9360 = vpack.c.b16 %v9331, %v9330
      %v9361 = vpack.c.b16 %v9333, %v9332
      %v9362 = vpack.c.b16 %v9335, %v9334
      %v9363 = vpack.c.b16 %v9337, %v9336
      %v9364 = vpack.c.b16 %v9339, %v9338
      %v9365 = vpack.c.b16 %v9341, %v9340
      %v9366 = vpack.c.b16 %v9343, %v9342
      %v9367 = vpack.c.b16 %v9345, %v9344
      %v9368 = vpack.c.b16 %v9347, %v9346
      %v9369 = vpack.c.b16 %v9349, %v9348
      %v9370 = vpack.c.b16 %v9351, %v9350
      %v9371 = vpack.c.b16 %v9353, %v9352
      %v9391 = vsel %vm839, %v9224, 0
      %v9394 = vsel %vm839, %v9227, 0
      %v9397 = vsel %vm839, %v9230, 0
      %v9400 = vsel %vm839, %v9233, 0
      %v9403 = vsel %vm839, %v9236, 0
      %v9406 = vsel %vm839, %v9239, 0
      %v9409 = vsel %vm839, %v9242, 0
      %v9412 = vsel %vm839, %v9245, 0
      %9414 = vmatprep.subr.bf16.mxu0 0
      %9415 = vmatpush1.bf16.msra.mxu0 %v9354
      %9416 = vmatprep.subr.bf16.mxu0 0
      %9417 = vmatpush1.bf16.msra.mxu0 %v9355
      %9418 = vmatprep.subr.bf16.mxu0 0
      %9419 = vmatpush1.bf16.msra.mxu0 %v9356
      %9420 = vmatprep.subr.bf16.mxu0 0
      %9421 = vmatpush1.bf16.msra.mxu0 %v9357
      %9422 = vmatprep.subr.bf16.mxu0 0
      %9423 = vmatpush1.bf16.msra.mxu0 %v9358
      %9424 = vmatprep.subr.bf16.mxu0 0
      %9425 = vmatpush1.bf16.msra.mxu0 %v9359
      %9426 = vmatprep.subr.bf16.mxu0 0
      %9427 = vmatpush1.bf16.msra.mxu0 %v9360
      %9428 = vmatprep.subr.bf16.mxu0 0
      %9429 = vmatpush1.bf16.msra.mxu0 %v9361
      %9430 = vmatprep.subr.bf16.mxu0 0
      %9431 = vmatpush1.bf16.msra.mxu0 %v9362
      %9432 = vmatprep.subr.bf16.mxu0 0
      %9433 = vmatpush1.bf16.msra.mxu0 %v9363
      %9434 = vmatprep.subr.bf16.mxu0 0
      %9435 = vmatpush1.bf16.msra.mxu0 %v9364
      %9436 = vmatprep.subr.bf16.mxu0 0
      %9437 = vmatpush1.bf16.msra.mxu0 %v9365
      %9438 = vmatprep.subr.bf16.mxu0 0
      %9439 = vmatpush1.bf16.msra.mxu0 %v9366
      %9440 = vmatprep.subr.bf16.mxu0 0
      %9441 = vmatpush1.bf16.msra.mxu0 %v9367
      %9442 = vmatprep.subr.bf16.mxu0 0
      %9443 = vmatpush1.bf16.msra.mxu0 %v9368
      %9444 = vmatprep.subr.bf16.mxu0 0
      %9445 = vmatpush1.bf16.msra.mxu0 %v9369
      %9446 = vmatprep.mubr.bf16.mxu0 %v9223
      %9447 = vmatmul.mubr.bf16.gmra.mrb[0].mxu0 %v9222
      %v9448 = vpop.f32.mrb[0].mxu0
      %v9449 = vadd.f32 0.0, %v9448
      %v9450 = vpop.f32.mrb[0].mxu0
      %v9451 = vpop.f32.mrb[0].mxu0
      %v9452 = vadd.f32 0.0, %v9451
      %v9453 = vpop.f32.mrb[0].mxu0
      %9454 = vmatprep.mubr.bf16.mxu0 %v9226
      %9455 = vmatmul.mubr.bf16.gmra.mrb[0].mxu0 %v9225
      %v9456 = vpop.f32.mrb[0].mxu0
      %v9457 = vadd.f32 0.0, %v9456
      %v9458 = vpop.f32.mrb[0].mxu0
      %v9459 = vpop.f32.mrb[0].mxu0
      %v9460 = vadd.f32 0.0, %v9459
      %v9461 = vpop.f32.mrb[0].mxu0
      %9462 = vmatprep.mubr.bf16.mxu0 %v9229
      %9463 = vmatmul.mubr.bf16.gmra.mrb[0].mxu0 %v9228
      %v9464 = vpop.f32.mrb[0].mxu0
      %v9465 = vadd.f32 0.0, %v9464
      %v9466 = vpop.f32.mrb[0].mxu0
      %v9467 = vpop.f32.mrb[0].mxu0
      %v9468 = vadd.f32 0.0, %v9467
      %v9469 = vpop.f32.mrb[0].mxu0
      %9470 = vmatprep.mubr.bf16.mxu0 %v9232
      %9471 = vmatmul.mubr.bf16.gmra.mrb[0].mxu0 %v9231
      %v9472 = vpop.f32.mrb[0].mxu0
      %v9473 = vadd.f32 0.0, %v9472
      %v9474 = vpop.f32.mrb[0].mxu0
      %v9475 = vpop.f32.mrb[0].mxu0
      %v9476 = vadd.f32 0.0, %v9475
      %v9477 = vpop.f32.mrb[0].mxu0
      %9478 = vmatprep.mubr.bf16.mxu0 %v9235
      %9479 = vmatmul.mubr.bf16.gmra.mrb[0].mxu0 %v9234
      %v9480 = vpop.f32.mrb[0].mxu0
      %v9481 = vadd.f32 0.0, %v9480
      %v9482 = vpop.f32.mrb[0].mxu0
      %v9483 = vpop.f32.mrb[0].mxu0
      %v9484 = vadd.f32 0.0, %v9483
      %v9485 = vpop.f32.mrb[0].mxu0
      %9486 = vmatprep.mubr.bf16.mxu0 %v9238
      %9487 = vmatmul.mubr.bf16.gmra.mrb[0].mxu0 %v9237
      %v9488 = vpop.f32.mrb[0].mxu0
      %v9489 = vadd.f32 0.0, %v9488
      %v9490 = vpop.f32.mrb[0].mxu0
      %v9491 = vpop.f32.mrb[0].mxu0
      %v9492 = vadd.f32 0.0, %v9491
      %v9493 = vpop.f32.mrb[0].mxu0
      %9494 = vmatprep.mubr.bf16.mxu0 %v9241
      %9495 = vmatmul.mubr.bf16.gmra.mrb[0].mxu0 %v9240
      %v9496 = vpop.f32.mrb[0].mxu0
      %v9497 = vadd.f32 0.0, %v9496
      %v9498 = vpop.f32.mrb[0].mxu0
      %v9499 = vpop.f32.mrb[0].mxu0
      %v9500 = vadd.f32 0.0, %v9499
      %v9501 = vpop.f32.mrb[0].mxu0
      %9502 = vmatprep.mubr.bf16.mxu0 %v9244
      %9503 = vmatmul.mubr.bf16.gmra.mrb[0].mxu0 %v9243
      %v9504 = vpop.f32.mrb[0].mxu0
      %v9505 = vadd.f32 0.0, %v9504
      %v9506 = vpop.f32.mrb[0].mxu0
      %v9507 = vpop.f32.mrb[0].mxu0
      %v9508 = vadd.f32 0.0, %v9507
      %v9509 = vpop.f32.mrb[0].mxu0
      %9510 = vdwg.mxu0
      %9511 = vmatprep.subr.bf16.mxu0 0
      %9512 = vmatpush1.bf16.msra.mxu0 %v9370
      %9513 = vmatprep.subr.bf16.mxu0 0
      %9514 = vmatpush1.bf16.msra.mxu0 %v9371
      %9515 = vmatprep.subr.bf16.mxu0 0
      %9516 = vmatpush1.bf16.msra.mxu0 0
      %9517 = vmatprep.subr.bf16.mxu0 0
      %9518 = vmatpush1.bf16.msra.mxu0 0
      %9519 = vmatprep.subr.bf16.mxu0 0
      %9520 = vmatpush1.bf16.msra.mxu0 0
      %9521 = vmatprep.subr.bf16.mxu0 0
      %9522 = vmatpush1.bf16.msra.mxu0 0
      %9523 = vmatprep.subr.bf16.mxu0 0
      %9524 = vmatpush1.bf16.msra.mxu0 0
      %9525 = vmatprep.subr.bf16.mxu0 0
      %9526 = vmatpush1.bf16.msra.mxu0 0
      %9527 = vmatprep.subr.bf16.mxu0 0
      %9528 = vmatpush1.bf16.msra.mxu0 0
      %9529 = vmatprep.subr.bf16.mxu0 0
      %9530 = vmatpush1.bf16.msra.mxu0 0
      %9531 = vmatprep.subr.bf16.mxu0 0
      %9532 = vmatpush1.bf16.msra.mxu0 0
      %9533 = vmatprep.subr.bf16.mxu0 0
      %9534 = vmatpush1.bf16.msra.mxu0 0
      %9535 = vmatprep.subr.bf16.mxu0 0
      %9536 = vmatpush1.bf16.msra.mxu0 0
      %9537 = vmatprep.subr.bf16.mxu0 0
      %9538 = vmatpush1.bf16.msra.mxu0 0
      %9539 = vmatprep.subr.bf16.mxu0 0
      %9540 = vmatpush1.bf16.msra.mxu0 0
      %9541 = vmatprep.subr.bf16.mxu0 0
      %9542 = vmatpush1.bf16.msra.mxu0 0
      %9543 = vmatprep.mubr.bf16.mxu0 0
      %9544 = vmatmul.mubr.bf16.gmra.mrb[0].mxu0 %v9391
      %v9545 = vpop.f32.mrb[0].mxu0
      %v9546 = vadd.f32 %v9449, %v9545
      %v9547 = vpop.f32.mrb[0].mxu0
      %v9548 = vpop.f32.mrb[0].mxu0
      %v9549 = vadd.f32 %v9452, %v9548
      %v9550 = vpop.f32.mrb[0].mxu0
      %9551 = vmatprep.mubr.bf16.mxu0 0
      %9552 = vmatmul.mubr.bf16.gmra.mrb[0].mxu0 %v9394
      %v9553 = vpop.f32.mrb[0].mxu0
      %v9554 = vadd.f32 %v9457, %v9553
      %v9555 = vpop.f32.mrb[0].mxu0
      %v9556 = vpop.f32.mrb[0].mxu0
      %v9557 = vadd.f32 %v9460, %v9556
      %v9558 = vpop.f32.mrb[0].mxu0
      %9559 = vmatprep.mubr.bf16.mxu0 0
      %9560 = vmatmul.mubr.bf16.gmra.mrb[0].mxu0 %v9397
      %v9561 = vpop.f32.mrb[0].mxu0
      %v9562 = vadd.f32 %v9465, %v9561
      %v9563 = vpop.f32.mrb[0].mxu0
      %v9564 = vpop.f32.mrb[0].mxu0
      %v9565 = vadd.f32 %v9468, %v9564
      %v9566 = vpop.f32.mrb[0].mxu0
      %9567 = vmatprep.mubr.bf16.mxu0 0
      %9568 = vmatmul.mubr.bf16.gmra.mrb[0].mxu0 %v9400
      %v9569 = vpop.f32.mrb[0].mxu0
      %v9570 = vadd.f32 %v9473, %v9569
      %v9571 = vpop.f32.mrb[0].mxu0
      %v9572 = vpop.f32.mrb[0].mxu0
      %v9573 = vadd.f32 %v9476, %v9572
      %v9574 = vpop.f32.mrb[0].mxu0
      %9575 = vmatprep.mubr.bf16.mxu0 0
      %9576 = vmatmul.mubr.bf16.gmra.mrb[0].mxu0 %v9403
      %v9577 = vpop.f32.mrb[0].mxu0
      %v9578 = vadd.f32 %v9481, %v9577
      %v9579 = vpop.f32.mrb[0].mxu0
      %v9580 = vpop.f32.mrb[0].mxu0
      %v9581 = vadd.f32 %v9484, %v9580
      %v9582 = vpop.f32.mrb[0].mxu0
      %9583 = vmatprep.mubr.bf16.mxu0 0
      %9584 = vmatmul.mubr.bf16.gmra.mrb[0].mxu0 %v9406
      %v9585 = vpop.f32.mrb[0].mxu0
      %v9586 = vadd.f32 %v9489, %v9585
      %v9587 = vpop.f32.mrb[0].mxu0
      %v9588 = vpop.f32.mrb[0].mxu0
      %v9589 = vadd.f32 %v9492, %v9588
      %v9590 = vpop.f32.mrb[0].mxu0
      %9591 = vmatprep.mubr.bf16.mxu0 0
      %9592 = vmatmul.mubr.bf16.gmra.mrb[0].mxu0 %v9409
      %v9593 = vpop.f32.mrb[0].mxu0
      %v9594 = vadd.f32 %v9497, %v9593
      %v9595 = vpop.f32.mrb[0].mxu0
      %v9596 = vpop.f32.mrb[0].mxu0
      %v9597 = vadd.f32 %v9500, %v9596
      %v9598 = vpop.f32.mrb[0].mxu0
      %9599 = vmatprep.mubr.bf16.mxu0 0
      %9600 = vmatmul.mubr.bf16.gmra.mrb[0].mxu0 %v9412
      %v9601 = vpop.f32.mrb[0].mxu0
      %v9602 = vadd.f32 %v9505, %v9601
      %v9603 = vpop.f32.mrb[0].mxu0
      %v9604 = vpop.f32.mrb[0].mxu0
      %v9605 = vadd.f32 %v9508, %v9604
      %v9606 = vpop.f32.mrb[0].mxu0
      %9607 = vdwg.mxu0
      %v9608 = vld [vmem:[%s10] sm:$0x1]
      %v9610 = vlaneseq
      %v9611 = vshrl.u32 %v9610, 7
      %v9612 = vsub.s32 0, %v9611
      %v9613 = vrot.slane %v9608, %v9612
      %v9615 = vadd.f32 %v9546, %v9613
      %v9616 = vadd.f32 %v9549, %v9613
      %v9617 = vadd.f32 %v9554, %v9613
      %v9618 = vadd.f32 %v9557, %v9613
      %v9619 = vadd.f32 %v9562, %v9613
      %v9620 = vadd.f32 %v9565, %v9613
      %v9621 = vadd.f32 %v9570, %v9613
      %v9622 = vadd.f32 %v9573, %v9613
      %v9623 = vadd.f32 %v9578, %v9613
      %v9624 = vadd.f32 %v9581, %v9613
      %v9625 = vadd.f32 %v9586, %v9613
      %v9626 = vadd.f32 %v9589, %v9613
      %v9627 = vadd.f32 %v9594, %v9613
      %v9628 = vadd.f32 %v9597, %v9613
      %v9629 = vadd.f32 %v9602, %v9613
      %v9630 = vadd.f32 %v9605, %v9613
      %v9631 = vsel %vm839, %v9615, 0.0
      %v9632 = vsel %vm839, %v9616, 0.0
      %v9633 = vadd.f32 %v9631, %v9632
      %v9634 = vsel %vm839, %v9617, 0.0
      %v9635 = vadd.f32 %v9633, %v9634
      %v9636 = vsel %vm839, %v9618, 0.0
      %v9637 = vadd.f32 %v9635, %v9636
      %v9638 = vsel %vm839, %v9619, 0.0
      %v9639 = vadd.f32 %v9637, %v9638
      %v9640 = vsel %vm839, %v9620, 0.0
      %v9641 = vadd.f32 %v9639, %v9640
      %v9642 = vsel %vm839, %v9621, 0.0
      %v9643 = vadd.f32 %v9641, %v9642
      %v9644 = vsel %vm839, %v9622, 0.0
      %v9645 = vadd.f32 %v9643, %v9644
      %v9646 = vrot.slane %v9645, 4
      %v9647 = vadd.f32 %v9645, %v9646
      %v9648 = vrot.slane %v9647, 2
      %v9649 = vadd.f32 %v9647, %v9648
      %v9650 = vrot.slane %v9649, 1
      %v9651 = vadd.f32 %v9649, %v9650
      %v9652 = vrcp.pop 64.0
      %v9653 = vmul.f32 %v9651, %v9652
      %v9654 = vsub.f32 %v9615, %v9653
      %v9655 = vsub.f32 %v9616, %v9653
      %v9656 = vsub.f32 %v9617, %v9653
      %v9657 = vsub.f32 %v9618, %v9653
      %v9658 = vsub.f32 %v9619, %v9653
      %v9659 = vsub.f32 %v9620, %v9653
      %v9660 = vsub.f32 %v9621, %v9653
      %v9661 = vsub.f32 %v9622, %v9653
      %v9662 = vmul.f32 %v9654, %v9654
      %v9663 = vmul.f32 %v9655, %v9655
      %v9664 = vmul.f32 %v9656, %v9656
      %v9665 = vmul.f32 %v9657, %v9657
      %v9666 = vmul.f32 %v9658, %v9658
      %v9667 = vmul.f32 %v9659, %v9659
      %v9668 = vmul.f32 %v9660, %v9660
      %v9669 = vmul.f32 %v9661, %v9661
      %v9670 = vsel %vm839, %v9662, 0.0
      %v9671 = vsel %vm839, %v9663, 0.0
      %v9672 = vadd.f32 %v9670, %v9671
      %v9673 = vsel %vm839, %v9664, 0.0
      %v9674 = vadd.f32 %v9672, %v9673
      %v9675 = vsel %vm839, %v9665, 0.0
      %v9676 = vadd.f32 %v9674, %v9675
      %v9677 = vsel %vm839, %v9666, 0.0
      %v9678 = vadd.f32 %v9676, %v9677
      %v9679 = vsel %vm839, %v9667, 0.0
      %v9680 = vadd.f32 %v9678, %v9679
      %v9681 = vsel %vm839, %v9668, 0.0
      %v9682 = vadd.f32 %v9680, %v9681
      %v9683 = vsel %vm839, %v9669, 0.0
      %v9684 = vadd.f32 %v9682, %v9683
      %v9685 = vrot.slane %v9684, 4
      %v9686 = vadd.f32 %v9684, %v9685
      %v9687 = vrot.slane %v9686, 2
      %v9688 = vadd.f32 %v9686, %v9687
      %v9689 = vrot.slane %v9688, 1
      %v9690 = vadd.f32 %v9688, %v9689
      %v9691 = vmul.f32 %v9690, %v9652
      %v9692 = vadd.f32 %v9691, 1e-05
      %v9693 = vrsqrt.pop %v9692
      %v9694 = vmul.f32 %v9654, %v9693
      %v9695 = vmul.f32 %v9655, %v9693
      %v9696 = vmul.f32 %v9656, %v9693
      %v9697 = vmul.f32 %v9657, %v9693
      %v9698 = vmul.f32 %v9658, %v9693
      %v9699 = vmul.f32 %v9659, %v9693
      %v9700 = vmul.f32 %v9660, %v9693
      %v9701 = vmul.f32 %v9661, %v9693
      %vm9702 = vcmp.gt.f32.partialorder %v9694, 0.0
      %vm9703 = vcmp.gt.f32.partialorder %v9695, 0.0
      %vm9704 = vcmp.gt.f32.partialorder %v9696, 0.0
      %vm9705 = vcmp.gt.f32.partialorder %v9697, 0.0
      %vm9706 = vcmp.gt.f32.partialorder %v9698, 0.0
      %vm9707 = vcmp.gt.f32.partialorder %v9699, 0.0
      %vm9708 = vcmp.gt.f32.partialorder %v9700, 0.0
      %vm9709 = vcmp.gt.f32.partialorder %v9701, 0.0
      %v9710 = vmul.f32 %v9694, 0.2
      %v9711 = vmul.f32 %v9695, 0.2
      %v9712 = vmul.f32 %v9696, 0.2
      %v9713 = vmul.f32 %v9697, 0.2
      %v9714 = vmul.f32 %v9698, 0.2
      %v9715 = vmul.f32 %v9699, 0.2
      %v9716 = vmul.f32 %v9700, 0.2
      %v9717 = vmul.f32 %v9701, 0.2
      %v9718 = vsel %vm9702, %v9694, %v9710
      %v9719 = vsel %vm9703, %v9695, %v9711
      %v9720 = vsel %vm9704, %v9696, %v9712
      %v9721 = vsel %vm9705, %v9697, %v9713
      %v9722 = vsel %vm9706, %v9698, %v9714
      %v9723 = vsel %vm9707, %v9699, %v9715
      %v9724 = vsel %vm9708, %v9700, %v9716
      %v9725 = vsel %vm9709, %v9701, %v9717
      %v9726 = vsel %vm839, %v9623, 0.0
      %v9727 = vsel %vm839, %v9624, 0.0
      %v9728 = vadd.f32 %v9726, %v9727
      %v9729 = vsel %vm839, %v9625, 0.0
      %v9730 = vadd.f32 %v9728, %v9729
      %v9731 = vsel %vm839, %v9626, 0.0
      %v9732 = vadd.f32 %v9730, %v9731
      %v9733 = vsel %vm839, %v9627, 0.0
      %v9734 = vadd.f32 %v9732, %v9733
      %v9735 = vsel %vm839, %v9628, 0.0
      %v9736 = vadd.f32 %v9734, %v9735
      %v9737 = vsel %vm839, %v9629, 0.0
      %v9738 = vadd.f32 %v9736, %v9737
      %v9739 = vsel %vm839, %v9630, 0.0
      %v9740 = vadd.f32 %v9738, %v9739
      %v9741 = vrot.slane %v9740, 4
      %v9742 = vadd.f32 %v9740, %v9741
      %v9743 = vrot.slane %v9742, 2
      %v9744 = vadd.f32 %v9742, %v9743
      %v9745 = vrot.slane %v9744, 1
      %v9746 = vadd.f32 %v9744, %v9745
      %v9747 = vmul.f32 %v9746, %v9652
      %v9748 = vsub.f32 %v9623, %v9747
      %v9749 = vsub.f32 %v9624, %v9747
      %v9750 = vsub.f32 %v9625, %v9747
      %v9751 = vsub.f32 %v9626, %v9747
      %v9752 = vsub.f32 %v9627, %v9747
      %v9753 = vsub.f32 %v9628, %v9747
      %v9754 = vsub.f32 %v9629, %v9747
      %v9755 = vsub.f32 %v9630, %v9747
      %v9756 = vmul.f32 %v9748, %v9748
      %v9757 = vmul.f32 %v9749, %v9749
      %v9758 = vmul.f32 %v9750, %v9750
      %v9759 = vmul.f32 %v9751, %v9751
      %v9760 = vmul.f32 %v9752, %v9752
      %v9761 = vmul.f32 %v9753, %v9753
      %v9762 = vmul.f32 %v9754, %v9754
      %v9763 = vmul.f32 %v9755, %v9755
      %v9764 = vsel %vm839, %v9756, 0.0
      %v9765 = vsel %vm839, %v9757, 0.0
      %v9766 = vadd.f32 %v9764, %v9765
      %v9767 = vsel %vm839, %v9758, 0.0
      %v9768 = vadd.f32 %v9766, %v9767
      %v9769 = vsel %vm839, %v9759, 0.0
      %v9770 = vadd.f32 %v9768, %v9769
      %v9771 = vsel %vm839, %v9760, 0.0
      %v9772 = vadd.f32 %v9770, %v9771
      %v9773 = vsel %vm839, %v9761, 0.0
      %v9774 = vadd.f32 %v9772, %v9773
      %v9775 = vsel %vm839, %v9762, 0.0
      %v9776 = vadd.f32 %v9774, %v9775
      %v9777 = vsel %vm839, %v9763, 0.0
      %v9778 = vadd.f32 %v9776, %v9777
      %v9779 = vrot.slane %v9778, 4
      %v9780 = vadd.f32 %v9778, %v9779
      %v9781 = vrot.slane %v9780, 2
      %v9782 = vadd.f32 %v9780, %v9781
      %v9783 = vrot.slane %v9782, 1
      %v9784 = vadd.f32 %v9782, %v9783
      %v9785 = vmul.f32 %v9784, %v9652
      %v9786 = vadd.f32 %v9785, 1e-05
      %v9787 = vrsqrt.pop %v9786
      %v9788 = vmul.f32 %v9748, %v9787
      %v9789 = vmul.f32 %v9749, %v9787
      %v9790 = vmul.f32 %v9750, %v9787
      %v9791 = vmul.f32 %v9751, %v9787
      %v9792 = vmul.f32 %v9752, %v9787
      %v9793 = vmul.f32 %v9753, %v9787
      %v9794 = vmul.f32 %v9754, %v9787
      %v9795 = vmul.f32 %v9755, %v9787
      %vm9796 = vcmp.gt.f32.partialorder %v9788, 0.0
      %vm9797 = vcmp.gt.f32.partialorder %v9789, 0.0
      %vm9798 = vcmp.gt.f32.partialorder %v9790, 0.0
      %vm9799 = vcmp.gt.f32.partialorder %v9791, 0.0
      %vm9800 = vcmp.gt.f32.partialorder %v9792, 0.0
      %vm9801 = vcmp.gt.f32.partialorder %v9793, 0.0
      %vm9802 = vcmp.gt.f32.partialorder %v9794, 0.0
      %vm9803 = vcmp.gt.f32.partialorder %v9795, 0.0
      %v9804 = vmul.f32 %v9788, 0.2
      %v9805 = vmul.f32 %v9789, 0.2
      %v9806 = vmul.f32 %v9790, 0.2
      %v9807 = vmul.f32 %v9791, 0.2
      %v9808 = vmul.f32 %v9792, 0.2
      %v9809 = vmul.f32 %v9793, 0.2
      %v9810 = vmul.f32 %v9794, 0.2
      %v9811 = vmul.f32 %v9795, 0.2
      %v9812 = vsel %vm9796, %v9788, %v9804
      %v9813 = vsel %vm9797, %v9789, %v9805
      %v9814 = vsel %vm9798, %v9790, %v9806
      %v9815 = vsel %vm9799, %v9791, %v9807
      %v9816 = vsel %vm9800, %v9792, %v9808
      %v9817 = vsel %vm9801, %v9793, %v9809
      %v9818 = vsel %vm9802, %v9794, %v9810
      %v9819 = vsel %vm9803, %v9795, %v9811
      %9820 = vst.msk [vmem:[#allocation3 + $0x18] sm:$0xff] %vm839, %v9718
      %9821 = vst.msk [vmem:[#allocation3 + $0x20] sm:$0xff] %vm839, %v9719
      %9822 = vst.msk [vmem:[#allocation3 + $0x28] sm:$0xff] %vm839, %v9720
      %9823 = vst.msk [vmem:[#allocation3 + $0x30] sm:$0xff] %vm839, %v9721
      %9824 = vst.msk [vmem:[#allocation3 + $0x38] sm:$0xff] %vm839, %v9722
      %9825 = vst.msk [vmem:[#allocation3 + $0x40] sm:$0xff] %vm839, %v9723
      %9826 = vst.msk [vmem:[#allocation3 + $0x48] sm:$0xff] %vm839, %v9724
      %9827 = vst.msk [vmem:[#allocation3 + $0x50] sm:$0xff] %vm839, %v9725
      %9828 = vst.msk [vmem:[#allocation3 + $0x88] sm:$0xff] %vm839, %v9812
      %9829 = vst.msk [vmem:[#allocation3 + $0x90] sm:$0xff] %vm839, %v9813
      %9830 = vst.msk [vmem:[#allocation3 + $0x98] sm:$0xff] %vm839, %v9814
      %9831 = vst.msk [vmem:[#allocation3 + $0xa0] sm:$0xff] %vm839, %v9815
      %9832 = vst.msk [vmem:[#allocation3 + $0xa8] sm:$0xff] %vm839, %v9816
      %9833 = vst.msk [vmem:[#allocation3 + $0xb0] sm:$0xff] %vm839, %v9817
      %9834 = vst.msk [vmem:[#allocation3 + $0xb8] sm:$0xff] %vm839, %v9818
      %9835 = vst.msk [vmem:[#allocation3 + $0xc0] sm:$0xff] %vm839, %v9819
      %v9836 = vld [vmem:[#allocation3 + $0xf] sm:$0xff]
      %v9837 = vld [vmem:[#allocation3 + $0x17] sm:$0xff]
      %v9838 = vld [vmem:[#allocation3 + $0x1f] sm:$0xff]
      %v9839 = vld [vmem:[#allocation3 + $0x27] sm:$0xff]
      %v9840 = vld [vmem:[#allocation3 + $0x2f] sm:$0xff]
      %v9841 = vld [vmem:[#allocation3 + $0x37] sm:$0xff]
      %v9842 = vld [vmem:[#allocation3 + $0x3f] sm:$0xff]
      %v9843 = vld [vmem:[#allocation3 + $0x47] sm:$0xff]
      %v9844 = vld [vmem:[#allocation3 + $0x7f] sm:$0xff]
      %v9845 = vld [vmem:[#allocation3 + $0x87] sm:$0xff]
      %v9846 = vld [vmem:[#allocation3 + $0x8f] sm:$0xff]
      %v9847 = vld [vmem:[#allocation3 + $0x97] sm:$0xff]
      %v9848 = vld [vmem:[#allocation3 + $0x9f] sm:$0xff]
      %v9849 = vld [vmem:[#allocation3 + $0xa7] sm:$0xff]
      %v9850 = vld [vmem:[#allocation3 + $0xaf] sm:$0xff]
      %v9851 = vld [vmem:[#allocation3 + $0xb7] sm:$0xff]
      %v9852 = vsel %vm8282, %v9836, 0.0
      %v9853 = vsel %vm8283, %v9837, 0.0
      %v9854 = vsel %vm8284, %v9838, 0.0
      %v9855 = vsel %vm8285, %v9839, 0.0
      %v9856 = vsel %vm8286, %v9840, 0.0
      %v9857 = vsel %vm8287, %v9841, 0.0
      %v9858 = vsel %vm8288, %v9842, 0.0
      %v9859 = vsel %vm8289, %v9843, 0.0
      %v9860 = vsel %vm8290, %v9844, 0.0
      %v9861 = vsel %vm8291, %v9845, 0.0
      %v9862 = vsel %vm8292, %v9846, 0.0
      %v9863 = vsel %vm8293, %v9847, 0.0
      %v9864 = vsel %vm8294, %v9848, 0.0
      %v9865 = vsel %vm8295, %v9849, 0.0
      %v9866 = vsel %vm8296, %v9850, 0.0
      %v9867 = vsel %vm8297, %v9851, 0.0
      %v9868 = vld [vmem:[#allocation3 + $0x10] sm:$0xff]
      %v9869 = vld [vmem:[#allocation3 + $0x18] sm:$0xff]
      %v9870 = vld [vmem:[#allocation3 + $0x20] sm:$0xff]
      %v9871 = vld [vmem:[#allocation3 + $0x28] sm:$0xff]
      %v9872 = vld [vmem:[#allocation3 + $0x30] sm:$0xff]
      %v9873 = vld [vmem:[#allocation3 + $0x38] sm:$0xff]
      %v9874 = vld [vmem:[#allocation3 + $0x40] sm:$0xff]
      %v9875 = vld [vmem:[#allocation3 + $0x48] sm:$0xff]
      %v9876 = vld [vmem:[#allocation3 + $0x80] sm:$0xff]
      %v9877 = vld [vmem:[#allocation3 + $0x88] sm:$0xff]
      %v9878 = vld [vmem:[#allocation3 + $0x90] sm:$0xff]
      %v9879 = vld [vmem:[#allocation3 + $0x98] sm:$0xff]
      %v9880 = vld [vmem:[#allocation3 + $0xa0] sm:$0xff]
      %v9881 = vld [vmem:[#allocation3 + $0xa8] sm:$0xff]
      %v9882 = vld [vmem:[#allocation3 + $0xb0] sm:$0xff]
      %v9883 = vld [vmem:[#allocation3 + $0xb8] sm:$0xff]
      %v9884 = vsel %vm8346, %v9868, 0.0
      %v9885 = vsel %vm8347, %v9869, 0.0
      %v9886 = vsel %vm8348, %v9870, 0.0
      %v9887 = vsel %vm8349, %v9871, 0.0
      %v9888 = vsel %vm8350, %v9872, 0.0
      %v9889 = vsel %vm8351, %v9873, 0.0
      %v9890 = vsel %vm8352, %v9874, 0.0
      %v9891 = vsel %vm8353, %v9875, 0.0
      %v9892 = vsel %vm8354, %v9876, 0.0
      %v9893 = vsel %vm8355, %v9877, 0.0
      %v9894 = vsel %vm8356, %v9878, 0.0
      %v9895 = vsel %vm8357, %v9879, 0.0
      %v9896 = vsel %vm8358, %v9880, 0.0
      %v9897 = vsel %vm8359, %v9881, 0.0
      %v9898 = vsel %vm8360, %v9882, 0.0
      %v9899 = vsel %vm8361, %v9883, 0.0
      %v9900 = vld [vmem:[#allocation3 + $0x11] sm:$0xff]
      %v9901 = vld [vmem:[#allocation3 + $0x19] sm:$0xff]
      %v9902 = vld [vmem:[#allocation3 + $0x21] sm:$0xff]
      %v9903 = vld [vmem:[#allocation3 + $0x29] sm:$0xff]
      %v9904 = vld [vmem:[#allocation3 + $0x31] sm:$0xff]
      %v9905 = vld [vmem:[#allocation3 + $0x39] sm:$0xff]
      %v9906 = vld [vmem:[#allocation3 + $0x41] sm:$0xff]
      %v9907 = vld [vmem:[#allocation3 + $0x49] sm:$0xff]
      %v9908 = vld [vmem:[#allocation3 + $0x81] sm:$0xff]
      %v9909 = vld [vmem:[#allocation3 + $0x89] sm:$0xff]
      %v9910 = vld [vmem:[#allocation3 + $0x91] sm:$0xff]
      %v9911 = vld [vmem:[#allocation3 + $0x99] sm:$0xff]
      %v9912 = vld [vmem:[#allocation3 + $0xa1] sm:$0xff]
      %v9913 = vld [vmem:[#allocation3 + $0xa9] sm:$0xff]
      %v9914 = vld [vmem:[#allocation3 + $0xb1] sm:$0xff]
      %v9915 = vld [vmem:[#allocation3 + $0xb9] sm:$0xff]
      %v9916 = vsel %vm8426, %v9900, 0.0
      %v9917 = vsel %vm8427, %v9901, 0.0
      %v9918 = vsel %vm8428, %v9902, 0.0
      %v9919 = vsel %vm8429, %v9903, 0.0
      %v9920 = vsel %vm8430, %v9904, 0.0
      %v9921 = vsel %vm8431, %v9905, 0.0
      %v9922 = vsel %vm8432, %v9906, 0.0
      %v9923 = vsel %vm8433, %v9907, 0.0
      %v9924 = vsel %vm8434, %v9908, 0.0
      %v9925 = vsel %vm8435, %v9909, 0.0
      %v9926 = vsel %vm8436, %v9910, 0.0
      %v9927 = vsel %vm8437, %v9911, 0.0
      %v9928 = vsel %vm8438, %v9912, 0.0
      %v9929 = vsel %vm8439, %v9913, 0.0
      %v9930 = vsel %vm8440, %v9914, 0.0
      %v9931 = vsel %vm8441, %v9915, 0.0
      %v9932 = vld [vmem:[#allocation3 + $0x4f] sm:$0xff]
      %v9933 = vld [vmem:[#allocation3 + $0xbf] sm:$0xff]
      %v9934 = vsel %vm8476, %v9837, 0.0
      %v9935 = vsel %vm8477, %v9838, 0.0
      %v9936 = vsel %vm8478, %v9839, 0.0
      %v9937 = vsel %vm8479, %v9840, 0.0
      %v9938 = vsel %vm8480, %v9841, 0.0
      %v9939 = vsel %vm8481, %v9842, 0.0
      %v9940 = vsel %vm8482, %v9843, 0.0
      %v9941 = vsel %vm8483, %v9932, 0.0
      %v9942 = vsel %vm8484, %v9845, 0.0
      %v9943 = vsel %vm8485, %v9846, 0.0
      %v9944 = vsel %vm8486, %v9847, 0.0
      %v9945 = vsel %vm8487, %v9848, 0.0
      %v9946 = vsel %vm8488, %v9849, 0.0
      %v9947 = vsel %vm8489, %v9850, 0.0
      %v9948 = vsel %vm8490, %v9851, 0.0
      %v9949 = vsel %vm8491, %v9933, 0.0
      %v9950 = vld [vmem:[#allocation3 + $0x50] sm:$0xff]
      %v9951 = vld [vmem:[#allocation3 + $0xc0] sm:$0xff]
      %v9952 = vld [vmem:[#allocation3 + $0x51] sm:$0xff]
      %v9953 = vld [vmem:[#allocation3 + $0xc1] sm:$0xff]
      %v9954 = vsel %vm8528, %v9901, 0.0
      %v9955 = vsel %vm8529, %v9902, 0.0
      %v9956 = vsel %vm8530, %v9903, 0.0
      %v9957 = vsel %vm8531, %v9904, 0.0
      %v9958 = vsel %vm8532, %v9905, 0.0
      %v9959 = vsel %vm8533, %v9906, 0.0
      %v9960 = vsel %vm8534, %v9907, 0.0
      %v9961 = vsel %vm8535, %v9952, 0.0
      %v9962 = vsel %vm8536, %v9909, 0.0
      %v9963 = vsel %vm8537, %v9910, 0.0
      %v9964 = vsel %vm8538, %v9911, 0.0
      %v9965 = vsel %vm8539, %v9912, 0.0
      %v9966 = vsel %vm8540, %v9913, 0.0
      %v9967 = vsel %vm8541, %v9914, 0.0
      %v9968 = vsel %vm8542, %v9915, 0.0
      %v9969 = vsel %vm8543, %v9953, 0.0
      %v9970 = vld [vmem:[#allocation3 + $0x57] sm:$0xff]
      %v9971 = vld [vmem:[#allocation3 + $0xc7] sm:$0xff]
      %v9972 = vsel %vm8594, %v9838, 0.0
      %v9973 = vsel %vm8595, %v9839, 0.0
      %v9974 = vsel %vm8596, %v9840, 0.0
      %v9975 = vsel %vm8597, %v9841, 0.0
      %v9976 = vsel %vm8598, %v9842, 0.0
      %v9977 = vsel %vm8599, %v9843, 0.0
      %v9978 = vsel %vm8600, %v9932, 0.0
      %v9979 = vsel %vm8601, %v9970, 0.0
      %v9980 = vsel %vm8602, %v9846, 0.0
      %v9981 = vsel %vm8603, %v9847, 0.0
      %v9982 = vsel %vm8604, %v9848, 0.0
      %v9983 = vsel %vm8605, %v9849, 0.0
      %v9984 = vsel %vm8606, %v9850, 0.0
      %v9985 = vsel %vm8607, %v9851, 0.0
      %v9986 = vsel %vm8608, %v9933, 0.0
      %v9987 = vsel %vm8609, %v9971, 0.0
      %v9988 = vld [vmem:[#allocation3 + $0x58] sm:$0xff]
      %v9989 = vld [vmem:[#allocation3 + $0xc8] sm:$0xff]
      %v9990 = vsel %vm8644, %v9870, 0.0
      %v9991 = vsel %vm8645, %v9871, 0.0
      %v9992 = vsel %vm8646, %v9872, 0.0
      %v9993 = vsel %vm8647, %v9873, 0.0
      %v9994 = vsel %vm8648, %v9874, 0.0
      %v9995 = vsel %vm8649, %v9875, 0.0
      %v9996 = vsel %vm8650, %v9950, 0.0
      %v9997 = vsel %vm8651, %v9988, 0.0
      %v9998 = vsel %vm8652, %v9878, 0.0
      %v9999 = vsel %vm8653, %v9879, 0.0
      %v10000 = vsel %vm8654, %v9880, 0.0
      %v10001 = vsel %vm8655, %v9881, 0.0
      %v10002 = vsel %vm8656, %v9882, 0.0
      %v10003 = vsel %vm8657, %v9883, 0.0
      %v10004 = vsel %vm8658, %v9951, 0.0
      %v10005 = vsel %vm8659, %v9989, 0.0
      %v10006 = vld [vmem:[#allocation3 + $0x59] sm:$0xff]
      %v10007 = vld [vmem:[#allocation3 + $0xc9] sm:$0xff]
      %v10008 = vsel %vm8710, %v9902, 0.0
      %v10009 = vsel %vm8711, %v9903, 0.0
      %v10010 = vsel %vm8712, %v9904, 0.0
      %v10011 = vsel %vm8713, %v9905, 0.0
      %v10012 = vsel %vm8714, %v9906, 0.0
      %v10013 = vsel %vm8715, %v9907, 0.0
      %v10014 = vsel %vm8716, %v9952, 0.0
      %v10015 = vsel %vm8717, %v10006, 0.0
      %v10016 = vsel %vm8718, %v9910, 0.0
      %v10017 = vsel %vm8719, %v9911, 0.0
      %v10018 = vsel %vm8720, %v9912, 0.0
      %v10019 = vsel %vm8721, %v9913, 0.0
      %v10020 = vsel %vm8722, %v9914, 0.0
      %v10021 = vsel %vm8723, %v9915, 0.0
      %v10022 = vsel %vm8724, %v9953, 0.0
      %v10023 = vsel %vm8725, %v10007, 0.0
      %10040 = vrot.lane.b32.xlu0 %v9884, 32
      %v10041 = vpop.permute.xlu0 %10040
      %10042 = vrot.lane.b32.xlu0 %v9885, 32
      %v10043 = vpop.permute.xlu0 %10042
      %10044 = vrot.lane.b32.xlu0 %v9886, 32
      %v10045 = vpop.permute.xlu0 %10044
      %10046 = vrot.lane.b32.xlu0 %v9887, 32
      %v10047 = vpop.permute.xlu0 %10046
      %10048 = vrot.lane.b32.xlu0 %v9888, 32
      %v10049 = vpop.permute.xlu0 %10048
      %10050 = vrot.lane.b32.xlu0 %v9889, 32
      %v10051 = vpop.permute.xlu0 %10050
      %10052 = vrot.lane.b32.xlu0 %v9890, 32
      %v10053 = vpop.permute.xlu0 %10052
      %10054 = vrot.lane.b32.xlu0 %v9891, 32
      %v10055 = vpop.permute.xlu0 %10054
      %10056 = vrot.lane.b32.xlu0 %v9892, 32
      %v10057 = vpop.permute.xlu0 %10056
      %10058 = vrot.lane.b32.xlu0 %v9893, 32
      %v10059 = vpop.permute.xlu0 %10058
      %10060 = vrot.lane.b32.xlu0 %v9894, 32
      %v10061 = vpop.permute.xlu0 %10060
      %10062 = vrot.lane.b32.xlu0 %v9895, 32
      %v10063 = vpop.permute.xlu0 %10062
      %10064 = vrot.lane.b32.xlu0 %v9896, 32
      %v10065 = vpop.permute.xlu0 %10064
      %10066 = vrot.lane.b32.xlu0 %v9897, 32
      %v10067 = vpop.permute.xlu0 %10066
      %10068 = vrot.lane.b32.xlu0 %v9898, 32
      %v10069 = vpop.permute.xlu0 %10068
      %10070 = vrot.lane.b32.xlu0 %v9899, 32
      %v10071 = vpop.permute.xlu0 %10070
      %10104 = vrot.lane.b32.xlu0 %v9916, 64
      %v10105 = vpop.permute.xlu0 %10104
      %10106 = vrot.lane.b32.xlu0 %v9917, 64
      %v10107 = vpop.permute.xlu0 %10106
      %10108 = vrot.lane.b32.xlu0 %v9918, 64
      %v10109 = vpop.permute.xlu0 %10108
      %10110 = vrot.lane.b32.xlu0 %v9919, 64
      %v10111 = vpop.permute.xlu0 %10110
      %10112 = vrot.lane.b32.xlu0 %v9920, 64
      %v10113 = vpop.permute.xlu0 %10112
      %10114 = vrot.lane.b32.xlu0 %v9921, 64
      %v10115 = vpop.permute.xlu0 %10114
      %10116 = vrot.lane.b32.xlu0 %v9922, 64
      %v10117 = vpop.permute.xlu0 %10116
      %10118 = vrot.lane.b32.xlu0 %v9923, 64
      %v10119 = vpop.permute.xlu0 %10118
      %10120 = vrot.lane.b32.xlu0 %v9924, 64
      %v10121 = vpop.permute.xlu0 %10120
      %10122 = vrot.lane.b32.xlu0 %v9925, 64
      %v10123 = vpop.permute.xlu0 %10122
      %10124 = vrot.lane.b32.xlu0 %v9926, 64
      %v10125 = vpop.permute.xlu0 %10124
      %10126 = vrot.lane.b32.xlu0 %v9927, 64
      %v10127 = vpop.permute.xlu0 %10126
      %10128 = vrot.lane.b32.xlu0 %v9928, 64
      %v10129 = vpop.permute.xlu0 %10128
      %10130 = vrot.lane.b32.xlu0 %v9929, 64
      %v10131 = vpop.permute.xlu0 %10130
      %10132 = vrot.lane.b32.xlu0 %v9930, 64
      %v10133 = vpop.permute.xlu0 %10132
      %10134 = vrot.lane.b32.xlu0 %v9931, 64
      %v10135 = vpop.permute.xlu0 %10134
      %10168 = vrot.lane.b32.xlu0 %v9934, 96
      %v10169 = vpop.permute.xlu0 %10168
      %10170 = vrot.lane.b32.xlu0 %v9935, 96
      %v10171 = vpop.permute.xlu0 %10170
      %10172 = vrot.lane.b32.xlu0 %v9936, 96
      %v10173 = vpop.permute.xlu0 %10172
      %10174 = vrot.lane.b32.xlu0 %v9937, 96
      %v10175 = vpop.permute.xlu0 %10174
      %10176 = vrot.lane.b32.xlu0 %v9938, 96
      %v10177 = vpop.permute.xlu0 %10176
      %10178 = vrot.lane.b32.xlu0 %v9939, 96
      %v10179 = vpop.permute.xlu0 %10178
      %10180 = vrot.lane.b32.xlu0 %v9940, 96
      %v10181 = vpop.permute.xlu0 %10180
      %10182 = vrot.lane.b32.xlu0 %v9941, 96
      %v10183 = vpop.permute.xlu0 %10182
      %10184 = vrot.lane.b32.xlu0 %v9942, 96
      %v10185 = vpop.permute.xlu0 %10184
      %10186 = vrot.lane.b32.xlu0 %v9943, 96
      %v10187 = vpop.permute.xlu0 %10186
      %10188 = vrot.lane.b32.xlu0 %v9944, 96
      %v10189 = vpop.permute.xlu0 %10188
      %10190 = vrot.lane.b32.xlu0 %v9945, 96
      %v10191 = vpop.permute.xlu0 %10190
      %10192 = vrot.lane.b32.xlu0 %v9946, 96
      %v10193 = vpop.permute.xlu0 %10192
      %10194 = vrot.lane.b32.xlu0 %v9947, 96
      %v10195 = vpop.permute.xlu0 %10194
      %10196 = vrot.lane.b32.xlu0 %v9948, 96
      %v10197 = vpop.permute.xlu0 %10196
      %10198 = vrot.lane.b32.xlu0 %v9949, 96
      %v10199 = vpop.permute.xlu0 %10198
      %10232 = vrot.lane.b32.xlu0 %v9954, 32
      %v10233 = vpop.permute.xlu0 %10232
      %10234 = vrot.lane.b32.xlu0 %v9955, 32
      %v10235 = vpop.permute.xlu0 %10234
      %10236 = vrot.lane.b32.xlu0 %v9956, 32
      %v10237 = vpop.permute.xlu0 %10236
      %10238 = vrot.lane.b32.xlu0 %v9957, 32
      %v10239 = vpop.permute.xlu0 %10238
      %10240 = vrot.lane.b32.xlu0 %v9958, 32
      %v10241 = vpop.permute.xlu0 %10240
      %10242 = vrot.lane.b32.xlu0 %v9959, 32
      %v10243 = vpop.permute.xlu0 %10242
      %10244 = vrot.lane.b32.xlu0 %v9960, 32
      %v10245 = vpop.permute.xlu0 %10244
      %10246 = vrot.lane.b32.xlu0 %v9961, 32
      %v10247 = vpop.permute.xlu0 %10246
      %10248 = vrot.lane.b32.xlu0 %v9962, 32
      %v10249 = vpop.permute.xlu0 %10248
      %10250 = vrot.lane.b32.xlu0 %v9963, 32
      %v10251 = vpop.permute.xlu0 %10250
      %10252 = vrot.lane.b32.xlu0 %v9964, 32
      %v10253 = vpop.permute.xlu0 %10252
      %10254 = vrot.lane.b32.xlu0 %v9965, 32
      %v10255 = vpop.permute.xlu0 %10254
      %10256 = vrot.lane.b32.xlu0 %v9966, 32
      %v10257 = vpop.permute.xlu0 %10256
      %10258 = vrot.lane.b32.xlu0 %v9967, 32
      %v10259 = vpop.permute.xlu0 %10258
      %10260 = vrot.lane.b32.xlu0 %v9968, 32
      %v10261 = vpop.permute.xlu0 %10260
      %10262 = vrot.lane.b32.xlu0 %v9969, 32
      %v10263 = vpop.permute.xlu0 %10262
      %10296 = vrot.lane.b32.xlu0 %v9972, 64
      %v10297 = vpop.permute.xlu0 %10296
      %10298 = vrot.lane.b32.xlu0 %v9973, 64
      %v10299 = vpop.permute.xlu0 %10298
      %10300 = vrot.lane.b32.xlu0 %v9974, 64
      %v10301 = vpop.permute.xlu0 %10300
      %10302 = vrot.lane.b32.xlu0 %v9975, 64
      %v10303 = vpop.permute.xlu0 %10302
      %10304 = vrot.lane.b32.xlu0 %v9976, 64
      %v10305 = vpop.permute.xlu0 %10304
      %10306 = vrot.lane.b32.xlu0 %v9977, 64
      %v10307 = vpop.permute.xlu0 %10306
      %10308 = vrot.lane.b32.xlu0 %v9978, 64
      %v10309 = vpop.permute.xlu0 %10308
      %10310 = vrot.lane.b32.xlu0 %v9979, 64
      %v10311 = vpop.permute.xlu0 %10310
      %10312 = vrot.lane.b32.xlu0 %v9980, 64
      %v10313 = vpop.permute.xlu0 %10312
      %10314 = vrot.lane.b32.xlu0 %v9981, 64
      %v10315 = vpop.permute.xlu0 %10314
      %10316 = vrot.lane.b32.xlu0 %v9982, 64
      %v10317 = vpop.permute.xlu0 %10316
      %10318 = vrot.lane.b32.xlu0 %v9983, 64
      %v10319 = vpop.permute.xlu0 %10318
      %10320 = vrot.lane.b32.xlu0 %v9984, 64
      %v10321 = vpop.permute.xlu0 %10320
      %10322 = vrot.lane.b32.xlu0 %v9985, 64
      %v10323 = vpop.permute.xlu0 %10322
      %10324 = vrot.lane.b32.xlu0 %v9986, 64
      %v10325 = vpop.permute.xlu0 %10324
      %10326 = vrot.lane.b32.xlu0 %v9987, 64
      %v10327 = vpop.permute.xlu0 %10326
      %10360 = vrot.lane.b32.xlu0 %v9990, 96
      %v10361 = vpop.permute.xlu0 %10360
      %10362 = vrot.lane.b32.xlu0 %v9991, 96
      %v10363 = vpop.permute.xlu0 %10362
      %10364 = vrot.lane.b32.xlu0 %v9992, 96
      %v10365 = vpop.permute.xlu0 %10364
      %10366 = vrot.lane.b32.xlu0 %v9993, 96
      %v10367 = vpop.permute.xlu0 %10366
      %10368 = vrot.lane.b32.xlu0 %v9994, 96
      %v10369 = vpop.permute.xlu0 %10368
      %10370 = vrot.lane.b32.xlu0 %v9995, 96
      %v10371 = vpop.permute.xlu0 %10370
      %10372 = vrot.lane.b32.xlu0 %v9996, 96
      %v10373 = vpop.permute.xlu0 %10372
      %10374 = vrot.lane.b32.xlu0 %v9997, 96
      %v10375 = vpop.permute.xlu0 %10374
      %10376 = vrot.lane.b32.xlu0 %v9998, 96
      %v10377 = vpop.permute.xlu0 %10376
      %10378 = vrot.lane.b32.xlu0 %v9999, 96
      %v10379 = vpop.permute.xlu0 %10378
      %10380 = vrot.lane.b32.xlu0 %v10000, 96
      %v10381 = vpop.permute.xlu0 %10380
      %10382 = vrot.lane.b32.xlu0 %v10001, 96
      %v10383 = vpop.permute.xlu0 %10382
      %10384 = vrot.lane.b32.xlu0 %v10002, 96
      %v10385 = vpop.permute.xlu0 %10384
      %10386 = vrot.lane.b32.xlu0 %v10003, 96
      %v10387 = vpop.permute.xlu0 %10386
      %10388 = vrot.lane.b32.xlu0 %v10004, 96
      %v10389 = vpop.permute.xlu0 %10388
      %10390 = vrot.lane.b32.xlu0 %v10005, 96
      %v10391 = vpop.permute.xlu0 %10390
      %v10408 = vsel %vm839, %v9852, %v10041
      %v10409 = vsel %vm839, %v9853, %v10043
      %v10410 = vsel %vm839, %v9854, %v10045
      %v10411 = vsel %vm839, %v9855, %v10047
      %v10412 = vsel %vm839, %v9856, %v10049
      %v10413 = vsel %vm839, %v9857, %v10051
      %v10414 = vsel %vm839, %v9858, %v10053
      %v10415 = vsel %vm839, %v9859, %v10055
      %v10416 = vsel %vm839, %v9860, %v10057
      %v10417 = vsel %vm839, %v9861, %v10059
      %v10418 = vsel %vm839, %v9862, %v10061
      %v10419 = vsel %vm839, %v9863, %v10063
      %v10420 = vsel %vm839, %v9864, %v10065
      %v10421 = vsel %vm839, %v9865, %v10067
      %v10422 = vsel %vm839, %v9866, %v10069
      %v10423 = vsel %vm839, %v9867, %v10071
      %v10424 = vsel %vm6086, %v10408, %v10105
      %v10425 = vsel %vm6086, %v10409, %v10107
      %v10426 = vsel %vm6086, %v10410, %v10109
      %v10427 = vsel %vm6086, %v10411, %v10111
      %v10428 = vsel %vm6086, %v10412, %v10113
      %v10429 = vsel %vm6086, %v10413, %v10115
      %v10430 = vsel %vm6086, %v10414, %v10117
      %v10431 = vsel %vm6086, %v10415, %v10119
      %v10432 = vsel %vm6086, %v10416, %v10121
      %v10433 = vsel %vm6086, %v10417, %v10123
      %v10434 = vsel %vm6086, %v10418, %v10125
      %v10435 = vsel %vm6086, %v10419, %v10127
      %v10436 = vsel %vm6086, %v10420, %v10129
      %v10437 = vsel %vm6086, %v10421, %v10131
      %v10438 = vsel %vm6086, %v10422, %v10133
      %v10439 = vsel %vm6086, %v10423, %v10135
      %v10440 = vsel %vm6151, %v10424, %v10169
      %v10441 = vsel %vm6151, %v10425, %v10171
      %v10442 = vsel %vm6151, %v10426, %v10173
      %v10443 = vsel %vm6151, %v10427, %v10175
      %v10444 = vsel %vm6151, %v10428, %v10177
      %v10445 = vsel %vm6151, %v10429, %v10179
      %v10446 = vsel %vm6151, %v10430, %v10181
      %v10447 = vsel %vm6151, %v10431, %v10183
      %v10448 = vsel %vm6151, %v10432, %v10185
      %v10449 = vsel %vm6151, %v10433, %v10187
      %v10450 = vsel %vm6151, %v10434, %v10189
      %v10451 = vsel %vm6151, %v10435, %v10191
      %v10452 = vsel %vm6151, %v10436, %v10193
      %v10453 = vsel %vm6151, %v10437, %v10195
      %v10454 = vsel %vm6151, %v10438, %v10197
      %v10455 = vsel %vm6151, %v10439, %v10199
      %v10456 = vsel %vm839, %v9869, %v10233
      %v10457 = vsel %vm839, %v9870, %v10235
      %v10458 = vsel %vm839, %v9871, %v10237
      %v10459 = vsel %vm839, %v9872, %v10239
      %v10460 = vsel %vm839, %v9873, %v10241
      %v10461 = vsel %vm839, %v9874, %v10243
      %v10462 = vsel %vm839, %v9875, %v10245
      %v10463 = vsel %vm839, %v9950, %v10247
      %v10464 = vsel %vm839, %v9877, %v10249
      %v10465 = vsel %vm839, %v9878, %v10251
      %v10466 = vsel %vm839, %v9879, %v10253
      %v10467 = vsel %vm839, %v9880, %v10255
      %v10468 = vsel %vm839, %v9881, %v10257
      %v10469 = vsel %vm839, %v9882, %v10259
      %v10470 = vsel %vm839, %v9883, %v10261
      %v10471 = vsel %vm839, %v9951, %v10263
      %v10472 = vsel %vm6086, %v10456, %v10297
      %v10473 = vsel %vm6086, %v10457, %v10299
      %v10474 = vsel %vm6086, %v10458, %v10301
      %v10475 = vsel %vm6086, %v10459, %v10303
      %v10476 = vsel %vm6086, %v10460, %v10305
      %v10477 = vsel %vm6086, %v10461, %v10307
      %v10478 = vsel %vm6086, %v10462, %v10309
      %v10479 = vsel %vm6086, %v10463, %v10311
      %v10480 = vsel %vm6086, %v10464, %v10313
      %v10481 = vsel %vm6086, %v10465, %v10315
      %v10482 = vsel %vm6086, %v10466, %v10317
      %v10483 = vsel %vm6086, %v10467, %v10319
      %v10484 = vsel %vm6086, %v10468, %v10321
      %v10485 = vsel %vm6086, %v10469, %v10323
      %v10486 = vsel %vm6086, %v10470, %v10325
      %v10487 = vsel %vm6086, %v10471, %v10327
      %v10488 = vsel %vm6151, %v10472, %v10361
      %v10489 = vsel %vm6151, %v10473, %v10363
      %v10490 = vsel %vm6151, %v10474, %v10365
      %v10491 = vsel %vm6151, %v10475, %v10367
      %v10492 = vsel %vm6151, %v10476, %v10369
      %v10493 = vsel %vm6151, %v10477, %v10371
      %v10494 = vsel %vm6151, %v10478, %v10373
      %v10495 = vsel %vm6151, %v10479, %v10375
      %v10496 = vsel %vm6151, %v10480, %v10377
      %v10497 = vsel %vm6151, %v10481, %v10379
      %v10498 = vsel %vm6151, %v10482, %v10381
      %v10499 = vsel %vm6151, %v10483, %v10383
      %v10500 = vsel %vm6151, %v10484, %v10385
      %v10501 = vsel %vm6151, %v10485, %v10387
      %v10502 = vsel %vm6151, %v10486, %v10389
      %v10503 = vsel %vm6151, %v10487, %v10391
      %v10504 = vpack.c.bf16 %v10441, %v10440
      %v10505 = vpack.c.bf16 %v10489, %v10488
      %v10506 = vpack.c.bf16 %v10009, %v10008
      %v10507 = vpack.c.bf16 %v10443, %v10442
      %v10508 = vpack.c.bf16 %v10491, %v10490
      %v10509 = vpack.c.bf16 %v10011, %v10010
      %v10510 = vpack.c.bf16 %v10445, %v10444
      %v10511 = vpack.c.bf16 %v10493, %v10492
      %v10512 = vpack.c.bf16 %v10013, %v10012
      %v10513 = vpack.c.bf16 %v10447, %v10446
      %v10514 = vpack.c.bf16 %v10495, %v10494
      %v10515 = vpack.c.bf16 %v10015, %v10014
      %v10516 = vpack.c.bf16 %v10449, %v10448
      %v10517 = vpack.c.bf16 %v10497, %v10496
      %v10518 = vpack.c.bf16 %v10017, %v10016
      %v10519 = vpack.c.bf16 %v10451, %v10450
      %v10520 = vpack.c.bf16 %v10499, %v10498
      %v10521 = vpack.c.bf16 %v10019, %v10018
      %v10522 = vpack.c.bf16 %v10453, %v10452
      %v10523 = vpack.c.bf16 %v10501, %v10500
      %v10524 = vpack.c.bf16 %v10021, %v10020
      %v10525 = vpack.c.bf16 %v10455, %v10454
      %v10526 = vpack.c.bf16 %v10503, %v10502
      %v10527 = vpack.c.bf16 %v10023, %v10022
      %v10528 = vld [vmem:[%s11] sm:$0xf]
      %v10529 = vld [vmem:[%s11 + $0x4] sm:$0xf]
      %v10530 = vld [vmem:[%s11 + $0x8] sm:$0xf]
      %v10531 = vld [vmem:[%s11 + $0xc] sm:$0xf]
      %v10532 = vld [vmem:[%s11 + $0x10] sm:$0xf]
      %v10533 = vld [vmem:[%s11 + $0x14] sm:$0xf]
      %v10534 = vld [vmem:[%s11 + $0x18] sm:$0xf]
      %v10535 = vld [vmem:[%s11 + $0x1c] sm:$0xf]
      %v10536 = vld [vmem:[%s11 + $0x20] sm:$0xf]
      %v10537 = vld [vmem:[%s11 + $0x24] sm:$0xf]
      %v10538 = vld [vmem:[%s11 + $0x28] sm:$0xf]
      %v10539 = vld [vmem:[%s11 + $0x2c] sm:$0xf]
      %v10540 = vld [vmem:[%s11 + $0x30] sm:$0xf]
      %v10541 = vld [vmem:[%s11 + $0x34] sm:$0xf]
      %v10542 = vld [vmem:[%s11 + $0x38] sm:$0xf]
      %v10543 = vld [vmem:[%s11 + $0x3c] sm:$0xf]
      %v10544 = vld [vmem:[%s11 + $0x40] sm:$0xf]
      %v10545 = vld [vmem:[%s11 + $0x44] sm:$0xf]
      %v10546 = vld [vmem:[%s11 + $0x48] sm:$0xf]
      %v10547 = vld [vmem:[%s11 + $0x4c] sm:$0xf]
      %v10548 = vld [vmem:[%s11 + $0x50] sm:$0xf]
      %v10549 = vld [vmem:[%s11 + $0x54] sm:$0xf]
      %v10550 = vld [vmem:[%s11 + $0x58] sm:$0xf]
      %v10551 = vld [vmem:[%s11 + $0x5c] sm:$0xf]
      %v10552 = vld [vmem:[%s11 + $0x60] sm:$0xf]
      %v10553 = vld [vmem:[%s11 + $0x64] sm:$0xf]
      %v10554 = vld [vmem:[%s11 + $0x68] sm:$0xf]
      %v10555 = vld [vmem:[%s11 + $0x6c] sm:$0xf]
      %v10556 = vld [vmem:[%s11 + $0x70] sm:$0xf]
      %v10557 = vld [vmem:[%s11 + $0x74] sm:$0xf]
      %v10558 = vld [vmem:[%s11 + $0x78] sm:$0xf]
      %v10559 = vld [vmem:[%s11 + $0x7c] sm:$0xf]
      %v10560 = vld [vmem:[%s11 + $0x80] sm:$0xf]
      %v10561 = vld [vmem:[%s11 + $0x84] sm:$0xf]
      %v10562 = vld [vmem:[%s11 + $0x88] sm:$0xf]
      %v10563 = vld [vmem:[%s11 + $0x8c] sm:$0xf]
      %v10564 = vld [vmem:[%s12] sm:$0x1]
      %v10566 = vlaneseq
      %v10567 = vshrl.u32 %v10566, 7
      %v10568 = vsub.s32 0, %v10567
      %v10569 = vrot.slane %v10564, %v10568
      %v10607 = vunpack.c.l.b16 %v10528
      %v10608 = vunpack.c.l.b16 %v10529
      %v10609 = vunpack.c.l.b16 %v10530
      %v10610 = vunpack.c.l.b16 %v10531
      %v10611 = vunpack.c.l.b16 %v10532
      %v10612 = vunpack.c.l.b16 %v10533
      %v10613 = vunpack.c.l.b16 %v10534
      %v10614 = vunpack.c.l.b16 %v10535
      %v10615 = vunpack.c.l.b16 %v10536
      %v10616 = vunpack.c.l.b16 %v10537
      %v10617 = vunpack.c.l.b16 %v10538
      %v10618 = vunpack.c.l.b16 %v10539
      %v10619 = vunpack.c.l.b16 %v10540
      %v10620 = vunpack.c.l.b16 %v10541
      %v10621 = vunpack.c.l.b16 %v10542
      %v10622 = vunpack.c.l.b16 %v10543
      %v10623 = vunpack.c.l.b16 %v10544
      %v10624 = vunpack.c.l.b16 %v10545
      %v10625 = vunpack.c.l.b16 %v10546
      %v10626 = vunpack.c.l.b16 %v10547
      %v10627 = vunpack.c.l.b16 %v10548
      %v10628 = vunpack.c.l.b16 %v10549
      %v10629 = vunpack.c.l.b16 %v10550
      %v10630 = vunpack.c.l.b16 %v10551
      %v10631 = vunpack.c.l.b16 %v10552
      %v10632 = vunpack.c.l.b16 %v10553
      %v10633 = vunpack.c.l.b16 %v10554
      %v10634 = vunpack.c.l.b16 %v10555
      %v10635 = vunpack.c.l.b16 %v10556
      %v10636 = vunpack.c.l.b16 %v10557
      %v10637 = vunpack.c.l.b16 %v10558
      %v10638 = vunpack.c.l.b16 %v10559
      %v10639 = vunpack.c.l.b16 %v10560
      %v10640 = vunpack.c.l.b16 %v10561
      %v10641 = vunpack.c.l.b16 %v10562
      %v10642 = vunpack.c.l.b16 %v10563
      %v10643 = vpack.c.b16 %v10608, %v10607
      %v10644 = vpack.c.b16 %v10610, %v10609
      %v10645 = vpack.c.b16 %v10612, %v10611
      %v10646 = vpack.c.b16 %v10614, %v10613
      %v10647 = vpack.c.b16 %v10616, %v10615
      %v10648 = vpack.c.b16 %v10618, %v10617
      %v10649 = vpack.c.b16 %v10620, %v10619
      %v10650 = vpack.c.b16 %v10622, %v10621
      %v10651 = vpack.c.b16 %v10624, %v10623
      %v10652 = vpack.c.b16 %v10626, %v10625
      %v10653 = vpack.c.b16 %v10628, %v10627
      %v10654 = vpack.c.b16 %v10630, %v10629
      %v10655 = vpack.c.b16 %v10632, %v10631
      %v10656 = vpack.c.b16 %v10634, %v10633
      %v10657 = vpack.c.b16 %v10636, %v10635
      %v10658 = vpack.c.b16 %v10638, %v10637
      %v10659 = vpack.c.b16 %v10640, %v10639
      %v10660 = vpack.c.b16 %v10642, %v10641
      %v10680 = vsel %vm839, %v10506, 0
      %v10683 = vsel %vm839, %v10509, 0
      %v10686 = vsel %vm839, %v10512, 0
      %v10689 = vsel %vm839, %v10515, 0
      %v10692 = vsel %vm839, %v10518, 0
      %v10695 = vsel %vm839, %v10521, 0
      %v10698 = vsel %vm839, %v10524, 0
      %v10701 = vsel %vm839, %v10527, 0
      %10703 = vmatprep.subr.bf16.mxu0 0
      %10704 = vmatpush1.bf16.msra.mxu0 %v10643
      %10705 = vmatprep.subr.bf16.mxu0 0
      %10706 = vmatpush1.bf16.msra.mxu0 %v10644
      %10707 = vmatprep.subr.bf16.mxu0 0
      %10708 = vmatpush1.bf16.msra.mxu0 %v10645
      %10709 = vmatprep.subr.bf16.mxu0 0
      %10710 = vmatpush1.bf16.msra.mxu0 %v10646
      %10711 = vmatprep.subr.bf16.mxu0 0
      %10712 = vmatpush1.bf16.msra.mxu0 %v10647
      %10713 = vmatprep.subr.bf16.mxu0 0
      %10714 = vmatpush1.bf16.msra.mxu0 %v10648
      %10715 = vmatprep.subr.bf16.mxu0 0
      %10716 = vmatpush1.bf16.msra.mxu0 %v10649
      %10717 = vmatprep.subr.bf16.mxu0 0
      %10718 = vmatpush1.bf16.msra.mxu0 %v10650
      %10719 = vmatprep.subr.bf16.mxu0 0
      %10720 = vmatpush1.bf16.msra.mxu0 %v10651
      %10721 = vmatprep.subr.bf16.mxu0 0
      %10722 = vmatpush1.bf16.msra.mxu0 %v10652
      %10723 = vmatprep.subr.bf16.mxu0 0
      %10724 = vmatpush1.bf16.msra.mxu0 %v10653
      %10725 = vmatprep.subr.bf16.mxu0 0
      %10726 = vmatpush1.bf16.msra.mxu0 %v10654
      %10727 = vmatprep.subr.bf16.mxu0 0
      %10728 = vmatpush1.bf16.msra.mxu0 %v10655
      %10729 = vmatprep.subr.bf16.mxu0 0
      %10730 = vmatpush1.bf16.msra.mxu0 %v10656
      %10731 = vmatprep.subr.bf16.mxu0 0
      %10732 = vmatpush1.bf16.msra.mxu0 %v10657
      %10733 = vmatprep.subr.bf16.mxu0 0
      %10734 = vmatpush1.bf16.msra.mxu0 %v10658
      %10735 = vmatprep.mubr.bf16.mxu0 %v10505
      %10736 = vmatmul.mubr.bf16.gmra.mrb[0].mxu0 %v10504
      %v10737 = vpop.f32.mrb[0].mxu0
      %v10738 = vadd.f32 %v10569, %v10737
      %v10739 = vpop.f32.mrb[0].mxu0
      %v10740 = vpop.f32.mrb[0].mxu0
      %v10741 = vadd.f32 %v10569, %v10740
      %v10742 = vpop.f32.mrb[0].mxu0
      %10743 = vmatprep.mubr.bf16.mxu0 %v10508
      %10744 = vmatmul.mubr.bf16.gmra.mrb[0].mxu0 %v10507
      %v10745 = vpop.f32.mrb[0].mxu0
      %v10746 = vadd.f32 %v10569, %v10745
      %v10747 = vpop.f32.mrb[0].mxu0
      %v10748 = vpop.f32.mrb[0].mxu0
      %v10749 = vadd.f32 %v10569, %v10748
      %v10750 = vpop.f32.mrb[0].mxu0
      %10751 = vmatprep.mubr.bf16.mxu0 %v10511
      %10752 = vmatmul.mubr.bf16.gmra.mrb[0].mxu0 %v10510
      %v10753 = vpop.f32.mrb[0].mxu0
      %v10754 = vadd.f32 %v10569, %v10753
      %v10755 = vpop.f32.mrb[0].mxu0
      %v10756 = vpop.f32.mrb[0].mxu0
      %v10757 = vadd.f32 %v10569, %v10756
      %v10758 = vpop.f32.mrb[0].mxu0
      %10759 = vmatprep.mubr.bf16.mxu0 %v10514
      %10760 = vmatmul.mubr.bf16.gmra.mrb[0].mxu0 %v10513
      %v10761 = vpop.f32.mrb[0].mxu0
      %v10762 = vadd.f32 %v10569, %v10761
      %v10763 = vpop.f32.mrb[0].mxu0
      %v10764 = vpop.f32.mrb[0].mxu0
      %v10765 = vadd.f32 %v10569, %v10764
      %v10766 = vpop.f32.mrb[0].mxu0
      %10767 = vmatprep.mubr.bf16.mxu0 %v10517
      %10768 = vmatmul.mubr.bf16.gmra.mrb[0].mxu0 %v10516
      %v10769 = vpop.f32.mrb[0].mxu0
      %v10770 = vadd.f32 %v10569, %v10769
      %v10771 = vpop.f32.mrb[0].mxu0
      %v10772 = vpop.f32.mrb[0].mxu0
      %v10773 = vadd.f32 %v10569, %v10772
      %v10774 = vpop.f32.mrb[0].mxu0
      %10775 = vmatprep.mubr.bf16.mxu0 %v10520
      %10776 = vmatmul.mubr.bf16.gmra.mrb[0].mxu0 %v10519
      %v10777 = vpop.f32.mrb[0].mxu0
      %v10778 = vadd.f32 %v10569, %v10777
      %v10779 = vpop.f32.mrb[0].mxu0
      %v10780 = vpop.f32.mrb[0].mxu0
      %v10781 = vadd.f32 %v10569, %v10780
      %v10782 = vpop.f32.mrb[0].mxu0
      %10783 = vmatprep.mubr.bf16.mxu0 %v10523
      %10784 = vmatmul.mubr.bf16.gmra.mrb[0].mxu0 %v10522
      %v10785 = vpop.f32.mrb[0].mxu0
      %v10786 = vadd.f32 %v10569, %v10785
      %v10787 = vpop.f32.mrb[0].mxu0
      %v10788 = vpop.f32.mrb[0].mxu0
      %v10789 = vadd.f32 %v10569, %v10788
      %v10790 = vpop.f32.mrb[0].mxu0
      %10791 = vmatprep.mubr.bf16.mxu0 %v10526
      %10792 = vmatmul.mubr.bf16.gmra.mrb[0].mxu0 %v10525
      %v10793 = vpop.f32.mrb[0].mxu0
      %v10794 = vadd.f32 %v10569, %v10793
      %v10795 = vpop.f32.mrb[0].mxu0
      %v10796 = vpop.f32.mrb[0].mxu0
      %v10797 = vadd.f32 %v10569, %v10796
      %v10798 = vpop.f32.mrb[0].mxu0
      %10799 = vdwg.mxu0
      %10800 = vmatprep.subr.bf16.mxu0 0
      %10801 = vmatpush1.bf16.msra.mxu0 %v10659
      %10802 = vmatprep.subr.bf16.mxu0 0
      %10803 = vmatpush1.bf16.msra.mxu0 %v10660
      %10804 = vmatprep.subr.bf16.mxu0 0
      %10805 = vmatpush1.bf16.msra.mxu0 0
      %10806 = vmatprep.subr.bf16.mxu0 0
      %10807 = vmatpush1.bf16.msra.mxu0 0
      %10808 = vmatprep.subr.bf16.mxu0 0
      %10809 = vmatpush1.bf16.msra.mxu0 0
      %10810 = vmatprep.subr.bf16.mxu0 0
      %10811 = vmatpush1.bf16.msra.mxu0 0
      %10812 = vmatprep.subr.bf16.mxu0 0
      %10813 = vmatpush1.bf16.msra.mxu0 0
      %10814 = vmatprep.subr.bf16.mxu0 0
      %10815 = vmatpush1.bf16.msra.mxu0 0
      %10816 = vmatprep.subr.bf16.mxu0 0
      %10817 = vmatpush1.bf16.msra.mxu0 0
      %10818 = vmatprep.subr.bf16.mxu0 0
      %10819 = vmatpush1.bf16.msra.mxu0 0
      %10820 = vmatprep.subr.bf16.mxu0 0
      %10821 = vmatpush1.bf16.msra.mxu0 0
      %10822 = vmatprep.subr.bf16.mxu0 0
      %10823 = vmatpush1.bf16.msra.mxu0 0
      %10824 = vmatprep.subr.bf16.mxu0 0
      %10825 = vmatpush1.bf16.msra.mxu0 0
      %10826 = vmatprep.subr.bf16.mxu0 0
      %10827 = vmatpush1.bf16.msra.mxu0 0
      %10828 = vmatprep.subr.bf16.mxu0 0
      %10829 = vmatpush1.bf16.msra.mxu0 0
      %10830 = vmatprep.subr.bf16.mxu0 0
      %10831 = vmatpush1.bf16.msra.mxu0 0
      %10832 = vmatprep.mubr.bf16.mxu0 0
      %10833 = vmatmul.mubr.bf16.gmra.mrb[0].mxu0 %v10680
      %v10834 = vpop.f32.mrb[0].mxu0
      %v10835 = vadd.f32 %v10738, %v10834
      %v10836 = vpop.f32.mrb[0].mxu0
      %v10837 = vpop.f32.mrb[0].mxu0
      %v10838 = vadd.f32 %v10741, %v10837
      %v10839 = vpop.f32.mrb[0].mxu0
      %10840 = vmatprep.mubr.bf16.mxu0 0
      %10841 = vmatmul.mubr.bf16.gmra.mrb[0].mxu0 %v10683
      %v10842 = vpop.f32.mrb[0].mxu0
      %v10843 = vadd.f32 %v10746, %v10842
      %v10844 = vpop.f32.mrb[0].mxu0
      %v10845 = vpop.f32.mrb[0].mxu0
      %v10846 = vadd.f32 %v10749, %v10845
      %v10847 = vpop.f32.mrb[0].mxu0
      %10848 = vmatprep.mubr.bf16.mxu0 0
      %10849 = vmatmul.mubr.bf16.gmra.mrb[0].mxu0 %v10686
      %v10850 = vpop.f32.mrb[0].mxu0
      %v10851 = vadd.f32 %v10754, %v10850
      %v10852 = vpop.f32.mrb[0].mxu0
      %v10853 = vpop.f32.mrb[0].mxu0
      %v10854 = vadd.f32 %v10757, %v10853
      %v10855 = vpop.f32.mrb[0].mxu0
      %10856 = vmatprep.mubr.bf16.mxu0 0
      %10857 = vmatmul.mubr.bf16.gmra.mrb[0].mxu0 %v10689
      %v10858 = vpop.f32.mrb[0].mxu0
      %v10859 = vadd.f32 %v10762, %v10858
      %v10860 = vpop.f32.mrb[0].mxu0
      %v10861 = vpop.f32.mrb[0].mxu0
      %v10862 = vadd.f32 %v10765, %v10861
      %v10863 = vpop.f32.mrb[0].mxu0
      %10864 = vmatprep.mubr.bf16.mxu0 0
      %10865 = vmatmul.mubr.bf16.gmra.mrb[0].mxu0 %v10692
      %v10866 = vpop.f32.mrb[0].mxu0
      %v10867 = vadd.f32 %v10770, %v10866
      %v10868 = vpop.f32.mrb[0].mxu0
      %v10869 = vpop.f32.mrb[0].mxu0
      %v10870 = vadd.f32 %v10773, %v10869
      %v10871 = vpop.f32.mrb[0].mxu0
      %10872 = vmatprep.mubr.bf16.mxu0 0
      %10873 = vmatmul.mubr.bf16.gmra.mrb[0].mxu0 %v10695
      %v10874 = vpop.f32.mrb[0].mxu0
      %v10875 = vadd.f32 %v10778, %v10874
      %v10876 = vpop.f32.mrb[0].mxu0
      %v10877 = vpop.f32.mrb[0].mxu0
      %v10878 = vadd.f32 %v10781, %v10877
      %v10879 = vpop.f32.mrb[0].mxu0
      %10880 = vmatprep.mubr.bf16.mxu0 0
      %10881 = vmatmul.mubr.bf16.gmra.mrb[0].mxu0 %v10698
      %v10882 = vpop.f32.mrb[0].mxu0
      %v10883 = vadd.f32 %v10786, %v10882
      %v10884 = vpop.f32.mrb[0].mxu0
      %v10885 = vpop.f32.mrb[0].mxu0
      %v10886 = vadd.f32 %v10789, %v10885
      %v10887 = vpop.f32.mrb[0].mxu0
      %10888 = vmatprep.mubr.bf16.mxu0 0
      %10889 = vmatmul.mubr.bf16.gmra.mrb[0].mxu0 %v10701
      %v10890 = vpop.f32.mrb[0].mxu0
      %v10891 = vadd.f32 %v10794, %v10890
      %v10892 = vpop.f32.mrb[0].mxu0
      %v10893 = vpop.f32.mrb[0].mxu0
      %v10894 = vadd.f32 %v10797, %v10893
      %v10895 = vpop.f32.mrb[0].mxu0
      %10896 = vdwg.mxu0
      %10913 = vrot.lane.b32.xlu0 %v9546, 96
      %v10914 = vpop.permute.xlu0 %10913
      %10915 = vrot.lane.b32.xlu0 %v9549, 96
      %v10916 = vpop.permute.xlu0 %10915
      %10917 = vrot.lane.b32.xlu0 %v9554, 96
      %v10918 = vpop.permute.xlu0 %10917
      %10919 = vrot.lane.b32.xlu0 %v9557, 96
      %v10920 = vpop.permute.xlu0 %10919
      %10921 = vrot.lane.b32.xlu0 %v9562, 96
      %v10922 = vpop.permute.xlu0 %10921
      %10923 = vrot.lane.b32.xlu0 %v9565, 96
      %v10924 = vpop.permute.xlu0 %10923
      %10925 = vrot.lane.b32.xlu0 %v9570, 96
      %v10926 = vpop.permute.xlu0 %10925
      %10927 = vrot.lane.b32.xlu0 %v9573, 96
      %v10928 = vpop.permute.xlu0 %10927
      %10929 = vrot.lane.b32.xlu0 %v9578, 96
      %v10930 = vpop.permute.xlu0 %10929
      %10931 = vrot.lane.b32.xlu0 %v9581, 96
      %v10932 = vpop.permute.xlu0 %10931
      %10933 = vrot.lane.b32.xlu0 %v9586, 96
      %v10934 = vpop.permute.xlu0 %10933
      %10935 = vrot.lane.b32.xlu0 %v9589, 96
      %v10936 = vpop.permute.xlu0 %10935
      %10937 = vrot.lane.b32.xlu0 %v9594, 96
      %v10938 = vpop.permute.xlu0 %10937
      %10939 = vrot.lane.b32.xlu0 %v9597, 96
      %v10940 = vpop.permute.xlu0 %10939
      %10941 = vrot.lane.b32.xlu0 %v9602, 96
      %v10942 = vpop.permute.xlu0 %10941
      %10943 = vrot.lane.b32.xlu0 %v9605, 96
      %v10944 = vpop.permute.xlu0 %10943
      %v10961 = vadd.f32 %v10835, %v10914
      %v10962 = vadd.f32 %v10838, %v10916
      %v10963 = vadd.f32 %v10843, %v10918
      %v10964 = vadd.f32 %v10846, %v10920
      %v10965 = vadd.f32 %v10851, %v10922
      %v10966 = vadd.f32 %v10854, %v10924
      %v10967 = vadd.f32 %v10859, %v10926
      %v10968 = vadd.f32 %v10862, %v10928
      %v10969 = vadd.f32 %v10867, %v10930
      %v10970 = vadd.f32 %v10870, %v10932
      %v10971 = vadd.f32 %v10875, %v10934
      %v10972 = vadd.f32 %v10878, %v10936
      %v10973 = vadd.f32 %v10883, %v10938
      %v10974 = vadd.f32 %v10886, %v10940
      %v10975 = vadd.f32 %v10891, %v10942
      %v10976 = vadd.f32 %v10894, %v10944
      %v10977 = vld [vmem:[%s13] sm:$0x1]
      %v10979 = vlaneseq
      %v10980 = vshrl.u32 %v10979, 7
      %v10981 = vsub.s32 0, %v10980
      %v10982 = vrot.slane %v10977, %v10981
      %v10984 = vadd.f32 %v10961, %v10982
      %v10985 = vadd.f32 %v10962, %v10982
      %v10986 = vadd.f32 %v10963, %v10982
      %v10987 = vadd.f32 %v10964, %v10982
      %v10988 = vadd.f32 %v10965, %v10982
      %v10989 = vadd.f32 %v10966, %v10982
      %v10990 = vadd.f32 %v10967, %v10982
      %v10991 = vadd.f32 %v10968, %v10982
      %v10992 = vadd.f32 %v10969, %v10982
      %v10993 = vadd.f32 %v10970, %v10982
      %v10994 = vadd.f32 %v10971, %v10982
      %v10995 = vadd.f32 %v10972, %v10982
      %v10996 = vadd.f32 %v10973, %v10982
      %v10997 = vadd.f32 %v10974, %v10982
      %v10998 = vadd.f32 %v10975, %v10982
      %v10999 = vadd.f32 %v10976, %v10982
      %v11000 = vmax.f32 %v10984, 0.0
      %v11001 = vmax.f32 %v10985, 0.0
      %v11002 = vmax.f32 %v10986, 0.0
      %v11003 = vmax.f32 %v10987, 0.0
      %v11004 = vmax.f32 %v10988, 0.0
      %v11005 = vmax.f32 %v10989, 0.0
      %v11006 = vmax.f32 %v10990, 0.0
      %v11007 = vmax.f32 %v10991, 0.0
      %v11008 = vmax.f32 %v10992, 0.0
      %v11009 = vmax.f32 %v10993, 0.0
      %v11010 = vmax.f32 %v10994, 0.0
      %v11011 = vmax.f32 %v10995, 0.0
      %v11012 = vmax.f32 %v10996, 0.0
      %v11013 = vmax.f32 %v10997, 0.0
      %v11014 = vmax.f32 %v10998, 0.0
      %v11015 = vmax.f32 %v10999, 0.0
      %v11016 = vpack.c.bf16 %v11001, %v11000
      %v11017 = vpack.c.bf16 %v11003, %v11002
      %v11018 = vpack.c.bf16 %v11005, %v11004
      %v11019 = vpack.c.bf16 %v11007, %v11006
      %v11020 = vpack.c.bf16 %v11009, %v11008
      %v11021 = vpack.c.bf16 %v11011, %v11010
      %v11022 = vpack.c.bf16 %v11013, %v11012
      %v11023 = vpack.c.bf16 %v11015, %v11014
      %v11024 = vld [vmem:[%s3] sm:$0xf]
      %v11025 = vld [vmem:[%s3 + $0x4] sm:$0xf]
      %v11026 = vld [vmem:[%s3 + $0x8] sm:$0xf]
      %v11027 = vld [vmem:[%s3 + $0xc] sm:$0xf]
      %v11032 = vunpack.c.l.b16 %v11024
      %v11033 = vunpack.c.l.b16 %v11025
      %v11034 = vunpack.c.l.b16 %v11026
      %v11035 = vunpack.c.l.b16 %v11027
      %v11036 = vpack.c.b16 %v11033, %v11032
      %v11037 = vpack.c.b16 %v11035, %v11034
      %11040 = vmatprep.subr.bf16.mxu0 0
      %11041 = vmatpush1.bf16.msra.mxu0 %v11016
      %11042 = vmatprep.subr.bf16.mxu0 0
      %11043 = vmatpush1.bf16.msra.mxu0 %v11017
      %11044 = vmatprep.subr.bf16.mxu0 0
      %11045 = vmatpush1.bf16.msra.mxu0 %v11018
      %11046 = vmatprep.subr.bf16.mxu0 0
      %11047 = vmatpush1.bf16.msra.mxu0 %v11019
      %11048 = vmatprep.subr.bf16.mxu0 0
      %11049 = vmatpush1.bf16.msra.mxu0 %v11020
      %11050 = vmatprep.subr.bf16.mxu0 0
      %11051 = vmatpush1.bf16.msra.mxu0 %v11021
      %11052 = vmatprep.subr.bf16.mxu0 0
      %11053 = vmatpush1.bf16.msra.mxu0 %v11022
      %11054 = vmatprep.subr.bf16.mxu0 0
      %11055 = vmatpush1.bf16.msra.mxu0 %v11023
      %11056 = vmatprep.subr.bf16.mxu0 0
      %11057 = vmatpush1.bf16.msra.mxu0 0
      %11058 = vmatprep.subr.bf16.mxu0 0
      %11059 = vmatpush1.bf16.msra.mxu0 0
      %11060 = vmatprep.subr.bf16.mxu0 0
      %11061 = vmatpush1.bf16.msra.mxu0 0
      %11062 = vmatprep.subr.bf16.mxu0 0
      %11063 = vmatpush1.bf16.msra.mxu0 0
      %11064 = vmatprep.subr.bf16.mxu0 0
      %11065 = vmatpush1.bf16.msra.mxu0 0
      %11066 = vmatprep.subr.bf16.mxu0 0
      %11067 = vmatpush1.bf16.msra.mxu0 0
      %11068 = vmatprep.subr.bf16.mxu0 0
      %11069 = vmatpush1.bf16.msra.mxu0 0
      %11070 = vmatprep.subr.bf16.mxu0 0
      %11071 = vmatpush1.bf16.msra.mxu0 0
      %11072 = vmatprep.mubr.bf16.mxu0 0
      %11073 = vmatmul.mubr.bf16.gmra.mrb[0].mxu0 %v11036
      %v11074 = vpop.f32.mrb[0].mxu0
      %v11075 = vadd.f32 0.0, %v11074
      %v11076 = vpop.f32.mrb[0].mxu0
      %v11077 = vpop.f32.mrb[0].mxu0
      %v11078 = vadd.f32 0.0, %v11077
      %v11079 = vpop.f32.mrb[0].mxu0
      %11080 = vmatprep.mubr.bf16.mxu0 0
      %11081 = vmatmul.mubr.bf16.gmra.mrb[0].mxu0 %v11037
      %v11082 = vpop.f32.mrb[0].mxu0
      %v11083 = vadd.f32 0.0, %v11082
      %v11084 = vpop.f32.mrb[0].mxu0
      %v11085 = vpop.f32.mrb[0].mxu0
      %v11086 = vadd.f32 0.0, %v11085
      %v11087 = vpop.f32.mrb[0].mxu0
      %11088 = vdwg.mxu0
      %v11089 = vld [vmem:[%s14] sm:$0xff]
      %v11090 = vld [vmem:[%s14 + $0x8] sm:$0xff]
      %v11091 = vld [vmem:[%s14 + $0x10] sm:$0xff]
      %v11092 = vld [vmem:[%s14 + $0x18] sm:$0xff]
      %v11093 = vmul.f32 %v11075, %v11089
      %v11094 = vmul.f32 %v11078, %v11090
      %v11095 = vmul.f32 %v11083, %v11091
      %v11096 = vmul.f32 %v11086, %v11092
      %v11097 = vld [vmem:[%s17] sm:$0xf]
      %v11098 = vld [vmem:[%s17 + $0x4] sm:$0xf]
      %v11099 = vld [vmem:[%s17 + $0x8] sm:$0xf]
      %v11100 = vld [vmem:[%s17 + $0xc] sm:$0xf]
      %v11105 = vunpack.c.l.b16 %v11097
      %v11106 = vunpack.c.l.b16 %v11098
      %v11107 = vunpack.c.l.b16 %v11099
      %v11108 = vunpack.c.l.b16 %v11100
      %v11109 = vpack.c.b16 %v11106, %v11105
      %v11110 = vpack.c.b16 %v11108, %v11107
      %v11114 = vsel %vm839, %v11016, 0
      %v11117 = vsel %vm839, %v11017, 0
      %v11120 = vsel %vm839, %v11018, 0
      %v11123 = vsel %vm839, %v11019, 0
      %v11126 = vsel %vm839, %v11020, 0
      %v11129 = vsel %vm839, %v11021, 0
      %v11132 = vsel %vm839, %v11022, 0
      %v11135 = vsel %vm839, %v11023, 0
      %11137 = vmatprep.subr.bf16.mxu0 0
      %11138 = vmatpush1.bf16.msra.mxu0 %v11109
      %11139 = vmatprep.subr.bf16.mxu0 0
      %11140 = vmatpush1.bf16.msra.mxu0 %v11110
      %11141 = vmatprep.subr.bf16.mxu0 0
      %11142 = vmatpush1.bf16.msra.mxu0 0
      %11143 = vmatprep.subr.bf16.mxu0 0
      %11144 = vmatpush1.bf16.msra.mxu0 0
      %11145 = vmatprep.subr.bf16.mxu0 0
      %11146 = vmatpush1.bf16.msra.mxu0 0
      %11147 = vmatprep.subr.bf16.mxu0 0
      %11148 = vmatpush1.bf16.msra.mxu0 0
      %11149 = vmatprep.subr.bf16.mxu0 0
      %11150 = vmatpush1.bf16.msra.mxu0 0
      %11151 = vmatprep.subr.bf16.mxu0 0
      %11152 = vmatpush1.bf16.msra.mxu0 0
      %11153 = vmatprep.subr.bf16.mxu0 0
      %11154 = vmatpush1.bf16.msra.mxu0 0
      %11155 = vmatprep.subr.bf16.mxu0 0
      %11156 = vmatpush1.bf16.msra.mxu0 0
      %11157 = vmatprep.subr.bf16.mxu0 0
      %11158 = vmatpush1.bf16.msra.mxu0 0
      %11159 = vmatprep.subr.bf16.mxu0 0
      %11160 = vmatpush1.bf16.msra.mxu0 0
      %11161 = vmatprep.subr.bf16.mxu0 0
      %11162 = vmatpush1.bf16.msra.mxu0 0
      %11163 = vmatprep.subr.bf16.mxu0 0
      %11164 = vmatpush1.bf16.msra.mxu0 0
      %11165 = vmatprep.subr.bf16.mxu0 0
      %11166 = vmatpush1.bf16.msra.mxu0 0
      %11167 = vmatprep.subr.bf16.mxu0 0
      %11168 = vmatpush1.bf16.msra.mxu0 0
      %11169 = vmatprep.mubr.bf16.mxu0 0
      %11170 = vmatmul.mubr.bf16.gmra.mrb[0].mxu0 %v11114
      %v11171 = vpop.f32.mrb[0].mxu0
      %v11172 = vadd.f32 0.0, %v11171
      %v11173 = vpop.f32.mrb[0].mxu0
      %v11174 = vpop.f32.mrb[0].mxu0
      %v11175 = vadd.f32 0.0, %v11174
      %v11176 = vpop.f32.mrb[0].mxu0
      %11177 = vmatprep.mubr.bf16.mxu0 0
      %11178 = vmatmul.mubr.bf16.gmra.mrb[0].mxu0 %v11117
      %v11179 = vpop.f32.mrb[0].mxu0
      %v11180 = vadd.f32 0.0, %v11179
      %v11181 = vpop.f32.mrb[0].mxu0
      %v11182 = vpop.f32.mrb[0].mxu0
      %v11183 = vadd.f32 0.0, %v11182
      %v11184 = vpop.f32.mrb[0].mxu0
      %11185 = vmatprep.mubr.bf16.mxu0 0
      %11186 = vmatmul.mubr.bf16.gmra.mrb[0].mxu0 %v11120
      %v11187 = vpop.f32.mrb[0].mxu0
      %v11188 = vadd.f32 0.0, %v11187
      %v11189 = vpop.f32.mrb[0].mxu0
      %v11190 = vpop.f32.mrb[0].mxu0
      %v11191 = vadd.f32 0.0, %v11190
      %v11192 = vpop.f32.mrb[0].mxu0
      %11193 = vmatprep.mubr.bf16.mxu0 0
      %11194 = vmatmul.mubr.bf16.gmra.mrb[0].mxu0 %v11123
      %v11195 = vpop.f32.mrb[0].mxu0
      %v11196 = vadd.f32 0.0, %v11195
      %v11197 = vpop.f32.mrb[0].mxu0
      %v11198 = vpop.f32.mrb[0].mxu0
      %v11199 = vadd.f32 0.0, %v11198
      %v11200 = vpop.f32.mrb[0].mxu0
      %11201 = vmatprep.mubr.bf16.mxu0 0
      %11202 = vmatmul.mubr.bf16.gmra.mrb[0].mxu0 %v11126
      %v11203 = vpop.f32.mrb[0].mxu0
      %v11204 = vadd.f32 0.0, %v11203
      %v11205 = vpop.f32.mrb[0].mxu0
      %v11206 = vpop.f32.mrb[0].mxu0
      %v11207 = vadd.f32 0.0, %v11206
      %v11208 = vpop.f32.mrb[0].mxu0
      %11209 = vmatprep.mubr.bf16.mxu0 0
      %11210 = vmatmul.mubr.bf16.gmra.mrb[0].mxu0 %v11129
      %v11211 = vpop.f32.mrb[0].mxu0
      %v11212 = vadd.f32 0.0, %v11211
      %v11213 = vpop.f32.mrb[0].mxu0
      %v11214 = vpop.f32.mrb[0].mxu0
      %v11215 = vadd.f32 0.0, %v11214
      %v11216 = vpop.f32.mrb[0].mxu0
      %11217 = vmatprep.mubr.bf16.mxu0 0
      %11218 = vmatmul.mubr.bf16.gmra.mrb[0].mxu0 %v11132
      %v11219 = vpop.f32.mrb[0].mxu0
      %v11220 = vadd.f32 0.0, %v11219
      %v11221 = vpop.f32.mrb[0].mxu0
      %v11222 = vpop.f32.mrb[0].mxu0
      %v11223 = vadd.f32 0.0, %v11222
      %v11224 = vpop.f32.mrb[0].mxu0
      %11225 = vmatprep.mubr.bf16.mxu0 0
      %11226 = vmatmul.mubr.bf16.gmra.mrb[0].mxu0 %v11135
      %v11227 = vpop.f32.mrb[0].mxu0
      %v11228 = vadd.f32 0.0, %v11227
      %v11229 = vpop.f32.mrb[0].mxu0
      %v11230 = vpop.f32.mrb[0].mxu0
      %v11231 = vadd.f32 0.0, %v11230
      %v11232 = vpop.f32.mrb[0].mxu0
      %11233 = vdwg.mxu0
      %v11234 = vld [vmem:[%s593] sm:$0xf]
      %v11235 = vld [vmem:[%s593 + $0x4] sm:$0xf]
      %v11236 = vld [vmem:[%s593 + $0x8] sm:$0xf]
      %v11237 = vld [vmem:[%s593 + $0xc] sm:$0xf]
      %v11238 = vld [vmem:[%s593 + $0x10] sm:$0xf]
      %v11239 = vld [vmem:[%s593 + $0x14] sm:$0xf]
      %v11240 = vld [vmem:[%s593 + $0x18] sm:$0xf]
      %v11241 = vld [vmem:[%s593 + $0x1c] sm:$0xf]
      %v11242 = vld [vmem:[%s593 + $0x20] sm:$0xf]
      %v11243 = vld [vmem:[%s593 + $0x24] sm:$0xf]
      %v11244 = vld [vmem:[%s593 + $0x28] sm:$0xf]
      %v11245 = vld [vmem:[%s593 + $0x2c] sm:$0xf]
      %v11246 = vld [vmem:[%s593 + $0x30] sm:$0xf]
      %v11247 = vld [vmem:[%s593 + $0x34] sm:$0xf]
      %v11248 = vld [vmem:[%s593 + $0x38] sm:$0xf]
      %v11249 = vld [vmem:[%s593 + $0x3c] sm:$0xf]
      %v11250 = vld [vmem:[%s16] sm:$0xf]
      %v11251 = vld [vmem:[%s16 + $0x4] sm:$0xf]
      %v11252 = vld [vmem:[%s16 + $0x8] sm:$0xf]
      %v11253 = vld [vmem:[%s16 + $0xc] sm:$0xf]
      %v11254 = vld [vmem:[%s16 + $0x10] sm:$0xf]
      %v11255 = vld [vmem:[%s16 + $0x14] sm:$0xf]
      %v11256 = vld [vmem:[%s16 + $0x18] sm:$0xf]
      %v11257 = vld [vmem:[%s16 + $0x1c] sm:$0xf]
      %v11274 = vunpack.c.l.b16 %v11234
      %v11275 = vunpack.c.l.b16 %v11235
      %v11276 = vunpack.c.l.b16 %v11236
      %v11277 = vunpack.c.l.b16 %v11237
      %v11278 = vunpack.c.l.b16 %v11238
      %v11279 = vunpack.c.l.b16 %v11239
      %v11280 = vunpack.c.l.b16 %v11240
      %v11281 = vunpack.c.l.b16 %v11241
      %v11282 = vunpack.c.l.b16 %v11242
      %v11283 = vunpack.c.l.b16 %v11243
      %v11284 = vunpack.c.l.b16 %v11244
      %v11285 = vunpack.c.l.b16 %v11245
      %v11286 = vunpack.c.l.b16 %v11246
      %v11287 = vunpack.c.l.b16 %v11247
      %v11288 = vunpack.c.l.b16 %v11248
      %v11289 = vunpack.c.l.b16 %v11249
      %v11290 = vpack.c.b16 %v11275, %v11274
      %v11291 = vpack.c.b16 %v11277, %v11276
      %v11292 = vpack.c.b16 %v11279, %v11278
      %v11293 = vpack.c.b16 %v11281, %v11280
      %v11294 = vpack.c.b16 %v11283, %v11282
      %v11295 = vpack.c.b16 %v11285, %v11284
      %v11296 = vpack.c.b16 %v11287, %v11286
      %v11297 = vpack.c.b16 %v11289, %v11288
      %v11306 = vunpack.c.l.b16 %v11250
      %v11307 = vunpack.c.l.b16 %v11251
      %v11308 = vunpack.c.l.b16 %v11252
      %v11309 = vunpack.c.l.b16 %v11253
      %v11310 = vunpack.c.l.b16 %v11254
      %v11311 = vunpack.c.l.b16 %v11255
      %v11312 = vunpack.c.l.b16 %v11256
      %v11313 = vunpack.c.l.b16 %v11257
      %v11314 = vpack.c.b16 %v11307, %v11306
      %v11315 = vpack.c.b16 %v11309, %v11308
      %v11316 = vpack.c.b16 %v11311, %v11310
      %v11317 = vpack.c.b16 %v11313, %v11312
      %v11323 = vsel %vm6086, %v11290, 0
      %v11326 = vsel %vm6086, %v11291, 0
      %v11329 = vsel %vm6086, %v11292, 0
      %v11332 = vsel %vm6086, %v11293, 0
      %v11335 = vsel %vm6086, %v11294, 0
      %v11338 = vsel %vm6086, %v11295, 0
      %v11341 = vsel %vm6086, %v11296, 0
      %v11344 = vsel %vm6086, %v11297, 0
      %11346 = vmatprep.subr.bf16.mxu0 0
      %11347 = vmatpush1.bf16.msra.mxu0 %v11314
      %11348 = vmatprep.subr.bf16.mxu0 0
      %11349 = vmatpush1.bf16.msra.mxu0 %v11315
      %11350 = vmatprep.subr.bf16.mxu0 0
      %11351 = vmatpush1.bf16.msra.mxu0 %v11316
      %11352 = vmatprep.subr.bf16.mxu0 0
      %11353 = vmatpush1.bf16.msra.mxu0 %v11317
      %11354 = vmatprep.subr.bf16.mxu0 0
      %11355 = vmatpush1.bf16.msra.mxu0 0
      %11356 = vmatprep.subr.bf16.mxu0 0
      %11357 = vmatpush1.bf16.msra.mxu0 0
      %11358 = vmatprep.subr.bf16.mxu0 0
      %11359 = vmatpush1.bf16.msra.mxu0 0
      %11360 = vmatprep.subr.bf16.mxu0 0
      %11361 = vmatpush1.bf16.msra.mxu0 0
      %11362 = vmatprep.subr.bf16.mxu0 0
      %11363 = vmatpush1.bf16.msra.mxu0 0
      %11364 = vmatprep.subr.bf16.mxu0 0
      %11365 = vmatpush1.bf16.msra.mxu0 0
      %11366 = vmatprep.subr.bf16.mxu0 0
      %11367 = vmatpush1.bf16.msra.mxu0 0
      %11368 = vmatprep.subr.bf16.mxu0 0
      %11369 = vmatpush1.bf16.msra.mxu0 0
      %11370 = vmatprep.subr.bf16.mxu0 0
      %11371 = vmatpush1.bf16.msra.mxu0 0
      %11372 = vmatprep.subr.bf16.mxu0 0
      %11373 = vmatpush1.bf16.msra.mxu0 0
      %11374 = vmatprep.subr.bf16.mxu0 0
      %11375 = vmatpush1.bf16.msra.mxu0 0
      %11376 = vmatprep.subr.bf16.mxu0 0
      %11377 = vmatpush1.bf16.msra.mxu0 0
      %11378 = vmatprep.mubr.bf16.mxu0 0
      %11379 = vmatmul.mubr.bf16.gmra.mrb[0].mxu0 %v11323
      %v11380 = vpop.f32.mrb[0].mxu0
      %v11381 = vadd.f32 0.0, %v11380
      %v11382 = vpop.f32.mrb[0].mxu0
      %v11383 = vpop.f32.mrb[0].mxu0
      %v11384 = vadd.f32 0.0, %v11383
      %v11385 = vpop.f32.mrb[0].mxu0
      %11386 = vmatprep.mubr.bf16.mxu0 0
      %11387 = vmatmul.mubr.bf16.gmra.mrb[0].mxu0 %v11326
      %v11388 = vpop.f32.mrb[0].mxu0
      %v11389 = vadd.f32 0.0, %v11388
      %v11390 = vpop.f32.mrb[0].mxu0
      %v11391 = vpop.f32.mrb[0].mxu0
      %v11392 = vadd.f32 0.0, %v11391
      %v11393 = vpop.f32.mrb[0].mxu0
      %11394 = vmatprep.mubr.bf16.mxu0 0
      %11395 = vmatmul.mubr.bf16.gmra.mrb[0].mxu0 %v11329
      %v11396 = vpop.f32.mrb[0].mxu0
      %v11397 = vadd.f32 0.0, %v11396
      %v11398 = vpop.f32.mrb[0].mxu0
      %v11399 = vpop.f32.mrb[0].mxu0
      %v11400 = vadd.f32 0.0, %v11399
      %v11401 = vpop.f32.mrb[0].mxu0
      %11402 = vmatprep.mubr.bf16.mxu0 0
      %11403 = vmatmul.mubr.bf16.gmra.mrb[0].mxu0 %v11332
      %v11404 = vpop.f32.mrb[0].mxu0
      %v11405 = vadd.f32 0.0, %v11404
      %v11406 = vpop.f32.mrb[0].mxu0
      %v11407 = vpop.f32.mrb[0].mxu0
      %v11408 = vadd.f32 0.0, %v11407
      %v11409 = vpop.f32.mrb[0].mxu0
      %11410 = vmatprep.mubr.bf16.mxu0 0
      %11411 = vmatmul.mubr.bf16.gmra.mrb[0].mxu0 %v11335
      %v11412 = vpop.f32.mrb[0].mxu0
      %v11413 = vadd.f32 0.0, %v11412
      %v11414 = vpop.f32.mrb[0].mxu0
      %v11415 = vpop.f32.mrb[0].mxu0
      %v11416 = vadd.f32 0.0, %v11415
      %v11417 = vpop.f32.mrb[0].mxu0
      %11418 = vmatprep.mubr.bf16.mxu0 0
      %11419 = vmatmul.mubr.bf16.gmra.mrb[0].mxu0 %v11338
      %v11420 = vpop.f32.mrb[0].mxu0
      %v11421 = vadd.f32 0.0, %v11420
      %v11422 = vpop.f32.mrb[0].mxu0
      %v11423 = vpop.f32.mrb[0].mxu0
      %v11424 = vadd.f32 0.0, %v11423
      %v11425 = vpop.f32.mrb[0].mxu0
      %11426 = vmatprep.mubr.bf16.mxu0 0
      %11427 = vmatmul.mubr.bf16.gmra.mrb[0].mxu0 %v11341
      %v11428 = vpop.f32.mrb[0].mxu0
      %v11429 = vadd.f32 0.0, %v11428
      %v11430 = vpop.f32.mrb[0].mxu0
      %v11431 = vpop.f32.mrb[0].mxu0
      %v11432 = vadd.f32 0.0, %v11431
      %v11433 = vpop.f32.mrb[0].mxu0
      %11434 = vmatprep.mubr.bf16.mxu0 0
      %11435 = vmatmul.mubr.bf16.gmra.mrb[0].mxu0 %v11344
      %v11436 = vpop.f32.mrb[0].mxu0
      %v11437 = vadd.f32 0.0, %v11436
      %v11438 = vpop.f32.mrb[0].mxu0
      %v11439 = vpop.f32.mrb[0].mxu0
      %v11440 = vadd.f32 0.0, %v11439
      %v11441 = vpop.f32.mrb[0].mxu0
      %11442 = vdwg.mxu0
      %v11443 = vmul.f32 %v11172, %v11381
      %v11444 = vmul.f32 %v11175, %v11384
      %v11445 = vmul.f32 %v11180, %v11389
      %v11446 = vmul.f32 %v11183, %v11392
      %v11447 = vmul.f32 %v11188, %v11397
      %v11448 = vmul.f32 %v11191, %v11400
      %v11449 = vmul.f32 %v11196, %v11405
      %v11450 = vmul.f32 %v11199, %v11408
      %v11451 = vmul.f32 %v11204, %v11413
      %v11452 = vmul.f32 %v11207, %v11416
      %v11453 = vmul.f32 %v11212, %v11421
      %v11454 = vmul.f32 %v11215, %v11424
      %v11455 = vmul.f32 %v11220, %v11429
      %v11456 = vmul.f32 %v11223, %v11432
      %v11457 = vmul.f32 %v11228, %v11437
      %v11458 = vmul.f32 %v11231, %v11440
      %v11459 = vsel %vm839, %v11093, 0.0
      %11460 = vadd.xlane.f32.xlu0 %v11459
      %v11461 = vpop.xlane.xlu0 %11460
      %v11462 = vsel %vm839, %v11094, 0.0
      %11463 = vadd.xlane.f32.xlu0 %v11462
      %v11464 = vpop.xlane.xlu0 %11463
      %v11465 = vadd.f32 %v11461, %v11464
      %v11466 = vrot.slane %v11465, 4
      %v11467 = vadd.f32 %v11465, %v11466
      %v11468 = vrot.slane %v11467, 2
      %v11469 = vadd.f32 %v11467, %v11468
      %v11470 = vrot.slane %v11469, 1
      %v11471 = vadd.f32 %v11469, %v11470
      %vm11472 = vcmask 130048
      %v11473 = vsel %vm11472, %v11443, 0.0
      %11474 = vadd.xlane.f32.xlu0 %v11473
      %v11475 = vpop.xlane.xlu0 %11474
      %v11476 = vsel %vm11472, %v11444, 0.0
      %11477 = vadd.xlane.f32.xlu0 %v11476
      %v11478 = vpop.xlane.xlu0 %11477
      %v11479 = vsel %vm11472, %v11445, 0.0
      %11480 = vadd.xlane.f32.xlu0 %v11479
      %v11481 = vpop.xlane.xlu0 %11480
      %v11482 = vsel %vm11472, %v11446, 0.0
      %11483 = vadd.xlane.f32.xlu0 %v11482
      %v11484 = vpop.xlane.xlu0 %11483
      %v11485 = vsel %vm11472, %v11447, 0.0
      %11486 = vadd.xlane.f32.xlu0 %v11485
      %v11487 = vpop.xlane.xlu0 %11486
      %v11488 = vsel %vm11472, %v11448, 0.0
      %11489 = vadd.xlane.f32.xlu0 %v11488
      %v11490 = vpop.xlane.xlu0 %11489
      %v11491 = vsel %vm11472, %v11449, 0.0
      %11492 = vadd.xlane.f32.xlu0 %v11491
      %v11493 = vpop.xlane.xlu0 %11492
      %v11494 = vsel %vm11472, %v11450, 0.0
      %11495 = vadd.xlane.f32.xlu0 %v11494
      %v11496 = vpop.xlane.xlu0 %11495
      %v11497 = vadd.f32 %v11475, %v11478
      %v11498 = vadd.f32 %v11497, %v11481
      %v11499 = vadd.f32 %v11498, %v11484
      %v11500 = vadd.f32 %v11499, %v11487
      %v11501 = vadd.f32 %v11500, %v11490
      %v11502 = vadd.f32 %v11501, %v11493
      %v11503 = vadd.f32 %v11502, %v11496
      %v11504 = vrot.slane %v11503, 4
      %v11505 = vadd.f32 %v11503, %v11504
      %v11506 = vrot.slane %v11505, 2
      %v11507 = vadd.f32 %v11505, %v11506
      %v11508 = vrot.slane %v11507, 1
      %v11509 = vadd.f32 %v11507, %v11508
      %v11510 = vadd.f32 %v11471, %v11509
      %v11511 = vmul.f32 %v11510, 0.015625
      %v11512 = vld [vmem:[#allocation4] sm:$0x1]
      %v11513 = vadd.f32 %v11511, %v11512
      %v11514 = vsel %vm839, %v11095, 0.0
      %11515 = vadd.xlane.f32.xlu0 %v11514
      %v11516 = vpop.xlane.xlu0 %11515
      %v11517 = vsel %vm839, %v11096, 0.0
      %11518 = vadd.xlane.f32.xlu0 %v11517
      %v11519 = vpop.xlane.xlu0 %11518
      %v11520 = vadd.f32 %v11516, %v11519
      %v11521 = vrot.slane %v11520, 4
      %v11522 = vadd.f32 %v11520, %v11521
      %v11523 = vrot.slane %v11522, 2
      %v11524 = vadd.f32 %v11522, %v11523
      %v11525 = vrot.slane %v11524, 1
      %v11526 = vadd.f32 %v11524, %v11525
      %v11527 = vsel %vm11472, %v11451, 0.0
      %11528 = vadd.xlane.f32.xlu0 %v11527
      %v11529 = vpop.xlane.xlu0 %11528
      %v11530 = vsel %vm11472, %v11452, 0.0
      %11531 = vadd.xlane.f32.xlu0 %v11530
      %v11532 = vpop.xlane.xlu0 %11531
      %v11533 = vsel %vm11472, %v11453, 0.0
      %11534 = vadd.xlane.f32.xlu0 %v11533
      %v11535 = vpop.xlane.xlu0 %11534
      %v11536 = vsel %vm11472, %v11454, 0.0
      %11537 = vadd.xlane.f32.xlu0 %v11536
      %v11538 = vpop.xlane.xlu0 %11537
      %v11539 = vsel %vm11472, %v11455, 0.0
      %11540 = vadd.xlane.f32.xlu0 %v11539
      %v11541 = vpop.xlane.xlu0 %11540
      %v11542 = vsel %vm11472, %v11456, 0.0
      %11543 = vadd.xlane.f32.xlu0 %v11542
      %v11544 = vpop.xlane.xlu0 %11543
      %v11545 = vsel %vm11472, %v11457, 0.0
      %11546 = vadd.xlane.f32.xlu0 %v11545
      %v11547 = vpop.xlane.xlu0 %11546
      %v11548 = vsel %vm11472, %v11458, 0.0
      %11549 = vadd.xlane.f32.xlu0 %v11548
      %v11550 = vpop.xlane.xlu0 %11549
      %v11551 = vadd.f32 %v11529, %v11532
      %v11552 = vadd.f32 %v11551, %v11535
      %v11553 = vadd.f32 %v11552, %v11538
      %v11554 = vadd.f32 %v11553, %v11541
      %v11555 = vadd.f32 %v11554, %v11544
      %v11556 = vadd.f32 %v11555, %v11547
      %v11557 = vadd.f32 %v11556, %v11550
      %v11558 = vrot.slane %v11557, 4
      %v11559 = vadd.f32 %v11557, %v11558
      %v11560 = vrot.slane %v11559, 2
      %v11561 = vadd.f32 %v11559, %v11560
      %v11562 = vrot.slane %v11561, 1
      %v11563 = vadd.f32 %v11561, %v11562
      %v11564 = vadd.f32 %v11526, %v11563
      %v11565 = vmul.f32 %v11564, 0.015625
      %v11566 = vadd.f32 %v11565, %v11512
      %v11568 = vlaneseq
      %v11569 = vshrl.u32 %v11568, 7
      %v11570 = vsub.s32 0, %v11569
      %v11571 = vrot.slane %v11566, %v11570
      %11572 = vrot.lane.b32.xlu0 %v11571, 1
      %v11573 = vpop.permute.xlu0 %11572
      %vm11575 = vcmask 7168
      %v11576 = vsel %vm11575, %v11513, %v11573
      %vm11577 = vcmask 8192
      %11578 = vst.msk [vmem:[%s597] sm:$0x1] %vm11577, %v11576
      %p11579 = scmp.lt.s32.totalorder %s31, 1
      %s11580 = scalar_select %p11579, %s31, 1
      %s11581 = scalar_lea.vmem %s18, %s11580
      // Predicated region
      $region93: #{discriminator_forward.1} parent=91 // pred_check
        %p11582 = pneg %p437
      $region94: #{discriminator_forward.1} parent=91 // pred_check_branch
        %11584 = sbr.rel (%p11582) target = $region96
      $region95: #{discriminator_forward.1} parent=91 // pred_region
        _
      $region96: #{discriminator_forward.1} parent=91 // pred_fallthru
        _
    $region92: #{discriminator_forward.1} parent=5 // pred_fallthru
      _
    %p11585 = scmp.le.s32.totalorder 2, %s26
    // Predicated region
    $region97: #{discriminator_forward.1} parent=5 // pred_check
      %p11586 = pneg %p11585
    $region98: #{discriminator_forward.1} parent=5 // pred_check_branch
      %11588 = sbr.rel (%p11586) target = $region100
    $region99: #{discriminator_forward.1} parent=5 // pred_region
      %s11589 = ssub.s32 %s26, 2
      // Predicated region
      $region101: #{discriminator_forward.1} parent=99 // pred_check
        %p11590 = pneg %p443
      $region102: #{discriminator_forward.1} parent=99 // pred_check_branch
        %11592 = sbr.rel (%p11590) target = $region104
      $region103: #{discriminator_forward.1} parent=99 // pred_region
        %p11593 = scmp.lt.s32.totalorder %s32, 1
        %s11594 = scalar_select %p11593, %s32, 1
        %s11595 = scalar_lea.vmem %s18, %s11594
      $region104: #{discriminator_forward.1} parent=99 // pred_fallthru
        _
    $region100: #{discriminator_forward.1} parent=5 // pred_fallthru
      _
  $region6: #{discriminator_forward.1} parent=0 // loop_footer
    %s30 = sadd.s32 1, %s26
  $region7: #{discriminator_forward.1} parent=0 // loop_footer_branch
    %25 = sbr.rel target = $region3
  $region8: #{discriminator_forward.1} parent=0 // loop_exit
    _

</llo_original>
